<compile_context>
chip_gen: v6e
topology: v6e:2x2x1
jax: 0.10.0
libtpu: 0.0.40
codegen_flags: <defaults>
</compile_context>

<pallas_src>
import jax
import jax.numpy as jnp
from jax.experimental import pallas as pl
from jax.experimental.pallas import tpu as pltpu

LATENT_DIMS = 2
IN_FEATURES = 784          # 1 * 28 * 28
HIDDEN = 512

# Lane-aligned padded sizes.
F_PAD = 896                # 7 * 128 : pads 784 to full 128-lane granules
LATENT_PAD = 128           # pad the 2-wide latent to one full lane block


def _round_up(a, m):
    return ((a + m - 1) // m) * m


def _cdiv(a, b):
    return -(-a // b)


def autoencoder_kernel(x_ref,
                       w1_ref, b1_ref,   # encoder fc1: 896 -> 512   (bf16 / f32)
                       w2_ref, b2_ref,   # encoder fc2: 512 -> 128   (bf16 / f32)
                       w3_ref, b3_ref,   # decoder fc1: 128 -> 512   (bf16 / f32)
                       w4_ref, b4_ref,   # decoder fc2: 512 -> 896   (bf16 / f32)
                       out_ref):
    # x tile arrives already in bf16 (streamed); f32 MXU accumulation.
    x = x_ref[...]                                                  # (TB, 896) bf16

    # ---- Encoder ----
    h = jnp.dot(x, w1_ref[...], preferred_element_type=jnp.float32) + b1_ref[...]
    h = jnp.maximum(h, 0.0)                                         # ReLU (f32, VPU)
    z = jnp.dot(h.astype(jnp.bfloat16), w2_ref[...],
                preferred_element_type=jnp.float32) + b2_ref[...]   # (TB, 128), lanes 2..127 == 0

    # ---- Decoder ----
    d = jnp.dot(z.astype(jnp.bfloat16), w3_ref[...],
                preferred_element_type=jnp.float32) + b3_ref[...]
    d = jnp.maximum(d, 0.0)                                         # ReLU (f32)
    y = jnp.dot(d.astype(jnp.bfloat16), w4_ref[...],
                preferred_element_type=jnp.float32) + b4_ref[...]

    out_ref[...] = jax.nn.sigmoid(y).astype(jnp.bfloat16)           # (TB, 896) bf16


def pad_params_for_kernel(params):
    """Zero-pad to lane-aligned shapes and cast weights to bf16 (once, host side)."""
    w1, b1, w2, b2, w3, b3, w4, b4 = params
    w1p = jnp.pad(w1, ((0, F_PAD - IN_FEATURES), (0, 0))).astype(jnp.bfloat16)
    b1p = b1.astype(jnp.float32)
    w2p = jnp.pad(w2, ((0, 0), (0, LATENT_PAD - LATENT_DIMS))).astype(jnp.bfloat16)
    b2p = jnp.pad(b2, ((0, 0), (0, LATENT_PAD - LATENT_DIMS))).astype(jnp.float32)
    w3p = jnp.pad(w3, ((0, LATENT_PAD - LATENT_DIMS), (0, 0))).astype(jnp.bfloat16)
    b3p = b3.astype(jnp.float32)
    w4p = jnp.pad(w4, ((0, 0), (0, F_PAD - IN_FEATURES))).astype(jnp.bfloat16)
    b4p = jnp.pad(b4, ((0, 0), (0, F_PAD - IN_FEATURES))).astype(jnp.float32)
    return (w1p, b1p, w2p, b2p, w3p, b3p, w4p, b4p)


def _tile_config(batch):
    """Pick (TB, vmem_limit_bytes) per chip generation.

    v5e: MXU-bound after bf16 I/O -> big tiles (TB up to 1024), >=2 grid steps
         for pipelining; 128 MiB physical VMEM easily covers 64 MiB scoped.
    v6e/v7x (and default): HBM-bound -> TB up to 512 and >=4 grid steps so
         megacore sharding (v7x) and x/out DMA pipelining engage; 32 MiB scoped.
    """
    kind = jax.devices()[0].device_kind.lower()
    is_v5e = ("v5e" in kind) or ("v5 lite" in kind) or ("v5lite" in kind)
    if is_v5e:
        tb_max, target_steps, vmem_bytes = 1024, 2, 64 << 20
    else:
        tb_max, target_steps, vmem_bytes = 512, 4, 32 << 20
    # TB: multiple of 16 (bf16 sublane packing), >=16, <= tb_max.
    tb = min(tb_max, max(16, _round_up(_cdiv(batch, target_steps), 16)))
    return tb, vmem_bytes


def _build_pallas_call(TB, B_pad, vmem_bytes, single_buffer_resident):
    nb = B_pad // TB

    def const_spec(shape):
        # Weights / biases: constant index_map -> resident in VMEM across all
        # grid steps; single-buffer them when supported (never re-fetched).
        if single_buffer_resident:
            return pl.BlockSpec(shape, lambda i: (0, 0),
                                pipeline_mode=pl.Buffered(1))
        return pl.BlockSpec(shape, lambda i: (0, 0))

    return pl.pallas_call(
        autoencoder_kernel,
        out_shape=jax.ShapeDtypeStruct((B_pad, F_PAD), jnp.bfloat16),
        grid=(nb,),
        in_specs=[
            pl.BlockSpec((TB, F_PAD), lambda i: (i, 0)),     # x: streamed bf16 tile
            const_spec((F_PAD, HIDDEN)),      const_spec((1, HIDDEN)),
            const_spec((HIDDEN, LATENT_PAD)), const_spec((1, LATENT_PAD)),
            const_spec((LATENT_PAD, HIDDEN)), const_spec((1, HIDDEN)),
            const_spec((HIDDEN, F_PAD)),      const_spec((1, F_PAD)),
        ],
        out_specs=pl.BlockSpec((TB, F_PAD), lambda i: (i, 0)),
        compiler_params=pltpu.CompilerParams(
            dimension_semantics=("parallel",),   # megacore sharding on v7x
            vmem_limit_bytes=vmem_bytes,
        ),
    )


def autoencoder_forward(x_nchw, params):
    """x_nchw: (B, 1, 28, 28) float32. Returns (B, 1, 28, 28) float32."""
    B = x_nchw.shape[0]
    TB, vmem_bytes = _tile_config(B)
    B_pad = _round_up(B, TB)

    # Cast to bf16 first (halves the pad traffic), then zero-pad batch/features.
    x_flat = x_nchw.reshape(B, IN_FEATURES).astype(jnp.bfloat16)
    x_padded = jnp.pad(x_flat, ((0, B_pad - B), (0, F_PAD - IN_FEATURES)))

    padded_params = pad_params_for_kernel(params)

    try:
        out_padded = _build_pallas_call(TB, B_pad, vmem_bytes, True)(
            x_padded, *padded_params)
    except Exception:
        # pl.Buffered(1) single-buffering not accepted by this jax build:
        # fall back to default double-buffered resident weights (correctness
        # identical, only ~2 MB extra VMEM).
        out_padded = _build_pallas_call(TB, B_pad, vmem_bytes, False)(
            x_padded, *padded_params)

    # Slice / reshape on the bf16 result; cast to f32 last.
    out = out_padded[:B, :IN_FEATURES].reshape(B, 1, 28, 28)
    return out.astype(jnp.float32)


def init_params(key):
    """Deterministic init matching the torch module's parameter shapes.

    Weights are stored transposed relative to torch (in, out) so the kernel
    does x @ W. Biases are (1, out). Scale mimics nn.Linear default init.
    """
    keys = jax.random.split(key, 8)

    def lin(kw, kb, fan_in, fan_out):
        bound = 1.0 / jnp.sqrt(jnp.float32(fan_in))
        w = jax.random.uniform(kw, (fan_in, fan_out), jnp.float32, -bound, bound)
        b = jax.random.uniform(kb, (1, fan_out), jnp.float32, -bound, bound)
        return w, b

    w1, b1 = lin(keys[0], keys[1], IN_FEATURES, HIDDEN)      # encoder.fc1
    w2, b2 = lin(keys[2], keys[3], HIDDEN, LATENT_DIMS)      # encoder.fc2
    w3, b3 = lin(keys[4], keys[5], LATENT_DIMS, HIDDEN)      # decoder.fc1
    w4, b4 = lin(keys[6], keys[7], HIDDEN, IN_FEATURES)      # decoder.fc2
    return (w1, b1, w2, b2, w3, b3, w4, b4)


def reference_forward(x_nchw, params):
    """Pure-JAX f32 reference for correctness checking."""
    w1, b1, w2, b2, w3, b3, w4, b4 = params
    B = x_nchw.shape[0]
    x = x_nchw.reshape(B, IN_FEATURES)
    h = jnp.maximum(x @ w1 + b1, 0.0)
    z = h @ w2 + b2
    d = jnp.maximum(z @ w3 + b3, 0.0)
    y = jax.nn.sigmoid(d @ w4 + b4)
    return y.reshape(B, 1, 28, 28)


if __name__ == "__main__":
    key = jax.random.PRNGKey(0)
    k_x, k_p = jax.random.split(key)

    B = 2
    x = jax.random.normal(k_x, (B, 1, 28, 28), jnp.float32)
    params = init_params(k_p)

    out = autoencoder_forward(x, params)
    out = jax.block_until_ready(out)

    ref = reference_forward(x, params)
    assert out.shape == (B, 1, 28, 28)
    # bf16 streams + bf16 MXU operands with f32 accumulation -> loose tolerance.
    assert jnp.allclose(out, ref, atol=3e-2, rtol=3e-2), "mismatch vs reference"

    print("KERNEL_OK")
</pallas_src>

<mosaic_0001>
module attributes {stable_mosaic.version = 11 : i64} {
  func.func @autoencoder_kernel(%arg0: i32, %arg1: memref<16x896xbf16, #tpu.memory_space<vmem>>, %arg2: memref<896x512xbf16, #tpu.memory_space<vmem>>, %arg3: memref<1x512xf32, #tpu.memory_space<vmem>>, %arg4: memref<512x128xbf16, #tpu.memory_space<vmem>>, %arg5: memref<1x128xf32, #tpu.memory_space<vmem>>, %arg6: memref<128x512xbf16, #tpu.memory_space<vmem>>, %arg7: memref<1x512xf32, #tpu.memory_space<vmem>>, %arg8: memref<512x896xbf16, #tpu.memory_space<vmem>>, %arg9: memref<1x896xf32, #tpu.memory_space<vmem>>, %arg10: memref<16x896xbf16, #tpu.memory_space<vmem>>) attributes {dimension_semantics = [#tpu.dimension_semantics<parallel>], iteration_bounds = array<i64: 1>, scalar_prefetch = 0 : i64, scratch_operands = 0 : i64, tpu.core_type = #tpu.core_type<tc>, window_params = [{transform_indices = @transform_0, window_bounds = array<i64: 16, 896>}, {pipeline_mode = #tpu.pipeline_mode<synchronous>, transform_indices = @transform_1, window_bounds = array<i64: 896, 512>}, {pipeline_mode = #tpu.pipeline_mode<synchronous>, transform_indices = @transform_2, window_bounds = array<i64: 1, 512>}, {pipeline_mode = #tpu.pipeline_mode<synchronous>, transform_indices = @transform_3, window_bounds = array<i64: 512, 128>}, {pipeline_mode = #tpu.pipeline_mode<synchronous>, transform_indices = @transform_4, window_bounds = array<i64: 1, 128>}, {pipeline_mode = #tpu.pipeline_mode<synchronous>, transform_indices = @transform_5, window_bounds = array<i64: 128, 512>}, {pipeline_mode = #tpu.pipeline_mode<synchronous>, transform_indices = @transform_6, window_bounds = array<i64: 1, 512>}, {pipeline_mode = #tpu.pipeline_mode<synchronous>, transform_indices = @transform_7, window_bounds = array<i64: 512, 896>}, {pipeline_mode = #tpu.pipeline_mode<synchronous>, transform_indices = @transform_8, window_bounds = array<i64: 1, 896>}, {transform_indices = @transform_9, window_bounds = array<i64: 16, 896>}]} {
    %c0 = arith.constant 0 : index
    %c0_0 = arith.constant 0 : index
    %0 = vector.load %arg1[%c0, %c0_0] : memref<16x896xbf16, #tpu.memory_space<vmem>>, vector<16x896xbf16>
    %c0_1 = arith.constant 0 : index
    %c0_2 = arith.constant 0 : index
    %1 = vector.load %arg2[%c0_1, %c0_2] : memref<896x512xbf16, #tpu.memory_space<vmem>>, vector<896x512xbf16>
    %cst = arith.constant dense<0.000000e+00> : vector<16x512xf32>
    %2 = tpu.matmul %0, %1, %cst {dimension_numbers = #tpu.dot_dimension_numbers<[1], [0], [0], [1], [0, 0, 1, 1], [], []>} : vector<16x896xbf16>, vector<896x512xbf16>, vector<16x512xf32> -> vector<16x512xf32>
    %c0_3 = arith.constant 0 : index
    %c0_4 = arith.constant 0 : index
    %3 = vector.load %arg3[%c0_3, %c0_4] : memref<1x512xf32, #tpu.memory_space<vmem>>, vector<1x512xf32>
    %4 = vector.broadcast %3 : vector<1x512xf32> to vector<16x512xf32>
    %5 = arith.addf %2, %4 : vector<16x512xf32>
    %cst_5 = arith.constant 0.000000e+00 : f32
    %6 = vector.broadcast %cst_5 : f32 to vector<16x512xf32>
    %7 = arith.maximumf %5, %6 : vector<16x512xf32>
    %8 = arith.truncf %7 : vector<16x512xf32> to vector<16x512xbf16>
    %c0_6 = arith.constant 0 : index
    %c0_7 = arith.constant 0 : index
    %9 = vector.load %arg4[%c0_6, %c0_7] : memref<512x128xbf16, #tpu.memory_space<vmem>>, vector<512x128xbf16>
    %cst_8 = arith.constant dense<0.000000e+00> : vector<16x128xf32>
    %10 = tpu.matmul %8, %9, %cst_8 {dimension_numbers = #tpu.dot_dimension_numbers<[1], [0], [0], [1], [0, 0, 1, 1], [], []>} : vector<16x512xbf16>, vector<512x128xbf16>, vector<16x128xf32> -> vector<16x128xf32>
    %c0_9 = arith.constant 0 : index
    %c0_10 = arith.constant 0 : index
    %11 = vector.load %arg5[%c0_9, %c0_10] : memref<1x128xf32, #tpu.memory_space<vmem>>, vector<1x128xf32>
    %12 = vector.broadcast %11 : vector<1x128xf32> to vector<16x128xf32>
    %13 = arith.addf %10, %12 : vector<16x128xf32>
    %14 = arith.truncf %13 : vector<16x128xf32> to vector<16x128xbf16>
    %c0_11 = arith.constant 0 : index
    %c0_12 = arith.constant 0 : index
    %15 = vector.load %arg6[%c0_11, %c0_12] : memref<128x512xbf16, #tpu.memory_space<vmem>>, vector<128x512xbf16>
    %cst_13 = arith.constant dense<0.000000e+00> : vector<16x512xf32>
    %16 = tpu.matmul %14, %15, %cst_13 {dimension_numbers = #tpu.dot_dimension_numbers<[1], [0], [0], [1], [0, 0, 1, 1], [], []>} : vector<16x128xbf16>, vector<128x512xbf16>, vector<16x512xf32> -> vector<16x512xf32>
    %c0_14 = arith.constant 0 : index
    %c0_15 = arith.constant 0 : index
    %17 = vector.load %arg7[%c0_14, %c0_15] : memref<1x512xf32, #tpu.memory_space<vmem>>, vector<1x512xf32>
    %18 = vector.broadcast %17 : vector<1x512xf32> to vector<16x512xf32>
    %19 = arith.addf %16, %18 : vector<16x512xf32>
    %cst_16 = arith.constant 0.000000e+00 : f32
    %20 = vector.broadcast %cst_16 : f32 to vector<16x512xf32>
    %21 = arith.maximumf %19, %20 : vector<16x512xf32>
    %22 = arith.truncf %21 : vector<16x512xf32> to vector<16x512xbf16>
    %c0_17 = arith.constant 0 : index
    %c0_18 = arith.constant 0 : index
    %23 = vector.load %arg8[%c0_17, %c0_18] : memref<512x896xbf16, #tpu.memory_space<vmem>>, vector<512x896xbf16>
    %cst_19 = arith.constant dense<0.000000e+00> : vector<16x896xf32>
    %24 = tpu.matmul %22, %23, %cst_19 {dimension_numbers = #tpu.dot_dimension_numbers<[1], [0], [0], [1], [0, 0, 1, 1], [], []>} : vector<16x512xbf16>, vector<512x896xbf16>, vector<16x896xf32> -> vector<16x896xf32>
    %c0_20 = arith.constant 0 : index
    %c0_21 = arith.constant 0 : index
    %25 = vector.load %arg9[%c0_20, %c0_21] : memref<1x896xf32, #tpu.memory_space<vmem>>, vector<1x896xf32>
    %26 = vector.broadcast %25 : vector<1x896xf32> to vector<16x896xf32>
    %27 = arith.addf %24, %26 : vector<16x896xf32>
    %28 = arith.negf %27 : vector<16x896xf32>
    %29 = math.exp %28 : vector<16x896xf32>
    %cst_22 = arith.constant 1.000000e+00 : f32
    %30 = vector.broadcast %cst_22 : f32 to vector<16x896xf32>
    %31 = arith.addf %30, %29 : vector<16x896xf32>
    %32 = arith.divf %30, %31 : vector<16x896xf32>
    %33 = arith.truncf %32 : vector<16x896xf32> to vector<16x896xbf16>
    %c0_23 = arith.constant 0 : index
    %c0_24 = arith.constant 0 : index
    %34 = vector.load %arg10[%c0_23, %c0_24] : memref<16x896xbf16, #tpu.memory_space<vmem>>, vector<16x896xbf16>
    tpu.vector_store %arg10[%c0_23, %c0_24], %33 {strides = array<i32>} : memref<16x896xbf16, #tpu.memory_space<vmem>>, vector<16x896xbf16>,
    return
  }
  func.func @transform_0(%arg0: i32) -> (i32, i32) {
    %c0_i32 = arith.constant 0 : i32
    %c0_i32_0 = arith.constant 0 : i32
    return %arg0, %c0_i32 : i32, i32
  }
  func.func @transform_1(%arg0: i32) -> (i32, i32) {
    %c0_i32 = arith.constant 0 : i32
    %c0_i32_0 = arith.constant 0 : i32
    %c0_i32_1 = arith.constant 0 : i32
    return %c0_i32, %c0_i32_0 : i32, i32
  }
  func.func @transform_2(%arg0: i32) -> (i32, i32) {
    %c0_i32 = arith.constant 0 : i32
    %c0_i32_0 = arith.constant 0 : i32
    %c0_i32_1 = arith.constant 0 : i32
    return %c0_i32, %c0_i32_0 : i32, i32
  }
  func.func @transform_3(%arg0: i32) -> (i32, i32) {
    %c0_i32 = arith.constant 0 : i32
    %c0_i32_0 = arith.constant 0 : i32
    %c0_i32_1 = arith.constant 0 : i32
    return %c0_i32, %c0_i32_0 : i32, i32
  }
  func.func @transform_4(%arg0: i32) -> (i32, i32) {
    %c0_i32 = arith.constant 0 : i32
    %c0_i32_0 = arith.constant 0 : i32
    %c0_i32_1 = arith.constant 0 : i32
    return %c0_i32, %c0_i32_0 : i32, i32
  }
  func.func @transform_5(%arg0: i32) -> (i32, i32) {
    %c0_i32 = arith.constant 0 : i32
    %c0_i32_0 = arith.constant 0 : i32
    %c0_i32_1 = arith.constant 0 : i32
    return %c0_i32, %c0_i32_0 : i32, i32
  }
  func.func @transform_6(%arg0: i32) -> (i32, i32) {
    %c0_i32 = arith.constant 0 : i32
    %c0_i32_0 = arith.constant 0 : i32
    %c0_i32_1 = arith.constant 0 : i32
    return %c0_i32, %c0_i32_0 : i32, i32
  }
  func.func @transform_7(%arg0: i32) -> (i32, i32) {
    %c0_i32 = arith.constant 0 : i32
    %c0_i32_0 = arith.constant 0 : i32
    %c0_i32_1 = arith.constant 0 : i32
    return %c0_i32, %c0_i32_0 : i32, i32
  }
  func.func @transform_8(%arg0: i32) -> (i32, i32) {
    %c0_i32 = arith.constant 0 : i32
    %c0_i32_0 = arith.constant 0 : i32
    %c0_i32_1 = arith.constant 0 : i32
    return %c0_i32, %c0_i32_0 : i32, i32
  }
  func.func @transform_9(%arg0: i32) -> (i32, i32) {
    %c0_i32 = arith.constant 0 : i32
    %c0_i32_0 = arith.constant 0 : i32
    return %arg0, %c0_i32 : i32, i32
  }
}

module attributes {stable_mosaic.version = 11 : i64} {
  func.func @autoencoder_kernel(%arg0: i32, %arg1: memref<16x896xbf16, #tpu.memory_space<vmem>>, %arg2: memref<896x512xbf16, #tpu.memory_space<vmem>>, %arg3: memref<1x512xf32, #tpu.memory_space<vmem>>, %arg4: memref<512x128xbf16, #tpu.memory_space<vmem>>, %arg5: memref<1x128xf32, #tpu.memory_space<vmem>>, %arg6: memref<128x512xbf16, #tpu.memory_space<vmem>>, %arg7: memref<1x512xf32, #tpu.memory_space<vmem>>, %arg8: memref<512x896xbf16, #tpu.memory_space<vmem>>, %arg9: memref<1x896xf32, #tpu.memory_space<vmem>>, %arg10: memref<16x896xbf16, #tpu.memory_space<vmem>>) attributes {dimension_semantics = [#tpu.dimension_semantics<parallel>], iteration_bounds = array<i64: 1>, scalar_prefetch = 0 : i64, scratch_operands = 0 : i64, tpu.core_type = #tpu.core_type<tc>, window_params = [{transform_indices = @transform_0, window_bounds = array<i64: 16, 896>}, {pipeline_mode = #tpu.pipeline_mode<synchronous>, transform_indices = @transform_1, window_bounds = array<i64: 896, 512>}, {pipeline_mode = #tpu.pipeline_mode<synchronous>, transform_indices = @transform_2, window_bounds = array<i64: 1, 512>}, {pipeline_mode = #tpu.pipeline_mode<synchronous>, transform_indices = @transform_3, window_bounds = array<i64: 512, 128>}, {pipeline_mode = #tpu.pipeline_mode<synchronous>, transform_indices = @transform_4, window_bounds = array<i64: 1, 128>}, {pipeline_mode = #tpu.pipeline_mode<synchronous>, transform_indices = @transform_5, window_bounds = array<i64: 128, 512>}, {pipeline_mode = #tpu.pipeline_mode<synchronous>, transform_indices = @transform_6, window_bounds = array<i64: 1, 512>}, {pipeline_mode = #tpu.pipeline_mode<synchronous>, transform_indices = @transform_7, window_bounds = array<i64: 512, 896>}, {pipeline_mode = #tpu.pipeline_mode<synchronous>, transform_indices = @transform_8, window_bounds = array<i64: 1, 896>}, {transform_indices = @transform_9, window_bounds = array<i64: 16, 896>}]} {
    %c0 = arith.constant 0 : index
    %c0_0 = arith.constant 0 : index
    %0 = vector.load %arg1[%c0, %c0_0] : memref<16x896xbf16, #tpu.memory_space<vmem>>, vector<16x896xbf16>
    %c0_1 = arith.constant 0 : index
    %c0_2 = arith.constant 0 : index
    %1 = vector.load %arg2[%c0_1, %c0_2] : memref<896x512xbf16, #tpu.memory_space<vmem>>, vector<896x512xbf16>
    %cst = arith.constant dense<0.000000e+00> : vector<16x512xf32>
    %2 = tpu.matmul %0, %1, %cst {dimension_numbers = #tpu.dot_dimension_numbers<[1], [0], [0], [1], [0, 0, 1, 1], [], []>} : vector<16x896xbf16>, vector<896x512xbf16>, vector<16x512xf32> -> vector<16x512xf32>
    %c0_3 = arith.constant 0 : index
    %c0_4 = arith.constant 0 : index
    %3 = vector.load %arg3[%c0_3, %c0_4] : memref<1x512xf32, #tpu.memory_space<vmem>>, vector<1x512xf32>
    %4 = vector.broadcast %3 : vector<1x512xf32> to vector<16x512xf32>
    %5 = arith.addf %2, %4 : vector<16x512xf32>
    %cst_5 = arith.constant 0.000000e+00 : f32
    %6 = vector.broadcast %cst_5 : f32 to vector<16x512xf32>
    %7 = arith.maximumf %5, %6 : vector<16x512xf32>
    %8 = arith.truncf %7 : vector<16x512xf32> to vector<16x512xbf16>
    %c0_6 = arith.constant 0 : index
    %c0_7 = arith.constant 0 : index
    %9 = vector.load %arg4[%c0_6, %c0_7] : memref<512x128xbf16, #tpu.memory_space<vmem>>, vector<512x128xbf16>
    %cst_8 = arith.constant dense<0.000000e+00> : vector<16x128xf32>
    %10 = tpu.matmul %8, %9, %cst_8 {dimension_numbers = #tpu.dot_dimension_numbers<[1], [0], [0], [1], [0, 0, 1, 1], [], []>} : vector<16x512xbf16>, vector<512x128xbf16>, vector<16x128xf32> -> vector<16x128xf32>
    %c0_9 = arith.constant 0 : index
    %c0_10 = arith.constant 0 : index
    %11 = vector.load %arg5[%c0_9, %c0_10] : memref<1x128xf32, #tpu.memory_space<vmem>>, vector<1x128xf32>
    %12 = vector.broadcast %11 : vector<1x128xf32> to vector<16x128xf32>
    %13 = arith.addf %10, %12 : vector<16x128xf32>
    %14 = arith.truncf %13 : vector<16x128xf32> to vector<16x128xbf16>
    %c0_11 = arith.constant 0 : index
    %c0_12 = arith.constant 0 : index
    %15 = vector.load %arg6[%c0_11, %c0_12] : memref<128x512xbf16, #tpu.memory_space<vmem>>, vector<128x512xbf16>
    %cst_13 = arith.constant dense<0.000000e+00> : vector<16x512xf32>
    %16 = tpu.matmul %14, %15, %cst_13 {dimension_numbers = #tpu.dot_dimension_numbers<[1], [0], [0], [1], [0, 0, 1, 1], [], []>} : vector<16x128xbf16>, vector<128x512xbf16>, vector<16x512xf32> -> vector<16x512xf32>
    %c0_14 = arith.constant 0 : index
    %c0_15 = arith.constant 0 : index
    %17 = vector.load %arg7[%c0_14, %c0_15] : memref<1x512xf32, #tpu.memory_space<vmem>>, vector<1x512xf32>
    %18 = vector.broadcast %17 : vector<1x512xf32> to vector<16x512xf32>
    %19 = arith.addf %16, %18 : vector<16x512xf32>
    %cst_16 = arith.constant 0.000000e+00 : f32
    %20 = vector.broadcast %cst_16 : f32 to vector<16x512xf32>
    %21 = arith.maximumf %19, %20 : vector<16x512xf32>
    %22 = arith.truncf %21 : vector<16x512xf32> to vector<16x512xbf16>
    %c0_17 = arith.constant 0 : index
    %c0_18 = arith.constant 0 : index
    %23 = vector.load %arg8[%c0_17, %c0_18] : memref<512x896xbf16, #tpu.memory_space<vmem>>, vector<512x896xbf16>
    %cst_19 = arith.constant dense<0.000000e+00> : vector<16x896xf32>
    %24 = tpu.matmul %22, %23, %cst_19 {dimension_numbers = #tpu.dot_dimension_numbers<[1], [0], [0], [1], [0, 0, 1, 1], [], []>} : vector<16x512xbf16>, vector<512x896xbf16>, vector<16x896xf32> -> vector<16x896xf32>
    %c0_20 = arith.constant 0 : index
    %c0_21 = arith.constant 0 : index
    %25 = vector.load %arg9[%c0_20, %c0_21] : memref<1x896xf32, #tpu.memory_space<vmem>>, vector<1x896xf32>
    %26 = vector.broadcast %25 : vector<1x896xf32> to vector<16x896xf32>
    %27 = arith.addf %24, %26 : vector<16x896xf32>
    %28 = arith.negf %27 : vector<16x896xf32>
    %29 = math.exp %28 : vector<16x896xf32>
    %cst_22 = arith.constant 1.000000e+00 : f32
    %30 = vector.broadcast %cst_22 : f32 to vector<16x896xf32>
    %31 = arith.addf %30, %29 : vector<16x896xf32>
    %32 = arith.divf %30, %31 : vector<16x896xf32>
    %33 = arith.truncf %32 : vector<16x896xf32> to vector<16x896xbf16>
    %c0_23 = arith.constant 0 : index
    %c0_24 = arith.constant 0 : index
    %34 = vector.load %arg10[%c0_23, %c0_24] : memref<16x896xbf16, #tpu.memory_space<vmem>>, vector<16x896xbf16>
    tpu.vector_store %arg10[%c0_23, %c0_24], %33 {strides = array<i32>} : memref<16x896xbf16, #tpu.memory_space<vmem>>, vector<16x896xbf16>,
    return
  }
  func.func @transform_0(%arg0: i32) -> (i32, i32) {
    %c0_i32 = arith.constant 0 : i32
    %c0_i32_0 = arith.constant 0 : i32
    return %arg0, %c0_i32 : i32, i32
  }
  func.func @transform_1(%arg0: i32) -> (i32, i32) {
    %c0_i32 = arith.constant 0 : i32
    %c0_i32_0 = arith.constant 0 : i32
    %c0_i32_1 = arith.constant 0 : i32
    return %c0_i32, %c0_i32_0 : i32, i32
  }
  func.func @transform_2(%arg0: i32) -> (i32, i32) {
    %c0_i32 = arith.constant 0 : i32
    %c0_i32_0 = arith.constant 0 : i32
    %c0_i32_1 = arith.constant 0 : i32
    return %c0_i32, %c0_i32_0 : i32, i32
  }
  func.func @transform_3(%arg0: i32) -> (i32, i32) {
    %c0_i32 = arith.constant 0 : i32
    %c0_i32_0 = arith.constant 0 : i32
    %c0_i32_1 = arith.constant 0 : i32
    return %c0_i32, %c0_i32_0 : i32, i32
  }
  func.func @transform_4(%arg0: i32) -> (i32, i32) {
    %c0_i32 = arith.constant 0 : i32
    %c0_i32_0 = arith.constant 0 : i32
    %c0_i32_1 = arith.constant 0 : i32
    return %c0_i32, %c0_i32_0 : i32, i32
  }
  func.func @transform_5(%arg0: i32) -> (i32, i32) {
    %c0_i32 = arith.constant 0 : i32
    %c0_i32_0 = arith.constant 0 : i32
    %c0_i32_1 = arith.constant 0 : i32
    return %c0_i32, %c0_i32_0 : i32, i32
  }
  func.func @transform_6(%arg0: i32) -> (i32, i32) {
    %c0_i32 = arith.constant 0 : i32
    %c0_i32_0 = arith.constant 0 : i32
    %c0_i32_1 = arith.constant 0 : i32
    return %c0_i32, %c0_i32_0 : i32, i32
  }
  func.func @transform_7(%arg0: i32) -> (i32, i32) {
    %c0_i32 = arith.constant 0 : i32
    %c0_i32_0 = arith.constant 0 : i32
    %c0_i32_1 = arith.constant 0 : i32
    return %c0_i32, %c0_i32_0 : i32, i32
  }
  func.func @transform_8(%arg0: i32) -> (i32, i32) {
    %c0_i32 = arith.constant 0 : i32
    %c0_i32_0 = arith.constant 0 : i32
    %c0_i32_1 = arith.constant 0 : i32
    return %c0_i32, %c0_i32_0 : i32, i32
  }
  func.func @transform_9(%arg0: i32) -> (i32, i32) {
    %c0_i32 = arith.constant 0 : i32
    %c0_i32_0 = arith.constant 0 : i32
    return %arg0, %c0_i32 : i32, i32
  }
}

</mosaic_0001>

<llo_original>
// kernel: tpu_custom_call.1
$region0: #{tpu_custom_call.1}
  #allocation0 [shape = 'u32[]', space=smem, size = 0x4, offset = 0x4, fixed_abs, tag = 'smem constant byte address 0x4 - core index']
  #allocation1 [shape = 'u32[144,128]{1,0:T(1,128)}', space=vmem, size = 0x12000, scoped, tag = 'internal scratch']
  %s0 = inlined_call_operand.hbm [shape: bf16[16,896], index: 0, kind: input, shape index: {}]
  %s1 = inlined_call_operand.hbm [shape: bf16[896,512], index: 1, kind: input, shape index: {}]
  %s2 = inlined_call_operand.hbm [shape: f32[1,512], index: 2, kind: input, shape index: {}]
  %s3 = inlined_call_operand.hbm [shape: bf16[512,128], index: 3, kind: input, shape index: {}]
  %s4 = inlined_call_operand.vmem [shape: f32[1,128], index: 4, kind: input, shape index: {}]
  %s5 = inlined_call_operand.hbm [shape: bf16[128,512], index: 5, kind: input, shape index: {}]
  %s6 = inlined_call_operand.vmem [shape: f32[1,512], index: 6, kind: input, shape index: {}]
  %s7 = inlined_call_operand.hbm [shape: bf16[512,896], index: 7, kind: input, shape index: {}]
  %s8 = inlined_call_operand.vmem [shape: f32[1,896], index: 8, kind: input, shape index: {}]
  %s9 = inlined_call_operand.hbm [shape: bf16[16,896], index: 9, kind: output, shape index: {}]
  %s10 = sld [smem:[#allocation0]]
  $region70: #{tpu_custom_call.1} parent=0
    _
  %s12 = ssub.s32 1, %s10
  %s13 = scalar_select 0, %s12, %s10
  $region1: #{tpu_custom_call.1} parent=0
    #allocation2 [shape = 'u8[28672]{0}', space=vmem, size = 0x7000, scoped, tag = 'input window, operand 0, single buffered']
    #allocation3 [shape = 's32[1]{0}', space=sflag, size = 0x4, scoped, tag = 'scoped memory for tpu_custom_call.1']
    #allocation4 [shape = 's32[1]{0}', space=sflag, size = 0x4, scoped, tag = 'scoped memory for tpu_custom_call.1']
    #allocation5 [shape = 'u8[917504]{0}', space=vmem, size = 0xe0000, scoped, tag = 'input window, operand 1, single buffered']
    #allocation6 [shape = 's32[1]{0}', space=sflag, size = 0x4, scoped, tag = 'scoped memory for tpu_custom_call.1']
    #allocation7 [shape = 'u8[2048]{0}', space=vmem, size = 0x800, scoped, tag = 'input window, operand 2, single buffered']
    #allocation8 [shape = 'u8[131072]{0}', space=vmem, size = 0x20000, scoped, tag = 'input window, operand 3, single buffered']
    #allocation9 [shape = 's32[1]{0}', space=sflag, size = 0x4, scoped, tag = 'scoped memory for tpu_custom_call.1']
    #allocation10 [shape = 'u8[131072]{0}', space=vmem, size = 0x20000, scoped, tag = 'input window, operand 5, single buffered']
    #allocation11 [shape = 'u8[917504]{0}', space=vmem, size = 0xe0000, scoped, tag = 'input window, operand 7, single buffered']
    #allocation12 [shape = 's32[1]{0}', space=sflag, size = 0x4, scoped, tag = 'scoped memory for tpu_custom_call.1']
    #allocation13 [shape = 'u8[28672]{0}', space=vmem, size = 0x7000, scoped, tag = 'output window, operand 0, single buffered']
    %14 = vsyncpa [#allocation3], 0
    %15 = vsyncpa [#allocation6], 0
    %16 = vsyncpa [#allocation9], 0
    %17 = vsyncpa [#allocation12], 0
    %18 = vsyncpa [#allocation4], 0
    // Predicated region
    $region2: #{tpu_custom_call.1} parent=1 // pred_check
      _
    $region3: #{tpu_custom_call.1} parent=1 // pred_check_branch
      %20 = sbr.rel (0) target = $region5
    $region4: #{tpu_custom_call.1} parent=1 // pred_region
      %s22 = ssub.s32 896, 896
      %23 = vsyncadd [#allocation3], %s22
      %s24 = sshll.u32 [#allocation2], 4
      %s25 = int_to_ptr.vmem [resolvable:$true] %s24
      %30 = dma.hbm_to_vmem [thread:$0]  %s0, 896, %s25, [#allocation3], 448, 448, 28
    $region5: #{tpu_custom_call.1} parent=1 // pred_fallthru
      _
    // Predicated region
    $region6: #{tpu_custom_call.1} parent=1 // pred_check
      _
    $region7: #{tpu_custom_call.1} parent=1 // pred_check_branch
      %32 = sbr.rel (0) target = $region9
    $region8: #{tpu_custom_call.1} parent=1 // pred_region
      %s34 = ssub.s32 28672, 28672
      %35 = vsyncadd [#allocation6], %s34
      %s36 = sshll.u32 [#allocation5], 4
      %s37 = int_to_ptr.vmem [resolvable:$true] %s36
      %42 = dma.hbm_to_vmem [thread:$0]  %s1, 28672, %s37, [#allocation6], 256, 256, 16
    $region9: #{tpu_custom_call.1} parent=1 // pred_fallthru
      _
    // Predicated region
    $region10: #{tpu_custom_call.1} parent=1 // pred_check
      _
    $region11: #{tpu_custom_call.1} parent=1 // pred_check_branch
      %44 = sbr.rel (0) target = $region13
    $region12: #{tpu_custom_call.1} parent=1 // pred_region
      %s46 = ssub.s32 64, 64
      %47 = vsyncadd [#allocation6], %s46
      %s49 = sshll.u32 [#allocation7], 4
      %s50 = int_to_ptr.vmem [resolvable:$true] %s49
      %52 = dma.hbm_to_vmem [thread:$0]  %s2, 64, %s50, [#allocation6]
    $region13: #{tpu_custom_call.1} parent=1 // pred_fallthru
      _
    // Predicated region
    $region14: #{tpu_custom_call.1} parent=1 // pred_check
      _
    $region15: #{tpu_custom_call.1} parent=1 // pred_check_branch
      %54 = sbr.rel (0) target = $region17
    $region16: #{tpu_custom_call.1} parent=1 // pred_region
      %s56 = ssub.s32 4096, 4096
      %57 = vsyncadd [#allocation9], %s56
      %s58 = sshll.u32 [#allocation8], 4
      %s59 = int_to_ptr.vmem [resolvable:$true] %s58
      %64 = dma.hbm_to_vmem [thread:$0]  %s3, 4096, %s59, [#allocation9], 64, 64, 4
    $region17: #{tpu_custom_call.1} parent=1 // pred_fallthru
      _
    // Predicated region
    $region18: #{tpu_custom_call.1} parent=1 // pred_check
      _
    $region19: #{tpu_custom_call.1} parent=1 // pred_check_branch
      %66 = sbr.rel (0) target = $region21
    $region20: #{tpu_custom_call.1} parent=1 // pred_region
      _
    $region21: #{tpu_custom_call.1} parent=1 // pred_fallthru
      _
    // Predicated region
    $region22: #{tpu_custom_call.1} parent=1 // pred_check
      _
    $region23: #{tpu_custom_call.1} parent=1 // pred_check_branch
      %68 = sbr.rel (0) target = $region25
    $region24: #{tpu_custom_call.1} parent=1 // pred_region
      %s70 = ssub.s32 4096, 4096
      %71 = vsyncadd [#allocation9], %s70
      %s72 = sshll.u32 [#allocation10], 4
      %s73 = int_to_ptr.vmem [resolvable:$true] %s72
      %78 = dma.hbm_to_vmem [thread:$0]  %s5, 4096, %s73, [#allocation9], 256, 256, 16
    $region25: #{tpu_custom_call.1} parent=1 // pred_fallthru
      _
    // Predicated region
    $region26: #{tpu_custom_call.1} parent=1 // pred_check
      _
    $region27: #{tpu_custom_call.1} parent=1 // pred_check_branch
      %80 = sbr.rel (0) target = $region29
    $region28: #{tpu_custom_call.1} parent=1 // pred_region
      _
    $region29: #{tpu_custom_call.1} parent=1 // pred_fallthru
      _
    // Predicated region
    $region30: #{tpu_custom_call.1} parent=1 // pred_check
      _
    $region31: #{tpu_custom_call.1} parent=1 // pred_check_branch
      %82 = sbr.rel (0) target = $region33
    $region32: #{tpu_custom_call.1} parent=1 // pred_region
      %s84 = ssub.s32 28672, 28672
      %85 = vsyncadd [#allocation12], %s84
      %s86 = sshll.u32 [#allocation11], 4
      %s87 = int_to_ptr.vmem [resolvable:$true] %s86
      %92 = dma.hbm_to_vmem [thread:$0]  %s7, 28672, %s87, [#allocation12], 448, 448, 28
    $region33: #{tpu_custom_call.1} parent=1 // pred_fallthru
      _
    // Predicated region
    $region34: #{tpu_custom_call.1} parent=1 // pred_check
      _
    $region35: #{tpu_custom_call.1} parent=1 // pred_check_branch
      %94 = sbr.rel (0) target = $region37
    $region36: #{tpu_custom_call.1} parent=1 // pred_region
      _
    $region37: #{tpu_custom_call.1} parent=1 // pred_fallthru
      _
    // Predicated region
    $region38: #{tpu_custom_call.1} parent=1 // pred_check
      _
    $region39: #{tpu_custom_call.1} parent=1 // pred_check_branch
      %96 = sbr.rel (0) target = $region41
    $region40: #{tpu_custom_call.1} parent=1 // pred_region
      %97 = dma.done [#allocation3], 896
    $region41: #{tpu_custom_call.1} parent=1 // pred_fallthru
      _
    // Predicated region
    $region42: #{tpu_custom_call.1} parent=1 // pred_check
      _
    $region43: #{tpu_custom_call.1} parent=1 // pred_check_branch
      %99 = sbr.rel (0) target = $region45
    $region44: #{tpu_custom_call.1} parent=1 // pred_region
      %100 = dma.done [#allocation6], 28672
    $region45: #{tpu_custom_call.1} parent=1 // pred_fallthru
      _
    // Predicated region
    $region46: #{tpu_custom_call.1} parent=1 // pred_check
      _
    $region47: #{tpu_custom_call.1} parent=1 // pred_check_branch
      %102 = sbr.rel (0) target = $region49
    $region48: #{tpu_custom_call.1} parent=1 // pred_region
      %103 = dma.done [#allocation6], 64
    $region49: #{tpu_custom_call.1} parent=1 // pred_fallthru
      _
    // Predicated region
    $region50: #{tpu_custom_call.1} parent=1 // pred_check
      _
    $region51: #{tpu_custom_call.1} parent=1 // pred_check_branch
      %105 = sbr.rel (0) target = $region53
    $region52: #{tpu_custom_call.1} parent=1 // pred_region
      %106 = dma.done [#allocation9], 4096
    $region53: #{tpu_custom_call.1} parent=1 // pred_fallthru
      _
    // Predicated region
    $region54: #{tpu_custom_call.1} parent=1 // pred_check
      _
    $region55: #{tpu_custom_call.1} parent=1 // pred_check_branch
      %108 = sbr.rel (0) target = $region57
    $region56: #{tpu_custom_call.1} parent=1 // pred_region
      %109 = dma.done [#allocation9], 4096
    $region57: #{tpu_custom_call.1} parent=1 // pred_fallthru
      _
    // Predicated region
    $region58: #{tpu_custom_call.1} parent=1 // pred_check
      _
    $region59: #{tpu_custom_call.1} parent=1 // pred_check_branch
      %111 = sbr.rel (0) target = $region61
    $region60: #{tpu_custom_call.1} parent=1 // pred_region
      %112 = dma.done [#allocation12], 28672
    $region61: #{tpu_custom_call.1} parent=1 // pred_fallthru
      _
    %v114 = vld [vmem:[#allocation2] sm:$0xff]
    %v115 = vld [vmem:[#allocation2 + $0x8] sm:$0xff]
    %v116 = vld [vmem:[#allocation2 + $0x10] sm:$0xff]
    %v117 = vld [vmem:[#allocation2 + $0x18] sm:$0xf]
    %v118 = vld [vmem:[#allocation2 + $0x1c] sm:$0xff]
    %v119 = vld [vmem:[#allocation2 + $0x24] sm:$0xff]
    %v120 = vld [vmem:[#allocation2 + $0x2c] sm:$0xff]
    %v121 = vld [vmem:[#allocation2 + $0x34] sm:$0xf]
    %v122 = vld [vmem:[#allocation5] sm:$0xff]
    %v123 = vld [vmem:[#allocation5 + $0x8] sm:$0xff]
    %v124 = vld [vmem:[#allocation5 + $0x10] sm:$0xff]
    %v125 = vld [vmem:[#allocation5 + $0x18] sm:$0xff]
    %v126 = vld [vmem:[#allocation5 + $0x20] sm:$0xff]
    %v127 = vld [vmem:[#allocation5 + $0x28] sm:$0xff]
    %v128 = vld [vmem:[#allocation5 + $0x30] sm:$0xff]
    %v129 = vld [vmem:[#allocation5 + $0x38] sm:$0xff]
    %v130 = vld [vmem:[#allocation5 + $0x40] sm:$0xff]
    %v131 = vld [vmem:[#allocation5 + $0x48] sm:$0xff]
    %v132 = vld [vmem:[#allocation5 + $0x50] sm:$0xff]
    %v133 = vld [vmem:[#allocation5 + $0x58] sm:$0xff]
    %v134 = vld [vmem:[#allocation5 + $0x60] sm:$0xff]
    %v135 = vld [vmem:[#allocation5 + $0x68] sm:$0xff]
    %v136 = vld [vmem:[#allocation5 + $0x70] sm:$0xff]
    %v137 = vld [vmem:[#allocation5 + $0x78] sm:$0xff]
    %v138 = vld [vmem:[#allocation5 + $0x80] sm:$0xff]
    %v139 = vld [vmem:[#allocation5 + $0x88] sm:$0xff]
    %v140 = vld [vmem:[#allocation5 + $0x90] sm:$0xff]
    %v141 = vld [vmem:[#allocation5 + $0x98] sm:$0xff]
    %v142 = vld [vmem:[#allocation5 + $0xa0] sm:$0xff]
    %v143 = vld [vmem:[#allocation5 + $0xa8] sm:$0xff]
    %v144 = vld [vmem:[#allocation5 + $0xb0] sm:$0xff]
    %v145 = vld [vmem:[#allocation5 + $0xb8] sm:$0xff]
    %v146 = vld [vmem:[#allocation5 + $0xc0] sm:$0xff]
    %v147 = vld [vmem:[#allocation5 + $0xc8] sm:$0xff]
    %v148 = vld [vmem:[#allocation5 + $0xd0] sm:$0xff]
    %v149 = vld [vmem:[#allocation5 + $0xd8] sm:$0xff]
    %v150 = vld [vmem:[#allocation5 + $0xe0] sm:$0xff]
    %v151 = vld [vmem:[#allocation5 + $0xe8] sm:$0xff]
    %v152 = vld [vmem:[#allocation5 + $0xf0] sm:$0xff]
    %v153 = vld [vmem:[#allocation5 + $0xf8] sm:$0xff]
    %v154 = vld [vmem:[#allocation5 + $0x100] sm:$0xff]
    %v155 = vld [vmem:[#allocation5 + $0x108] sm:$0xff]
    %v156 = vld [vmem:[#allocation5 + $0x110] sm:$0xff]
    %v157 = vld [vmem:[#allocation5 + $0x118] sm:$0xff]
    %v158 = vld [vmem:[#allocation5 + $0x120] sm:$0xff]
    %v159 = vld [vmem:[#allocation5 + $0x128] sm:$0xff]
    %v160 = vld [vmem:[#allocation5 + $0x130] sm:$0xff]
    %v161 = vld [vmem:[#allocation5 + $0x138] sm:$0xff]
    %v162 = vld [vmem:[#allocation5 + $0x140] sm:$0xff]
    %v163 = vld [vmem:[#allocation5 + $0x148] sm:$0xff]
    %v164 = vld [vmem:[#allocation5 + $0x150] sm:$0xff]
    %v165 = vld [vmem:[#allocation5 + $0x158] sm:$0xff]
    %v166 = vld [vmem:[#allocation5 + $0x160] sm:$0xff]
    %v167 = vld [vmem:[#allocation5 + $0x168] sm:$0xff]
    %v168 = vld [vmem:[#allocation5 + $0x170] sm:$0xff]
    %v169 = vld [vmem:[#allocation5 + $0x178] sm:$0xff]
    %v170 = vld [vmem:[#allocation5 + $0x180] sm:$0xff]
    %v171 = vld [vmem:[#allocation5 + $0x188] sm:$0xff]
    %v172 = vld [vmem:[#allocation5 + $0x190] sm:$0xff]
    %v173 = vld [vmem:[#allocation5 + $0x198] sm:$0xff]
    %v174 = vld [vmem:[#allocation5 + $0x1a0] sm:$0xff]
    %v175 = vld [vmem:[#allocation5 + $0x1a8] sm:$0xff]
    %v176 = vld [vmem:[#allocation5 + $0x1b0] sm:$0xff]
    %v177 = vld [vmem:[#allocation5 + $0x1b8] sm:$0xff]
    %v178 = vld [vmem:[#allocation5 + $0x1c0] sm:$0xff]
    %v179 = vld [vmem:[#allocation5 + $0x1c8] sm:$0xff]
    %v180 = vld [vmem:[#allocation5 + $0x1d0] sm:$0xff]
    %v181 = vld [vmem:[#allocation5 + $0x1d8] sm:$0xff]
    %v182 = vld [vmem:[#allocation5 + $0x1e0] sm:$0xff]
    %v183 = vld [vmem:[#allocation5 + $0x1e8] sm:$0xff]
    %v184 = vld [vmem:[#allocation5 + $0x1f0] sm:$0xff]
    %v185 = vld [vmem:[#allocation5 + $0x1f8] sm:$0xff]
    %v186 = vld [vmem:[#allocation5 + $0x200] sm:$0xff]
    %v187 = vld [vmem:[#allocation5 + $0x208] sm:$0xff]
    %v188 = vld [vmem:[#allocation5 + $0x210] sm:$0xff]
    %v189 = vld [vmem:[#allocation5 + $0x218] sm:$0xff]
    %v190 = vld [vmem:[#allocation5 + $0x220] sm:$0xff]
    %v191 = vld [vmem:[#allocation5 + $0x228] sm:$0xff]
    %v192 = vld [vmem:[#allocation5 + $0x230] sm:$0xff]
    %v193 = vld [vmem:[#allocation5 + $0x238] sm:$0xff]
    %v194 = vld [vmem:[#allocation5 + $0x240] sm:$0xff]
    %v195 = vld [vmem:[#allocation5 + $0x248] sm:$0xff]
    %v196 = vld [vmem:[#allocation5 + $0x250] sm:$0xff]
    %v197 = vld [vmem:[#allocation5 + $0x258] sm:$0xff]
    %v198 = vld [vmem:[#allocation5 + $0x260] sm:$0xff]
    %v199 = vld [vmem:[#allocation5 + $0x268] sm:$0xff]
    %v200 = vld [vmem:[#allocation5 + $0x270] sm:$0xff]
    %v201 = vld [vmem:[#allocation5 + $0x278] sm:$0xff]
    %v202 = vld [vmem:[#allocation5 + $0x280] sm:$0xff]
    %v203 = vld [vmem:[#allocation5 + $0x288] sm:$0xff]
    %v204 = vld [vmem:[#allocation5 + $0x290] sm:$0xff]
    %v205 = vld [vmem:[#allocation5 + $0x298] sm:$0xff]
    %v206 = vld [vmem:[#allocation5 + $0x2a0] sm:$0xff]
    %v207 = vld [vmem:[#allocation5 + $0x2a8] sm:$0xff]
    %v208 = vld [vmem:[#allocation5 + $0x2b0] sm:$0xff]
    %v209 = vld [vmem:[#allocation5 + $0x2b8] sm:$0xff]
    %v210 = vld [vmem:[#allocation5 + $0x2c0] sm:$0xff]
    %v211 = vld [vmem:[#allocation5 + $0x2c8] sm:$0xff]
    %v212 = vld [vmem:[#allocation5 + $0x2d0] sm:$0xff]
    %v213 = vld [vmem:[#allocation5 + $0x2d8] sm:$0xff]
    %v214 = vld [vmem:[#allocation5 + $0x2e0] sm:$0xff]
    %v215 = vld [vmem:[#allocation5 + $0x2e8] sm:$0xff]
    %v216 = vld [vmem:[#allocation5 + $0x2f0] sm:$0xff]
    %v217 = vld [vmem:[#allocation5 + $0x2f8] sm:$0xff]
    %v218 = vld [vmem:[#allocation5 + $0x300] sm:$0xff]
    %v219 = vld [vmem:[#allocation5 + $0x308] sm:$0xff]
    %v220 = vld [vmem:[#allocation5 + $0x310] sm:$0xff]
    %v221 = vld [vmem:[#allocation5 + $0x318] sm:$0xff]
    %v222 = vld [vmem:[#allocation5 + $0x320] sm:$0xff]
    %v223 = vld [vmem:[#allocation5 + $0x328] sm:$0xff]
    %v224 = vld [vmem:[#allocation5 + $0x330] sm:$0xff]
    %v225 = vld [vmem:[#allocation5 + $0x338] sm:$0xff]
    %v226 = vld [vmem:[#allocation5 + $0x340] sm:$0xff]
    %v227 = vld [vmem:[#allocation5 + $0x348] sm:$0xff]
    %v228 = vld [vmem:[#allocation5 + $0x350] sm:$0xff]
    %v229 = vld [vmem:[#allocation5 + $0x358] sm:$0xff]
    %v230 = vld [vmem:[#allocation5 + $0x360] sm:$0xff]
    %v231 = vld [vmem:[#allocation5 + $0x368] sm:$0xff]
    %v232 = vld [vmem:[#allocation5 + $0x370] sm:$0xff]
    %v233 = vld [vmem:[#allocation5 + $0x378] sm:$0xff]
    %v234 = vld [vmem:[#allocation5 + $0x380] sm:$0xff]
    %v235 = vld [vmem:[#allocation5 + $0x388] sm:$0xff]
    %v236 = vld [vmem:[#allocation5 + $0x390] sm:$0xff]
    %v237 = vld [vmem:[#allocation5 + $0x398] sm:$0xff]
    %v238 = vld [vmem:[#allocation5 + $0x3a0] sm:$0xff]
    %v239 = vld [vmem:[#allocation5 + $0x3a8] sm:$0xff]
    %v240 = vld [vmem:[#allocation5 + $0x3b0] sm:$0xff]
    %v241 = vld [vmem:[#allocation5 + $0x3b8] sm:$0xff]
    %v242 = vld [vmem:[#allocation5 + $0x3c0] sm:$0xff]
    %v243 = vld [vmem:[#allocation5 + $0x3c8] sm:$0xff]
    %v244 = vld [vmem:[#allocation5 + $0x3d0] sm:$0xff]
    %v245 = vld [vmem:[#allocation5 + $0x3d8] sm:$0xff]
    %v246 = vld [vmem:[#allocation5 + $0x3e0] sm:$0xff]
    %v247 = vld [vmem:[#allocation5 + $0x3e8] sm:$0xff]
    %v248 = vld [vmem:[#allocation5 + $0x3f0] sm:$0xff]
    %v249 = vld [vmem:[#allocation5 + $0x3f8] sm:$0xff]
    %v250 = vld [vmem:[#allocation5 + $0x400] sm:$0xff]
    %v251 = vld [vmem:[#allocation5 + $0x408] sm:$0xff]
    %v252 = vld [vmem:[#allocation5 + $0x410] sm:$0xff]
    %v253 = vld [vmem:[#allocation5 + $0x418] sm:$0xff]
    %v254 = vld [vmem:[#allocation5 + $0x420] sm:$0xff]
    %v255 = vld [vmem:[#allocation5 + $0x428] sm:$0xff]
    %v256 = vld [vmem:[#allocation5 + $0x430] sm:$0xff]
    %v257 = vld [vmem:[#allocation5 + $0x438] sm:$0xff]
    %v258 = vld [vmem:[#allocation5 + $0x440] sm:$0xff]
    %v259 = vld [vmem:[#allocation5 + $0x448] sm:$0xff]
    %v260 = vld [vmem:[#allocation5 + $0x450] sm:$0xff]
    %v261 = vld [vmem:[#allocation5 + $0x458] sm:$0xff]
    %v262 = vld [vmem:[#allocation5 + $0x460] sm:$0xff]
    %v263 = vld [vmem:[#allocation5 + $0x468] sm:$0xff]
    %v264 = vld [vmem:[#allocation5 + $0x470] sm:$0xff]
    %v265 = vld [vmem:[#allocation5 + $0x478] sm:$0xff]
    %v266 = vld [vmem:[#allocation5 + $0x480] sm:$0xff]
    %v267 = vld [vmem:[#allocation5 + $0x488] sm:$0xff]
    %v268 = vld [vmem:[#allocation5 + $0x490] sm:$0xff]
    %v269 = vld [vmem:[#allocation5 + $0x498] sm:$0xff]
    %v270 = vld [vmem:[#allocation5 + $0x4a0] sm:$0xff]
    %v271 = vld [vmem:[#allocation5 + $0x4a8] sm:$0xff]
    %v272 = vld [vmem:[#allocation5 + $0x4b0] sm:$0xff]
    %v273 = vld [vmem:[#allocation5 + $0x4b8] sm:$0xff]
    %v274 = vld [vmem:[#allocation5 + $0x4c0] sm:$0xff]
    %v275 = vld [vmem:[#allocation5 + $0x4c8] sm:$0xff]
    %v276 = vld [vmem:[#allocation5 + $0x4d0] sm:$0xff]
    %v277 = vld [vmem:[#allocation5 + $0x4d8] sm:$0xff]
    %v278 = vld [vmem:[#allocation5 + $0x4e0] sm:$0xff]
    %v279 = vld [vmem:[#allocation5 + $0x4e8] sm:$0xff]
    %v280 = vld [vmem:[#allocation5 + $0x4f0] sm:$0xff]
    %v281 = vld [vmem:[#allocation5 + $0x4f8] sm:$0xff]
    %v282 = vld [vmem:[#allocation5 + $0x500] sm:$0xff]
    %v283 = vld [vmem:[#allocation5 + $0x508] sm:$0xff]
    %v284 = vld [vmem:[#allocation5 + $0x510] sm:$0xff]
    %v285 = vld [vmem:[#allocation5 + $0x518] sm:$0xff]
    %v286 = vld [vmem:[#allocation5 + $0x520] sm:$0xff]
    %v287 = vld [vmem:[#allocation5 + $0x528] sm:$0xff]
    %v288 = vld [vmem:[#allocation5 + $0x530] sm:$0xff]
    %v289 = vld [vmem:[#allocation5 + $0x538] sm:$0xff]
    %v290 = vld [vmem:[#allocation5 + $0x540] sm:$0xff]
    %v291 = vld [vmem:[#allocation5 + $0x548] sm:$0xff]
    %v292 = vld [vmem:[#allocation5 + $0x550] sm:$0xff]
    %v293 = vld [vmem:[#allocation5 + $0x558] sm:$0xff]
    %v294 = vld [vmem:[#allocation5 + $0x560] sm:$0xff]
    %v295 = vld [vmem:[#allocation5 + $0x568] sm:$0xff]
    %v296 = vld [vmem:[#allocation5 + $0x570] sm:$0xff]
    %v297 = vld [vmem:[#allocation5 + $0x578] sm:$0xff]
    %v298 = vld [vmem:[#allocation5 + $0x580] sm:$0xff]
    %v299 = vld [vmem:[#allocation5 + $0x588] sm:$0xff]
    %v300 = vld [vmem:[#allocation5 + $0x590] sm:$0xff]
    %v301 = vld [vmem:[#allocation5 + $0x598] sm:$0xff]
    %v302 = vld [vmem:[#allocation5 + $0x5a0] sm:$0xff]
    %v303 = vld [vmem:[#allocation5 + $0x5a8] sm:$0xff]
    %v304 = vld [vmem:[#allocation5 + $0x5b0] sm:$0xff]
    %v305 = vld [vmem:[#allocation5 + $0x5b8] sm:$0xff]
    %v306 = vld [vmem:[#allocation5 + $0x5c0] sm:$0xff]
    %v307 = vld [vmem:[#allocation5 + $0x5c8] sm:$0xff]
    %v308 = vld [vmem:[#allocation5 + $0x5d0] sm:$0xff]
    %v309 = vld [vmem:[#allocation5 + $0x5d8] sm:$0xff]
    %v310 = vld [vmem:[#allocation5 + $0x5e0] sm:$0xff]
    %v311 = vld [vmem:[#allocation5 + $0x5e8] sm:$0xff]
    %v312 = vld [vmem:[#allocation5 + $0x5f0] sm:$0xff]
    %v313 = vld [vmem:[#allocation5 + $0x5f8] sm:$0xff]
    %v314 = vld [vmem:[#allocation5 + $0x600] sm:$0xff]
    %v315 = vld [vmem:[#allocation5 + $0x608] sm:$0xff]
    %v316 = vld [vmem:[#allocation5 + $0x610] sm:$0xff]
    %v317 = vld [vmem:[#allocation5 + $0x618] sm:$0xff]
    %v318 = vld [vmem:[#allocation5 + $0x620] sm:$0xff]
    %v319 = vld [vmem:[#allocation5 + $0x628] sm:$0xff]
    %v320 = vld [vmem:[#allocation5 + $0x630] sm:$0xff]
    %v321 = vld [vmem:[#allocation5 + $0x638] sm:$0xff]
    %v322 = vld [vmem:[#allocation5 + $0x640] sm:$0xff]
    %v323 = vld [vmem:[#allocation5 + $0x648] sm:$0xff]
    %v324 = vld [vmem:[#allocation5 + $0x650] sm:$0xff]
    %v325 = vld [vmem:[#allocation5 + $0x658] sm:$0xff]
    %v326 = vld [vmem:[#allocation5 + $0x660] sm:$0xff]
    %v327 = vld [vmem:[#allocation5 + $0x668] sm:$0xff]
    %v328 = vld [vmem:[#allocation5 + $0x670] sm:$0xff]
    %v329 = vld [vmem:[#allocation5 + $0x678] sm:$0xff]
    %v330 = vld [vmem:[#allocation5 + $0x680] sm:$0xff]
    %v331 = vld [vmem:[#allocation5 + $0x688] sm:$0xff]
    %v332 = vld [vmem:[#allocation5 + $0x690] sm:$0xff]
    %v333 = vld [vmem:[#allocation5 + $0x698] sm:$0xff]
    %v334 = vld [vmem:[#allocation5 + $0x6a0] sm:$0xff]
    %v335 = vld [vmem:[#allocation5 + $0x6a8] sm:$0xff]
    %v336 = vld [vmem:[#allocation5 + $0x6b0] sm:$0xff]
    %v337 = vld [vmem:[#allocation5 + $0x6b8] sm:$0xff]
    %v338 = vld [vmem:[#allocation5 + $0x6c0] sm:$0xff]
    %v339 = vld [vmem:[#allocation5 + $0x6c8] sm:$0xff]
    %v340 = vld [vmem:[#allocation5 + $0x6d0] sm:$0xff]
    %v341 = vld [vmem:[#allocation5 + $0x6d8] sm:$0xff]
    %v342 = vld [vmem:[#allocation5 + $0x6e0] sm:$0xff]
    %v343 = vld [vmem:[#allocation5 + $0x6e8] sm:$0xff]
    %v344 = vld [vmem:[#allocation5 + $0x6f0] sm:$0xff]
    %v345 = vld [vmem:[#allocation5 + $0x6f8] sm:$0xff]
    %v346 = vld [vmem:[#allocation7] sm:$0xf]
    %v348 = vlaneseq
    %v349 = vshrl.u32 %v348, 7
    %v350 = vsub.s32 0, %v349
    %v351 = vrot.slane %v346, %v350
    %v352 = vlaneseq
    %v353 = vshrl.u32 %v352, 7
    %v354 = vsub.s32 1, %v353
    %v355 = vrot.slane %v346, %v354
    %v356 = vlaneseq
    %v357 = vshrl.u32 %v356, 7
    %v358 = vsub.s32 2, %v357
    %v359 = vrot.slane %v346, %v358
    %v360 = vlaneseq
    %v361 = vshrl.u32 %v360, 7
    %v362 = vsub.s32 3, %v361
    %v363 = vrot.slane %v346, %v362
    %v376 = vunpack.c.l.b16 %v114
    %v377 = vunpack.c.h.b16 %v114
    %v378 = vunpack.c.l.b16 %v115
    %v379 = vunpack.c.h.b16 %v115
    %v380 = vunpack.c.l.b16 %v116
    %v381 = vunpack.c.h.b16 %v116
    %v382 = vunpack.c.l.b16 %v117
    %v383 = vunpack.c.l.b16 %v118
    %v384 = vunpack.c.h.b16 %v118
    %v385 = vunpack.c.l.b16 %v119
    %v386 = vunpack.c.h.b16 %v119
    %v387 = vunpack.c.l.b16 %v120
    %v388 = vunpack.c.h.b16 %v120
    %v389 = vunpack.c.l.b16 %v121
    %v390 = vpack.c.b16 %v383, %v376
    %v391 = vpack.c.b16 %v384, %v377
    %v392 = vpack.c.b16 %v385, %v378
    %v393 = vpack.c.b16 %v386, %v379
    %v394 = vpack.c.b16 %v387, %v380
    %v395 = vpack.c.b16 %v388, %v381
    %v396 = vpack.c.b16 %v389, %v382
    %v628 = vunpack.c.l.b16 %v122
    %v629 = vunpack.c.h.b16 %v122
    %v630 = vunpack.c.l.b16 %v123
    %v631 = vunpack.c.h.b16 %v123
    %v632 = vunpack.c.l.b16 %v124
    %v633 = vunpack.c.h.b16 %v124
    %v634 = vunpack.c.l.b16 %v125
    %v635 = vunpack.c.h.b16 %v125
    %v636 = vunpack.c.l.b16 %v126
    %v637 = vunpack.c.h.b16 %v126
    %v638 = vunpack.c.l.b16 %v127
    %v639 = vunpack.c.h.b16 %v127
    %v640 = vunpack.c.l.b16 %v128
    %v641 = vunpack.c.h.b16 %v128
    %v642 = vunpack.c.l.b16 %v129
    %v643 = vunpack.c.h.b16 %v129
    %v644 = vunpack.c.l.b16 %v130
    %v645 = vunpack.c.h.b16 %v130
    %v646 = vunpack.c.l.b16 %v131
    %v647 = vunpack.c.h.b16 %v131
    %v648 = vunpack.c.l.b16 %v132
    %v649 = vunpack.c.h.b16 %v132
    %v650 = vunpack.c.l.b16 %v133
    %v651 = vunpack.c.h.b16 %v133
    %v652 = vunpack.c.l.b16 %v134
    %v653 = vunpack.c.h.b16 %v134
    %v654 = vunpack.c.l.b16 %v135
    %v655 = vunpack.c.h.b16 %v135
    %v656 = vunpack.c.l.b16 %v136
    %v657 = vunpack.c.h.b16 %v136
    %v658 = vunpack.c.l.b16 %v137
    %v659 = vunpack.c.h.b16 %v137
    %v660 = vunpack.c.l.b16 %v138
    %v661 = vunpack.c.h.b16 %v138
    %v662 = vunpack.c.l.b16 %v139
    %v663 = vunpack.c.h.b16 %v139
    %v664 = vunpack.c.l.b16 %v140
    %v665 = vunpack.c.h.b16 %v140
    %v666 = vunpack.c.l.b16 %v141
    %v667 = vunpack.c.h.b16 %v141
    %v668 = vunpack.c.l.b16 %v142
    %v669 = vunpack.c.h.b16 %v142
    %v670 = vunpack.c.l.b16 %v143
    %v671 = vunpack.c.h.b16 %v143
    %v672 = vunpack.c.l.b16 %v144
    %v673 = vunpack.c.h.b16 %v144
    %v674 = vunpack.c.l.b16 %v145
    %v675 = vunpack.c.h.b16 %v145
    %v676 = vunpack.c.l.b16 %v146
    %v677 = vunpack.c.h.b16 %v146
    %v678 = vunpack.c.l.b16 %v147
    %v679 = vunpack.c.h.b16 %v147
    %v680 = vunpack.c.l.b16 %v148
    %v681 = vunpack.c.h.b16 %v148
    %v682 = vunpack.c.l.b16 %v149
    %v683 = vunpack.c.h.b16 %v149
    %v684 = vunpack.c.l.b16 %v150
    %v685 = vunpack.c.h.b16 %v150
    %v686 = vunpack.c.l.b16 %v151
    %v687 = vunpack.c.h.b16 %v151
    %v688 = vunpack.c.l.b16 %v152
    %v689 = vunpack.c.h.b16 %v152
    %v690 = vunpack.c.l.b16 %v153
    %v691 = vunpack.c.h.b16 %v153
    %v692 = vunpack.c.l.b16 %v154
    %v693 = vunpack.c.h.b16 %v154
    %v694 = vunpack.c.l.b16 %v155
    %v695 = vunpack.c.h.b16 %v155
    %v696 = vunpack.c.l.b16 %v156
    %v697 = vunpack.c.h.b16 %v156
    %v698 = vunpack.c.l.b16 %v157
    %v699 = vunpack.c.h.b16 %v157
    %v700 = vunpack.c.l.b16 %v158
    %v701 = vunpack.c.h.b16 %v158
    %v702 = vunpack.c.l.b16 %v159
    %v703 = vunpack.c.h.b16 %v159
    %v704 = vunpack.c.l.b16 %v160
    %v705 = vunpack.c.h.b16 %v160
    %v706 = vunpack.c.l.b16 %v161
    %v707 = vunpack.c.h.b16 %v161
    %v708 = vunpack.c.l.b16 %v162
    %v709 = vunpack.c.h.b16 %v162
    %v710 = vunpack.c.l.b16 %v163
    %v711 = vunpack.c.h.b16 %v163
    %v712 = vunpack.c.l.b16 %v164
    %v713 = vunpack.c.h.b16 %v164
    %v714 = vunpack.c.l.b16 %v165
    %v715 = vunpack.c.h.b16 %v165
    %v716 = vunpack.c.l.b16 %v166
    %v717 = vunpack.c.h.b16 %v166
    %v718 = vunpack.c.l.b16 %v167
    %v719 = vunpack.c.h.b16 %v167
    %v720 = vunpack.c.l.b16 %v168
    %v721 = vunpack.c.h.b16 %v168
    %v722 = vunpack.c.l.b16 %v169
    %v723 = vunpack.c.h.b16 %v169
    %v724 = vunpack.c.l.b16 %v170
    %v725 = vunpack.c.h.b16 %v170
    %v726 = vunpack.c.l.b16 %v171
    %v727 = vunpack.c.h.b16 %v171
    %v728 = vunpack.c.l.b16 %v172
    %v729 = vunpack.c.h.b16 %v172
    %v730 = vunpack.c.l.b16 %v173
    %v731 = vunpack.c.h.b16 %v173
    %v732 = vunpack.c.l.b16 %v174
    %v733 = vunpack.c.h.b16 %v174
    %v734 = vunpack.c.l.b16 %v175
    %v735 = vunpack.c.h.b16 %v175
    %v736 = vunpack.c.l.b16 %v176
    %v737 = vunpack.c.h.b16 %v176
    %v738 = vunpack.c.l.b16 %v177
    %v739 = vunpack.c.h.b16 %v177
    %v740 = vunpack.c.l.b16 %v178
    %v741 = vunpack.c.h.b16 %v178
    %v742 = vunpack.c.l.b16 %v179
    %v743 = vunpack.c.h.b16 %v179
    %v744 = vunpack.c.l.b16 %v180
    %v745 = vunpack.c.h.b16 %v180
    %v746 = vunpack.c.l.b16 %v181
    %v747 = vunpack.c.h.b16 %v181
    %v748 = vunpack.c.l.b16 %v182
    %v749 = vunpack.c.h.b16 %v182
    %v750 = vunpack.c.l.b16 %v183
    %v751 = vunpack.c.h.b16 %v183
    %v752 = vunpack.c.l.b16 %v184
    %v753 = vunpack.c.h.b16 %v184
    %v754 = vunpack.c.l.b16 %v185
    %v755 = vunpack.c.h.b16 %v185
    %v756 = vunpack.c.l.b16 %v186
    %v757 = vunpack.c.h.b16 %v186
    %v758 = vunpack.c.l.b16 %v187
    %v759 = vunpack.c.h.b16 %v187
    %v760 = vunpack.c.l.b16 %v188
    %v761 = vunpack.c.h.b16 %v188
    %v762 = vunpack.c.l.b16 %v189
    %v763 = vunpack.c.h.b16 %v189
    %v764 = vunpack.c.l.b16 %v190
    %v765 = vunpack.c.h.b16 %v190
    %v766 = vunpack.c.l.b16 %v191
    %v767 = vunpack.c.h.b16 %v191
    %v768 = vunpack.c.l.b16 %v192
    %v769 = vunpack.c.h.b16 %v192
    %v770 = vunpack.c.l.b16 %v193
    %v771 = vunpack.c.h.b16 %v193
    %v772 = vunpack.c.l.b16 %v194
    %v773 = vunpack.c.h.b16 %v194
    %v774 = vunpack.c.l.b16 %v195
    %v775 = vunpack.c.h.b16 %v195
    %v776 = vunpack.c.l.b16 %v196
    %v777 = vunpack.c.h.b16 %v196
    %v778 = vunpack.c.l.b16 %v197
    %v779 = vunpack.c.h.b16 %v197
    %v780 = vunpack.c.l.b16 %v198
    %v781 = vunpack.c.h.b16 %v198
    %v782 = vunpack.c.l.b16 %v199
    %v783 = vunpack.c.h.b16 %v199
    %v784 = vunpack.c.l.b16 %v200
    %v785 = vunpack.c.h.b16 %v200
    %v786 = vunpack.c.l.b16 %v201
    %v787 = vunpack.c.h.b16 %v201
    %v788 = vunpack.c.l.b16 %v202
    %v789 = vunpack.c.h.b16 %v202
    %v790 = vunpack.c.l.b16 %v203
    %v791 = vunpack.c.h.b16 %v203
    %v792 = vunpack.c.l.b16 %v204
    %v793 = vunpack.c.h.b16 %v204
    %v794 = vunpack.c.l.b16 %v205
    %v795 = vunpack.c.h.b16 %v205
    %v796 = vunpack.c.l.b16 %v206
    %v797 = vunpack.c.h.b16 %v206
    %v798 = vunpack.c.l.b16 %v207
    %v799 = vunpack.c.h.b16 %v207
    %v800 = vunpack.c.l.b16 %v208
    %v801 = vunpack.c.h.b16 %v208
    %v802 = vunpack.c.l.b16 %v209
    %v803 = vunpack.c.h.b16 %v209
    %v804 = vunpack.c.l.b16 %v210
    %v805 = vunpack.c.h.b16 %v210
    %v806 = vunpack.c.l.b16 %v211
    %v807 = vunpack.c.h.b16 %v211
    %v808 = vunpack.c.l.b16 %v212
    %v809 = vunpack.c.h.b16 %v212
    %v810 = vunpack.c.l.b16 %v213
    %v811 = vunpack.c.h.b16 %v213
    %v812 = vunpack.c.l.b16 %v214
    %v813 = vunpack.c.h.b16 %v214
    %v814 = vunpack.c.l.b16 %v215
    %v815 = vunpack.c.h.b16 %v215
    %v816 = vunpack.c.l.b16 %v216
    %v817 = vunpack.c.h.b16 %v216
    %v818 = vunpack.c.l.b16 %v217
    %v819 = vunpack.c.h.b16 %v217
    %v820 = vunpack.c.l.b16 %v218
    %v821 = vunpack.c.h.b16 %v218
    %v822 = vunpack.c.l.b16 %v219
    %v823 = vunpack.c.h.b16 %v219
    %v824 = vunpack.c.l.b16 %v220
    %v825 = vunpack.c.h.b16 %v220
    %v826 = vunpack.c.l.b16 %v221
    %v827 = vunpack.c.h.b16 %v221
    %v828 = vunpack.c.l.b16 %v222
    %v829 = vunpack.c.h.b16 %v222
    %v830 = vunpack.c.l.b16 %v223
    %v831 = vunpack.c.h.b16 %v223
    %v832 = vunpack.c.l.b16 %v224
    %v833 = vunpack.c.h.b16 %v224
    %v834 = vunpack.c.l.b16 %v225
    %v835 = vunpack.c.h.b16 %v225
    %v836 = vunpack.c.l.b16 %v226
    %v837 = vunpack.c.h.b16 %v226
    %v838 = vunpack.c.l.b16 %v227
    %v839 = vunpack.c.h.b16 %v227
    %v840 = vunpack.c.l.b16 %v228
    %v841 = vunpack.c.h.b16 %v228
    %v842 = vunpack.c.l.b16 %v229
    %v843 = vunpack.c.h.b16 %v229
    %v844 = vunpack.c.l.b16 %v230
    %v845 = vunpack.c.h.b16 %v230
    %v846 = vunpack.c.l.b16 %v231
    %v847 = vunpack.c.h.b16 %v231
    %v848 = vunpack.c.l.b16 %v232
    %v849 = vunpack.c.h.b16 %v232
    %v850 = vunpack.c.l.b16 %v233
    %v851 = vunpack.c.h.b16 %v233
    %v852 = vunpack.c.l.b16 %v234
    %v853 = vunpack.c.h.b16 %v234
    %v854 = vunpack.c.l.b16 %v235
    %v855 = vunpack.c.h.b16 %v235
    %v856 = vunpack.c.l.b16 %v236
    %v857 = vunpack.c.h.b16 %v236
    %v858 = vunpack.c.l.b16 %v237
    %v859 = vunpack.c.h.b16 %v237
    %v860 = vunpack.c.l.b16 %v238
    %v861 = vunpack.c.h.b16 %v238
    %v862 = vunpack.c.l.b16 %v239
    %v863 = vunpack.c.h.b16 %v239
    %v864 = vunpack.c.l.b16 %v240
    %v865 = vunpack.c.h.b16 %v240
    %v866 = vunpack.c.l.b16 %v241
    %v867 = vunpack.c.h.b16 %v241
    %v868 = vunpack.c.l.b16 %v242
    %v869 = vunpack.c.h.b16 %v242
    %v870 = vunpack.c.l.b16 %v243
    %v871 = vunpack.c.h.b16 %v243
    %v872 = vunpack.c.l.b16 %v244
    %v873 = vunpack.c.h.b16 %v244
    %v874 = vunpack.c.l.b16 %v245
    %v875 = vunpack.c.h.b16 %v245
    %v876 = vunpack.c.l.b16 %v246
    %v877 = vunpack.c.h.b16 %v246
    %v878 = vunpack.c.l.b16 %v247
    %v879 = vunpack.c.h.b16 %v247
    %v880 = vunpack.c.l.b16 %v248
    %v881 = vunpack.c.h.b16 %v248
    %v882 = vunpack.c.l.b16 %v249
    %v883 = vunpack.c.h.b16 %v249
    %v884 = vunpack.c.l.b16 %v250
    %v885 = vunpack.c.h.b16 %v250
    %v886 = vunpack.c.l.b16 %v251
    %v887 = vunpack.c.h.b16 %v251
    %v888 = vunpack.c.l.b16 %v252
    %v889 = vunpack.c.h.b16 %v252
    %v890 = vunpack.c.l.b16 %v253
    %v891 = vunpack.c.h.b16 %v253
    %v892 = vunpack.c.l.b16 %v254
    %v893 = vunpack.c.h.b16 %v254
    %v894 = vunpack.c.l.b16 %v255
    %v895 = vunpack.c.h.b16 %v255
    %v896 = vunpack.c.l.b16 %v256
    %v897 = vunpack.c.h.b16 %v256
    %v898 = vunpack.c.l.b16 %v257
    %v899 = vunpack.c.h.b16 %v257
    %v900 = vunpack.c.l.b16 %v258
    %v901 = vunpack.c.h.b16 %v258
    %v902 = vunpack.c.l.b16 %v259
    %v903 = vunpack.c.h.b16 %v259
    %v904 = vunpack.c.l.b16 %v260
    %v905 = vunpack.c.h.b16 %v260
    %v906 = vunpack.c.l.b16 %v261
    %v907 = vunpack.c.h.b16 %v261
    %v908 = vunpack.c.l.b16 %v262
    %v909 = vunpack.c.h.b16 %v262
    %v910 = vunpack.c.l.b16 %v263
    %v911 = vunpack.c.h.b16 %v263
    %v912 = vunpack.c.l.b16 %v264
    %v913 = vunpack.c.h.b16 %v264
    %v914 = vunpack.c.l.b16 %v265
    %v915 = vunpack.c.h.b16 %v265
    %v916 = vunpack.c.l.b16 %v266
    %v917 = vunpack.c.h.b16 %v266
    %v918 = vunpack.c.l.b16 %v267
    %v919 = vunpack.c.h.b16 %v267
    %v920 = vunpack.c.l.b16 %v268
    %v921 = vunpack.c.h.b16 %v268
    %v922 = vunpack.c.l.b16 %v269
    %v923 = vunpack.c.h.b16 %v269
    %v924 = vunpack.c.l.b16 %v270
    %v925 = vunpack.c.h.b16 %v270
    %v926 = vunpack.c.l.b16 %v271
    %v927 = vunpack.c.h.b16 %v271
    %v928 = vunpack.c.l.b16 %v272
    %v929 = vunpack.c.h.b16 %v272
    %v930 = vunpack.c.l.b16 %v273
    %v931 = vunpack.c.h.b16 %v273
    %v932 = vunpack.c.l.b16 %v274
    %v933 = vunpack.c.h.b16 %v274
    %v934 = vunpack.c.l.b16 %v275
    %v935 = vunpack.c.h.b16 %v275
    %v936 = vunpack.c.l.b16 %v276
    %v937 = vunpack.c.h.b16 %v276
    %v938 = vunpack.c.l.b16 %v277
    %v939 = vunpack.c.h.b16 %v277
    %v940 = vunpack.c.l.b16 %v278
    %v941 = vunpack.c.h.b16 %v278
    %v942 = vunpack.c.l.b16 %v279
    %v943 = vunpack.c.h.b16 %v279
    %v944 = vunpack.c.l.b16 %v280
    %v945 = vunpack.c.h.b16 %v280
    %v946 = vunpack.c.l.b16 %v281
    %v947 = vunpack.c.h.b16 %v281
    %v948 = vunpack.c.l.b16 %v282
    %v949 = vunpack.c.h.b16 %v282
    %v950 = vunpack.c.l.b16 %v283
    %v951 = vunpack.c.h.b16 %v283
    %v952 = vunpack.c.l.b16 %v284
    %v953 = vunpack.c.h.b16 %v284
    %v954 = vunpack.c.l.b16 %v285
    %v955 = vunpack.c.h.b16 %v285
    %v956 = vunpack.c.l.b16 %v286
    %v957 = vunpack.c.h.b16 %v286
    %v958 = vunpack.c.l.b16 %v287
    %v959 = vunpack.c.h.b16 %v287
    %v960 = vunpack.c.l.b16 %v288
    %v961 = vunpack.c.h.b16 %v288
    %v962 = vunpack.c.l.b16 %v289
    %v963 = vunpack.c.h.b16 %v289
    %v964 = vunpack.c.l.b16 %v290
    %v965 = vunpack.c.h.b16 %v290
    %v966 = vunpack.c.l.b16 %v291
    %v967 = vunpack.c.h.b16 %v291
    %v968 = vunpack.c.l.b16 %v292
    %v969 = vunpack.c.h.b16 %v292
    %v970 = vunpack.c.l.b16 %v293
    %v971 = vunpack.c.h.b16 %v293
    %v972 = vunpack.c.l.b16 %v294
    %v973 = vunpack.c.h.b16 %v294
    %v974 = vunpack.c.l.b16 %v295
    %v975 = vunpack.c.h.b16 %v295
    %v976 = vunpack.c.l.b16 %v296
    %v977 = vunpack.c.h.b16 %v296
    %v978 = vunpack.c.l.b16 %v297
    %v979 = vunpack.c.h.b16 %v297
    %v980 = vunpack.c.l.b16 %v298
    %v981 = vunpack.c.h.b16 %v298
    %v982 = vunpack.c.l.b16 %v299
    %v983 = vunpack.c.h.b16 %v299
    %v984 = vunpack.c.l.b16 %v300
    %v985 = vunpack.c.h.b16 %v300
    %v986 = vunpack.c.l.b16 %v301
    %v987 = vunpack.c.h.b16 %v301
    %v988 = vunpack.c.l.b16 %v302
    %v989 = vunpack.c.h.b16 %v302
    %v990 = vunpack.c.l.b16 %v303
    %v991 = vunpack.c.h.b16 %v303
    %v992 = vunpack.c.l.b16 %v304
    %v993 = vunpack.c.h.b16 %v304
    %v994 = vunpack.c.l.b16 %v305
    %v995 = vunpack.c.h.b16 %v305
    %v996 = vunpack.c.l.b16 %v306
    %v997 = vunpack.c.h.b16 %v306
    %v998 = vunpack.c.l.b16 %v307
    %v999 = vunpack.c.h.b16 %v307
    %v1000 = vunpack.c.l.b16 %v308
    %v1001 = vunpack.c.h.b16 %v308
    %v1002 = vunpack.c.l.b16 %v309
    %v1003 = vunpack.c.h.b16 %v309
    %v1004 = vunpack.c.l.b16 %v310
    %v1005 = vunpack.c.h.b16 %v310
    %v1006 = vunpack.c.l.b16 %v311
    %v1007 = vunpack.c.h.b16 %v311
    %v1008 = vunpack.c.l.b16 %v312
    %v1009 = vunpack.c.h.b16 %v312
    %v1010 = vunpack.c.l.b16 %v313
    %v1011 = vunpack.c.h.b16 %v313
    %v1012 = vunpack.c.l.b16 %v314
    %v1013 = vunpack.c.h.b16 %v314
    %v1014 = vunpack.c.l.b16 %v315
    %v1015 = vunpack.c.h.b16 %v315
    %v1016 = vunpack.c.l.b16 %v316
    %v1017 = vunpack.c.h.b16 %v316
    %v1018 = vunpack.c.l.b16 %v317
    %v1019 = vunpack.c.h.b16 %v317
    %v1020 = vunpack.c.l.b16 %v318
    %v1021 = vunpack.c.h.b16 %v318
    %v1022 = vunpack.c.l.b16 %v319
    %v1023 = vunpack.c.h.b16 %v319
    %v1024 = vunpack.c.l.b16 %v320
    %v1025 = vunpack.c.h.b16 %v320
    %v1026 = vunpack.c.l.b16 %v321
    %v1027 = vunpack.c.h.b16 %v321
    %v1028 = vunpack.c.l.b16 %v322
    %v1029 = vunpack.c.h.b16 %v322
    %v1030 = vunpack.c.l.b16 %v323
    %v1031 = vunpack.c.h.b16 %v323
    %v1032 = vunpack.c.l.b16 %v324
    %v1033 = vunpack.c.h.b16 %v324
    %v1034 = vunpack.c.l.b16 %v325
    %v1035 = vunpack.c.h.b16 %v325
    %v1036 = vunpack.c.l.b16 %v326
    %v1037 = vunpack.c.h.b16 %v326
    %v1038 = vunpack.c.l.b16 %v327
    %v1039 = vunpack.c.h.b16 %v327
    %v1040 = vunpack.c.l.b16 %v328
    %v1041 = vunpack.c.h.b16 %v328
    %v1042 = vunpack.c.l.b16 %v329
    %v1043 = vunpack.c.h.b16 %v329
    %v1044 = vunpack.c.l.b16 %v330
    %v1045 = vunpack.c.h.b16 %v330
    %v1046 = vunpack.c.l.b16 %v331
    %v1047 = vunpack.c.h.b16 %v331
    %v1048 = vunpack.c.l.b16 %v332
    %v1049 = vunpack.c.h.b16 %v332
    %v1050 = vunpack.c.l.b16 %v333
    %v1051 = vunpack.c.h.b16 %v333
    %v1052 = vunpack.c.l.b16 %v334
    %v1053 = vunpack.c.h.b16 %v334
    %v1054 = vunpack.c.l.b16 %v335
    %v1055 = vunpack.c.h.b16 %v335
    %v1056 = vunpack.c.l.b16 %v336
    %v1057 = vunpack.c.h.b16 %v336
    %v1058 = vunpack.c.l.b16 %v337
    %v1059 = vunpack.c.h.b16 %v337
    %v1060 = vunpack.c.l.b16 %v338
    %v1061 = vunpack.c.h.b16 %v338
    %v1062 = vunpack.c.l.b16 %v339
    %v1063 = vunpack.c.h.b16 %v339
    %v1064 = vunpack.c.l.b16 %v340
    %v1065 = vunpack.c.h.b16 %v340
    %v1066 = vunpack.c.l.b16 %v341
    %v1067 = vunpack.c.h.b16 %v341
    %v1068 = vunpack.c.l.b16 %v342
    %v1069 = vunpack.c.h.b16 %v342
    %v1070 = vunpack.c.l.b16 %v343
    %v1071 = vunpack.c.h.b16 %v343
    %v1072 = vunpack.c.l.b16 %v344
    %v1073 = vunpack.c.h.b16 %v344
    %v1074 = vunpack.c.l.b16 %v345
    %v1075 = vunpack.c.h.b16 %v345
    %v1076 = vpack.c.b16 %v632, %v628
    %v1077 = vpack.c.b16 %v633, %v629
    %v1078 = vpack.c.b16 %v634, %v630
    %v1079 = vpack.c.b16 %v635, %v631
    %v1080 = vpack.c.b16 %v640, %v636
    %v1081 = vpack.c.b16 %v641, %v637
    %v1082 = vpack.c.b16 %v642, %v638
    %v1083 = vpack.c.b16 %v643, %v639
    %v1084 = vpack.c.b16 %v648, %v644
    %v1085 = vpack.c.b16 %v649, %v645
    %v1086 = vpack.c.b16 %v650, %v646
    %v1087 = vpack.c.b16 %v651, %v647
    %v1088 = vpack.c.b16 %v656, %v652
    %v1089 = vpack.c.b16 %v657, %v653
    %v1090 = vpack.c.b16 %v658, %v654
    %v1091 = vpack.c.b16 %v659, %v655
    %v1092 = vpack.c.b16 %v664, %v660
    %v1093 = vpack.c.b16 %v665, %v661
    %v1094 = vpack.c.b16 %v666, %v662
    %v1095 = vpack.c.b16 %v667, %v663
    %v1096 = vpack.c.b16 %v672, %v668
    %v1097 = vpack.c.b16 %v673, %v669
    %v1098 = vpack.c.b16 %v674, %v670
    %v1099 = vpack.c.b16 %v675, %v671
    %v1100 = vpack.c.b16 %v680, %v676
    %v1101 = vpack.c.b16 %v681, %v677
    %v1102 = vpack.c.b16 %v682, %v678
    %v1103 = vpack.c.b16 %v683, %v679
    %v1104 = vpack.c.b16 %v688, %v684
    %v1105 = vpack.c.b16 %v689, %v685
    %v1106 = vpack.c.b16 %v690, %v686
    %v1107 = vpack.c.b16 %v691, %v687
    %v1108 = vpack.c.b16 %v696, %v692
    %v1109 = vpack.c.b16 %v697, %v693
    %v1110 = vpack.c.b16 %v698, %v694
    %v1111 = vpack.c.b16 %v699, %v695
    %v1112 = vpack.c.b16 %v704, %v700
    %v1113 = vpack.c.b16 %v705, %v701
    %v1114 = vpack.c.b16 %v706, %v702
    %v1115 = vpack.c.b16 %v707, %v703
    %v1116 = vpack.c.b16 %v712, %v708
    %v1117 = vpack.c.b16 %v713, %v709
    %v1118 = vpack.c.b16 %v714, %v710
    %v1119 = vpack.c.b16 %v715, %v711
    %v1120 = vpack.c.b16 %v720, %v716
    %v1121 = vpack.c.b16 %v721, %v717
    %v1122 = vpack.c.b16 %v722, %v718
    %v1123 = vpack.c.b16 %v723, %v719
    %v1124 = vpack.c.b16 %v728, %v724
    %v1125 = vpack.c.b16 %v729, %v725
    %v1126 = vpack.c.b16 %v730, %v726
    %v1127 = vpack.c.b16 %v731, %v727
    %v1128 = vpack.c.b16 %v736, %v732
    %v1129 = vpack.c.b16 %v737, %v733
    %v1130 = vpack.c.b16 %v738, %v734
    %v1131 = vpack.c.b16 %v739, %v735
    %v1132 = vpack.c.b16 %v744, %v740
    %v1133 = vpack.c.b16 %v745, %v741
    %v1134 = vpack.c.b16 %v746, %v742
    %v1135 = vpack.c.b16 %v747, %v743
    %v1136 = vpack.c.b16 %v752, %v748
    %v1137 = vpack.c.b16 %v753, %v749
    %v1138 = vpack.c.b16 %v754, %v750
    %v1139 = vpack.c.b16 %v755, %v751
    %v1140 = vpack.c.b16 %v760, %v756
    %v1141 = vpack.c.b16 %v761, %v757
    %v1142 = vpack.c.b16 %v762, %v758
    %v1143 = vpack.c.b16 %v763, %v759
    %v1144 = vpack.c.b16 %v768, %v764
    %v1145 = vpack.c.b16 %v769, %v765
    %v1146 = vpack.c.b16 %v770, %v766
    %v1147 = vpack.c.b16 %v771, %v767
    %v1148 = vpack.c.b16 %v776, %v772
    %v1149 = vpack.c.b16 %v777, %v773
    %v1150 = vpack.c.b16 %v778, %v774
    %v1151 = vpack.c.b16 %v779, %v775
    %v1152 = vpack.c.b16 %v784, %v780
    %v1153 = vpack.c.b16 %v785, %v781
    %v1154 = vpack.c.b16 %v786, %v782
    %v1155 = vpack.c.b16 %v787, %v783
    %v1156 = vpack.c.b16 %v792, %v788
    %v1157 = vpack.c.b16 %v793, %v789
    %v1158 = vpack.c.b16 %v794, %v790
    %v1159 = vpack.c.b16 %v795, %v791
    %v1160 = vpack.c.b16 %v800, %v796
    %v1161 = vpack.c.b16 %v801, %v797
    %v1162 = vpack.c.b16 %v802, %v798
    %v1163 = vpack.c.b16 %v803, %v799
    %v1164 = vpack.c.b16 %v808, %v804
    %v1165 = vpack.c.b16 %v809, %v805
    %v1166 = vpack.c.b16 %v810, %v806
    %v1167 = vpack.c.b16 %v811, %v807
    %v1168 = vpack.c.b16 %v816, %v812
    %v1169 = vpack.c.b16 %v817, %v813
    %v1170 = vpack.c.b16 %v818, %v814
    %v1171 = vpack.c.b16 %v819, %v815
    %v1172 = vpack.c.b16 %v824, %v820
    %v1173 = vpack.c.b16 %v825, %v821
    %v1174 = vpack.c.b16 %v826, %v822
    %v1175 = vpack.c.b16 %v827, %v823
    %v1176 = vpack.c.b16 %v832, %v828
    %v1177 = vpack.c.b16 %v833, %v829
    %v1178 = vpack.c.b16 %v834, %v830
    %v1179 = vpack.c.b16 %v835, %v831
    %v1180 = vpack.c.b16 %v840, %v836
    %v1181 = vpack.c.b16 %v841, %v837
    %v1182 = vpack.c.b16 %v842, %v838
    %v1183 = vpack.c.b16 %v843, %v839
    %v1184 = vpack.c.b16 %v848, %v844
    %v1185 = vpack.c.b16 %v849, %v845
    %v1186 = vpack.c.b16 %v850, %v846
    %v1187 = vpack.c.b16 %v851, %v847
    %v1188 = vpack.c.b16 %v856, %v852
    %v1189 = vpack.c.b16 %v857, %v853
    %v1190 = vpack.c.b16 %v858, %v854
    %v1191 = vpack.c.b16 %v859, %v855
    %v1192 = vpack.c.b16 %v864, %v860
    %v1193 = vpack.c.b16 %v865, %v861
    %v1194 = vpack.c.b16 %v866, %v862
    %v1195 = vpack.c.b16 %v867, %v863
    %v1196 = vpack.c.b16 %v872, %v868
    %v1197 = vpack.c.b16 %v873, %v869
    %v1198 = vpack.c.b16 %v874, %v870
    %v1199 = vpack.c.b16 %v875, %v871
    %v1200 = vpack.c.b16 %v880, %v876
    %v1201 = vpack.c.b16 %v881, %v877
    %v1202 = vpack.c.b16 %v882, %v878
    %v1203 = vpack.c.b16 %v883, %v879
    %v1204 = vpack.c.b16 %v888, %v884
    %v1205 = vpack.c.b16 %v889, %v885
    %v1206 = vpack.c.b16 %v890, %v886
    %v1207 = vpack.c.b16 %v891, %v887
    %v1208 = vpack.c.b16 %v896, %v892
    %v1209 = vpack.c.b16 %v897, %v893
    %v1210 = vpack.c.b16 %v898, %v894
    %v1211 = vpack.c.b16 %v899, %v895
    %v1212 = vpack.c.b16 %v904, %v900
    %v1213 = vpack.c.b16 %v905, %v901
    %v1214 = vpack.c.b16 %v906, %v902
    %v1215 = vpack.c.b16 %v907, %v903
    %v1216 = vpack.c.b16 %v912, %v908
    %v1217 = vpack.c.b16 %v913, %v909
    %v1218 = vpack.c.b16 %v914, %v910
    %v1219 = vpack.c.b16 %v915, %v911
    %v1220 = vpack.c.b16 %v920, %v916
    %v1221 = vpack.c.b16 %v921, %v917
    %v1222 = vpack.c.b16 %v922, %v918
    %v1223 = vpack.c.b16 %v923, %v919
    %v1224 = vpack.c.b16 %v928, %v924
    %v1225 = vpack.c.b16 %v929, %v925
    %v1226 = vpack.c.b16 %v930, %v926
    %v1227 = vpack.c.b16 %v931, %v927
    %v1228 = vpack.c.b16 %v936, %v932
    %v1229 = vpack.c.b16 %v937, %v933
    %v1230 = vpack.c.b16 %v938, %v934
    %v1231 = vpack.c.b16 %v939, %v935
    %v1232 = vpack.c.b16 %v944, %v940
    %v1233 = vpack.c.b16 %v945, %v941
    %v1234 = vpack.c.b16 %v946, %v942
    %v1235 = vpack.c.b16 %v947, %v943
    %v1236 = vpack.c.b16 %v952, %v948
    %v1237 = vpack.c.b16 %v953, %v949
    %v1238 = vpack.c.b16 %v954, %v950
    %v1239 = vpack.c.b16 %v955, %v951
    %v1240 = vpack.c.b16 %v960, %v956
    %v1241 = vpack.c.b16 %v961, %v957
    %v1242 = vpack.c.b16 %v962, %v958
    %v1243 = vpack.c.b16 %v963, %v959
    %v1244 = vpack.c.b16 %v968, %v964
    %v1245 = vpack.c.b16 %v969, %v965
    %v1246 = vpack.c.b16 %v970, %v966
    %v1247 = vpack.c.b16 %v971, %v967
    %v1248 = vpack.c.b16 %v976, %v972
    %v1249 = vpack.c.b16 %v977, %v973
    %v1250 = vpack.c.b16 %v978, %v974
    %v1251 = vpack.c.b16 %v979, %v975
    %v1252 = vpack.c.b16 %v984, %v980
    %v1253 = vpack.c.b16 %v985, %v981
    %v1254 = vpack.c.b16 %v986, %v982
    %v1255 = vpack.c.b16 %v987, %v983
    %v1256 = vpack.c.b16 %v992, %v988
    %v1257 = vpack.c.b16 %v993, %v989
    %v1258 = vpack.c.b16 %v994, %v990
    %v1259 = vpack.c.b16 %v995, %v991
    %v1260 = vpack.c.b16 %v1000, %v996
    %v1261 = vpack.c.b16 %v1001, %v997
    %v1262 = vpack.c.b16 %v1002, %v998
    %v1263 = vpack.c.b16 %v1003, %v999
    %v1264 = vpack.c.b16 %v1008, %v1004
    %v1265 = vpack.c.b16 %v1009, %v1005
    %v1266 = vpack.c.b16 %v1010, %v1006
    %v1267 = vpack.c.b16 %v1011, %v1007
    %v1268 = vpack.c.b16 %v1016, %v1012
    %v1269 = vpack.c.b16 %v1017, %v1013
    %v1270 = vpack.c.b16 %v1018, %v1014
    %v1271 = vpack.c.b16 %v1019, %v1015
    %v1272 = vpack.c.b16 %v1024, %v1020
    %v1273 = vpack.c.b16 %v1025, %v1021
    %v1274 = vpack.c.b16 %v1026, %v1022
    %v1275 = vpack.c.b16 %v1027, %v1023
    %v1276 = vpack.c.b16 %v1032, %v1028
    %v1277 = vpack.c.b16 %v1033, %v1029
    %v1278 = vpack.c.b16 %v1034, %v1030
    %v1279 = vpack.c.b16 %v1035, %v1031
    %v1280 = vpack.c.b16 %v1040, %v1036
    %v1281 = vpack.c.b16 %v1041, %v1037
    %v1282 = vpack.c.b16 %v1042, %v1038
    %v1283 = vpack.c.b16 %v1043, %v1039
    %v1284 = vpack.c.b16 %v1048, %v1044
    %v1285 = vpack.c.b16 %v1049, %v1045
    %v1286 = vpack.c.b16 %v1050, %v1046
    %v1287 = vpack.c.b16 %v1051, %v1047
    %v1288 = vpack.c.b16 %v1056, %v1052
    %v1289 = vpack.c.b16 %v1057, %v1053
    %v1290 = vpack.c.b16 %v1058, %v1054
    %v1291 = vpack.c.b16 %v1059, %v1055
    %v1292 = vpack.c.b16 %v1064, %v1060
    %v1293 = vpack.c.b16 %v1065, %v1061
    %v1294 = vpack.c.b16 %v1066, %v1062
    %v1295 = vpack.c.b16 %v1067, %v1063
    %v1296 = vpack.c.b16 %v1072, %v1068
    %v1297 = vpack.c.b16 %v1073, %v1069
    %v1298 = vpack.c.b16 %v1074, %v1070
    %v1299 = vpack.c.b16 %v1075, %v1071
    %1524 = vmatprep.subr.bf16.mxu0 %v1105
    %1525 = vmatpush1.bf16.msra.mxu0 %v1104
    %1526 = vmatprep.subr.bf16.mxu0 %v1101
    %1527 = vmatpush1.bf16.msra.mxu0 %v1100
    %1528 = vmatprep.subr.bf16.mxu0 %v1097
    %1529 = vmatpush1.bf16.msra.mxu0 %v1096
    %1530 = vmatprep.subr.bf16.mxu0 %v1093
    %1531 = vmatpush1.bf16.msra.mxu0 %v1092
    %1532 = vmatprep.subr.bf16.mxu0 %v1089
    %1533 = vmatpush1.bf16.msra.mxu0 %v1088
    %1534 = vmatprep.subr.bf16.mxu0 %v1085
    %1535 = vmatpush1.bf16.msra.mxu0 %v1084
    %1536 = vmatprep.subr.bf16.mxu0 %v1081
    %1537 = vmatpush1.bf16.msra.mxu0 %v1080
    %1538 = vmatprep.subr.bf16.mxu0 %v1077
    %1539 = vmatpush1.bf16.msra.mxu0 %v1076
    %1540 = vmatprep.subr.bf16.mxu0 %v1137
    %1541 = vmatpush2.bf16.msra.mxu0 %v1136
    %1542 = vmatprep.subr.bf16.mxu0 %v1133
    %1543 = vmatpush2.bf16.msra.mxu0 %v1132
    %1544 = vmatprep.subr.bf16.mxu0 %v1129
    %1545 = vmatpush2.bf16.msra.mxu0 %v1128
    %1546 = vmatprep.subr.bf16.mxu0 %v1125
    %1547 = vmatpush2.bf16.msra.mxu0 %v1124
    %1548 = vmatprep.subr.bf16.mxu0 %v1121
    %1549 = vmatpush2.bf16.msra.mxu0 %v1120
    %1550 = vmatprep.subr.bf16.mxu0 %v1117
    %1551 = vmatpush2.bf16.msra.mxu0 %v1116
    %1552 = vmatprep.subr.bf16.mxu0 %v1113
    %1553 = vmatpush2.bf16.msra.mxu0 %v1112
    %1554 = vmatprep.subr.bf16.mxu0 %v1109
    %1555 = vmatpush2.bf16.msra.mxu0 %v1108
    %1556 = vmatprep.mubr.bf16.mxu0 %v391
    %1557 = vmatmul.mubr.bf16.gmra.mxu0 %v390
    %v1558 = vpop.f32.mrf.mxu0
    %v1559 = vadd.f32 %v351, %v1558
    %v1560 = vpop.f32.mrf.mxu0
    %v1561 = vadd.f32 %v355, %v1560
    %v1562 = vpop.f32.mrf.mxu0
    %v1563 = vadd.f32 %v351, %v1562
    %v1564 = vpop.f32.mrf.mxu0
    %v1565 = vadd.f32 %v355, %v1564
    %1566 = vdwg.mxu0
    %1567 = vmatprep.subr.bf16.mxu0 %v1169
    %1568 = vmatpush1.bf16.msra.mxu0 %v1168
    %1569 = vmatprep.subr.bf16.mxu0 %v1165
    %1570 = vmatpush1.bf16.msra.mxu0 %v1164
    %1571 = vmatprep.subr.bf16.mxu0 %v1161
    %1572 = vmatpush1.bf16.msra.mxu0 %v1160
    %1573 = vmatprep.subr.bf16.mxu0 %v1157
    %1574 = vmatpush1.bf16.msra.mxu0 %v1156
    %1575 = vmatprep.subr.bf16.mxu0 %v1153
    %1576 = vmatpush1.bf16.msra.mxu0 %v1152
    %1577 = vmatprep.subr.bf16.mxu0 %v1149
    %1578 = vmatpush1.bf16.msra.mxu0 %v1148
    %1579 = vmatprep.subr.bf16.mxu0 %v1145
    %1580 = vmatpush1.bf16.msra.mxu0 %v1144
    %1581 = vmatprep.subr.bf16.mxu0 %v1141
    %1582 = vmatpush1.bf16.msra.mxu0 %v1140
    %1583 = vmatprep.subr.bf16.mxu0 %v1201
    %1584 = vmatpush2.bf16.msra.mxu0 %v1200
    %1585 = vmatprep.subr.bf16.mxu0 %v1197
    %1586 = vmatpush2.bf16.msra.mxu0 %v1196
    %1587 = vmatprep.subr.bf16.mxu0 %v1193
    %1588 = vmatpush2.bf16.msra.mxu0 %v1192
    %1589 = vmatprep.subr.bf16.mxu0 %v1189
    %1590 = vmatpush2.bf16.msra.mxu0 %v1188
    %1591 = vmatprep.subr.bf16.mxu0 %v1185
    %1592 = vmatpush2.bf16.msra.mxu0 %v1184
    %1593 = vmatprep.subr.bf16.mxu0 %v1181
    %1594 = vmatpush2.bf16.msra.mxu0 %v1180
    %1595 = vmatprep.subr.bf16.mxu0 %v1177
    %1596 = vmatpush2.bf16.msra.mxu0 %v1176
    %1597 = vmatprep.subr.bf16.mxu0 %v1173
    %1598 = vmatpush2.bf16.msra.mxu0 %v1172
    %1599 = vmatprep.mubr.bf16.mxu0 %v393
    %1600 = vmatmul.mubr.bf16.gmra.mxu0 %v392
    %v1601 = vpop.f32.mrf.mxu0
    %v1602 = vadd.f32 %v1559, %v1601
    %v1603 = vpop.f32.mrf.mxu0
    %v1604 = vadd.f32 %v1561, %v1603
    %v1605 = vpop.f32.mrf.mxu0
    %v1606 = vadd.f32 %v1563, %v1605
    %v1607 = vpop.f32.mrf.mxu0
    %v1608 = vadd.f32 %v1565, %v1607
    %1609 = vdwg.mxu0
    %1610 = vmatprep.subr.bf16.mxu0 %v1233
    %1611 = vmatpush1.bf16.msra.mxu0 %v1232
    %1612 = vmatprep.subr.bf16.mxu0 %v1229
    %1613 = vmatpush1.bf16.msra.mxu0 %v1228
    %1614 = vmatprep.subr.bf16.mxu0 %v1225
    %1615 = vmatpush1.bf16.msra.mxu0 %v1224
    %1616 = vmatprep.subr.bf16.mxu0 %v1221
    %1617 = vmatpush1.bf16.msra.mxu0 %v1220
    %1618 = vmatprep.subr.bf16.mxu0 %v1217
    %1619 = vmatpush1.bf16.msra.mxu0 %v1216
    %1620 = vmatprep.subr.bf16.mxu0 %v1213
    %1621 = vmatpush1.bf16.msra.mxu0 %v1212
    %1622 = vmatprep.subr.bf16.mxu0 %v1209
    %1623 = vmatpush1.bf16.msra.mxu0 %v1208
    %1624 = vmatprep.subr.bf16.mxu0 %v1205
    %1625 = vmatpush1.bf16.msra.mxu0 %v1204
    %1626 = vmatprep.subr.bf16.mxu0 %v1265
    %1627 = vmatpush2.bf16.msra.mxu0 %v1264
    %1628 = vmatprep.subr.bf16.mxu0 %v1261
    %1629 = vmatpush2.bf16.msra.mxu0 %v1260
    %1630 = vmatprep.subr.bf16.mxu0 %v1257
    %1631 = vmatpush2.bf16.msra.mxu0 %v1256
    %1632 = vmatprep.subr.bf16.mxu0 %v1253
    %1633 = vmatpush2.bf16.msra.mxu0 %v1252
    %1634 = vmatprep.subr.bf16.mxu0 %v1249
    %1635 = vmatpush2.bf16.msra.mxu0 %v1248
    %1636 = vmatprep.subr.bf16.mxu0 %v1245
    %1637 = vmatpush2.bf16.msra.mxu0 %v1244
    %1638 = vmatprep.subr.bf16.mxu0 %v1241
    %1639 = vmatpush2.bf16.msra.mxu0 %v1240
    %1640 = vmatprep.subr.bf16.mxu0 %v1237
    %1641 = vmatpush2.bf16.msra.mxu0 %v1236
    %1642 = vmatprep.mubr.bf16.mxu0 %v395
    %1643 = vmatmul.mubr.bf16.gmra.mxu0 %v394
    %v1644 = vpop.f32.mrf.mxu0
    %v1645 = vadd.f32 %v1602, %v1644
    %v1646 = vpop.f32.mrf.mxu0
    %v1647 = vadd.f32 %v1604, %v1646
    %v1648 = vpop.f32.mrf.mxu0
    %v1649 = vadd.f32 %v1606, %v1648
    %v1650 = vpop.f32.mrf.mxu0
    %v1651 = vadd.f32 %v1608, %v1650
    %1652 = vdwg.mxu0
    %1653 = vmatprep.subr.bf16.mxu0 %v1297
    %1654 = vmatpush1.bf16.msra.mxu0 %v1296
    %1655 = vmatprep.subr.bf16.mxu0 %v1293
    %1656 = vmatpush1.bf16.msra.mxu0 %v1292
    %1657 = vmatprep.subr.bf16.mxu0 %v1289
    %1658 = vmatpush1.bf16.msra.mxu0 %v1288
    %1659 = vmatprep.subr.bf16.mxu0 %v1285
    %1660 = vmatpush1.bf16.msra.mxu0 %v1284
    %1661 = vmatprep.subr.bf16.mxu0 %v1281
    %1662 = vmatpush1.bf16.msra.mxu0 %v1280
    %1663 = vmatprep.subr.bf16.mxu0 %v1277
    %1664 = vmatpush1.bf16.msra.mxu0 %v1276
    %1665 = vmatprep.subr.bf16.mxu0 %v1273
    %1666 = vmatpush1.bf16.msra.mxu0 %v1272
    %1667 = vmatprep.subr.bf16.mxu0 %v1269
    %1668 = vmatpush1.bf16.msra.mxu0 %v1268
    %1669 = vmatprep.subr.bf16.mxu0 0
    %1670 = vmatpush2.bf16.msra.mxu0 0
    %1671 = vmatprep.subr.bf16.mxu0 0
    %1672 = vmatpush2.bf16.msra.mxu0 0
    %1673 = vmatprep.subr.bf16.mxu0 0
    %1674 = vmatpush2.bf16.msra.mxu0 0
    %1675 = vmatprep.subr.bf16.mxu0 0
    %1676 = vmatpush2.bf16.msra.mxu0 0
    %1677 = vmatprep.subr.bf16.mxu0 0
    %1678 = vmatpush2.bf16.msra.mxu0 0
    %1679 = vmatprep.subr.bf16.mxu0 0
    %1680 = vmatpush2.bf16.msra.mxu0 0
    %1681 = vmatprep.subr.bf16.mxu0 0
    %1682 = vmatpush2.bf16.msra.mxu0 0
    %1683 = vmatprep.subr.bf16.mxu0 0
    %1684 = vmatpush2.bf16.msra.mxu0 0
    %1685 = vmatprep.mubr.bf16.mxu0 0
    %1686 = vmatmul.mubr.bf16.gmra.mxu0 %v396
    %v1687 = vpop.f32.mrf.mxu0
    %v1688 = vadd.f32 %v1645, %v1687
    %v1689 = vpop.f32.mrf.mxu0
    %v1690 = vadd.f32 %v1647, %v1689
    %v1691 = vpop.f32.mrf.mxu0
    %v1692 = vadd.f32 %v1649, %v1691
    %v1693 = vpop.f32.mrf.mxu0
    %v1694 = vadd.f32 %v1651, %v1693
    %1695 = vdwg.mxu0
    %1696 = vmatprep.subr.bf16.mxu0 %v1107
    %1697 = vmatpush1.bf16.msra.mxu0 %v1106
    %1698 = vmatprep.subr.bf16.mxu0 %v1103
    %1699 = vmatpush1.bf16.msra.mxu0 %v1102
    %1700 = vmatprep.subr.bf16.mxu0 %v1099
    %1701 = vmatpush1.bf16.msra.mxu0 %v1098
    %1702 = vmatprep.subr.bf16.mxu0 %v1095
    %1703 = vmatpush1.bf16.msra.mxu0 %v1094
    %1704 = vmatprep.subr.bf16.mxu0 %v1091
    %1705 = vmatpush1.bf16.msra.mxu0 %v1090
    %1706 = vmatprep.subr.bf16.mxu0 %v1087
    %1707 = vmatpush1.bf16.msra.mxu0 %v1086
    %1708 = vmatprep.subr.bf16.mxu0 %v1083
    %1709 = vmatpush1.bf16.msra.mxu0 %v1082
    %1710 = vmatprep.subr.bf16.mxu0 %v1079
    %1711 = vmatpush1.bf16.msra.mxu0 %v1078
    %1712 = vmatprep.subr.bf16.mxu0 %v1139
    %1713 = vmatpush2.bf16.msra.mxu0 %v1138
    %1714 = vmatprep.subr.bf16.mxu0 %v1135
    %1715 = vmatpush2.bf16.msra.mxu0 %v1134
    %1716 = vmatprep.subr.bf16.mxu0 %v1131
    %1717 = vmatpush2.bf16.msra.mxu0 %v1130
    %1718 = vmatprep.subr.bf16.mxu0 %v1127
    %1719 = vmatpush2.bf16.msra.mxu0 %v1126
    %1720 = vmatprep.subr.bf16.mxu0 %v1123
    %1721 = vmatpush2.bf16.msra.mxu0 %v1122
    %1722 = vmatprep.subr.bf16.mxu0 %v1119
    %1723 = vmatpush2.bf16.msra.mxu0 %v1118
    %1724 = vmatprep.subr.bf16.mxu0 %v1115
    %1725 = vmatpush2.bf16.msra.mxu0 %v1114
    %1726 = vmatprep.subr.bf16.mxu0 %v1111
    %1727 = vmatpush2.bf16.msra.mxu0 %v1110
    %1728 = vmatprep.mubr.bf16.mxu0 %v391
    %1729 = vmatmul.mubr.bf16.gmra.mxu0 %v390
    %v1730 = vpop.f32.mrf.mxu0
    %v1731 = vadd.f32 %v359, %v1730
    %v1732 = vpop.f32.mrf.mxu0
    %v1733 = vadd.f32 %v363, %v1732
    %v1734 = vpop.f32.mrf.mxu0
    %v1735 = vadd.f32 %v359, %v1734
    %v1736 = vpop.f32.mrf.mxu0
    %v1737 = vadd.f32 %v363, %v1736
    %1738 = vdwg.mxu0
    %1739 = vmatprep.subr.bf16.mxu0 %v1171
    %1740 = vmatpush1.bf16.msra.mxu0 %v1170
    %1741 = vmatprep.subr.bf16.mxu0 %v1167
    %1742 = vmatpush1.bf16.msra.mxu0 %v1166
    %1743 = vmatprep.subr.bf16.mxu0 %v1163
    %1744 = vmatpush1.bf16.msra.mxu0 %v1162
    %1745 = vmatprep.subr.bf16.mxu0 %v1159
    %1746 = vmatpush1.bf16.msra.mxu0 %v1158
    %1747 = vmatprep.subr.bf16.mxu0 %v1155
    %1748 = vmatpush1.bf16.msra.mxu0 %v1154
    %1749 = vmatprep.subr.bf16.mxu0 %v1151
    %1750 = vmatpush1.bf16.msra.mxu0 %v1150
    %1751 = vmatprep.subr.bf16.mxu0 %v1147
    %1752 = vmatpush1.bf16.msra.mxu0 %v1146
    %1753 = vmatprep.subr.bf16.mxu0 %v1143
    %1754 = vmatpush1.bf16.msra.mxu0 %v1142
    %1755 = vmatprep.subr.bf16.mxu0 %v1203
    %1756 = vmatpush2.bf16.msra.mxu0 %v1202
    %1757 = vmatprep.subr.bf16.mxu0 %v1199
    %1758 = vmatpush2.bf16.msra.mxu0 %v1198
    %1759 = vmatprep.subr.bf16.mxu0 %v1195
    %1760 = vmatpush2.bf16.msra.mxu0 %v1194
    %1761 = vmatprep.subr.bf16.mxu0 %v1191
    %1762 = vmatpush2.bf16.msra.mxu0 %v1190
    %1763 = vmatprep.subr.bf16.mxu0 %v1187
    %1764 = vmatpush2.bf16.msra.mxu0 %v1186
    %1765 = vmatprep.subr.bf16.mxu0 %v1183
    %1766 = vmatpush2.bf16.msra.mxu0 %v1182
    %1767 = vmatprep.subr.bf16.mxu0 %v1179
    %1768 = vmatpush2.bf16.msra.mxu0 %v1178
    %1769 = vmatprep.subr.bf16.mxu0 %v1175
    %1770 = vmatpush2.bf16.msra.mxu0 %v1174
    %1771 = vmatprep.mubr.bf16.mxu0 %v393
    %1772 = vmatmul.mubr.bf16.gmra.mxu0 %v392
    %v1773 = vpop.f32.mrf.mxu0
    %v1774 = vadd.f32 %v1731, %v1773
    %v1775 = vpop.f32.mrf.mxu0
    %v1776 = vadd.f32 %v1733, %v1775
    %v1777 = vpop.f32.mrf.mxu0
    %v1778 = vadd.f32 %v1735, %v1777
    %v1779 = vpop.f32.mrf.mxu0
    %v1780 = vadd.f32 %v1737, %v1779
    %1781 = vdwg.mxu0
    %1782 = vmatprep.subr.bf16.mxu0 %v1235
    %1783 = vmatpush1.bf16.msra.mxu0 %v1234
    %1784 = vmatprep.subr.bf16.mxu0 %v1231
    %1785 = vmatpush1.bf16.msra.mxu0 %v1230
    %1786 = vmatprep.subr.bf16.mxu0 %v1227
    %1787 = vmatpush1.bf16.msra.mxu0 %v1226
    %1788 = vmatprep.subr.bf16.mxu0 %v1223
    %1789 = vmatpush1.bf16.msra.mxu0 %v1222
    %1790 = vmatprep.subr.bf16.mxu0 %v1219
    %1791 = vmatpush1.bf16.msra.mxu0 %v1218
    %1792 = vmatprep.subr.bf16.mxu0 %v1215
    %1793 = vmatpush1.bf16.msra.mxu0 %v1214
    %1794 = vmatprep.subr.bf16.mxu0 %v1211
    %1795 = vmatpush1.bf16.msra.mxu0 %v1210
    %1796 = vmatprep.subr.bf16.mxu0 %v1207
    %1797 = vmatpush1.bf16.msra.mxu0 %v1206
    %1798 = vmatprep.subr.bf16.mxu0 %v1267
    %1799 = vmatpush2.bf16.msra.mxu0 %v1266
    %1800 = vmatprep.subr.bf16.mxu0 %v1263
    %1801 = vmatpush2.bf16.msra.mxu0 %v1262
    %1802 = vmatprep.subr.bf16.mxu0 %v1259
    %1803 = vmatpush2.bf16.msra.mxu0 %v1258
    %1804 = vmatprep.subr.bf16.mxu0 %v1255
    %1805 = vmatpush2.bf16.msra.mxu0 %v1254
    %1806 = vmatprep.subr.bf16.mxu0 %v1251
    %1807 = vmatpush2.bf16.msra.mxu0 %v1250
    %1808 = vmatprep.subr.bf16.mxu0 %v1247
    %1809 = vmatpush2.bf16.msra.mxu0 %v1246
    %1810 = vmatprep.subr.bf16.mxu0 %v1243
    %1811 = vmatpush2.bf16.msra.mxu0 %v1242
    %1812 = vmatprep.subr.bf16.mxu0 %v1239
    %1813 = vmatpush2.bf16.msra.mxu0 %v1238
    %1814 = vmatprep.mubr.bf16.mxu0 %v395
    %1815 = vmatmul.mubr.bf16.gmra.mxu0 %v394
    %v1816 = vpop.f32.mrf.mxu0
    %v1817 = vadd.f32 %v1774, %v1816
    %v1818 = vpop.f32.mrf.mxu0
    %v1819 = vadd.f32 %v1776, %v1818
    %v1820 = vpop.f32.mrf.mxu0
    %v1821 = vadd.f32 %v1778, %v1820
    %v1822 = vpop.f32.mrf.mxu0
    %v1823 = vadd.f32 %v1780, %v1822
    %1824 = vdwg.mxu0
    %1825 = vmatprep.subr.bf16.mxu0 %v1299
    %1826 = vmatpush1.bf16.msra.mxu0 %v1298
    %1827 = vmatprep.subr.bf16.mxu0 %v1295
    %1828 = vmatpush1.bf16.msra.mxu0 %v1294
    %1829 = vmatprep.subr.bf16.mxu0 %v1291
    %1830 = vmatpush1.bf16.msra.mxu0 %v1290
    %1831 = vmatprep.subr.bf16.mxu0 %v1287
    %1832 = vmatpush1.bf16.msra.mxu0 %v1286
    %1833 = vmatprep.subr.bf16.mxu0 %v1283
    %1834 = vmatpush1.bf16.msra.mxu0 %v1282
    %1835 = vmatprep.subr.bf16.mxu0 %v1279
    %1836 = vmatpush1.bf16.msra.mxu0 %v1278
    %1837 = vmatprep.subr.bf16.mxu0 %v1275
    %1838 = vmatpush1.bf16.msra.mxu0 %v1274
    %1839 = vmatprep.subr.bf16.mxu0 %v1271
    %1840 = vmatpush1.bf16.msra.mxu0 %v1270
    %1841 = vmatprep.subr.bf16.mxu0 0
    %1842 = vmatpush2.bf16.msra.mxu0 0
    %1843 = vmatprep.subr.bf16.mxu0 0
    %1844 = vmatpush2.bf16.msra.mxu0 0
    %1845 = vmatprep.subr.bf16.mxu0 0
    %1846 = vmatpush2.bf16.msra.mxu0 0
    %1847 = vmatprep.subr.bf16.mxu0 0
    %1848 = vmatpush2.bf16.msra.mxu0 0
    %1849 = vmatprep.subr.bf16.mxu0 0
    %1850 = vmatpush2.bf16.msra.mxu0 0
    %1851 = vmatprep.subr.bf16.mxu0 0
    %1852 = vmatpush2.bf16.msra.mxu0 0
    %1853 = vmatprep.subr.bf16.mxu0 0
    %1854 = vmatpush2.bf16.msra.mxu0 0
    %1855 = vmatprep.subr.bf16.mxu0 0
    %1856 = vmatpush2.bf16.msra.mxu0 0
    %1857 = vmatprep.mubr.bf16.mxu0 0
    %1858 = vmatmul.mubr.bf16.gmra.mxu0 %v396
    %v1859 = vpop.f32.mrf.mxu0
    %v1860 = vadd.f32 %v1817, %v1859
    %v1861 = vpop.f32.mrf.mxu0
    %v1862 = vadd.f32 %v1819, %v1861
    %v1863 = vpop.f32.mrf.mxu0
    %v1864 = vadd.f32 %v1821, %v1863
    %v1865 = vpop.f32.mrf.mxu0
    %v1866 = vadd.f32 %v1823, %v1865
    %1867 = vdwg.mxu0
    %v1868 = vmax.f32 %v1688, 0.0
    %v1869 = vmax.f32 %v1690, 0.0
    %v1870 = vmax.f32 %v1860, 0.0
    %v1871 = vmax.f32 %v1862, 0.0
    %v1872 = vmax.f32 %v1692, 0.0
    %v1873 = vmax.f32 %v1694, 0.0
    %v1874 = vmax.f32 %v1864, 0.0
    %v1875 = vmax.f32 %v1866, 0.0
    %v1876 = vpack.c.bf16 %v1872, %v1868
    %v1877 = vpack.c.bf16 %v1873, %v1869
    %v1878 = vpack.c.bf16 %v1874, %v1870
    %v1879 = vpack.c.bf16 %v1875, %v1871
    %v1880 = vld [vmem:[#allocation8] sm:$0xf]
    %v1881 = vld [vmem:[#allocation8 + $0x4] sm:$0xf]
    %v1882 = vld [vmem:[#allocation8 + $0x8] sm:$0xf]
    %v1883 = vld [vmem:[#allocation8 + $0xc] sm:$0xf]
    %v1884 = vld [vmem:[#allocation8 + $0x10] sm:$0xf]
    %v1885 = vld [vmem:[#allocation8 + $0x14] sm:$0xf]
    %v1886 = vld [vmem:[#allocation8 + $0x18] sm:$0xf]
    %v1887 = vld [vmem:[#allocation8 + $0x1c] sm:$0xf]
    %v1888 = vld [vmem:[#allocation8 + $0x20] sm:$0xf]
    %v1889 = vld [vmem:[#allocation8 + $0x24] sm:$0xf]
    %v1890 = vld [vmem:[#allocation8 + $0x28] sm:$0xf]
    %v1891 = vld [vmem:[#allocation8 + $0x2c] sm:$0xf]
    %v1892 = vld [vmem:[#allocation8 + $0x30] sm:$0xf]
    %v1893 = vld [vmem:[#allocation8 + $0x34] sm:$0xf]
    %v1894 = vld [vmem:[#allocation8 + $0x38] sm:$0xf]
    %v1895 = vld [vmem:[#allocation8 + $0x3c] sm:$0xf]
    %v1896 = vld [vmem:[#allocation8 + $0x40] sm:$0xf]
    %v1897 = vld [vmem:[#allocation8 + $0x44] sm:$0xf]
    %v1898 = vld [vmem:[#allocation8 + $0x48] sm:$0xf]
    %v1899 = vld [vmem:[#allocation8 + $0x4c] sm:$0xf]
    %v1900 = vld [vmem:[#allocation8 + $0x50] sm:$0xf]
    %v1901 = vld [vmem:[#allocation8 + $0x54] sm:$0xf]
    %v1902 = vld [vmem:[#allocation8 + $0x58] sm:$0xf]
    %v1903 = vld [vmem:[#allocation8 + $0x5c] sm:$0xf]
    %v1904 = vld [vmem:[#allocation8 + $0x60] sm:$0xf]
    %v1905 = vld [vmem:[#allocation8 + $0x64] sm:$0xf]
    %v1906 = vld [vmem:[#allocation8 + $0x68] sm:$0xf]
    %v1907 = vld [vmem:[#allocation8 + $0x6c] sm:$0xf]
    %v1908 = vld [vmem:[#allocation8 + $0x70] sm:$0xf]
    %v1909 = vld [vmem:[#allocation8 + $0x74] sm:$0xf]
    %v1910 = vld [vmem:[#allocation8 + $0x78] sm:$0xf]
    %v1911 = vld [vmem:[#allocation8 + $0x7c] sm:$0xf]
    %v1912 = vld [vmem:[#allocation8 + $0x80] sm:$0xf]
    %v1913 = vld [vmem:[#allocation8 + $0x84] sm:$0xf]
    %v1914 = vld [vmem:[#allocation8 + $0x88] sm:$0xf]
    %v1915 = vld [vmem:[#allocation8 + $0x8c] sm:$0xf]
    %v1916 = vld [vmem:[#allocation8 + $0x90] sm:$0xf]
    %v1917 = vld [vmem:[#allocation8 + $0x94] sm:$0xf]
    %v1918 = vld [vmem:[#allocation8 + $0x98] sm:$0xf]
    %v1919 = vld [vmem:[#allocation8 + $0x9c] sm:$0xf]
    %v1920 = vld [vmem:[#allocation8 + $0xa0] sm:$0xf]
    %v1921 = vld [vmem:[#allocation8 + $0xa4] sm:$0xf]
    %v1922 = vld [vmem:[#allocation8 + $0xa8] sm:$0xf]
    %v1923 = vld [vmem:[#allocation8 + $0xac] sm:$0xf]
    %v1924 = vld [vmem:[#allocation8 + $0xb0] sm:$0xf]
    %v1925 = vld [vmem:[#allocation8 + $0xb4] sm:$0xf]
    %v1926 = vld [vmem:[#allocation8 + $0xb8] sm:$0xf]
    %v1927 = vld [vmem:[#allocation8 + $0xbc] sm:$0xf]
    %v1928 = vld [vmem:[#allocation8 + $0xc0] sm:$0xf]
    %v1929 = vld [vmem:[#allocation8 + $0xc4] sm:$0xf]
    %v1930 = vld [vmem:[#allocation8 + $0xc8] sm:$0xf]
    %v1931 = vld [vmem:[#allocation8 + $0xcc] sm:$0xf]
    %v1932 = vld [vmem:[#allocation8 + $0xd0] sm:$0xf]
    %v1933 = vld [vmem:[#allocation8 + $0xd4] sm:$0xf]
    %v1934 = vld [vmem:[#allocation8 + $0xd8] sm:$0xf]
    %v1935 = vld [vmem:[#allocation8 + $0xdc] sm:$0xf]
    %v1936 = vld [vmem:[#allocation8 + $0xe0] sm:$0xf]
    %v1937 = vld [vmem:[#allocation8 + $0xe4] sm:$0xf]
    %v1938 = vld [vmem:[#allocation8 + $0xe8] sm:$0xf]
    %v1939 = vld [vmem:[#allocation8 + $0xec] sm:$0xf]
    %v1940 = vld [vmem:[#allocation8 + $0xf0] sm:$0xf]
    %v1941 = vld [vmem:[#allocation8 + $0xf4] sm:$0xf]
    %v1942 = vld [vmem:[#allocation8 + $0xf8] sm:$0xf]
    %v1943 = vld [vmem:[#allocation8 + $0xfc] sm:$0xf]
    %v1944 = vld [vmem:[%s4] sm:$0x1]
    %v1946 = vlaneseq
    %v1947 = vshrl.u32 %v1946, 7
    %v1948 = vsub.s32 0, %v1947
    %v1949 = vrot.slane %v1944, %v1948
    %v2015 = vunpack.c.l.b16 %v1880
    %v2016 = vunpack.c.l.b16 %v1881
    %v2017 = vunpack.c.l.b16 %v1882
    %v2018 = vunpack.c.l.b16 %v1883
    %v2019 = vunpack.c.l.b16 %v1884
    %v2020 = vunpack.c.l.b16 %v1885
    %v2021 = vunpack.c.l.b16 %v1886
    %v2022 = vunpack.c.l.b16 %v1887
    %v2023 = vunpack.c.l.b16 %v1888
    %v2024 = vunpack.c.l.b16 %v1889
    %v2025 = vunpack.c.l.b16 %v1890
    %v2026 = vunpack.c.l.b16 %v1891
    %v2027 = vunpack.c.l.b16 %v1892
    %v2028 = vunpack.c.l.b16 %v1893
    %v2029 = vunpack.c.l.b16 %v1894
    %v2030 = vunpack.c.l.b16 %v1895
    %v2031 = vunpack.c.l.b16 %v1896
    %v2032 = vunpack.c.l.b16 %v1897
    %v2033 = vunpack.c.l.b16 %v1898
    %v2034 = vunpack.c.l.b16 %v1899
    %v2035 = vunpack.c.l.b16 %v1900
    %v2036 = vunpack.c.l.b16 %v1901
    %v2037 = vunpack.c.l.b16 %v1902
    %v2038 = vunpack.c.l.b16 %v1903
    %v2039 = vunpack.c.l.b16 %v1904
    %v2040 = vunpack.c.l.b16 %v1905
    %v2041 = vunpack.c.l.b16 %v1906
    %v2042 = vunpack.c.l.b16 %v1907
    %v2043 = vunpack.c.l.b16 %v1908
    %v2044 = vunpack.c.l.b16 %v1909
    %v2045 = vunpack.c.l.b16 %v1910
    %v2046 = vunpack.c.l.b16 %v1911
    %v2047 = vunpack.c.l.b16 %v1912
    %v2048 = vunpack.c.l.b16 %v1913
    %v2049 = vunpack.c.l.b16 %v1914
    %v2050 = vunpack.c.l.b16 %v1915
    %v2051 = vunpack.c.l.b16 %v1916
    %v2052 = vunpack.c.l.b16 %v1917
    %v2053 = vunpack.c.l.b16 %v1918
    %v2054 = vunpack.c.l.b16 %v1919
    %v2055 = vunpack.c.l.b16 %v1920
    %v2056 = vunpack.c.l.b16 %v1921
    %v2057 = vunpack.c.l.b16 %v1922
    %v2058 = vunpack.c.l.b16 %v1923
    %v2059 = vunpack.c.l.b16 %v1924
    %v2060 = vunpack.c.l.b16 %v1925
    %v2061 = vunpack.c.l.b16 %v1926
    %v2062 = vunpack.c.l.b16 %v1927
    %v2063 = vunpack.c.l.b16 %v1928
    %v2064 = vunpack.c.l.b16 %v1929
    %v2065 = vunpack.c.l.b16 %v1930
    %v2066 = vunpack.c.l.b16 %v1931
    %v2067 = vunpack.c.l.b16 %v1932
    %v2068 = vunpack.c.l.b16 %v1933
    %v2069 = vunpack.c.l.b16 %v1934
    %v2070 = vunpack.c.l.b16 %v1935
    %v2071 = vunpack.c.l.b16 %v1936
    %v2072 = vunpack.c.l.b16 %v1937
    %v2073 = vunpack.c.l.b16 %v1938
    %v2074 = vunpack.c.l.b16 %v1939
    %v2075 = vunpack.c.l.b16 %v1940
    %v2076 = vunpack.c.l.b16 %v1941
    %v2077 = vunpack.c.l.b16 %v1942
    %v2078 = vunpack.c.l.b16 %v1943
    %v2079 = vpack.c.b16 %v2016, %v2015
    %v2080 = vpack.c.b16 %v2018, %v2017
    %v2081 = vpack.c.b16 %v2020, %v2019
    %v2082 = vpack.c.b16 %v2022, %v2021
    %v2083 = vpack.c.b16 %v2024, %v2023
    %v2084 = vpack.c.b16 %v2026, %v2025
    %v2085 = vpack.c.b16 %v2028, %v2027
    %v2086 = vpack.c.b16 %v2030, %v2029
    %v2087 = vpack.c.b16 %v2032, %v2031
    %v2088 = vpack.c.b16 %v2034, %v2033
    %v2089 = vpack.c.b16 %v2036, %v2035
    %v2090 = vpack.c.b16 %v2038, %v2037
    %v2091 = vpack.c.b16 %v2040, %v2039
    %v2092 = vpack.c.b16 %v2042, %v2041
    %v2093 = vpack.c.b16 %v2044, %v2043
    %v2094 = vpack.c.b16 %v2046, %v2045
    %v2095 = vpack.c.b16 %v2048, %v2047
    %v2096 = vpack.c.b16 %v2050, %v2049
    %v2097 = vpack.c.b16 %v2052, %v2051
    %v2098 = vpack.c.b16 %v2054, %v2053
    %v2099 = vpack.c.b16 %v2056, %v2055
    %v2100 = vpack.c.b16 %v2058, %v2057
    %v2101 = vpack.c.b16 %v2060, %v2059
    %v2102 = vpack.c.b16 %v2062, %v2061
    %v2103 = vpack.c.b16 %v2064, %v2063
    %v2104 = vpack.c.b16 %v2066, %v2065
    %v2105 = vpack.c.b16 %v2068, %v2067
    %v2106 = vpack.c.b16 %v2070, %v2069
    %v2107 = vpack.c.b16 %v2072, %v2071
    %v2108 = vpack.c.b16 %v2074, %v2073
    %v2109 = vpack.c.b16 %v2076, %v2075
    %v2110 = vpack.c.b16 %v2078, %v2077
    %2143 = vmatprep.subr.bf16.mxu0 0
    %2144 = vmatpush1.bf16.msra.mxu0 %v2086
    %2145 = vmatprep.subr.bf16.mxu0 0
    %2146 = vmatpush1.bf16.msra.mxu0 %v2085
    %2147 = vmatprep.subr.bf16.mxu0 0
    %2148 = vmatpush1.bf16.msra.mxu0 %v2084
    %2149 = vmatprep.subr.bf16.mxu0 0
    %2150 = vmatpush1.bf16.msra.mxu0 %v2083
    %2151 = vmatprep.subr.bf16.mxu0 0
    %2152 = vmatpush1.bf16.msra.mxu0 %v2082
    %2153 = vmatprep.subr.bf16.mxu0 0
    %2154 = vmatpush1.bf16.msra.mxu0 %v2081
    %2155 = vmatprep.subr.bf16.mxu0 0
    %2156 = vmatpush1.bf16.msra.mxu0 %v2080
    %2157 = vmatprep.subr.bf16.mxu0 0
    %2158 = vmatpush1.bf16.msra.mxu0 %v2079
    %2159 = vmatprep.subr.bf16.mxu0 0
    %2160 = vmatpush2.bf16.msra.mxu0 %v2094
    %2161 = vmatprep.subr.bf16.mxu0 0
    %2162 = vmatpush2.bf16.msra.mxu0 %v2093
    %2163 = vmatprep.subr.bf16.mxu0 0
    %2164 = vmatpush2.bf16.msra.mxu0 %v2092
    %2165 = vmatprep.subr.bf16.mxu0 0
    %2166 = vmatpush2.bf16.msra.mxu0 %v2091
    %2167 = vmatprep.subr.bf16.mxu0 0
    %2168 = vmatpush2.bf16.msra.mxu0 %v2090
    %2169 = vmatprep.subr.bf16.mxu0 0
    %2170 = vmatpush2.bf16.msra.mxu0 %v2089
    %2171 = vmatprep.subr.bf16.mxu0 0
    %2172 = vmatpush2.bf16.msra.mxu0 %v2088
    %2173 = vmatprep.subr.bf16.mxu0 0
    %2174 = vmatpush2.bf16.msra.mxu0 %v2087
    %2175 = vmatprep.mubr.bf16.mxu0 %v1877
    %2176 = vmatmul.mubr.bf16.gmra.mxu0 %v1876
    %v2177 = vpop.f32.mrf.mxu0
    %v2178 = vadd.f32 %v1949, %v2177
    %v2179 = vpop.f32.mrf.mxu0
    %v2180 = vpop.f32.mrf.mxu0
    %v2181 = vadd.f32 %v1949, %v2180
    %v2182 = vpop.f32.mrf.mxu0
    %2183 = vdwg.mxu0
    %2184 = vmatprep.subr.bf16.mxu0 0
    %2185 = vmatpush1.bf16.msra.mxu0 %v2102
    %2186 = vmatprep.subr.bf16.mxu0 0
    %2187 = vmatpush1.bf16.msra.mxu0 %v2101
    %2188 = vmatprep.subr.bf16.mxu0 0
    %2189 = vmatpush1.bf16.msra.mxu0 %v2100
    %2190 = vmatprep.subr.bf16.mxu0 0
    %2191 = vmatpush1.bf16.msra.mxu0 %v2099
    %2192 = vmatprep.subr.bf16.mxu0 0
    %2193 = vmatpush1.bf16.msra.mxu0 %v2098
    %2194 = vmatprep.subr.bf16.mxu0 0
    %2195 = vmatpush1.bf16.msra.mxu0 %v2097
    %2196 = vmatprep.subr.bf16.mxu0 0
    %2197 = vmatpush1.bf16.msra.mxu0 %v2096
    %2198 = vmatprep.subr.bf16.mxu0 0
    %2199 = vmatpush1.bf16.msra.mxu0 %v2095
    %2200 = vmatprep.subr.bf16.mxu0 0
    %2201 = vmatpush2.bf16.msra.mxu0 %v2110
    %2202 = vmatprep.subr.bf16.mxu0 0
    %2203 = vmatpush2.bf16.msra.mxu0 %v2109
    %2204 = vmatprep.subr.bf16.mxu0 0
    %2205 = vmatpush2.bf16.msra.mxu0 %v2108
    %2206 = vmatprep.subr.bf16.mxu0 0
    %2207 = vmatpush2.bf16.msra.mxu0 %v2107
    %2208 = vmatprep.subr.bf16.mxu0 0
    %2209 = vmatpush2.bf16.msra.mxu0 %v2106
    %2210 = vmatprep.subr.bf16.mxu0 0
    %2211 = vmatpush2.bf16.msra.mxu0 %v2105
    %2212 = vmatprep.subr.bf16.mxu0 0
    %2213 = vmatpush2.bf16.msra.mxu0 %v2104
    %2214 = vmatprep.subr.bf16.mxu0 0
    %2215 = vmatpush2.bf16.msra.mxu0 %v2103
    %2216 = vmatprep.mubr.bf16.mxu0 %v1879
    %2217 = vmatmul.mubr.bf16.gmra.mxu0 %v1878
    %v2218 = vpop.f32.mrf.mxu0
    %v2219 = vadd.f32 %v2178, %v2218
    %v2220 = vpop.f32.mrf.mxu0
    %v2221 = vpop.f32.mrf.mxu0
    %v2222 = vadd.f32 %v2181, %v2221
    %v2223 = vpop.f32.mrf.mxu0
    %2224 = vdwg.mxu0
    %v2225 = vpack.c.bf16 %v2222, %v2219
    %v2226 = vld [vmem:[#allocation10] sm:$0xff]
    %v2227 = vld [vmem:[#allocation10 + $0x8] sm:$0xff]
    %v2228 = vld [vmem:[#allocation10 + $0x10] sm:$0xff]
    %v2229 = vld [vmem:[#allocation10 + $0x18] sm:$0xff]
    %v2230 = vld [vmem:[#allocation10 + $0x20] sm:$0xff]
    %v2231 = vld [vmem:[#allocation10 + $0x28] sm:$0xff]
    %v2232 = vld [vmem:[#allocation10 + $0x30] sm:$0xff]
    %v2233 = vld [vmem:[#allocation10 + $0x38] sm:$0xff]
    %v2234 = vld [vmem:[#allocation10 + $0x40] sm:$0xff]
    %v2235 = vld [vmem:[#allocation10 + $0x48] sm:$0xff]
    %v2236 = vld [vmem:[#allocation10 + $0x50] sm:$0xff]
    %v2237 = vld [vmem:[#allocation10 + $0x58] sm:$0xff]
    %v2238 = vld [vmem:[#allocation10 + $0x60] sm:$0xff]
    %v2239 = vld [vmem:[#allocation10 + $0x68] sm:$0xff]
    %v2240 = vld [vmem:[#allocation10 + $0x70] sm:$0xff]
    %v2241 = vld [vmem:[#allocation10 + $0x78] sm:$0xff]
    %v2242 = vld [vmem:[#allocation10 + $0x80] sm:$0xff]
    %v2243 = vld [vmem:[#allocation10 + $0x88] sm:$0xff]
    %v2244 = vld [vmem:[#allocation10 + $0x90] sm:$0xff]
    %v2245 = vld [vmem:[#allocation10 + $0x98] sm:$0xff]
    %v2246 = vld [vmem:[#allocation10 + $0xa0] sm:$0xff]
    %v2247 = vld [vmem:[#allocation10 + $0xa8] sm:$0xff]
    %v2248 = vld [vmem:[#allocation10 + $0xb0] sm:$0xff]
    %v2249 = vld [vmem:[#allocation10 + $0xb8] sm:$0xff]
    %v2250 = vld [vmem:[#allocation10 + $0xc0] sm:$0xff]
    %v2251 = vld [vmem:[#allocation10 + $0xc8] sm:$0xff]
    %v2252 = vld [vmem:[#allocation10 + $0xd0] sm:$0xff]
    %v2253 = vld [vmem:[#allocation10 + $0xd8] sm:$0xff]
    %v2254 = vld [vmem:[#allocation10 + $0xe0] sm:$0xff]
    %v2255 = vld [vmem:[#allocation10 + $0xe8] sm:$0xff]
    %v2256 = vld [vmem:[#allocation10 + $0xf0] sm:$0xff]
    %v2257 = vld [vmem:[#allocation10 + $0xf8] sm:$0xff]
    %v2258 = vld [vmem:[%s6] sm:$0xf]
    %v2260 = vlaneseq
    %v2261 = vshrl.u32 %v2260, 7
    %v2262 = vsub.s32 0, %v2261
    %v2263 = vrot.slane %v2258, %v2262
    %v2264 = vlaneseq
    %v2265 = vshrl.u32 %v2264, 7
    %v2266 = vsub.s32 1, %v2265
    %v2267 = vrot.slane %v2258, %v2266
    %v2268 = vlaneseq
    %v2269 = vshrl.u32 %v2268, 7
    %v2270 = vsub.s32 2, %v2269
    %v2271 = vrot.slane %v2258, %v2270
    %v2272 = vlaneseq
    %v2273 = vshrl.u32 %v2272, 7
    %v2274 = vsub.s32 3, %v2273
    %v2275 = vrot.slane %v2258, %v2274
    %v2312 = vunpack.c.l.b16 %v2226
    %v2313 = vunpack.c.h.b16 %v2226
    %v2314 = vunpack.c.l.b16 %v2227
    %v2315 = vunpack.c.h.b16 %v2227
    %v2316 = vunpack.c.l.b16 %v2228
    %v2317 = vunpack.c.h.b16 %v2228
    %v2318 = vunpack.c.l.b16 %v2229
    %v2319 = vunpack.c.h.b16 %v2229
    %v2320 = vunpack.c.l.b16 %v2230
    %v2321 = vunpack.c.h.b16 %v2230
    %v2322 = vunpack.c.l.b16 %v2231
    %v2323 = vunpack.c.h.b16 %v2231
    %v2324 = vunpack.c.l.b16 %v2232
    %v2325 = vunpack.c.h.b16 %v2232
    %v2326 = vunpack.c.l.b16 %v2233
    %v2327 = vunpack.c.h.b16 %v2233
    %v2328 = vunpack.c.l.b16 %v2234
    %v2329 = vunpack.c.h.b16 %v2234
    %v2330 = vunpack.c.l.b16 %v2235
    %v2331 = vunpack.c.h.b16 %v2235
    %v2332 = vunpack.c.l.b16 %v2236
    %v2333 = vunpack.c.h.b16 %v2236
    %v2334 = vunpack.c.l.b16 %v2237
    %v2335 = vunpack.c.h.b16 %v2237
    %v2336 = vunpack.c.l.b16 %v2238
    %v2337 = vunpack.c.h.b16 %v2238
    %v2338 = vunpack.c.l.b16 %v2239
    %v2339 = vunpack.c.h.b16 %v2239
    %v2340 = vunpack.c.l.b16 %v2240
    %v2341 = vunpack.c.h.b16 %v2240
    %v2342 = vunpack.c.l.b16 %v2241
    %v2343 = vunpack.c.h.b16 %v2241
    %v2344 = vunpack.c.l.b16 %v2242
    %v2345 = vunpack.c.h.b16 %v2242
    %v2346 = vunpack.c.l.b16 %v2243
    %v2347 = vunpack.c.h.b16 %v2243
    %v2348 = vunpack.c.l.b16 %v2244
    %v2349 = vunpack.c.h.b16 %v2244
    %v2350 = vunpack.c.l.b16 %v2245
    %v2351 = vunpack.c.h.b16 %v2245
    %v2352 = vunpack.c.l.b16 %v2246
    %v2353 = vunpack.c.h.b16 %v2246
    %v2354 = vunpack.c.l.b16 %v2247
    %v2355 = vunpack.c.h.b16 %v2247
    %v2356 = vunpack.c.l.b16 %v2248
    %v2357 = vunpack.c.h.b16 %v2248
    %v2358 = vunpack.c.l.b16 %v2249
    %v2359 = vunpack.c.h.b16 %v2249
    %v2360 = vunpack.c.l.b16 %v2250
    %v2361 = vunpack.c.h.b16 %v2250
    %v2362 = vunpack.c.l.b16 %v2251
    %v2363 = vunpack.c.h.b16 %v2251
    %v2364 = vunpack.c.l.b16 %v2252
    %v2365 = vunpack.c.h.b16 %v2252
    %v2366 = vunpack.c.l.b16 %v2253
    %v2367 = vunpack.c.h.b16 %v2253
    %v2368 = vunpack.c.l.b16 %v2254
    %v2369 = vunpack.c.h.b16 %v2254
    %v2370 = vunpack.c.l.b16 %v2255
    %v2371 = vunpack.c.h.b16 %v2255
    %v2372 = vunpack.c.l.b16 %v2256
    %v2373 = vunpack.c.h.b16 %v2256
    %v2374 = vunpack.c.l.b16 %v2257
    %v2375 = vunpack.c.h.b16 %v2257
    %v2376 = vpack.c.b16 %v2316, %v2312
    %v2377 = vpack.c.b16 %v2317, %v2313
    %v2378 = vpack.c.b16 %v2318, %v2314
    %v2379 = vpack.c.b16 %v2319, %v2315
    %v2380 = vpack.c.b16 %v2324, %v2320
    %v2381 = vpack.c.b16 %v2325, %v2321
    %v2382 = vpack.c.b16 %v2326, %v2322
    %v2383 = vpack.c.b16 %v2327, %v2323
    %v2384 = vpack.c.b16 %v2332, %v2328
    %v2385 = vpack.c.b16 %v2333, %v2329
    %v2386 = vpack.c.b16 %v2334, %v2330
    %v2387 = vpack.c.b16 %v2335, %v2331
    %v2388 = vpack.c.b16 %v2340, %v2336
    %v2389 = vpack.c.b16 %v2341, %v2337
    %v2390 = vpack.c.b16 %v2342, %v2338
    %v2391 = vpack.c.b16 %v2343, %v2339
    %v2392 = vpack.c.b16 %v2348, %v2344
    %v2393 = vpack.c.b16 %v2349, %v2345
    %v2394 = vpack.c.b16 %v2350, %v2346
    %v2395 = vpack.c.b16 %v2351, %v2347
    %v2396 = vpack.c.b16 %v2356, %v2352
    %v2397 = vpack.c.b16 %v2357, %v2353
    %v2398 = vpack.c.b16 %v2358, %v2354
    %v2399 = vpack.c.b16 %v2359, %v2355
    %v2400 = vpack.c.b16 %v2364, %v2360
    %v2401 = vpack.c.b16 %v2365, %v2361
    %v2402 = vpack.c.b16 %v2366, %v2362
    %v2403 = vpack.c.b16 %v2367, %v2363
    %v2404 = vpack.c.b16 %v2372, %v2368
    %v2405 = vpack.c.b16 %v2373, %v2369
    %v2406 = vpack.c.b16 %v2374, %v2370
    %v2407 = vpack.c.b16 %v2375, %v2371
    %2440 = vmatprep.subr.bf16.mxu0 %v2405
    %2441 = vmatpush1.bf16.msra.mxu0 %v2404
    %2442 = vmatprep.subr.bf16.mxu0 %v2401
    %2443 = vmatpush1.bf16.msra.mxu0 %v2400
    %2444 = vmatprep.subr.bf16.mxu0 %v2397
    %2445 = vmatpush1.bf16.msra.mxu0 %v2396
    %2446 = vmatprep.subr.bf16.mxu0 %v2393
    %2447 = vmatpush1.bf16.msra.mxu0 %v2392
    %2448 = vmatprep.subr.bf16.mxu0 %v2389
    %2449 = vmatpush1.bf16.msra.mxu0 %v2388
    %2450 = vmatprep.subr.bf16.mxu0 %v2385
    %2451 = vmatpush1.bf16.msra.mxu0 %v2384
    %2452 = vmatprep.subr.bf16.mxu0 %v2381
    %2453 = vmatpush1.bf16.msra.mxu0 %v2380
    %2454 = vmatprep.subr.bf16.mxu0 %v2377
    %2455 = vmatpush1.bf16.msra.mxu0 %v2376
    %2456 = vmatprep.subr.bf16.mxu0 0
    %2457 = vmatpush2.bf16.msra.mxu0 0
    %2458 = vmatprep.subr.bf16.mxu0 0
    %2459 = vmatpush2.bf16.msra.mxu0 0
    %2460 = vmatprep.subr.bf16.mxu0 0
    %2461 = vmatpush2.bf16.msra.mxu0 0
    %2462 = vmatprep.subr.bf16.mxu0 0
    %2463 = vmatpush2.bf16.msra.mxu0 0
    %2464 = vmatprep.subr.bf16.mxu0 0
    %2465 = vmatpush2.bf16.msra.mxu0 0
    %2466 = vmatprep.subr.bf16.mxu0 0
    %2467 = vmatpush2.bf16.msra.mxu0 0
    %2468 = vmatprep.subr.bf16.mxu0 0
    %2469 = vmatpush2.bf16.msra.mxu0 0
    %2470 = vmatprep.subr.bf16.mxu0 0
    %2471 = vmatpush2.bf16.msra.mxu0 0
    %2472 = vmatprep.mubr.bf16.mxu0 0
    %2473 = vmatmul.mubr.bf16.gmra.mxu0 %v2225
    %v2474 = vpop.f32.mrf.mxu0
    %v2475 = vadd.f32 %v2263, %v2474
    %v2476 = vpop.f32.mrf.mxu0
    %v2477 = vadd.f32 %v2267, %v2476
    %v2478 = vpop.f32.mrf.mxu0
    %v2479 = vadd.f32 %v2263, %v2478
    %v2480 = vpop.f32.mrf.mxu0
    %v2481 = vadd.f32 %v2267, %v2480
    %2482 = vdwg.mxu0
    %2483 = vmatprep.subr.bf16.mxu0 %v2407
    %2484 = vmatpush1.bf16.msra.mxu0 %v2406
    %2485 = vmatprep.subr.bf16.mxu0 %v2403
    %2486 = vmatpush1.bf16.msra.mxu0 %v2402
    %2487 = vmatprep.subr.bf16.mxu0 %v2399
    %2488 = vmatpush1.bf16.msra.mxu0 %v2398
    %2489 = vmatprep.subr.bf16.mxu0 %v2395
    %2490 = vmatpush1.bf16.msra.mxu0 %v2394
    %2491 = vmatprep.subr.bf16.mxu0 %v2391
    %2492 = vmatpush1.bf16.msra.mxu0 %v2390
    %2493 = vmatprep.subr.bf16.mxu0 %v2387
    %2494 = vmatpush1.bf16.msra.mxu0 %v2386
    %2495 = vmatprep.subr.bf16.mxu0 %v2383
    %2496 = vmatpush1.bf16.msra.mxu0 %v2382
    %2497 = vmatprep.subr.bf16.mxu0 %v2379
    %2498 = vmatpush1.bf16.msra.mxu0 %v2378
    %2499 = vmatprep.subr.bf16.mxu0 0
    %2500 = vmatpush2.bf16.msra.mxu0 0
    %2501 = vmatprep.subr.bf16.mxu0 0
    %2502 = vmatpush2.bf16.msra.mxu0 0
    %2503 = vmatprep.subr.bf16.mxu0 0
    %2504 = vmatpush2.bf16.msra.mxu0 0
    %2505 = vmatprep.subr.bf16.mxu0 0
    %2506 = vmatpush2.bf16.msra.mxu0 0
    %2507 = vmatprep.subr.bf16.mxu0 0
    %2508 = vmatpush2.bf16.msra.mxu0 0
    %2509 = vmatprep.subr.bf16.mxu0 0
    %2510 = vmatpush2.bf16.msra.mxu0 0
    %2511 = vmatprep.subr.bf16.mxu0 0
    %2512 = vmatpush2.bf16.msra.mxu0 0
    %2513 = vmatprep.subr.bf16.mxu0 0
    %2514 = vmatpush2.bf16.msra.mxu0 0
    %2515 = vmatprep.mubr.bf16.mxu0 0
    %2516 = vmatmul.mubr.bf16.gmra.mxu0 %v2225
    %v2517 = vpop.f32.mrf.mxu0
    %v2518 = vadd.f32 %v2271, %v2517
    %v2519 = vpop.f32.mrf.mxu0
    %v2520 = vadd.f32 %v2275, %v2519
    %v2521 = vpop.f32.mrf.mxu0
    %v2522 = vadd.f32 %v2271, %v2521
    %v2523 = vpop.f32.mrf.mxu0
    %v2524 = vadd.f32 %v2275, %v2523
    %2525 = vdwg.mxu0
    %v2526 = vmax.f32 %v2475, 0.0
    %v2527 = vmax.f32 %v2477, 0.0
    %v2528 = vmax.f32 %v2518, 0.0
    %v2529 = vmax.f32 %v2520, 0.0
    %v2530 = vmax.f32 %v2479, 0.0
    %v2531 = vmax.f32 %v2481, 0.0
    %v2532 = vmax.f32 %v2522, 0.0
    %v2533 = vmax.f32 %v2524, 0.0
    %v2534 = vpack.c.bf16 %v2530, %v2526
    %v2535 = vpack.c.bf16 %v2531, %v2527
    %v2536 = vpack.c.bf16 %v2532, %v2528
    %v2537 = vpack.c.bf16 %v2533, %v2529
    %v2538 = vld [vmem:[#allocation11] sm:$0xff]
    %v2539 = vld [vmem:[#allocation11 + $0x8] sm:$0xff]
    %v2540 = vld [vmem:[#allocation11 + $0x10] sm:$0xff]
    %v2541 = vld [vmem:[#allocation11 + $0x18] sm:$0xf]
    %v2542 = vld [vmem:[#allocation11 + $0x1c] sm:$0xff]
    %v2543 = vld [vmem:[#allocation11 + $0x24] sm:$0xff]
    %v2544 = vld [vmem:[#allocation11 + $0x2c] sm:$0xff]
    %v2545 = vld [vmem:[#allocation11 + $0x34] sm:$0xf]
    %v2546 = vld [vmem:[#allocation11 + $0x38] sm:$0xff]
    %v2547 = vld [vmem:[#allocation11 + $0x40] sm:$0xff]
    %v2548 = vld [vmem:[#allocation11 + $0x48] sm:$0xff]
    %v2549 = vld [vmem:[#allocation11 + $0x50] sm:$0xf]
    %v2550 = vld [vmem:[#allocation11 + $0x54] sm:$0xff]
    %v2551 = vld [vmem:[#allocation11 + $0x5c] sm:$0xff]
    %v2552 = vld [vmem:[#allocation11 + $0x64] sm:$0xff]
    %v2553 = vld [vmem:[#allocation11 + $0x6c] sm:$0xf]
    %v2554 = vld [vmem:[#allocation11 + $0x70] sm:$0xff]
    %v2555 = vld [vmem:[#allocation11 + $0x78] sm:$0xff]
    %v2556 = vld [vmem:[#allocation11 + $0x80] sm:$0xff]
    %v2557 = vld [vmem:[#allocation11 + $0x88] sm:$0xf]
    %v2558 = vld [vmem:[#allocation11 + $0x8c] sm:$0xff]
    %v2559 = vld [vmem:[#allocation11 + $0x94] sm:$0xff]
    %v2560 = vld [vmem:[#allocation11 + $0x9c] sm:$0xff]
    %v2561 = vld [vmem:[#allocation11 + $0xa4] sm:$0xf]
    %v2562 = vld [vmem:[#allocation11 + $0xa8] sm:$0xff]
    %v2563 = vld [vmem:[#allocation11 + $0xb0] sm:$0xff]
    %v2564 = vld [vmem:[#allocation11 + $0xb8] sm:$0xff]
    %v2565 = vld [vmem:[#allocation11 + $0xc0] sm:$0xf]
    %v2566 = vld [vmem:[#allocation11 + $0xc4] sm:$0xff]
    %v2567 = vld [vmem:[#allocation11 + $0xcc] sm:$0xff]
    %v2568 = vld [vmem:[#allocation11 + $0xd4] sm:$0xff]
    %v2569 = vld [vmem:[#allocation11 + $0xdc] sm:$0xf]
    %v2570 = vld [vmem:[#allocation11 + $0xe0] sm:$0xff]
    %v2571 = vld [vmem:[#allocation11 + $0xe8] sm:$0xff]
    %v2572 = vld [vmem:[#allocation11 + $0xf0] sm:$0xff]
    %v2573 = vld [vmem:[#allocation11 + $0xf8] sm:$0xf]
    %v2574 = vld [vmem:[#allocation11 + $0xfc] sm:$0xff]
    %v2575 = vld [vmem:[#allocation11 + $0x104] sm:$0xff]
    %v2576 = vld [vmem:[#allocation11 + $0x10c] sm:$0xff]
    %v2577 = vld [vmem:[#allocation11 + $0x114] sm:$0xf]
    %v2578 = vld [vmem:[#allocation11 + $0x118] sm:$0xff]
    %v2579 = vld [vmem:[#allocation11 + $0x120] sm:$0xff]
    %v2580 = vld [vmem:[#allocation11 + $0x128] sm:$0xff]
    %v2581 = vld [vmem:[#allocation11 + $0x130] sm:$0xf]
    %v2582 = vld [vmem:[#allocation11 + $0x134] sm:$0xff]
    %v2583 = vld [vmem:[#allocation11 + $0x13c] sm:$0xff]
    %v2584 = vld [vmem:[#allocation11 + $0x144] sm:$0xff]
    %v2585 = vld [vmem:[#allocation11 + $0x14c] sm:$0xf]
    %v2586 = vld [vmem:[#allocation11 + $0x150] sm:$0xff]
    %v2587 = vld [vmem:[#allocation11 + $0x158] sm:$0xff]
    %v2588 = vld [vmem:[#allocation11 + $0x160] sm:$0xff]
    %v2589 = vld [vmem:[#allocation11 + $0x168] sm:$0xf]
    %v2590 = vld [vmem:[#allocation11 + $0x16c] sm:$0xff]
    %v2591 = vld [vmem:[#allocation11 + $0x174] sm:$0xff]
    %v2592 = vld [vmem:[#allocation11 + $0x17c] sm:$0xff]
    %v2593 = vld [vmem:[#allocation11 + $0x184] sm:$0xf]
    %v2594 = vld [vmem:[#allocation11 + $0x188] sm:$0xff]
    %v2595 = vld [vmem:[#allocation11 + $0x190] sm:$0xff]
    %v2596 = vld [vmem:[#allocation11 + $0x198] sm:$0xff]
    %v2597 = vld [vmem:[#allocation11 + $0x1a0] sm:$0xf]
    %v2598 = vld [vmem:[#allocation11 + $0x1a4] sm:$0xff]
    %v2599 = vld [vmem:[#allocation11 + $0x1ac] sm:$0xff]
    %v2600 = vld [vmem:[#allocation11 + $0x1b4] sm:$0xff]
    %v2601 = vld [vmem:[#allocation11 + $0x1bc] sm:$0xf]
    %v2602 = vld [vmem:[#allocation11 + $0x1c0] sm:$0xff]
    %v2603 = vld [vmem:[#allocation11 + $0x1c8] sm:$0xff]
    %v2604 = vld [vmem:[#allocation11 + $0x1d0] sm:$0xff]
    %v2605 = vld [vmem:[#allocation11 + $0x1d8] sm:$0xf]
    %v2606 = vld [vmem:[#allocation11 + $0x1dc] sm:$0xff]
    %v2607 = vld [vmem:[#allocation11 + $0x1e4] sm:$0xff]
    %v2608 = vld [vmem:[#allocation11 + $0x1ec] sm:$0xff]
    %v2609 = vld [vmem:[#allocation11 + $0x1f4] sm:$0xf]
    %v2610 = vld [vmem:[#allocation11 + $0x1f8] sm:$0xff]
    %v2611 = vld [vmem:[#allocation11 + $0x200] sm:$0xff]
    %v2612 = vld [vmem:[#allocation11 + $0x208] sm:$0xff]
    %v2613 = vld [vmem:[#allocation11 + $0x210] sm:$0xf]
    %v2614 = vld [vmem:[#allocation11 + $0x214] sm:$0xff]
    %v2615 = vld [vmem:[#allocation11 + $0x21c] sm:$0xff]
    %v2616 = vld [vmem:[#allocation11 + $0x224] sm:$0xff]
    %v2617 = vld [vmem:[#allocation11 + $0x22c] sm:$0xf]
    %v2618 = vld [vmem:[#allocation11 + $0x230] sm:$0xff]
    %v2619 = vld [vmem:[#allocation11 + $0x238] sm:$0xff]
    %v2620 = vld [vmem:[#allocation11 + $0x240] sm:$0xff]
    %v2621 = vld [vmem:[#allocation11 + $0x248] sm:$0xf]
    %v2622 = vld [vmem:[#allocation11 + $0x24c] sm:$0xff]
    %v2623 = vld [vmem:[#allocation11 + $0x254] sm:$0xff]
    %v2624 = vld [vmem:[#allocation11 + $0x25c] sm:$0xff]
    %v2625 = vld [vmem:[#allocation11 + $0x264] sm:$0xf]
    %v2626 = vld [vmem:[#allocation11 + $0x268] sm:$0xff]
    %v2627 = vld [vmem:[#allocation11 + $0x270] sm:$0xff]
    %v2628 = vld [vmem:[#allocation11 + $0x278] sm:$0xff]
    %v2629 = vld [vmem:[#allocation11 + $0x280] sm:$0xf]
    %v2630 = vld [vmem:[#allocation11 + $0x284] sm:$0xff]
    %v2631 = vld [vmem:[#allocation11 + $0x28c] sm:$0xff]
    %v2632 = vld [vmem:[#allocation11 + $0x294] sm:$0xff]
    %v2633 = vld [vmem:[#allocation11 + $0x29c] sm:$0xf]
    %v2634 = vld [vmem:[#allocation11 + $0x2a0] sm:$0xff]
    %v2635 = vld [vmem:[#allocation11 + $0x2a8] sm:$0xff]
    %v2636 = vld [vmem:[#allocation11 + $0x2b0] sm:$0xff]
    %v2637 = vld [vmem:[#allocation11 + $0x2b8] sm:$0xf]
    %v2638 = vld [vmem:[#allocation11 + $0x2bc] sm:$0xff]
    %v2639 = vld [vmem:[#allocation11 + $0x2c4] sm:$0xff]
    %v2640 = vld [vmem:[#allocation11 + $0x2cc] sm:$0xff]
    %v2641 = vld [vmem:[#allocation11 + $0x2d4] sm:$0xf]
    %v2642 = vld [vmem:[#allocation11 + $0x2d8] sm:$0xff]
    %v2643 = vld [vmem:[#allocation11 + $0x2e0] sm:$0xff]
    %v2644 = vld [vmem:[#allocation11 + $0x2e8] sm:$0xff]
    %v2645 = vld [vmem:[#allocation11 + $0x2f0] sm:$0xf]
    %v2646 = vld [vmem:[#allocation11 + $0x2f4] sm:$0xff]
    %v2647 = vld [vmem:[#allocation11 + $0x2fc] sm:$0xff]
    %v2648 = vld [vmem:[#allocation11 + $0x304] sm:$0xff]
    %v2649 = vld [vmem:[#allocation11 + $0x30c] sm:$0xf]
    %v2650 = vld [vmem:[#allocation11 + $0x310] sm:$0xff]
    %v2651 = vld [vmem:[#allocation11 + $0x318] sm:$0xff]
    %v2652 = vld [vmem:[#allocation11 + $0x320] sm:$0xff]
    %v2653 = vld [vmem:[#allocation11 + $0x328] sm:$0xf]
    %v2654 = vld [vmem:[#allocation11 + $0x32c] sm:$0xff]
    %v2655 = vld [vmem:[#allocation11 + $0x334] sm:$0xff]
    %v2656 = vld [vmem:[#allocation11 + $0x33c] sm:$0xff]
    %v2657 = vld [vmem:[#allocation11 + $0x344] sm:$0xf]
    %v2658 = vld [vmem:[#allocation11 + $0x348] sm:$0xff]
    %v2659 = vld [vmem:[#allocation11 + $0x350] sm:$0xff]
    %v2660 = vld [vmem:[#allocation11 + $0x358] sm:$0xff]
    %v2661 = vld [vmem:[#allocation11 + $0x360] sm:$0xf]
    %v2662 = vld [vmem:[#allocation11 + $0x364] sm:$0xff]
    %v2663 = vld [vmem:[#allocation11 + $0x36c] sm:$0xff]
    %v2664 = vld [vmem:[#allocation11 + $0x374] sm:$0xff]
    %v2665 = vld [vmem:[#allocation11 + $0x37c] sm:$0xf]
    %v2666 = vld [vmem:[#allocation11 + $0x380] sm:$0xff]
    %v2667 = vld [vmem:[#allocation11 + $0x388] sm:$0xff]
    %v2668 = vld [vmem:[#allocation11 + $0x390] sm:$0xff]
    %v2669 = vld [vmem:[#allocation11 + $0x398] sm:$0xf]
    %v2670 = vld [vmem:[#allocation11 + $0x39c] sm:$0xff]
    %v2671 = vld [vmem:[#allocation11 + $0x3a4] sm:$0xff]
    %v2672 = vld [vmem:[#allocation11 + $0x3ac] sm:$0xff]
    %v2673 = vld [vmem:[#allocation11 + $0x3b4] sm:$0xf]
    %v2674 = vld [vmem:[#allocation11 + $0x3b8] sm:$0xff]
    %v2675 = vld [vmem:[#allocation11 + $0x3c0] sm:$0xff]
    %v2676 = vld [vmem:[#allocation11 + $0x3c8] sm:$0xff]
    %v2677 = vld [vmem:[#allocation11 + $0x3d0] sm:$0xf]
    %v2678 = vld [vmem:[#allocation11 + $0x3d4] sm:$0xff]
    %v2679 = vld [vmem:[#allocation11 + $0x3dc] sm:$0xff]
    %v2680 = vld [vmem:[#allocation11 + $0x3e4] sm:$0xff]
    %v2681 = vld [vmem:[#allocation11 + $0x3ec] sm:$0xf]
    %v2682 = vld [vmem:[#allocation11 + $0x3f0] sm:$0xff]
    %v2683 = vld [vmem:[#allocation11 + $0x3f8] sm:$0xff]
    %v2684 = vld [vmem:[#allocation11 + $0x400] sm:$0xff]
    %v2685 = vld [vmem:[#allocation11 + $0x408] sm:$0xf]
    %v2686 = vld [vmem:[#allocation11 + $0x40c] sm:$0xff]
    %v2687 = vld [vmem:[#allocation11 + $0x414] sm:$0xff]
    %v2688 = vld [vmem:[#allocation11 + $0x41c] sm:$0xff]
    %v2689 = vld [vmem:[#allocation11 + $0x424] sm:$0xf]
    %v2690 = vld [vmem:[#allocation11 + $0x428] sm:$0xff]
    %v2691 = vld [vmem:[#allocation11 + $0x430] sm:$0xff]
    %v2692 = vld [vmem:[#allocation11 + $0x438] sm:$0xff]
    %v2693 = vld [vmem:[#allocation11 + $0x440] sm:$0xf]
    %v2694 = vld [vmem:[#allocation11 + $0x444] sm:$0xff]
    %v2695 = vld [vmem:[#allocation11 + $0x44c] sm:$0xff]
    %v2696 = vld [vmem:[#allocation11 + $0x454] sm:$0xff]
    %v2697 = vld [vmem:[#allocation11 + $0x45c] sm:$0xf]
    %v2698 = vld [vmem:[#allocation11 + $0x460] sm:$0xff]
    %v2699 = vld [vmem:[#allocation11 + $0x468] sm:$0xff]
    %v2700 = vld [vmem:[#allocation11 + $0x470] sm:$0xff]
    %v2701 = vld [vmem:[#allocation11 + $0x478] sm:$0xf]
    %v2702 = vld [vmem:[#allocation11 + $0x47c] sm:$0xff]
    %v2703 = vld [vmem:[#allocation11 + $0x484] sm:$0xff]
    %v2704 = vld [vmem:[#allocation11 + $0x48c] sm:$0xff]
    %v2705 = vld [vmem:[#allocation11 + $0x494] sm:$0xf]
    %v2706 = vld [vmem:[#allocation11 + $0x498] sm:$0xff]
    %v2707 = vld [vmem:[#allocation11 + $0x4a0] sm:$0xff]
    %v2708 = vld [vmem:[#allocation11 + $0x4a8] sm:$0xff]
    %v2709 = vld [vmem:[#allocation11 + $0x4b0] sm:$0xf]
    %v2710 = vld [vmem:[#allocation11 + $0x4b4] sm:$0xff]
    %v2711 = vld [vmem:[#allocation11 + $0x4bc] sm:$0xff]
    %v2712 = vld [vmem:[#allocation11 + $0x4c4] sm:$0xff]
    %v2713 = vld [vmem:[#allocation11 + $0x4cc] sm:$0xf]
    %v2714 = vld [vmem:[#allocation11 + $0x4d0] sm:$0xff]
    %v2715 = vld [vmem:[#allocation11 + $0x4d8] sm:$0xff]
    %v2716 = vld [vmem:[#allocation11 + $0x4e0] sm:$0xff]
    %v2717 = vld [vmem:[#allocation11 + $0x4e8] sm:$0xf]
    %v2718 = vld [vmem:[#allocation11 + $0x4ec] sm:$0xff]
    %v2719 = vld [vmem:[#allocation11 + $0x4f4] sm:$0xff]
    %v2720 = vld [vmem:[#allocation11 + $0x4fc] sm:$0xff]
    %v2721 = vld [vmem:[#allocation11 + $0x504] sm:$0xf]
    %v2722 = vld [vmem:[#allocation11 + $0x508] sm:$0xff]
    %v2723 = vld [vmem:[#allocation11 + $0x510] sm:$0xff]
    %v2724 = vld [vmem:[#allocation11 + $0x518] sm:$0xff]
    %v2725 = vld [vmem:[#allocation11 + $0x520] sm:$0xf]
    %v2726 = vld [vmem:[#allocation11 + $0x524] sm:$0xff]
    %v2727 = vld [vmem:[#allocation11 + $0x52c] sm:$0xff]
    %v2728 = vld [vmem:[#allocation11 + $0x534] sm:$0xff]
    %v2729 = vld [vmem:[#allocation11 + $0x53c] sm:$0xf]
    %v2730 = vld [vmem:[#allocation11 + $0x540] sm:$0xff]
    %v2731 = vld [vmem:[#allocation11 + $0x548] sm:$0xff]
    %v2732 = vld [vmem:[#allocation11 + $0x550] sm:$0xff]
    %v2733 = vld [vmem:[#allocation11 + $0x558] sm:$0xf]
    %v2734 = vld [vmem:[#allocation11 + $0x55c] sm:$0xff]
    %v2735 = vld [vmem:[#allocation11 + $0x564] sm:$0xff]
    %v2736 = vld [vmem:[#allocation11 + $0x56c] sm:$0xff]
    %v2737 = vld [vmem:[#allocation11 + $0x574] sm:$0xf]
    %v2738 = vld [vmem:[#allocation11 + $0x578] sm:$0xff]
    %v2739 = vld [vmem:[#allocation11 + $0x580] sm:$0xff]
    %v2740 = vld [vmem:[#allocation11 + $0x588] sm:$0xff]
    %v2741 = vld [vmem:[#allocation11 + $0x590] sm:$0xf]
    %v2742 = vld [vmem:[#allocation11 + $0x594] sm:$0xff]
    %v2743 = vld [vmem:[#allocation11 + $0x59c] sm:$0xff]
    %v2744 = vld [vmem:[#allocation11 + $0x5a4] sm:$0xff]
    %v2745 = vld [vmem:[#allocation11 + $0x5ac] sm:$0xf]
    %v2746 = vld [vmem:[#allocation11 + $0x5b0] sm:$0xff]
    %v2747 = vld [vmem:[#allocation11 + $0x5b8] sm:$0xff]
    %v2748 = vld [vmem:[#allocation11 + $0x5c0] sm:$0xff]
    %v2749 = vld [vmem:[#allocation11 + $0x5c8] sm:$0xf]
    %v2750 = vld [vmem:[#allocation11 + $0x5cc] sm:$0xff]
    %v2751 = vld [vmem:[#allocation11 + $0x5d4] sm:$0xff]
    %v2752 = vld [vmem:[#allocation11 + $0x5dc] sm:$0xff]
    %v2753 = vld [vmem:[#allocation11 + $0x5e4] sm:$0xf]
    %v2754 = vld [vmem:[#allocation11 + $0x5e8] sm:$0xff]
    %v2755 = vld [vmem:[#allocation11 + $0x5f0] sm:$0xff]
    %v2756 = vld [vmem:[#allocation11 + $0x5f8] sm:$0xff]
    %v2757 = vld [vmem:[#allocation11 + $0x600] sm:$0xf]
    %v2758 = vld [vmem:[#allocation11 + $0x604] sm:$0xff]
    %v2759 = vld [vmem:[#allocation11 + $0x60c] sm:$0xff]
    %v2760 = vld [vmem:[#allocation11 + $0x614] sm:$0xff]
    %v2761 = vld [vmem:[#allocation11 + $0x61c] sm:$0xf]
    %v2762 = vld [vmem:[#allocation11 + $0x620] sm:$0xff]
    %v2763 = vld [vmem:[#allocation11 + $0x628] sm:$0xff]
    %v2764 = vld [vmem:[#allocation11 + $0x630] sm:$0xff]
    %v2765 = vld [vmem:[#allocation11 + $0x638] sm:$0xf]
    %v2766 = vld [vmem:[#allocation11 + $0x63c] sm:$0xff]
    %v2767 = vld [vmem:[#allocation11 + $0x644] sm:$0xff]
    %v2768 = vld [vmem:[#allocation11 + $0x64c] sm:$0xff]
    %v2769 = vld [vmem:[#allocation11 + $0x654] sm:$0xf]
    %v2770 = vld [vmem:[#allocation11 + $0x658] sm:$0xff]
    %v2771 = vld [vmem:[#allocation11 + $0x660] sm:$0xff]
    %v2772 = vld [vmem:[#allocation11 + $0x668] sm:$0xff]
    %v2773 = vld [vmem:[#allocation11 + $0x670] sm:$0xf]
    %v2774 = vld [vmem:[#allocation11 + $0x674] sm:$0xff]
    %v2775 = vld [vmem:[#allocation11 + $0x67c] sm:$0xff]
    %v2776 = vld [vmem:[#allocation11 + $0x684] sm:$0xff]
    %v2777 = vld [vmem:[#allocation11 + $0x68c] sm:$0xf]
    %v2778 = vld [vmem:[#allocation11 + $0x690] sm:$0xff]
    %v2779 = vld [vmem:[#allocation11 + $0x698] sm:$0xff]
    %v2780 = vld [vmem:[#allocation11 + $0x6a0] sm:$0xff]
    %v2781 = vld [vmem:[#allocation11 + $0x6a8] sm:$0xf]
    %v2782 = vld [vmem:[#allocation11 + $0x6ac] sm:$0xff]
    %v2783 = vld [vmem:[#allocation11 + $0x6b4] sm:$0xff]
    %v2784 = vld [vmem:[#allocation11 + $0x6bc] sm:$0xff]
    %v2785 = vld [vmem:[#allocation11 + $0x6c4] sm:$0xf]
    %v2786 = vld [vmem:[#allocation11 + $0x6c8] sm:$0xff]
    %v2787 = vld [vmem:[#allocation11 + $0x6d0] sm:$0xff]
    %v2788 = vld [vmem:[#allocation11 + $0x6d8] sm:$0xff]
    %v2789 = vld [vmem:[#allocation11 + $0x6e0] sm:$0xf]
    %v2790 = vld [vmem:[#allocation11 + $0x6e4] sm:$0xff]
    %v2791 = vld [vmem:[#allocation11 + $0x6ec] sm:$0xff]
    %v2792 = vld [vmem:[#allocation11 + $0x6f4] sm:$0xff]
    %v2793 = vld [vmem:[#allocation11 + $0x6fc] sm:$0xf]
    %v2794 = vld [vmem:[%s8] sm:$0xff]
    %v2796 = vlaneseq
    %v2797 = vshrl.u32 %v2796, 7
    %v2798 = vsub.s32 0, %v2797
    %v2799 = vrot.slane %v2794, %v2798
    %v2800 = vlaneseq
    %v2801 = vshrl.u32 %v2800, 7
    %v2802 = vsub.s32 1, %v2801
    %v2803 = vrot.slane %v2794, %v2802
    %v2804 = vlaneseq
    %v2805 = vshrl.u32 %v2804, 7
    %v2806 = vsub.s32 2, %v2805
    %v2807 = vrot.slane %v2794, %v2806
    %v2808 = vlaneseq
    %v2809 = vshrl.u32 %v2808, 7
    %v2810 = vsub.s32 3, %v2809
    %v2811 = vrot.slane %v2794, %v2810
    %v2812 = vlaneseq
    %v2813 = vshrl.u32 %v2812, 7
    %v2814 = vsub.s32 4, %v2813
    %v2815 = vrot.slane %v2794, %v2814
    %v2816 = vlaneseq
    %v2817 = vshrl.u32 %v2816, 7
    %v2818 = vsub.s32 5, %v2817
    %v2819 = vrot.slane %v2794, %v2818
    %v2820 = vlaneseq
    %v2821 = vshrl.u32 %v2820, 7
    %v2822 = vsub.s32 6, %v2821
    %v2823 = vrot.slane %v2794, %v2822
    %v3087 = vunpack.c.l.b16 %v2538
    %v3088 = vunpack.c.h.b16 %v2538
    %v3089 = vunpack.c.l.b16 %v2539
    %v3090 = vunpack.c.h.b16 %v2539
    %v3091 = vunpack.c.l.b16 %v2540
    %v3092 = vunpack.c.h.b16 %v2540
    %v3093 = vunpack.c.l.b16 %v2541
    %v3094 = vunpack.c.l.b16 %v2542
    %v3095 = vunpack.c.h.b16 %v2542
    %v3096 = vunpack.c.l.b16 %v2543
    %v3097 = vunpack.c.h.b16 %v2543
    %v3098 = vunpack.c.l.b16 %v2544
    %v3099 = vunpack.c.h.b16 %v2544
    %v3100 = vunpack.c.l.b16 %v2545
    %v3101 = vunpack.c.l.b16 %v2546
    %v3102 = vunpack.c.h.b16 %v2546
    %v3103 = vunpack.c.l.b16 %v2547
    %v3104 = vunpack.c.h.b16 %v2547
    %v3105 = vunpack.c.l.b16 %v2548
    %v3106 = vunpack.c.h.b16 %v2548
    %v3107 = vunpack.c.l.b16 %v2549
    %v3108 = vunpack.c.l.b16 %v2550
    %v3109 = vunpack.c.h.b16 %v2550
    %v3110 = vunpack.c.l.b16 %v2551
    %v3111 = vunpack.c.h.b16 %v2551
    %v3112 = vunpack.c.l.b16 %v2552
    %v3113 = vunpack.c.h.b16 %v2552
    %v3114 = vunpack.c.l.b16 %v2553
    %v3115 = vunpack.c.l.b16 %v2554
    %v3116 = vunpack.c.h.b16 %v2554
    %v3117 = vunpack.c.l.b16 %v2555
    %v3118 = vunpack.c.h.b16 %v2555
    %v3119 = vunpack.c.l.b16 %v2556
    %v3120 = vunpack.c.h.b16 %v2556
    %v3121 = vunpack.c.l.b16 %v2557
    %v3122 = vunpack.c.l.b16 %v2558
    %v3123 = vunpack.c.h.b16 %v2558
    %v3124 = vunpack.c.l.b16 %v2559
    %v3125 = vunpack.c.h.b16 %v2559
    %v3126 = vunpack.c.l.b16 %v2560
    %v3127 = vunpack.c.h.b16 %v2560
    %v3128 = vunpack.c.l.b16 %v2561
    %v3129 = vunpack.c.l.b16 %v2562
    %v3130 = vunpack.c.h.b16 %v2562
    %v3131 = vunpack.c.l.b16 %v2563
    %v3132 = vunpack.c.h.b16 %v2563
    %v3133 = vunpack.c.l.b16 %v2564
    %v3134 = vunpack.c.h.b16 %v2564
    %v3135 = vunpack.c.l.b16 %v2565
    %v3136 = vunpack.c.l.b16 %v2566
    %v3137 = vunpack.c.h.b16 %v2566
    %v3138 = vunpack.c.l.b16 %v2567
    %v3139 = vunpack.c.h.b16 %v2567
    %v3140 = vunpack.c.l.b16 %v2568
    %v3141 = vunpack.c.h.b16 %v2568
    %v3142 = vunpack.c.l.b16 %v2569
    %v3143 = vunpack.c.l.b16 %v2570
    %v3144 = vunpack.c.h.b16 %v2570
    %v3145 = vunpack.c.l.b16 %v2571
    %v3146 = vunpack.c.h.b16 %v2571
    %v3147 = vunpack.c.l.b16 %v2572
    %v3148 = vunpack.c.h.b16 %v2572
    %v3149 = vunpack.c.l.b16 %v2573
    %v3150 = vunpack.c.l.b16 %v2574
    %v3151 = vunpack.c.h.b16 %v2574
    %v3152 = vunpack.c.l.b16 %v2575
    %v3153 = vunpack.c.h.b16 %v2575
    %v3154 = vunpack.c.l.b16 %v2576
    %v3155 = vunpack.c.h.b16 %v2576
    %v3156 = vunpack.c.l.b16 %v2577
    %v3157 = vunpack.c.l.b16 %v2578
    %v3158 = vunpack.c.h.b16 %v2578
    %v3159 = vunpack.c.l.b16 %v2579
    %v3160 = vunpack.c.h.b16 %v2579
    %v3161 = vunpack.c.l.b16 %v2580
    %v3162 = vunpack.c.h.b16 %v2580
    %v3163 = vunpack.c.l.b16 %v2581
    %v3164 = vunpack.c.l.b16 %v2582
    %v3165 = vunpack.c.h.b16 %v2582
    %v3166 = vunpack.c.l.b16 %v2583
    %v3167 = vunpack.c.h.b16 %v2583
    %v3168 = vunpack.c.l.b16 %v2584
    %v3169 = vunpack.c.h.b16 %v2584
    %v3170 = vunpack.c.l.b16 %v2585
    %v3171 = vunpack.c.l.b16 %v2586
    %v3172 = vunpack.c.h.b16 %v2586
    %v3173 = vunpack.c.l.b16 %v2587
    %v3174 = vunpack.c.h.b16 %v2587
    %v3175 = vunpack.c.l.b16 %v2588
    %v3176 = vunpack.c.h.b16 %v2588
    %v3177 = vunpack.c.l.b16 %v2589
    %v3178 = vunpack.c.l.b16 %v2590
    %v3179 = vunpack.c.h.b16 %v2590
    %v3180 = vunpack.c.l.b16 %v2591
    %v3181 = vunpack.c.h.b16 %v2591
    %v3182 = vunpack.c.l.b16 %v2592
    %v3183 = vunpack.c.h.b16 %v2592
    %v3184 = vunpack.c.l.b16 %v2593
    %v3185 = vunpack.c.l.b16 %v2594
    %v3186 = vunpack.c.h.b16 %v2594
    %v3187 = vunpack.c.l.b16 %v2595
    %v3188 = vunpack.c.h.b16 %v2595
    %v3189 = vunpack.c.l.b16 %v2596
    %v3190 = vunpack.c.h.b16 %v2596
    %v3191 = vunpack.c.l.b16 %v2597
    %v3192 = vunpack.c.l.b16 %v2598
    %v3193 = vunpack.c.h.b16 %v2598
    %v3194 = vunpack.c.l.b16 %v2599
    %v3195 = vunpack.c.h.b16 %v2599
    %v3196 = vunpack.c.l.b16 %v2600
    %v3197 = vunpack.c.h.b16 %v2600
    %v3198 = vunpack.c.l.b16 %v2601
    %v3199 = vunpack.c.l.b16 %v2602
    %v3200 = vunpack.c.h.b16 %v2602
    %v3201 = vunpack.c.l.b16 %v2603
    %v3202 = vunpack.c.h.b16 %v2603
    %v3203 = vunpack.c.l.b16 %v2604
    %v3204 = vunpack.c.h.b16 %v2604
    %v3205 = vunpack.c.l.b16 %v2605
    %v3206 = vunpack.c.l.b16 %v2606
    %v3207 = vunpack.c.h.b16 %v2606
    %v3208 = vunpack.c.l.b16 %v2607
    %v3209 = vunpack.c.h.b16 %v2607
    %v3210 = vunpack.c.l.b16 %v2608
    %v3211 = vunpack.c.h.b16 %v2608
    %v3212 = vunpack.c.l.b16 %v2609
    %v3213 = vunpack.c.l.b16 %v2610
    %v3214 = vunpack.c.h.b16 %v2610
    %v3215 = vunpack.c.l.b16 %v2611
    %v3216 = vunpack.c.h.b16 %v2611
    %v3217 = vunpack.c.l.b16 %v2612
    %v3218 = vunpack.c.h.b16 %v2612
    %v3219 = vunpack.c.l.b16 %v2613
    %v3220 = vunpack.c.l.b16 %v2614
    %v3221 = vunpack.c.h.b16 %v2614
    %v3222 = vunpack.c.l.b16 %v2615
    %v3223 = vunpack.c.h.b16 %v2615
    %v3224 = vunpack.c.l.b16 %v2616
    %v3225 = vunpack.c.h.b16 %v2616
    %v3226 = vunpack.c.l.b16 %v2617
    %v3227 = vunpack.c.l.b16 %v2618
    %v3228 = vunpack.c.h.b16 %v2618
    %v3229 = vunpack.c.l.b16 %v2619
    %v3230 = vunpack.c.h.b16 %v2619
    %v3231 = vunpack.c.l.b16 %v2620
    %v3232 = vunpack.c.h.b16 %v2620
    %v3233 = vunpack.c.l.b16 %v2621
    %v3234 = vunpack.c.l.b16 %v2622
    %v3235 = vunpack.c.h.b16 %v2622
    %v3236 = vunpack.c.l.b16 %v2623
    %v3237 = vunpack.c.h.b16 %v2623
    %v3238 = vunpack.c.l.b16 %v2624
    %v3239 = vunpack.c.h.b16 %v2624
    %v3240 = vunpack.c.l.b16 %v2625
    %v3241 = vunpack.c.l.b16 %v2626
    %v3242 = vunpack.c.h.b16 %v2626
    %v3243 = vunpack.c.l.b16 %v2627
    %v3244 = vunpack.c.h.b16 %v2627
    %v3245 = vunpack.c.l.b16 %v2628
    %v3246 = vunpack.c.h.b16 %v2628
    %v3247 = vunpack.c.l.b16 %v2629
    %v3248 = vunpack.c.l.b16 %v2630
    %v3249 = vunpack.c.h.b16 %v2630
    %v3250 = vunpack.c.l.b16 %v2631
    %v3251 = vunpack.c.h.b16 %v2631
    %v3252 = vunpack.c.l.b16 %v2632
    %v3253 = vunpack.c.h.b16 %v2632
    %v3254 = vunpack.c.l.b16 %v2633
    %v3255 = vunpack.c.l.b16 %v2634
    %v3256 = vunpack.c.h.b16 %v2634
    %v3257 = vunpack.c.l.b16 %v2635
    %v3258 = vunpack.c.h.b16 %v2635
    %v3259 = vunpack.c.l.b16 %v2636
    %v3260 = vunpack.c.h.b16 %v2636
    %v3261 = vunpack.c.l.b16 %v2637
    %v3262 = vunpack.c.l.b16 %v2638
    %v3263 = vunpack.c.h.b16 %v2638
    %v3264 = vunpack.c.l.b16 %v2639
    %v3265 = vunpack.c.h.b16 %v2639
    %v3266 = vunpack.c.l.b16 %v2640
    %v3267 = vunpack.c.h.b16 %v2640
    %v3268 = vunpack.c.l.b16 %v2641
    %v3269 = vunpack.c.l.b16 %v2642
    %v3270 = vunpack.c.h.b16 %v2642
    %v3271 = vunpack.c.l.b16 %v2643
    %v3272 = vunpack.c.h.b16 %v2643
    %v3273 = vunpack.c.l.b16 %v2644
    %v3274 = vunpack.c.h.b16 %v2644
    %v3275 = vunpack.c.l.b16 %v2645
    %v3276 = vunpack.c.l.b16 %v2646
    %v3277 = vunpack.c.h.b16 %v2646
    %v3278 = vunpack.c.l.b16 %v2647
    %v3279 = vunpack.c.h.b16 %v2647
    %v3280 = vunpack.c.l.b16 %v2648
    %v3281 = vunpack.c.h.b16 %v2648
    %v3282 = vunpack.c.l.b16 %v2649
    %v3283 = vunpack.c.l.b16 %v2650
    %v3284 = vunpack.c.h.b16 %v2650
    %v3285 = vunpack.c.l.b16 %v2651
    %v3286 = vunpack.c.h.b16 %v2651
    %v3287 = vunpack.c.l.b16 %v2652
    %v3288 = vunpack.c.h.b16 %v2652
    %v3289 = vunpack.c.l.b16 %v2653
    %v3290 = vunpack.c.l.b16 %v2654
    %v3291 = vunpack.c.h.b16 %v2654
    %v3292 = vunpack.c.l.b16 %v2655
    %v3293 = vunpack.c.h.b16 %v2655
    %v3294 = vunpack.c.l.b16 %v2656
    %v3295 = vunpack.c.h.b16 %v2656
    %v3296 = vunpack.c.l.b16 %v2657
    %v3297 = vunpack.c.l.b16 %v2658
    %v3298 = vunpack.c.h.b16 %v2658
    %v3299 = vunpack.c.l.b16 %v2659
    %v3300 = vunpack.c.h.b16 %v2659
    %v3301 = vunpack.c.l.b16 %v2660
    %v3302 = vunpack.c.h.b16 %v2660
    %v3303 = vunpack.c.l.b16 %v2661
    %v3304 = vunpack.c.l.b16 %v2662
    %v3305 = vunpack.c.h.b16 %v2662
    %v3306 = vunpack.c.l.b16 %v2663
    %v3307 = vunpack.c.h.b16 %v2663
    %v3308 = vunpack.c.l.b16 %v2664
    %v3309 = vunpack.c.h.b16 %v2664
    %v3310 = vunpack.c.l.b16 %v2665
    %v3311 = vunpack.c.l.b16 %v2666
    %v3312 = vunpack.c.h.b16 %v2666
    %v3313 = vunpack.c.l.b16 %v2667
    %v3314 = vunpack.c.h.b16 %v2667
    %v3315 = vunpack.c.l.b16 %v2668
    %v3316 = vunpack.c.h.b16 %v2668
    %v3317 = vunpack.c.l.b16 %v2669
    %v3318 = vunpack.c.l.b16 %v2670
    %v3319 = vunpack.c.h.b16 %v2670
    %v3320 = vunpack.c.l.b16 %v2671
    %v3321 = vunpack.c.h.b16 %v2671
    %v3322 = vunpack.c.l.b16 %v2672
    %v3323 = vunpack.c.h.b16 %v2672
    %v3324 = vunpack.c.l.b16 %v2673
    %v3325 = vunpack.c.l.b16 %v2674
    %v3326 = vunpack.c.h.b16 %v2674
    %v3327 = vunpack.c.l.b16 %v2675
    %v3328 = vunpack.c.h.b16 %v2675
    %v3329 = vunpack.c.l.b16 %v2676
    %v3330 = vunpack.c.h.b16 %v2676
    %v3331 = vunpack.c.l.b16 %v2677
    %v3332 = vunpack.c.l.b16 %v2678
    %v3333 = vunpack.c.h.b16 %v2678
    %v3334 = vunpack.c.l.b16 %v2679
    %v3335 = vunpack.c.h.b16 %v2679
    %v3336 = vunpack.c.l.b16 %v2680
    %v3337 = vunpack.c.h.b16 %v2680
    %v3338 = vunpack.c.l.b16 %v2681
    %v3339 = vunpack.c.l.b16 %v2682
    %v3340 = vunpack.c.h.b16 %v2682
    %v3341 = vunpack.c.l.b16 %v2683
    %v3342 = vunpack.c.h.b16 %v2683
    %v3343 = vunpack.c.l.b16 %v2684
    %v3344 = vunpack.c.h.b16 %v2684
    %v3345 = vunpack.c.l.b16 %v2685
    %v3346 = vunpack.c.l.b16 %v2686
    %v3347 = vunpack.c.h.b16 %v2686
    %v3348 = vunpack.c.l.b16 %v2687
    %v3349 = vunpack.c.h.b16 %v2687
    %v3350 = vunpack.c.l.b16 %v2688
    %v3351 = vunpack.c.h.b16 %v2688
    %v3352 = vunpack.c.l.b16 %v2689
    %v3353 = vunpack.c.l.b16 %v2690
    %v3354 = vunpack.c.h.b16 %v2690
    %v3355 = vunpack.c.l.b16 %v2691
    %v3356 = vunpack.c.h.b16 %v2691
    %v3357 = vunpack.c.l.b16 %v2692
    %v3358 = vunpack.c.h.b16 %v2692
    %v3359 = vunpack.c.l.b16 %v2693
    %v3360 = vunpack.c.l.b16 %v2694
    %v3361 = vunpack.c.h.b16 %v2694
    %v3362 = vunpack.c.l.b16 %v2695
    %v3363 = vunpack.c.h.b16 %v2695
    %v3364 = vunpack.c.l.b16 %v2696
    %v3365 = vunpack.c.h.b16 %v2696
    %v3366 = vunpack.c.l.b16 %v2697
    %v3367 = vunpack.c.l.b16 %v2698
    %v3368 = vunpack.c.h.b16 %v2698
    %v3369 = vunpack.c.l.b16 %v2699
    %v3370 = vunpack.c.h.b16 %v2699
    %v3371 = vunpack.c.l.b16 %v2700
    %v3372 = vunpack.c.h.b16 %v2700
    %v3373 = vunpack.c.l.b16 %v2701
    %v3374 = vunpack.c.l.b16 %v2702
    %v3375 = vunpack.c.h.b16 %v2702
    %v3376 = vunpack.c.l.b16 %v2703
    %v3377 = vunpack.c.h.b16 %v2703
    %v3378 = vunpack.c.l.b16 %v2704
    %v3379 = vunpack.c.h.b16 %v2704
    %v3380 = vunpack.c.l.b16 %v2705
    %v3381 = vunpack.c.l.b16 %v2706
    %v3382 = vunpack.c.h.b16 %v2706
    %v3383 = vunpack.c.l.b16 %v2707
    %v3384 = vunpack.c.h.b16 %v2707
    %v3385 = vunpack.c.l.b16 %v2708
    %v3386 = vunpack.c.h.b16 %v2708
    %v3387 = vunpack.c.l.b16 %v2709
    %v3388 = vunpack.c.l.b16 %v2710
    %v3389 = vunpack.c.h.b16 %v2710
    %v3390 = vunpack.c.l.b16 %v2711
    %v3391 = vunpack.c.h.b16 %v2711
    %v3392 = vunpack.c.l.b16 %v2712
    %v3393 = vunpack.c.h.b16 %v2712
    %v3394 = vunpack.c.l.b16 %v2713
    %v3395 = vunpack.c.l.b16 %v2714
    %v3396 = vunpack.c.h.b16 %v2714
    %v3397 = vunpack.c.l.b16 %v2715
    %v3398 = vunpack.c.h.b16 %v2715
    %v3399 = vunpack.c.l.b16 %v2716
    %v3400 = vunpack.c.h.b16 %v2716
    %v3401 = vunpack.c.l.b16 %v2717
    %v3402 = vunpack.c.l.b16 %v2718
    %v3403 = vunpack.c.h.b16 %v2718
    %v3404 = vunpack.c.l.b16 %v2719
    %v3405 = vunpack.c.h.b16 %v2719
    %v3406 = vunpack.c.l.b16 %v2720
    %v3407 = vunpack.c.h.b16 %v2720
    %v3408 = vunpack.c.l.b16 %v2721
    %v3409 = vunpack.c.l.b16 %v2722
    %v3410 = vunpack.c.h.b16 %v2722
    %v3411 = vunpack.c.l.b16 %v2723
    %v3412 = vunpack.c.h.b16 %v2723
    %v3413 = vunpack.c.l.b16 %v2724
    %v3414 = vunpack.c.h.b16 %v2724
    %v3415 = vunpack.c.l.b16 %v2725
    %v3416 = vunpack.c.l.b16 %v2726
    %v3417 = vunpack.c.h.b16 %v2726
    %v3418 = vunpack.c.l.b16 %v2727
    %v3419 = vunpack.c.h.b16 %v2727
    %v3420 = vunpack.c.l.b16 %v2728
    %v3421 = vunpack.c.h.b16 %v2728
    %v3422 = vunpack.c.l.b16 %v2729
    %v3423 = vunpack.c.l.b16 %v2730
    %v3424 = vunpack.c.h.b16 %v2730
    %v3425 = vunpack.c.l.b16 %v2731
    %v3426 = vunpack.c.h.b16 %v2731
    %v3427 = vunpack.c.l.b16 %v2732
    %v3428 = vunpack.c.h.b16 %v2732
    %v3429 = vunpack.c.l.b16 %v2733
    %v3430 = vunpack.c.l.b16 %v2734
    %v3431 = vunpack.c.h.b16 %v2734
    %v3432 = vunpack.c.l.b16 %v2735
    %v3433 = vunpack.c.h.b16 %v2735
    %v3434 = vunpack.c.l.b16 %v2736
    %v3435 = vunpack.c.h.b16 %v2736
    %v3436 = vunpack.c.l.b16 %v2737
    %v3437 = vunpack.c.l.b16 %v2738
    %v3438 = vunpack.c.h.b16 %v2738
    %v3439 = vunpack.c.l.b16 %v2739
    %v3440 = vunpack.c.h.b16 %v2739
    %v3441 = vunpack.c.l.b16 %v2740
    %v3442 = vunpack.c.h.b16 %v2740
    %v3443 = vunpack.c.l.b16 %v2741
    %v3444 = vunpack.c.l.b16 %v2742
    %v3445 = vunpack.c.h.b16 %v2742
    %v3446 = vunpack.c.l.b16 %v2743
    %v3447 = vunpack.c.h.b16 %v2743
    %v3448 = vunpack.c.l.b16 %v2744
    %v3449 = vunpack.c.h.b16 %v2744
    %v3450 = vunpack.c.l.b16 %v2745
    %v3451 = vunpack.c.l.b16 %v2746
    %v3452 = vunpack.c.h.b16 %v2746
    %v3453 = vunpack.c.l.b16 %v2747
    %v3454 = vunpack.c.h.b16 %v2747
    %v3455 = vunpack.c.l.b16 %v2748
    %v3456 = vunpack.c.h.b16 %v2748
    %v3457 = vunpack.c.l.b16 %v2749
    %v3458 = vunpack.c.l.b16 %v2750
    %v3459 = vunpack.c.h.b16 %v2750
    %v3460 = vunpack.c.l.b16 %v2751
    %v3461 = vunpack.c.h.b16 %v2751
    %v3462 = vunpack.c.l.b16 %v2752
    %v3463 = vunpack.c.h.b16 %v2752
    %v3464 = vunpack.c.l.b16 %v2753
    %v3465 = vunpack.c.l.b16 %v2754
    %v3466 = vunpack.c.h.b16 %v2754
    %v3467 = vunpack.c.l.b16 %v2755
    %v3468 = vunpack.c.h.b16 %v2755
    %v3469 = vunpack.c.l.b16 %v2756
    %v3470 = vunpack.c.h.b16 %v2756
    %v3471 = vunpack.c.l.b16 %v2757
    %v3472 = vunpack.c.l.b16 %v2758
    %v3473 = vunpack.c.h.b16 %v2758
    %v3474 = vunpack.c.l.b16 %v2759
    %v3475 = vunpack.c.h.b16 %v2759
    %v3476 = vunpack.c.l.b16 %v2760
    %v3477 = vunpack.c.h.b16 %v2760
    %v3478 = vunpack.c.l.b16 %v2761
    %v3479 = vunpack.c.l.b16 %v2762
    %v3480 = vunpack.c.h.b16 %v2762
    %v3481 = vunpack.c.l.b16 %v2763
    %v3482 = vunpack.c.h.b16 %v2763
    %v3483 = vunpack.c.l.b16 %v2764
    %v3484 = vunpack.c.h.b16 %v2764
    %v3485 = vunpack.c.l.b16 %v2765
    %v3486 = vunpack.c.l.b16 %v2766
    %v3487 = vunpack.c.h.b16 %v2766
    %v3488 = vunpack.c.l.b16 %v2767
    %v3489 = vunpack.c.h.b16 %v2767
    %v3490 = vunpack.c.l.b16 %v2768
    %v3491 = vunpack.c.h.b16 %v2768
    %v3492 = vunpack.c.l.b16 %v2769
    %v3493 = vunpack.c.l.b16 %v2770
    %v3494 = vunpack.c.h.b16 %v2770
    %v3495 = vunpack.c.l.b16 %v2771
    %v3496 = vunpack.c.h.b16 %v2771
    %v3497 = vunpack.c.l.b16 %v2772
    %v3498 = vunpack.c.h.b16 %v2772
    %v3499 = vunpack.c.l.b16 %v2773
    %v3500 = vunpack.c.l.b16 %v2774
    %v3501 = vunpack.c.h.b16 %v2774
    %v3502 = vunpack.c.l.b16 %v2775
    %v3503 = vunpack.c.h.b16 %v2775
    %v3504 = vunpack.c.l.b16 %v2776
    %v3505 = vunpack.c.h.b16 %v2776
    %v3506 = vunpack.c.l.b16 %v2777
    %v3507 = vunpack.c.l.b16 %v2778
    %v3508 = vunpack.c.h.b16 %v2778
    %v3509 = vunpack.c.l.b16 %v2779
    %v3510 = vunpack.c.h.b16 %v2779
    %v3511 = vunpack.c.l.b16 %v2780
    %v3512 = vunpack.c.h.b16 %v2780
    %v3513 = vunpack.c.l.b16 %v2781
    %v3514 = vunpack.c.l.b16 %v2782
    %v3515 = vunpack.c.h.b16 %v2782
    %v3516 = vunpack.c.l.b16 %v2783
    %v3517 = vunpack.c.h.b16 %v2783
    %v3518 = vunpack.c.l.b16 %v2784
    %v3519 = vunpack.c.h.b16 %v2784
    %v3520 = vunpack.c.l.b16 %v2785
    %v3521 = vunpack.c.l.b16 %v2786
    %v3522 = vunpack.c.h.b16 %v2786
    %v3523 = vunpack.c.l.b16 %v2787
    %v3524 = vunpack.c.h.b16 %v2787
    %v3525 = vunpack.c.l.b16 %v2788
    %v3526 = vunpack.c.h.b16 %v2788
    %v3527 = vunpack.c.l.b16 %v2789
    %v3528 = vunpack.c.l.b16 %v2790
    %v3529 = vunpack.c.h.b16 %v2790
    %v3530 = vunpack.c.l.b16 %v2791
    %v3531 = vunpack.c.h.b16 %v2791
    %v3532 = vunpack.c.l.b16 %v2792
    %v3533 = vunpack.c.h.b16 %v2792
    %v3534 = vunpack.c.l.b16 %v2793
    %v3535 = vpack.c.b16 %v3094, %v3087
    %v3536 = vpack.c.b16 %v3095, %v3088
    %v3537 = vpack.c.b16 %v3096, %v3089
    %v3538 = vpack.c.b16 %v3097, %v3090
    %v3539 = vpack.c.b16 %v3098, %v3091
    %v3540 = vpack.c.b16 %v3099, %v3092
    %v3541 = vpack.c.b16 %v3100, %v3093
    %v3542 = vpack.c.b16 %v3108, %v3101
    %v3543 = vpack.c.b16 %v3109, %v3102
    %v3544 = vpack.c.b16 %v3110, %v3103
    %v3545 = vpack.c.b16 %v3111, %v3104
    %v3546 = vpack.c.b16 %v3112, %v3105
    %v3547 = vpack.c.b16 %v3113, %v3106
    %v3548 = vpack.c.b16 %v3114, %v3107
    %v3549 = vpack.c.b16 %v3122, %v3115
    %v3550 = vpack.c.b16 %v3123, %v3116
    %v3551 = vpack.c.b16 %v3124, %v3117
    %v3552 = vpack.c.b16 %v3125, %v3118
    %v3553 = vpack.c.b16 %v3126, %v3119
    %v3554 = vpack.c.b16 %v3127, %v3120
    %v3555 = vpack.c.b16 %v3128, %v3121
    %v3556 = vpack.c.b16 %v3136, %v3129
    %v3557 = vpack.c.b16 %v3137, %v3130
    %v3558 = vpack.c.b16 %v3138, %v3131
    %v3559 = vpack.c.b16 %v3139, %v3132
    %v3560 = vpack.c.b16 %v3140, %v3133
    %v3561 = vpack.c.b16 %v3141, %v3134
    %v3562 = vpack.c.b16 %v3142, %v3135
    %v3563 = vpack.c.b16 %v3150, %v3143
    %v3564 = vpack.c.b16 %v3151, %v3144
    %v3565 = vpack.c.b16 %v3152, %v3145
    %v3566 = vpack.c.b16 %v3153, %v3146
    %v3567 = vpack.c.b16 %v3154, %v3147
    %v3568 = vpack.c.b16 %v3155, %v3148
    %v3569 = vpack.c.b16 %v3156, %v3149
    %v3570 = vpack.c.b16 %v3164, %v3157
    %v3571 = vpack.c.b16 %v3165, %v3158
    %v3572 = vpack.c.b16 %v3166, %v3159
    %v3573 = vpack.c.b16 %v3167, %v3160
    %v3574 = vpack.c.b16 %v3168, %v3161
    %v3575 = vpack.c.b16 %v3169, %v3162
    %v3576 = vpack.c.b16 %v3170, %v3163
    %v3577 = vpack.c.b16 %v3178, %v3171
    %v3578 = vpack.c.b16 %v3179, %v3172
    %v3579 = vpack.c.b16 %v3180, %v3173
    %v3580 = vpack.c.b16 %v3181, %v3174
    %v3581 = vpack.c.b16 %v3182, %v3175
    %v3582 = vpack.c.b16 %v3183, %v3176
    %v3583 = vpack.c.b16 %v3184, %v3177
    %v3584 = vpack.c.b16 %v3192, %v3185
    %v3585 = vpack.c.b16 %v3193, %v3186
    %v3586 = vpack.c.b16 %v3194, %v3187
    %v3587 = vpack.c.b16 %v3195, %v3188
    %v3588 = vpack.c.b16 %v3196, %v3189
    %v3589 = vpack.c.b16 %v3197, %v3190
    %v3590 = vpack.c.b16 %v3198, %v3191
    %v3591 = vpack.c.b16 %v3206, %v3199
    %v3592 = vpack.c.b16 %v3207, %v3200
    %v3593 = vpack.c.b16 %v3208, %v3201
    %v3594 = vpack.c.b16 %v3209, %v3202
    %v3595 = vpack.c.b16 %v3210, %v3203
    %v3596 = vpack.c.b16 %v3211, %v3204
    %v3597 = vpack.c.b16 %v3212, %v3205
    %v3598 = vpack.c.b16 %v3220, %v3213
    %v3599 = vpack.c.b16 %v3221, %v3214
    %v3600 = vpack.c.b16 %v3222, %v3215
    %v3601 = vpack.c.b16 %v3223, %v3216
    %v3602 = vpack.c.b16 %v3224, %v3217
    %v3603 = vpack.c.b16 %v3225, %v3218
    %v3604 = vpack.c.b16 %v3226, %v3219
    %v3605 = vpack.c.b16 %v3234, %v3227
    %v3606 = vpack.c.b16 %v3235, %v3228
    %v3607 = vpack.c.b16 %v3236, %v3229
    %v3608 = vpack.c.b16 %v3237, %v3230
    %v3609 = vpack.c.b16 %v3238, %v3231
    %v3610 = vpack.c.b16 %v3239, %v3232
    %v3611 = vpack.c.b16 %v3240, %v3233
    %v3612 = vpack.c.b16 %v3248, %v3241
    %v3613 = vpack.c.b16 %v3249, %v3242
    %v3614 = vpack.c.b16 %v3250, %v3243
    %v3615 = vpack.c.b16 %v3251, %v3244
    %v3616 = vpack.c.b16 %v3252, %v3245
    %v3617 = vpack.c.b16 %v3253, %v3246
    %v3618 = vpack.c.b16 %v3254, %v3247
    %v3619 = vpack.c.b16 %v3262, %v3255
    %v3620 = vpack.c.b16 %v3263, %v3256
    %v3621 = vpack.c.b16 %v3264, %v3257
    %v3622 = vpack.c.b16 %v3265, %v3258
    %v3623 = vpack.c.b16 %v3266, %v3259
    %v3624 = vpack.c.b16 %v3267, %v3260
    %v3625 = vpack.c.b16 %v3268, %v3261
    %v3626 = vpack.c.b16 %v3276, %v3269
    %v3627 = vpack.c.b16 %v3277, %v3270
    %v3628 = vpack.c.b16 %v3278, %v3271
    %v3629 = vpack.c.b16 %v3279, %v3272
    %v3630 = vpack.c.b16 %v3280, %v3273
    %v3631 = vpack.c.b16 %v3281, %v3274
    %v3632 = vpack.c.b16 %v3282, %v3275
    %v3633 = vpack.c.b16 %v3290, %v3283
    %v3634 = vpack.c.b16 %v3291, %v3284
    %v3635 = vpack.c.b16 %v3292, %v3285
    %v3636 = vpack.c.b16 %v3293, %v3286
    %v3637 = vpack.c.b16 %v3294, %v3287
    %v3638 = vpack.c.b16 %v3295, %v3288
    %v3639 = vpack.c.b16 %v3296, %v3289
    %v3640 = vpack.c.b16 %v3304, %v3297
    %v3641 = vpack.c.b16 %v3305, %v3298
    %v3642 = vpack.c.b16 %v3306, %v3299
    %v3643 = vpack.c.b16 %v3307, %v3300
    %v3644 = vpack.c.b16 %v3308, %v3301
    %v3645 = vpack.c.b16 %v3309, %v3302
    %v3646 = vpack.c.b16 %v3310, %v3303
    %v3647 = vpack.c.b16 %v3318, %v3311
    %v3648 = vpack.c.b16 %v3319, %v3312
    %v3649 = vpack.c.b16 %v3320, %v3313
    %v3650 = vpack.c.b16 %v3321, %v3314
    %v3651 = vpack.c.b16 %v3322, %v3315
    %v3652 = vpack.c.b16 %v3323, %v3316
    %v3653 = vpack.c.b16 %v3324, %v3317
    %v3654 = vpack.c.b16 %v3332, %v3325
    %v3655 = vpack.c.b16 %v3333, %v3326
    %v3656 = vpack.c.b16 %v3334, %v3327
    %v3657 = vpack.c.b16 %v3335, %v3328
    %v3658 = vpack.c.b16 %v3336, %v3329
    %v3659 = vpack.c.b16 %v3337, %v3330
    %v3660 = vpack.c.b16 %v3338, %v3331
    %v3661 = vpack.c.b16 %v3346, %v3339
    %v3662 = vpack.c.b16 %v3347, %v3340
    %v3663 = vpack.c.b16 %v3348, %v3341
    %v3664 = vpack.c.b16 %v3349, %v3342
    %v3665 = vpack.c.b16 %v3350, %v3343
    %v3666 = vpack.c.b16 %v3351, %v3344
    %v3667 = vpack.c.b16 %v3352, %v3345
    %v3668 = vpack.c.b16 %v3360, %v3353
    %v3669 = vpack.c.b16 %v3361, %v3354
    %v3670 = vpack.c.b16 %v3362, %v3355
    %v3671 = vpack.c.b16 %v3363, %v3356
    %v3672 = vpack.c.b16 %v3364, %v3357
    %v3673 = vpack.c.b16 %v3365, %v3358
    %v3674 = vpack.c.b16 %v3366, %v3359
    %v3675 = vpack.c.b16 %v3374, %v3367
    %v3676 = vpack.c.b16 %v3375, %v3368
    %v3677 = vpack.c.b16 %v3376, %v3369
    %v3678 = vpack.c.b16 %v3377, %v3370
    %v3679 = vpack.c.b16 %v3378, %v3371
    %v3680 = vpack.c.b16 %v3379, %v3372
    %v3681 = vpack.c.b16 %v3380, %v3373
    %v3682 = vpack.c.b16 %v3388, %v3381
    %v3683 = vpack.c.b16 %v3389, %v3382
    %v3684 = vpack.c.b16 %v3390, %v3383
    %v3685 = vpack.c.b16 %v3391, %v3384
    %v3686 = vpack.c.b16 %v3392, %v3385
    %v3687 = vpack.c.b16 %v3393, %v3386
    %v3688 = vpack.c.b16 %v3394, %v3387
    %v3689 = vpack.c.b16 %v3402, %v3395
    %v3690 = vpack.c.b16 %v3403, %v3396
    %v3691 = vpack.c.b16 %v3404, %v3397
    %v3692 = vpack.c.b16 %v3405, %v3398
    %v3693 = vpack.c.b16 %v3406, %v3399
    %v3694 = vpack.c.b16 %v3407, %v3400
    %v3695 = vpack.c.b16 %v3408, %v3401
    %v3696 = vpack.c.b16 %v3416, %v3409
    %v3697 = vpack.c.b16 %v3417, %v3410
    %v3698 = vpack.c.b16 %v3418, %v3411
    %v3699 = vpack.c.b16 %v3419, %v3412
    %v3700 = vpack.c.b16 %v3420, %v3413
    %v3701 = vpack.c.b16 %v3421, %v3414
    %v3702 = vpack.c.b16 %v3422, %v3415
    %v3703 = vpack.c.b16 %v3430, %v3423
    %v3704 = vpack.c.b16 %v3431, %v3424
    %v3705 = vpack.c.b16 %v3432, %v3425
    %v3706 = vpack.c.b16 %v3433, %v3426
    %v3707 = vpack.c.b16 %v3434, %v3427
    %v3708 = vpack.c.b16 %v3435, %v3428
    %v3709 = vpack.c.b16 %v3436, %v3429
    %v3710 = vpack.c.b16 %v3444, %v3437
    %v3711 = vpack.c.b16 %v3445, %v3438
    %v3712 = vpack.c.b16 %v3446, %v3439
    %v3713 = vpack.c.b16 %v3447, %v3440
    %v3714 = vpack.c.b16 %v3448, %v3441
    %v3715 = vpack.c.b16 %v3449, %v3442
    %v3716 = vpack.c.b16 %v3450, %v3443
    %v3717 = vpack.c.b16 %v3458, %v3451
    %v3718 = vpack.c.b16 %v3459, %v3452
    %v3719 = vpack.c.b16 %v3460, %v3453
    %v3720 = vpack.c.b16 %v3461, %v3454
    %v3721 = vpack.c.b16 %v3462, %v3455
    %v3722 = vpack.c.b16 %v3463, %v3456
    %v3723 = vpack.c.b16 %v3464, %v3457
    %v3724 = vpack.c.b16 %v3472, %v3465
    %v3725 = vpack.c.b16 %v3473, %v3466
    %v3726 = vpack.c.b16 %v3474, %v3467
    %v3727 = vpack.c.b16 %v3475, %v3468
    %v3728 = vpack.c.b16 %v3476, %v3469
    %v3729 = vpack.c.b16 %v3477, %v3470
    %v3730 = vpack.c.b16 %v3478, %v3471
    %v3731 = vpack.c.b16 %v3486, %v3479
    %v3732 = vpack.c.b16 %v3487, %v3480
    %v3733 = vpack.c.b16 %v3488, %v3481
    %v3734 = vpack.c.b16 %v3489, %v3482
    %v3735 = vpack.c.b16 %v3490, %v3483
    %v3736 = vpack.c.b16 %v3491, %v3484
    %v3737 = vpack.c.b16 %v3492, %v3485
    %v3738 = vpack.c.b16 %v3500, %v3493
    %v3739 = vpack.c.b16 %v3501, %v3494
    %v3740 = vpack.c.b16 %v3502, %v3495
    %v3741 = vpack.c.b16 %v3503, %v3496
    %v3742 = vpack.c.b16 %v3504, %v3497
    %v3743 = vpack.c.b16 %v3505, %v3498
    %v3744 = vpack.c.b16 %v3506, %v3499
    %v3745 = vpack.c.b16 %v3514, %v3507
    %v3746 = vpack.c.b16 %v3515, %v3508
    %v3747 = vpack.c.b16 %v3516, %v3509
    %v3748 = vpack.c.b16 %v3517, %v3510
    %v3749 = vpack.c.b16 %v3518, %v3511
    %v3750 = vpack.c.b16 %v3519, %v3512
    %v3751 = vpack.c.b16 %v3520, %v3513
    %v3752 = vpack.c.b16 %v3528, %v3521
    %v3753 = vpack.c.b16 %v3529, %v3522
    %v3754 = vpack.c.b16 %v3530, %v3523
    %v3755 = vpack.c.b16 %v3531, %v3524
    %v3756 = vpack.c.b16 %v3532, %v3525
    %v3757 = vpack.c.b16 %v3533, %v3526
    %v3758 = vpack.c.b16 %v3534, %v3527
    %3983 = vmatprep.subr.bf16.mxu0 %v3585
    %3984 = vmatpush1.bf16.msra.mxu0 %v3584
    %3985 = vmatprep.subr.bf16.mxu0 %v3578
    %3986 = vmatpush1.bf16.msra.mxu0 %v3577
    %3987 = vmatprep.subr.bf16.mxu0 %v3571
    %3988 = vmatpush1.bf16.msra.mxu0 %v3570
    %3989 = vmatprep.subr.bf16.mxu0 %v3564
    %3990 = vmatpush1.bf16.msra.mxu0 %v3563
    %3991 = vmatprep.subr.bf16.mxu0 %v3557
    %3992 = vmatpush1.bf16.msra.mxu0 %v3556
    %3993 = vmatprep.subr.bf16.mxu0 %v3550
    %3994 = vmatpush1.bf16.msra.mxu0 %v3549
    %3995 = vmatprep.subr.bf16.mxu0 %v3543
    %3996 = vmatpush1.bf16.msra.mxu0 %v3542
    %3997 = vmatprep.subr.bf16.mxu0 %v3536
    %3998 = vmatpush1.bf16.msra.mxu0 %v3535
    %3999 = vmatprep.subr.bf16.mxu0 %v3641
    %4000 = vmatpush2.bf16.msra.mxu0 %v3640
    %4001 = vmatprep.subr.bf16.mxu0 %v3634
    %4002 = vmatpush2.bf16.msra.mxu0 %v3633
    %4003 = vmatprep.subr.bf16.mxu0 %v3627
    %4004 = vmatpush2.bf16.msra.mxu0 %v3626
    %4005 = vmatprep.subr.bf16.mxu0 %v3620
    %4006 = vmatpush2.bf16.msra.mxu0 %v3619
    %4007 = vmatprep.subr.bf16.mxu0 %v3613
    %4008 = vmatpush2.bf16.msra.mxu0 %v3612
    %4009 = vmatprep.subr.bf16.mxu0 %v3606
    %4010 = vmatpush2.bf16.msra.mxu0 %v3605
    %4011 = vmatprep.subr.bf16.mxu0 %v3599
    %4012 = vmatpush2.bf16.msra.mxu0 %v3598
    %4013 = vmatprep.subr.bf16.mxu0 %v3592
    %4014 = vmatpush2.bf16.msra.mxu0 %v3591
    %4015 = vmatprep.mubr.bf16.mxu0 %v2535
    %4016 = vmatmul.mubr.bf16.gmra.mxu0 %v2534
    %v4017 = vpop.f32.mrf.mxu0
    %v4018 = vadd.f32 %v2799, %v4017
    %v4019 = vpop.f32.mrf.mxu0
    %v4020 = vadd.f32 %v2803, %v4019
    %v4021 = vpop.f32.mrf.mxu0
    %v4022 = vadd.f32 %v2799, %v4021
    %v4023 = vpop.f32.mrf.mxu0
    %v4024 = vadd.f32 %v2803, %v4023
    %4025 = vdwg.mxu0
    %4026 = vmatprep.subr.bf16.mxu0 %v3697
    %4027 = vmatpush1.bf16.msra.mxu0 %v3696
    %4028 = vmatprep.subr.bf16.mxu0 %v3690
    %4029 = vmatpush1.bf16.msra.mxu0 %v3689
    %4030 = vmatprep.subr.bf16.mxu0 %v3683
    %4031 = vmatpush1.bf16.msra.mxu0 %v3682
    %4032 = vmatprep.subr.bf16.mxu0 %v3676
    %4033 = vmatpush1.bf16.msra.mxu0 %v3675
    %4034 = vmatprep.subr.bf16.mxu0 %v3669
    %4035 = vmatpush1.bf16.msra.mxu0 %v3668
    %4036 = vmatprep.subr.bf16.mxu0 %v3662
    %4037 = vmatpush1.bf16.msra.mxu0 %v3661
    %4038 = vmatprep.subr.bf16.mxu0 %v3655
    %4039 = vmatpush1.bf16.msra.mxu0 %v3654
    %4040 = vmatprep.subr.bf16.mxu0 %v3648
    %4041 = vmatpush1.bf16.msra.mxu0 %v3647
    %4042 = vmatprep.subr.bf16.mxu0 %v3753
    %4043 = vmatpush2.bf16.msra.mxu0 %v3752
    %4044 = vmatprep.subr.bf16.mxu0 %v3746
    %4045 = vmatpush2.bf16.msra.mxu0 %v3745
    %4046 = vmatprep.subr.bf16.mxu0 %v3739
    %4047 = vmatpush2.bf16.msra.mxu0 %v3738
    %4048 = vmatprep.subr.bf16.mxu0 %v3732
    %4049 = vmatpush2.bf16.msra.mxu0 %v3731
    %4050 = vmatprep.subr.bf16.mxu0 %v3725
    %4051 = vmatpush2.bf16.msra.mxu0 %v3724
    %4052 = vmatprep.subr.bf16.mxu0 %v3718
    %4053 = vmatpush2.bf16.msra.mxu0 %v3717
    %4054 = vmatprep.subr.bf16.mxu0 %v3711
    %4055 = vmatpush2.bf16.msra.mxu0 %v3710
    %4056 = vmatprep.subr.bf16.mxu0 %v3704
    %4057 = vmatpush2.bf16.msra.mxu0 %v3703
    %4058 = vmatprep.mubr.bf16.mxu0 %v2537
    %4059 = vmatmul.mubr.bf16.gmra.mxu0 %v2536
    %v4060 = vpop.f32.mrf.mxu0
    %v4061 = vadd.f32 %v4018, %v4060
    %v4062 = vpop.f32.mrf.mxu0
    %v4063 = vadd.f32 %v4020, %v4062
    %v4064 = vpop.f32.mrf.mxu0
    %v4065 = vadd.f32 %v4022, %v4064
    %v4066 = vpop.f32.mrf.mxu0
    %v4067 = vadd.f32 %v4024, %v4066
    %4068 = vdwg.mxu0
    %4069 = vmatprep.subr.bf16.mxu0 %v3587
    %4070 = vmatpush1.bf16.msra.mxu0 %v3586
    %4071 = vmatprep.subr.bf16.mxu0 %v3580
    %4072 = vmatpush1.bf16.msra.mxu0 %v3579
    %4073 = vmatprep.subr.bf16.mxu0 %v3573
    %4074 = vmatpush1.bf16.msra.mxu0 %v3572
    %4075 = vmatprep.subr.bf16.mxu0 %v3566
    %4076 = vmatpush1.bf16.msra.mxu0 %v3565
    %4077 = vmatprep.subr.bf16.mxu0 %v3559
    %4078 = vmatpush1.bf16.msra.mxu0 %v3558
    %4079 = vmatprep.subr.bf16.mxu0 %v3552
    %4080 = vmatpush1.bf16.msra.mxu0 %v3551
    %4081 = vmatprep.subr.bf16.mxu0 %v3545
    %4082 = vmatpush1.bf16.msra.mxu0 %v3544
    %4083 = vmatprep.subr.bf16.mxu0 %v3538
    %4084 = vmatpush1.bf16.msra.mxu0 %v3537
    %4085 = vmatprep.subr.bf16.mxu0 %v3643
    %4086 = vmatpush2.bf16.msra.mxu0 %v3642
    %4087 = vmatprep.subr.bf16.mxu0 %v3636
    %4088 = vmatpush2.bf16.msra.mxu0 %v3635
    %4089 = vmatprep.subr.bf16.mxu0 %v3629
    %4090 = vmatpush2.bf16.msra.mxu0 %v3628
    %4091 = vmatprep.subr.bf16.mxu0 %v3622
    %4092 = vmatpush2.bf16.msra.mxu0 %v3621
    %4093 = vmatprep.subr.bf16.mxu0 %v3615
    %4094 = vmatpush2.bf16.msra.mxu0 %v3614
    %4095 = vmatprep.subr.bf16.mxu0 %v3608
    %4096 = vmatpush2.bf16.msra.mxu0 %v3607
    %4097 = vmatprep.subr.bf16.mxu0 %v3601
    %4098 = vmatpush2.bf16.msra.mxu0 %v3600
    %4099 = vmatprep.subr.bf16.mxu0 %v3594
    %4100 = vmatpush2.bf16.msra.mxu0 %v3593
    %4101 = vmatprep.mubr.bf16.mxu0 %v2535
    %4102 = vmatmul.mubr.bf16.gmra.mxu0 %v2534
    %v4103 = vpop.f32.mrf.mxu0
    %v4104 = vadd.f32 %v2807, %v4103
    %v4105 = vpop.f32.mrf.mxu0
    %v4106 = vadd.f32 %v2811, %v4105
    %v4107 = vpop.f32.mrf.mxu0
    %v4108 = vadd.f32 %v2807, %v4107
    %v4109 = vpop.f32.mrf.mxu0
    %v4110 = vadd.f32 %v2811, %v4109
    %4111 = vdwg.mxu0
    %4112 = vmatprep.subr.bf16.mxu0 %v3699
    %4113 = vmatpush1.bf16.msra.mxu0 %v3698
    %4114 = vmatprep.subr.bf16.mxu0 %v3692
    %4115 = vmatpush1.bf16.msra.mxu0 %v3691
    %4116 = vmatprep.subr.bf16.mxu0 %v3685
    %4117 = vmatpush1.bf16.msra.mxu0 %v3684
    %4118 = vmatprep.subr.bf16.mxu0 %v3678
    %4119 = vmatpush1.bf16.msra.mxu0 %v3677
    %4120 = vmatprep.subr.bf16.mxu0 %v3671
    %4121 = vmatpush1.bf16.msra.mxu0 %v3670
    %4122 = vmatprep.subr.bf16.mxu0 %v3664
    %4123 = vmatpush1.bf16.msra.mxu0 %v3663
    %4124 = vmatprep.subr.bf16.mxu0 %v3657
    %4125 = vmatpush1.bf16.msra.mxu0 %v3656
    %4126 = vmatprep.subr.bf16.mxu0 %v3650
    %4127 = vmatpush1.bf16.msra.mxu0 %v3649
    %4128 = vmatprep.subr.bf16.mxu0 %v3755
    %4129 = vmatpush2.bf16.msra.mxu0 %v3754
    %4130 = vmatprep.subr.bf16.mxu0 %v3748
    %4131 = vmatpush2.bf16.msra.mxu0 %v3747
    %4132 = vmatprep.subr.bf16.mxu0 %v3741
    %4133 = vmatpush2.bf16.msra.mxu0 %v3740
    %4134 = vmatprep.subr.bf16.mxu0 %v3734
    %4135 = vmatpush2.bf16.msra.mxu0 %v3733
    %4136 = vmatprep.subr.bf16.mxu0 %v3727
    %4137 = vmatpush2.bf16.msra.mxu0 %v3726
    %4138 = vmatprep.subr.bf16.mxu0 %v3720
    %4139 = vmatpush2.bf16.msra.mxu0 %v3719
    %4140 = vmatprep.subr.bf16.mxu0 %v3713
    %4141 = vmatpush2.bf16.msra.mxu0 %v3712
    %4142 = vmatprep.subr.bf16.mxu0 %v3706
    %4143 = vmatpush2.bf16.msra.mxu0 %v3705
    %4144 = vmatprep.mubr.bf16.mxu0 %v2537
    %4145 = vmatmul.mubr.bf16.gmra.mxu0 %v2536
    %v4146 = vpop.f32.mrf.mxu0
    %v4147 = vadd.f32 %v4104, %v4146
    %v4148 = vpop.f32.mrf.mxu0
    %v4149 = vadd.f32 %v4106, %v4148
    %v4150 = vpop.f32.mrf.mxu0
    %v4151 = vadd.f32 %v4108, %v4150
    %v4152 = vpop.f32.mrf.mxu0
    %v4153 = vadd.f32 %v4110, %v4152
    %4154 = vdwg.mxu0
    %4155 = vmatprep.subr.bf16.mxu0 %v3589
    %4156 = vmatpush1.bf16.msra.mxu0 %v3588
    %4157 = vmatprep.subr.bf16.mxu0 %v3582
    %4158 = vmatpush1.bf16.msra.mxu0 %v3581
    %4159 = vmatprep.subr.bf16.mxu0 %v3575
    %4160 = vmatpush1.bf16.msra.mxu0 %v3574
    %4161 = vmatprep.subr.bf16.mxu0 %v3568
    %4162 = vmatpush1.bf16.msra.mxu0 %v3567
    %4163 = vmatprep.subr.bf16.mxu0 %v3561
    %4164 = vmatpush1.bf16.msra.mxu0 %v3560
    %4165 = vmatprep.subr.bf16.mxu0 %v3554
    %4166 = vmatpush1.bf16.msra.mxu0 %v3553
    %4167 = vmatprep.subr.bf16.mxu0 %v3547
    %4168 = vmatpush1.bf16.msra.mxu0 %v3546
    %4169 = vmatprep.subr.bf16.mxu0 %v3540
    %4170 = vmatpush1.bf16.msra.mxu0 %v3539
    %4171 = vmatprep.subr.bf16.mxu0 %v3645
    %4172 = vmatpush2.bf16.msra.mxu0 %v3644
    %4173 = vmatprep.subr.bf16.mxu0 %v3638
    %4174 = vmatpush2.bf16.msra.mxu0 %v3637
    %4175 = vmatprep.subr.bf16.mxu0 %v3631
    %4176 = vmatpush2.bf16.msra.mxu0 %v3630
    %4177 = vmatprep.subr.bf16.mxu0 %v3624
    %4178 = vmatpush2.bf16.msra.mxu0 %v3623
    %4179 = vmatprep.subr.bf16.mxu0 %v3617
    %4180 = vmatpush2.bf16.msra.mxu0 %v3616
    %4181 = vmatprep.subr.bf16.mxu0 %v3610
    %4182 = vmatpush2.bf16.msra.mxu0 %v3609
    %4183 = vmatprep.subr.bf16.mxu0 %v3603
    %4184 = vmatpush2.bf16.msra.mxu0 %v3602
    %4185 = vmatprep.subr.bf16.mxu0 %v3596
    %4186 = vmatpush2.bf16.msra.mxu0 %v3595
    %4187 = vmatprep.mubr.bf16.mxu0 %v2535
    %4188 = vmatmul.mubr.bf16.gmra.mxu0 %v2534
    %v4189 = vpop.f32.mrf.mxu0
    %v4190 = vadd.f32 %v2815, %v4189
    %v4191 = vpop.f32.mrf.mxu0
    %v4192 = vadd.f32 %v2819, %v4191
    %v4193 = vpop.f32.mrf.mxu0
    %v4194 = vadd.f32 %v2815, %v4193
    %v4195 = vpop.f32.mrf.mxu0
    %v4196 = vadd.f32 %v2819, %v4195
    %4197 = vdwg.mxu0
    %4198 = vmatprep.subr.bf16.mxu0 %v3701
    %4199 = vmatpush1.bf16.msra.mxu0 %v3700
    %4200 = vmatprep.subr.bf16.mxu0 %v3694
    %4201 = vmatpush1.bf16.msra.mxu0 %v3693
    %4202 = vmatprep.subr.bf16.mxu0 %v3687
    %4203 = vmatpush1.bf16.msra.mxu0 %v3686
    %4204 = vmatprep.subr.bf16.mxu0 %v3680
    %4205 = vmatpush1.bf16.msra.mxu0 %v3679
    %4206 = vmatprep.subr.bf16.mxu0 %v3673
    %4207 = vmatpush1.bf16.msra.mxu0 %v3672
    %4208 = vmatprep.subr.bf16.mxu0 %v3666
    %4209 = vmatpush1.bf16.msra.mxu0 %v3665
    %4210 = vmatprep.subr.bf16.mxu0 %v3659
    %4211 = vmatpush1.bf16.msra.mxu0 %v3658
    %4212 = vmatprep.subr.bf16.mxu0 %v3652
    %4213 = vmatpush1.bf16.msra.mxu0 %v3651
    %4214 = vmatprep.subr.bf16.mxu0 %v3757
    %4215 = vmatpush2.bf16.msra.mxu0 %v3756
    %4216 = vmatprep.subr.bf16.mxu0 %v3750
    %4217 = vmatpush2.bf16.msra.mxu0 %v3749
    %4218 = vmatprep.subr.bf16.mxu0 %v3743
    %4219 = vmatpush2.bf16.msra.mxu0 %v3742
    %4220 = vmatprep.subr.bf16.mxu0 %v3736
    %4221 = vmatpush2.bf16.msra.mxu0 %v3735
    %4222 = vmatprep.subr.bf16.mxu0 %v3729
    %4223 = vmatpush2.bf16.msra.mxu0 %v3728
    %4224 = vmatprep.subr.bf16.mxu0 %v3722
    %4225 = vmatpush2.bf16.msra.mxu0 %v3721
    %4226 = vmatprep.subr.bf16.mxu0 %v3715
    %4227 = vmatpush2.bf16.msra.mxu0 %v3714
    %4228 = vmatprep.subr.bf16.mxu0 %v3708
    %4229 = vmatpush2.bf16.msra.mxu0 %v3707
    %4230 = vmatprep.mubr.bf16.mxu0 %v2537
    %4231 = vmatmul.mubr.bf16.gmra.mxu0 %v2536
    %v4232 = vpop.f32.mrf.mxu0
    %v4233 = vadd.f32 %v4190, %v4232
    %v4234 = vpop.f32.mrf.mxu0
    %v4235 = vadd.f32 %v4192, %v4234
    %v4236 = vpop.f32.mrf.mxu0
    %v4237 = vadd.f32 %v4194, %v4236
    %v4238 = vpop.f32.mrf.mxu0
    %v4239 = vadd.f32 %v4196, %v4238
    %4240 = vdwg.mxu0
    %4241 = vmatprep.subr.bf16.mxu0 0
    %4242 = vmatpush1.bf16.msra.mxu0 %v3590
    %4243 = vmatprep.subr.bf16.mxu0 0
    %4244 = vmatpush1.bf16.msra.mxu0 %v3583
    %4245 = vmatprep.subr.bf16.mxu0 0
    %4246 = vmatpush1.bf16.msra.mxu0 %v3576
    %4247 = vmatprep.subr.bf16.mxu0 0
    %4248 = vmatpush1.bf16.msra.mxu0 %v3569
    %4249 = vmatprep.subr.bf16.mxu0 0
    %4250 = vmatpush1.bf16.msra.mxu0 %v3562
    %4251 = vmatprep.subr.bf16.mxu0 0
    %4252 = vmatpush1.bf16.msra.mxu0 %v3555
    %4253 = vmatprep.subr.bf16.mxu0 0
    %4254 = vmatpush1.bf16.msra.mxu0 %v3548
    %4255 = vmatprep.subr.bf16.mxu0 0
    %4256 = vmatpush1.bf16.msra.mxu0 %v3541
    %4257 = vmatprep.subr.bf16.mxu0 0
    %4258 = vmatpush2.bf16.msra.mxu0 %v3646
    %4259 = vmatprep.subr.bf16.mxu0 0
    %4260 = vmatpush2.bf16.msra.mxu0 %v3639
    %4261 = vmatprep.subr.bf16.mxu0 0
    %4262 = vmatpush2.bf16.msra.mxu0 %v3632
    %4263 = vmatprep.subr.bf16.mxu0 0
    %4264 = vmatpush2.bf16.msra.mxu0 %v3625
    %4265 = vmatprep.subr.bf16.mxu0 0
    %4266 = vmatpush2.bf16.msra.mxu0 %v3618
    %4267 = vmatprep.subr.bf16.mxu0 0
    %4268 = vmatpush2.bf16.msra.mxu0 %v3611
    %4269 = vmatprep.subr.bf16.mxu0 0
    %4270 = vmatpush2.bf16.msra.mxu0 %v3604
    %4271 = vmatprep.subr.bf16.mxu0 0
    %4272 = vmatpush2.bf16.msra.mxu0 %v3597
    %4273 = vmatprep.mubr.bf16.mxu0 %v2535
    %4274 = vmatmul.mubr.bf16.gmra.mxu0 %v2534
    %v4275 = vpop.f32.mrf.mxu0
    %v4276 = vadd.f32 %v2823, %v4275
    %v4277 = vpop.f32.mrf.mxu0
    %v4278 = vpop.f32.mrf.mxu0
    %v4279 = vadd.f32 %v2823, %v4278
    %v4280 = vpop.f32.mrf.mxu0
    %4281 = vdwg.mxu0
    %4282 = vmatprep.subr.bf16.mxu0 0
    %4283 = vmatpush1.bf16.msra.mxu0 %v3702
    %4284 = vmatprep.subr.bf16.mxu0 0
    %4285 = vmatpush1.bf16.msra.mxu0 %v3695
    %4286 = vmatprep.subr.bf16.mxu0 0
    %4287 = vmatpush1.bf16.msra.mxu0 %v3688
    %4288 = vmatprep.subr.bf16.mxu0 0
    %4289 = vmatpush1.bf16.msra.mxu0 %v3681
    %4290 = vmatprep.subr.bf16.mxu0 0
    %4291 = vmatpush1.bf16.msra.mxu0 %v3674
    %4292 = vmatprep.subr.bf16.mxu0 0
    %4293 = vmatpush1.bf16.msra.mxu0 %v3667
    %4294 = vmatprep.subr.bf16.mxu0 0
    %4295 = vmatpush1.bf16.msra.mxu0 %v3660
    %4296 = vmatprep.subr.bf16.mxu0 0
    %4297 = vmatpush1.bf16.msra.mxu0 %v3653
    %4298 = vmatprep.subr.bf16.mxu0 0
    %4299 = vmatpush2.bf16.msra.mxu0 %v3758
    %4300 = vmatprep.subr.bf16.mxu0 0
    %4301 = vmatpush2.bf16.msra.mxu0 %v3751
    %4302 = vmatprep.subr.bf16.mxu0 0
    %4303 = vmatpush2.bf16.msra.mxu0 %v3744
    %4304 = vmatprep.subr.bf16.mxu0 0
    %4305 = vmatpush2.bf16.msra.mxu0 %v3737
    %4306 = vmatprep.subr.bf16.mxu0 0
    %4307 = vmatpush2.bf16.msra.mxu0 %v3730
    %4308 = vmatprep.subr.bf16.mxu0 0
    %4309 = vmatpush2.bf16.msra.mxu0 %v3723
    %4310 = vmatprep.subr.bf16.mxu0 0
    %4311 = vmatpush2.bf16.msra.mxu0 %v3716
    %4312 = vmatprep.subr.bf16.mxu0 0
    %4313 = vmatpush2.bf16.msra.mxu0 %v3709
    %4314 = vmatprep.mubr.bf16.mxu0 %v2537
    %4315 = vmatmul.mubr.bf16.gmra.mxu0 %v2536
    %v4316 = vpop.f32.mrf.mxu0
    %v4317 = vadd.f32 %v4276, %v4316
    %v4318 = vpop.f32.mrf.mxu0
    %v4319 = vpop.f32.mrf.mxu0
    %v4320 = vadd.f32 %v4279, %v4319
    %v4321 = vpop.f32.mrf.mxu0
    %4322 = vdwg.mxu0
    %v4323 = vxor.u32 %v4061, 2147483648
    %v4324 = vxor.u32 %v4063, 2147483648
    %v4325 = vxor.u32 %v4147, 2147483648
    %v4326 = vxor.u32 %v4149, 2147483648
    %v4327 = vxor.u32 %v4233, 2147483648
    %v4328 = vxor.u32 %v4235, 2147483648
    %v4329 = vxor.u32 %v4317, 2147483648
    %v4330 = vxor.u32 %v4065, 2147483648
    %v4331 = vxor.u32 %v4067, 2147483648
    %v4332 = vxor.u32 %v4151, 2147483648
    %v4333 = vxor.u32 %v4153, 2147483648
    %v4334 = vxor.u32 %v4237, 2147483648
    %v4335 = vxor.u32 %v4239, 2147483648
    %v4336 = vxor.u32 %v4320, 2147483648
    %v4337 = vmul.f32 %v4323, 1.442695
    %v4338 = vpow.pop %v4337
    %v4339 = vmul.f32 %v4324, 1.442695
    %v4340 = vpow.pop %v4339
    %v4341 = vmul.f32 %v4325, 1.442695
    %v4342 = vpow.pop %v4341
    %v4343 = vmul.f32 %v4326, 1.442695
    %v4344 = vpow.pop %v4343
    %v4345 = vmul.f32 %v4327, 1.442695
    %v4346 = vpow.pop %v4345
    %v4347 = vmul.f32 %v4328, 1.442695
    %v4348 = vpow.pop %v4347
    %v4349 = vmul.f32 %v4329, 1.442695
    %v4350 = vpow.pop %v4349
    %v4351 = vmul.f32 %v4330, 1.442695
    %v4352 = vpow.pop %v4351
    %v4353 = vmul.f32 %v4331, 1.442695
    %v4354 = vpow.pop %v4353
    %v4355 = vmul.f32 %v4332, 1.442695
    %v4356 = vpow.pop %v4355
    %v4357 = vmul.f32 %v4333, 1.442695
    %v4358 = vpow.pop %v4357
    %v4359 = vmul.f32 %v4334, 1.442695
    %v4360 = vpow.pop %v4359
    %v4361 = vmul.f32 %v4335, 1.442695
    %v4362 = vpow.pop %v4361
    %v4363 = vmul.f32 %v4336, 1.442695
    %v4364 = vpow.pop %v4363
    %v4365 = vadd.f32 %v4338, 1.0
    %v4366 = vadd.f32 %v4340, 1.0
    %v4367 = vadd.f32 %v4342, 1.0
    %v4368 = vadd.f32 %v4344, 1.0
    %v4369 = vadd.f32 %v4346, 1.0
    %v4370 = vadd.f32 %v4348, 1.0
    %v4371 = vadd.f32 %v4350, 1.0
    %v4372 = vadd.f32 %v4352, 1.0
    %v4373 = vadd.f32 %v4354, 1.0
    %v4374 = vadd.f32 %v4356, 1.0
    %v4375 = vadd.f32 %v4358, 1.0
    %v4376 = vadd.f32 %v4360, 1.0
    %v4377 = vadd.f32 %v4362, 1.0
    %v4378 = vadd.f32 %v4364, 1.0
    %v4379 = vrcp.pop %v4365
    %v4380 = vmul.f32 1.0, %v4379
    %v4381 = vrcp.pop %v4366
    %v4382 = vmul.f32 1.0, %v4381
    %v4383 = vrcp.pop %v4367
    %v4384 = vmul.f32 1.0, %v4383
    %v4385 = vrcp.pop %v4368
    %v4386 = vmul.f32 1.0, %v4385
    %v4387 = vrcp.pop %v4369
    %v4388 = vmul.f32 1.0, %v4387
    %v4389 = vrcp.pop %v4370
    %v4390 = vmul.f32 1.0, %v4389
    %v4391 = vrcp.pop %v4371
    %v4392 = vmul.f32 1.0, %v4391
    %v4393 = vrcp.pop %v4372
    %v4394 = vmul.f32 1.0, %v4393
    %v4395 = vrcp.pop %v4373
    %v4396 = vmul.f32 1.0, %v4395
    %v4397 = vrcp.pop %v4374
    %v4398 = vmul.f32 1.0, %v4397
    %v4399 = vrcp.pop %v4375
    %v4400 = vmul.f32 1.0, %v4399
    %v4401 = vrcp.pop %v4376
    %v4402 = vmul.f32 1.0, %v4401
    %v4403 = vrcp.pop %v4377
    %v4404 = vmul.f32 1.0, %v4403
    %v4405 = vrcp.pop %v4378
    %v4406 = vmul.f32 1.0, %v4405
    %v4407 = vpack.c.bf16 %v4394, %v4380
    %v4408 = vpack.c.bf16 %v4396, %v4382
    %v4409 = vpack.c.bf16 %v4398, %v4384
    %v4410 = vpack.c.bf16 %v4400, %v4386
    %v4411 = vpack.c.bf16 %v4402, %v4388
    %v4412 = vpack.c.bf16 %v4404, %v4390
    %v4413 = vpack.c.bf16 %v4406, %v4392
    %v4421 = vunpack.c.l.b16 %v4407
    %v4422 = vunpack.c.l.b16 %v4408
    %v4423 = vunpack.c.l.b16 %v4409
    %v4424 = vunpack.c.l.b16 %v4410
    %v4425 = vunpack.c.l.b16 %v4411
    %v4426 = vunpack.c.l.b16 %v4412
    %v4427 = vunpack.c.l.b16 %v4413
    %v4428 = vunpack.c.h.b16 %v4407
    %v4429 = vunpack.c.h.b16 %v4408
    %v4430 = vunpack.c.h.b16 %v4409
    %v4431 = vunpack.c.h.b16 %v4410
    %v4432 = vunpack.c.h.b16 %v4411
    %v4433 = vunpack.c.h.b16 %v4412
    %v4434 = vunpack.c.h.b16 %v4413
    %v4435 = vpack.c.b16 %v4422, %v4421
    %v4436 = vpack.c.b16 %v4424, %v4423
    %v4437 = vpack.c.b16 %v4426, %v4425
    %v4438 = vpack.c.b16 %v4427, %v4427
    %v4439 = vpack.c.b16 %v4429, %v4428
    %v4440 = vpack.c.b16 %v4431, %v4430
    %v4441 = vpack.c.b16 %v4433, %v4432
    %v4442 = vpack.c.b16 %v4434, %v4434
    %4451 = vst [vmem:[#allocation13] sm:$0xff] %v4435
    %4452 = vst [vmem:[#allocation13 + $0x8] sm:$0xff] %v4436
    %4453 = vst [vmem:[#allocation13 + $0x10] sm:$0xff] %v4437
    %4454 = vst [vmem:[#allocation13 + $0x18] sm:$0xf] %v4438
    %4455 = vst [vmem:[#allocation13 + $0x1c] sm:$0xff] %v4439
    %4456 = vst [vmem:[#allocation13 + $0x24] sm:$0xff] %v4440
    %4457 = vst [vmem:[#allocation13 + $0x2c] sm:$0xff] %v4441
    %4458 = vst [vmem:[#allocation13 + $0x34] sm:$0xf] %v4442
    // Predicated region
    $region62: #{tpu_custom_call.1} parent=1 // pred_check
      _
    $region63: #{tpu_custom_call.1} parent=1 // pred_check_branch
      %4460 = sbr.rel (0) target = $region65
    $region64: #{tpu_custom_call.1} parent=1 // pred_region
      %s4462 = ssub.s32 896, 896
      %4463 = vsyncadd [#allocation4], %s4462
      %s4464 = sshll.u32 [#allocation13], 4
      %s4465 = int_to_ptr.vmem [resolvable:$true] %s4464
      %4470 = dma.vmem_to_hbm [thread:$0]  %s4465, 896, %s9, [#allocation4], 448, 448, 28
    $region65: #{tpu_custom_call.1} parent=1 // pred_fallthru
      _
    // Predicated region
    $region66: #{tpu_custom_call.1} parent=1 // pred_check
      _
    $region67: #{tpu_custom_call.1} parent=1 // pred_check_branch
      %4472 = sbr.rel (0) target = $region69
    $region68: #{tpu_custom_call.1} parent=1 // pred_region
      %4473 = dma.done [#allocation4], 896
    $region69: #{tpu_custom_call.1} parent=1 // pred_fallthru
      _
    %4474 = vsyncpa [#allocation3], 1
    %4475 = vsyncpa [#allocation6], 1
    %4476 = vsyncpa [#allocation9], 1
    %4477 = vsyncpa [#allocation12], 1
    %4478 = vsyncpa [#allocation4], 1

// kernel: tpu_custom_call.1
$region0: #{tpu_custom_call.1}
  #allocation0 [shape = 'u32[]', space=smem, size = 0x4, offset = 0x4, fixed_abs, tag = 'smem constant byte address 0x4 - core index']
  #allocation1 [shape = 'u32[144,128]{1,0:T(1,128)}', space=vmem, size = 0x12000, scoped, tag = 'internal scratch']
  %s0 = inlined_call_operand.hbm [shape: bf16[16,896], index: 0, kind: input, shape index: {}]
  %s1 = inlined_call_operand.hbm [shape: bf16[896,512], index: 1, kind: input, shape index: {}]
  %s2 = inlined_call_operand.hbm [shape: f32[1,512], index: 2, kind: input, shape index: {}]
  %s3 = inlined_call_operand.hbm [shape: bf16[512,128], index: 3, kind: input, shape index: {}]
  %s4 = inlined_call_operand.vmem [shape: f32[1,128], index: 4, kind: input, shape index: {}]
  %s5 = inlined_call_operand.hbm [shape: bf16[128,512], index: 5, kind: input, shape index: {}]
  %s6 = inlined_call_operand.vmem [shape: f32[1,512], index: 6, kind: input, shape index: {}]
  %s7 = inlined_call_operand.hbm [shape: bf16[512,896], index: 7, kind: input, shape index: {}]
  %s8 = inlined_call_operand.vmem [shape: f32[1,896], index: 8, kind: input, shape index: {}]
  %s9 = inlined_call_operand.hbm [shape: bf16[16,896], index: 9, kind: output, shape index: {}]
  %s10 = sld [smem:[#allocation0]]
  $region70: #{tpu_custom_call.1} parent=0
    _
  %s12 = ssub.s32 1, %s10
  %s13 = scalar_select 0, %s12, %s10
  $region1: #{tpu_custom_call.1} parent=0
    #allocation2 [shape = 'u8[28672]{0}', space=vmem, size = 0x7000, scoped, tag = 'input window, operand 0, single buffered']
    #allocation3 [shape = 's32[1]{0}', space=sflag, size = 0x4, scoped, tag = 'scoped memory for tpu_custom_call.1']
    #allocation4 [shape = 's32[1]{0}', space=sflag, size = 0x4, scoped, tag = 'scoped memory for tpu_custom_call.1']
    #allocation5 [shape = 'u8[917504]{0}', space=vmem, size = 0xe0000, scoped, tag = 'input window, operand 1, single buffered']
    #allocation6 [shape = 's32[1]{0}', space=sflag, size = 0x4, scoped, tag = 'scoped memory for tpu_custom_call.1']
    #allocation7 [shape = 'u8[2048]{0}', space=vmem, size = 0x800, scoped, tag = 'input window, operand 2, single buffered']
    #allocation8 [shape = 'u8[131072]{0}', space=vmem, size = 0x20000, scoped, tag = 'input window, operand 3, single buffered']
    #allocation9 [shape = 's32[1]{0}', space=sflag, size = 0x4, scoped, tag = 'scoped memory for tpu_custom_call.1']
    #allocation10 [shape = 'u8[131072]{0}', space=vmem, size = 0x20000, scoped, tag = 'input window, operand 5, single buffered']
    #allocation11 [shape = 'u8[917504]{0}', space=vmem, size = 0xe0000, scoped, tag = 'input window, operand 7, single buffered']
    #allocation12 [shape = 's32[1]{0}', space=sflag, size = 0x4, scoped, tag = 'scoped memory for tpu_custom_call.1']
    #allocation13 [shape = 'u8[28672]{0}', space=vmem, size = 0x7000, scoped, tag = 'output window, operand 0, single buffered']
    %14 = vsyncpa [#allocation3], 0
    %15 = vsyncpa [#allocation6], 0
    %16 = vsyncpa [#allocation9], 0
    %17 = vsyncpa [#allocation12], 0
    %18 = vsyncpa [#allocation4], 0
    // Predicated region
    $region2: #{tpu_custom_call.1} parent=1 // pred_check
      _
    $region3: #{tpu_custom_call.1} parent=1 // pred_check_branch
      %20 = sbr.rel (0) target = $region5
    $region4: #{tpu_custom_call.1} parent=1 // pred_region
      %s22 = ssub.s32 896, 896
      %23 = vsyncadd [#allocation3], %s22
      %s24 = sshll.u32 [#allocation2], 4
      %s25 = int_to_ptr.vmem [resolvable:$true] %s24
      %30 = dma.hbm_to_vmem [thread:$0]  %s0, 896, %s25, [#allocation3], 448, 448, 28
    $region5: #{tpu_custom_call.1} parent=1 // pred_fallthru
      _
    // Predicated region
    $region6: #{tpu_custom_call.1} parent=1 // pred_check
      _
    $region7: #{tpu_custom_call.1} parent=1 // pred_check_branch
      %32 = sbr.rel (0) target = $region9
    $region8: #{tpu_custom_call.1} parent=1 // pred_region
      %s34 = ssub.s32 28672, 28672
      %35 = vsyncadd [#allocation6], %s34
      %s36 = sshll.u32 [#allocation5], 4
      %s37 = int_to_ptr.vmem [resolvable:$true] %s36
      %42 = dma.hbm_to_vmem [thread:$0]  %s1, 28672, %s37, [#allocation6], 256, 256, 16
    $region9: #{tpu_custom_call.1} parent=1 // pred_fallthru
      _
    // Predicated region
    $region10: #{tpu_custom_call.1} parent=1 // pred_check
      _
    $region11: #{tpu_custom_call.1} parent=1 // pred_check_branch
      %44 = sbr.rel (0) target = $region13
    $region12: #{tpu_custom_call.1} parent=1 // pred_region
      %s46 = ssub.s32 64, 64
      %47 = vsyncadd [#allocation6], %s46
      %s49 = sshll.u32 [#allocation7], 4
      %s50 = int_to_ptr.vmem [resolvable:$true] %s49
      %52 = dma.hbm_to_vmem [thread:$0]  %s2, 64, %s50, [#allocation6]
    $region13: #{tpu_custom_call.1} parent=1 // pred_fallthru
      _
    // Predicated region
    $region14: #{tpu_custom_call.1} parent=1 // pred_check
      _
    $region15: #{tpu_custom_call.1} parent=1 // pred_check_branch
      %54 = sbr.rel (0) target = $region17
    $region16: #{tpu_custom_call.1} parent=1 // pred_region
      %s56 = ssub.s32 4096, 4096
      %57 = vsyncadd [#allocation9], %s56
      %s58 = sshll.u32 [#allocation8], 4
      %s59 = int_to_ptr.vmem [resolvable:$true] %s58
      %64 = dma.hbm_to_vmem [thread:$0]  %s3, 4096, %s59, [#allocation9], 64, 64, 4
    $region17: #{tpu_custom_call.1} parent=1 // pred_fallthru
      _
    // Predicated region
    $region18: #{tpu_custom_call.1} parent=1 // pred_check
      _
    $region19: #{tpu_custom_call.1} parent=1 // pred_check_branch
      %66 = sbr.rel (0) target = $region21
    $region20: #{tpu_custom_call.1} parent=1 // pred_region
      _
    $region21: #{tpu_custom_call.1} parent=1 // pred_fallthru
      _
    // Predicated region
    $region22: #{tpu_custom_call.1} parent=1 // pred_check
      _
    $region23: #{tpu_custom_call.1} parent=1 // pred_check_branch
      %68 = sbr.rel (0) target = $region25
    $region24: #{tpu_custom_call.1} parent=1 // pred_region
      %s70 = ssub.s32 4096, 4096
      %71 = vsyncadd [#allocation9], %s70
      %s72 = sshll.u32 [#allocation10], 4
      %s73 = int_to_ptr.vmem [resolvable:$true] %s72
      %78 = dma.hbm_to_vmem [thread:$0]  %s5, 4096, %s73, [#allocation9], 256, 256, 16
    $region25: #{tpu_custom_call.1} parent=1 // pred_fallthru
      _
    // Predicated region
    $region26: #{tpu_custom_call.1} parent=1 // pred_check
      _
    $region27: #{tpu_custom_call.1} parent=1 // pred_check_branch
      %80 = sbr.rel (0) target = $region29
    $region28: #{tpu_custom_call.1} parent=1 // pred_region
      _
    $region29: #{tpu_custom_call.1} parent=1 // pred_fallthru
      _
    // Predicated region
    $region30: #{tpu_custom_call.1} parent=1 // pred_check
      _
    $region31: #{tpu_custom_call.1} parent=1 // pred_check_branch
      %82 = sbr.rel (0) target = $region33
    $region32: #{tpu_custom_call.1} parent=1 // pred_region
      %s84 = ssub.s32 28672, 28672
      %85 = vsyncadd [#allocation12], %s84
      %s86 = sshll.u32 [#allocation11], 4
      %s87 = int_to_ptr.vmem [resolvable:$true] %s86
      %92 = dma.hbm_to_vmem [thread:$0]  %s7, 28672, %s87, [#allocation12], 448, 448, 28
    $region33: #{tpu_custom_call.1} parent=1 // pred_fallthru
      _
    // Predicated region
    $region34: #{tpu_custom_call.1} parent=1 // pred_check
      _
    $region35: #{tpu_custom_call.1} parent=1 // pred_check_branch
      %94 = sbr.rel (0) target = $region37
    $region36: #{tpu_custom_call.1} parent=1 // pred_region
      _
    $region37: #{tpu_custom_call.1} parent=1 // pred_fallthru
      _
    // Predicated region
    $region38: #{tpu_custom_call.1} parent=1 // pred_check
      _
    $region39: #{tpu_custom_call.1} parent=1 // pred_check_branch
      %96 = sbr.rel (0) target = $region41
    $region40: #{tpu_custom_call.1} parent=1 // pred_region
      %97 = dma.done [#allocation3], 896
    $region41: #{tpu_custom_call.1} parent=1 // pred_fallthru
      _
    // Predicated region
    $region42: #{tpu_custom_call.1} parent=1 // pred_check
      _
    $region43: #{tpu_custom_call.1} parent=1 // pred_check_branch
      %99 = sbr.rel (0) target = $region45
    $region44: #{tpu_custom_call.1} parent=1 // pred_region
      %100 = dma.done [#allocation6], 28672
    $region45: #{tpu_custom_call.1} parent=1 // pred_fallthru
      _
    // Predicated region
    $region46: #{tpu_custom_call.1} parent=1 // pred_check
      _
    $region47: #{tpu_custom_call.1} parent=1 // pred_check_branch
      %102 = sbr.rel (0) target = $region49
    $region48: #{tpu_custom_call.1} parent=1 // pred_region
      %103 = dma.done [#allocation6], 64
    $region49: #{tpu_custom_call.1} parent=1 // pred_fallthru
      _
    // Predicated region
    $region50: #{tpu_custom_call.1} parent=1 // pred_check
      _
    $region51: #{tpu_custom_call.1} parent=1 // pred_check_branch
      %105 = sbr.rel (0) target = $region53
    $region52: #{tpu_custom_call.1} parent=1 // pred_region
      %106 = dma.done [#allocation9], 4096
    $region53: #{tpu_custom_call.1} parent=1 // pred_fallthru
      _
    // Predicated region
    $region54: #{tpu_custom_call.1} parent=1 // pred_check
      _
    $region55: #{tpu_custom_call.1} parent=1 // pred_check_branch
      %108 = sbr.rel (0) target = $region57
    $region56: #{tpu_custom_call.1} parent=1 // pred_region
      %109 = dma.done [#allocation9], 4096
    $region57: #{tpu_custom_call.1} parent=1 // pred_fallthru
      _
    // Predicated region
    $region58: #{tpu_custom_call.1} parent=1 // pred_check
      _
    $region59: #{tpu_custom_call.1} parent=1 // pred_check_branch
      %111 = sbr.rel (0) target = $region61
    $region60: #{tpu_custom_call.1} parent=1 // pred_region
      %112 = dma.done [#allocation12], 28672
    $region61: #{tpu_custom_call.1} parent=1 // pred_fallthru
      _
    %v114 = vld [vmem:[#allocation2] sm:$0xff]
    %v115 = vld [vmem:[#allocation2 + $0x8] sm:$0xff]
    %v116 = vld [vmem:[#allocation2 + $0x10] sm:$0xff]
    %v117 = vld [vmem:[#allocation2 + $0x18] sm:$0xf]
    %v118 = vld [vmem:[#allocation2 + $0x1c] sm:$0xff]
    %v119 = vld [vmem:[#allocation2 + $0x24] sm:$0xff]
    %v120 = vld [vmem:[#allocation2 + $0x2c] sm:$0xff]
    %v121 = vld [vmem:[#allocation2 + $0x34] sm:$0xf]
    %v122 = vld [vmem:[#allocation5] sm:$0xff]
    %v123 = vld [vmem:[#allocation5 + $0x8] sm:$0xff]
    %v124 = vld [vmem:[#allocation5 + $0x10] sm:$0xff]
    %v125 = vld [vmem:[#allocation5 + $0x18] sm:$0xff]
    %v126 = vld [vmem:[#allocation5 + $0x20] sm:$0xff]
    %v127 = vld [vmem:[#allocation5 + $0x28] sm:$0xff]
    %v128 = vld [vmem:[#allocation5 + $0x30] sm:$0xff]
    %v129 = vld [vmem:[#allocation5 + $0x38] sm:$0xff]
    %v130 = vld [vmem:[#allocation5 + $0x40] sm:$0xff]
    %v131 = vld [vmem:[#allocation5 + $0x48] sm:$0xff]
    %v132 = vld [vmem:[#allocation5 + $0x50] sm:$0xff]
    %v133 = vld [vmem:[#allocation5 + $0x58] sm:$0xff]
    %v134 = vld [vmem:[#allocation5 + $0x60] sm:$0xff]
    %v135 = vld [vmem:[#allocation5 + $0x68] sm:$0xff]
    %v136 = vld [vmem:[#allocation5 + $0x70] sm:$0xff]
    %v137 = vld [vmem:[#allocation5 + $0x78] sm:$0xff]
    %v138 = vld [vmem:[#allocation5 + $0x80] sm:$0xff]
    %v139 = vld [vmem:[#allocation5 + $0x88] sm:$0xff]
    %v140 = vld [vmem:[#allocation5 + $0x90] sm:$0xff]
    %v141 = vld [vmem:[#allocation5 + $0x98] sm:$0xff]
    %v142 = vld [vmem:[#allocation5 + $0xa0] sm:$0xff]
    %v143 = vld [vmem:[#allocation5 + $0xa8] sm:$0xff]
    %v144 = vld [vmem:[#allocation5 + $0xb0] sm:$0xff]
    %v145 = vld [vmem:[#allocation5 + $0xb8] sm:$0xff]
    %v146 = vld [vmem:[#allocation5 + $0xc0] sm:$0xff]
    %v147 = vld [vmem:[#allocation5 + $0xc8] sm:$0xff]
    %v148 = vld [vmem:[#allocation5 + $0xd0] sm:$0xff]
    %v149 = vld [vmem:[#allocation5 + $0xd8] sm:$0xff]
    %v150 = vld [vmem:[#allocation5 + $0xe0] sm:$0xff]
    %v151 = vld [vmem:[#allocation5 + $0xe8] sm:$0xff]
    %v152 = vld [vmem:[#allocation5 + $0xf0] sm:$0xff]
    %v153 = vld [vmem:[#allocation5 + $0xf8] sm:$0xff]
    %v154 = vld [vmem:[#allocation5 + $0x100] sm:$0xff]
    %v155 = vld [vmem:[#allocation5 + $0x108] sm:$0xff]
    %v156 = vld [vmem:[#allocation5 + $0x110] sm:$0xff]
    %v157 = vld [vmem:[#allocation5 + $0x118] sm:$0xff]
    %v158 = vld [vmem:[#allocation5 + $0x120] sm:$0xff]
    %v159 = vld [vmem:[#allocation5 + $0x128] sm:$0xff]
    %v160 = vld [vmem:[#allocation5 + $0x130] sm:$0xff]
    %v161 = vld [vmem:[#allocation5 + $0x138] sm:$0xff]
    %v162 = vld [vmem:[#allocation5 + $0x140] sm:$0xff]
    %v163 = vld [vmem:[#allocation5 + $0x148] sm:$0xff]
    %v164 = vld [vmem:[#allocation5 + $0x150] sm:$0xff]
    %v165 = vld [vmem:[#allocation5 + $0x158] sm:$0xff]
    %v166 = vld [vmem:[#allocation5 + $0x160] sm:$0xff]
    %v167 = vld [vmem:[#allocation5 + $0x168] sm:$0xff]
    %v168 = vld [vmem:[#allocation5 + $0x170] sm:$0xff]
    %v169 = vld [vmem:[#allocation5 + $0x178] sm:$0xff]
    %v170 = vld [vmem:[#allocation5 + $0x180] sm:$0xff]
    %v171 = vld [vmem:[#allocation5 + $0x188] sm:$0xff]
    %v172 = vld [vmem:[#allocation5 + $0x190] sm:$0xff]
    %v173 = vld [vmem:[#allocation5 + $0x198] sm:$0xff]
    %v174 = vld [vmem:[#allocation5 + $0x1a0] sm:$0xff]
    %v175 = vld [vmem:[#allocation5 + $0x1a8] sm:$0xff]
    %v176 = vld [vmem:[#allocation5 + $0x1b0] sm:$0xff]
    %v177 = vld [vmem:[#allocation5 + $0x1b8] sm:$0xff]
    %v178 = vld [vmem:[#allocation5 + $0x1c0] sm:$0xff]
    %v179 = vld [vmem:[#allocation5 + $0x1c8] sm:$0xff]
    %v180 = vld [vmem:[#allocation5 + $0x1d0] sm:$0xff]
    %v181 = vld [vmem:[#allocation5 + $0x1d8] sm:$0xff]
    %v182 = vld [vmem:[#allocation5 + $0x1e0] sm:$0xff]
    %v183 = vld [vmem:[#allocation5 + $0x1e8] sm:$0xff]
    %v184 = vld [vmem:[#allocation5 + $0x1f0] sm:$0xff]
    %v185 = vld [vmem:[#allocation5 + $0x1f8] sm:$0xff]
    %v186 = vld [vmem:[#allocation5 + $0x200] sm:$0xff]
    %v187 = vld [vmem:[#allocation5 + $0x208] sm:$0xff]
    %v188 = vld [vmem:[#allocation5 + $0x210] sm:$0xff]
    %v189 = vld [vmem:[#allocation5 + $0x218] sm:$0xff]
    %v190 = vld [vmem:[#allocation5 + $0x220] sm:$0xff]
    %v191 = vld [vmem:[#allocation5 + $0x228] sm:$0xff]
    %v192 = vld [vmem:[#allocation5 + $0x230] sm:$0xff]
    %v193 = vld [vmem:[#allocation5 + $0x238] sm:$0xff]
    %v194 = vld [vmem:[#allocation5 + $0x240] sm:$0xff]
    %v195 = vld [vmem:[#allocation5 + $0x248] sm:$0xff]
    %v196 = vld [vmem:[#allocation5 + $0x250] sm:$0xff]
    %v197 = vld [vmem:[#allocation5 + $0x258] sm:$0xff]
    %v198 = vld [vmem:[#allocation5 + $0x260] sm:$0xff]
    %v199 = vld [vmem:[#allocation5 + $0x268] sm:$0xff]
    %v200 = vld [vmem:[#allocation5 + $0x270] sm:$0xff]
    %v201 = vld [vmem:[#allocation5 + $0x278] sm:$0xff]
    %v202 = vld [vmem:[#allocation5 + $0x280] sm:$0xff]
    %v203 = vld [vmem:[#allocation5 + $0x288] sm:$0xff]
    %v204 = vld [vmem:[#allocation5 + $0x290] sm:$0xff]
    %v205 = vld [vmem:[#allocation5 + $0x298] sm:$0xff]
    %v206 = vld [vmem:[#allocation5 + $0x2a0] sm:$0xff]
    %v207 = vld [vmem:[#allocation5 + $0x2a8] sm:$0xff]
    %v208 = vld [vmem:[#allocation5 + $0x2b0] sm:$0xff]
    %v209 = vld [vmem:[#allocation5 + $0x2b8] sm:$0xff]
    %v210 = vld [vmem:[#allocation5 + $0x2c0] sm:$0xff]
    %v211 = vld [vmem:[#allocation5 + $0x2c8] sm:$0xff]
    %v212 = vld [vmem:[#allocation5 + $0x2d0] sm:$0xff]
    %v213 = vld [vmem:[#allocation5 + $0x2d8] sm:$0xff]
    %v214 = vld [vmem:[#allocation5 + $0x2e0] sm:$0xff]
    %v215 = vld [vmem:[#allocation5 + $0x2e8] sm:$0xff]
    %v216 = vld [vmem:[#allocation5 + $0x2f0] sm:$0xff]
    %v217 = vld [vmem:[#allocation5 + $0x2f8] sm:$0xff]
    %v218 = vld [vmem:[#allocation5 + $0x300] sm:$0xff]
    %v219 = vld [vmem:[#allocation5 + $0x308] sm:$0xff]
    %v220 = vld [vmem:[#allocation5 + $0x310] sm:$0xff]
    %v221 = vld [vmem:[#allocation5 + $0x318] sm:$0xff]
    %v222 = vld [vmem:[#allocation5 + $0x320] sm:$0xff]
    %v223 = vld [vmem:[#allocation5 + $0x328] sm:$0xff]
    %v224 = vld [vmem:[#allocation5 + $0x330] sm:$0xff]
    %v225 = vld [vmem:[#allocation5 + $0x338] sm:$0xff]
    %v226 = vld [vmem:[#allocation5 + $0x340] sm:$0xff]
    %v227 = vld [vmem:[#allocation5 + $0x348] sm:$0xff]
    %v228 = vld [vmem:[#allocation5 + $0x350] sm:$0xff]
    %v229 = vld [vmem:[#allocation5 + $0x358] sm:$0xff]
    %v230 = vld [vmem:[#allocation5 + $0x360] sm:$0xff]
    %v231 = vld [vmem:[#allocation5 + $0x368] sm:$0xff]
    %v232 = vld [vmem:[#allocation5 + $0x370] sm:$0xff]
    %v233 = vld [vmem:[#allocation5 + $0x378] sm:$0xff]
    %v234 = vld [vmem:[#allocation5 + $0x380] sm:$0xff]
    %v235 = vld [vmem:[#allocation5 + $0x388] sm:$0xff]
    %v236 = vld [vmem:[#allocation5 + $0x390] sm:$0xff]
    %v237 = vld [vmem:[#allocation5 + $0x398] sm:$0xff]
    %v238 = vld [vmem:[#allocation5 + $0x3a0] sm:$0xff]
    %v239 = vld [vmem:[#allocation5 + $0x3a8] sm:$0xff]
    %v240 = vld [vmem:[#allocation5 + $0x3b0] sm:$0xff]
    %v241 = vld [vmem:[#allocation5 + $0x3b8] sm:$0xff]
    %v242 = vld [vmem:[#allocation5 + $0x3c0] sm:$0xff]
    %v243 = vld [vmem:[#allocation5 + $0x3c8] sm:$0xff]
    %v244 = vld [vmem:[#allocation5 + $0x3d0] sm:$0xff]
    %v245 = vld [vmem:[#allocation5 + $0x3d8] sm:$0xff]
    %v246 = vld [vmem:[#allocation5 + $0x3e0] sm:$0xff]
    %v247 = vld [vmem:[#allocation5 + $0x3e8] sm:$0xff]
    %v248 = vld [vmem:[#allocation5 + $0x3f0] sm:$0xff]
    %v249 = vld [vmem:[#allocation5 + $0x3f8] sm:$0xff]
    %v250 = vld [vmem:[#allocation5 + $0x400] sm:$0xff]
    %v251 = vld [vmem:[#allocation5 + $0x408] sm:$0xff]
    %v252 = vld [vmem:[#allocation5 + $0x410] sm:$0xff]
    %v253 = vld [vmem:[#allocation5 + $0x418] sm:$0xff]
    %v254 = vld [vmem:[#allocation5 + $0x420] sm:$0xff]
    %v255 = vld [vmem:[#allocation5 + $0x428] sm:$0xff]
    %v256 = vld [vmem:[#allocation5 + $0x430] sm:$0xff]
    %v257 = vld [vmem:[#allocation5 + $0x438] sm:$0xff]
    %v258 = vld [vmem:[#allocation5 + $0x440] sm:$0xff]
    %v259 = vld [vmem:[#allocation5 + $0x448] sm:$0xff]
    %v260 = vld [vmem:[#allocation5 + $0x450] sm:$0xff]
    %v261 = vld [vmem:[#allocation5 + $0x458] sm:$0xff]
    %v262 = vld [vmem:[#allocation5 + $0x460] sm:$0xff]
    %v263 = vld [vmem:[#allocation5 + $0x468] sm:$0xff]
    %v264 = vld [vmem:[#allocation5 + $0x470] sm:$0xff]
    %v265 = vld [vmem:[#allocation5 + $0x478] sm:$0xff]
    %v266 = vld [vmem:[#allocation5 + $0x480] sm:$0xff]
    %v267 = vld [vmem:[#allocation5 + $0x488] sm:$0xff]
    %v268 = vld [vmem:[#allocation5 + $0x490] sm:$0xff]
    %v269 = vld [vmem:[#allocation5 + $0x498] sm:$0xff]
    %v270 = vld [vmem:[#allocation5 + $0x4a0] sm:$0xff]
    %v271 = vld [vmem:[#allocation5 + $0x4a8] sm:$0xff]
    %v272 = vld [vmem:[#allocation5 + $0x4b0] sm:$0xff]
    %v273 = vld [vmem:[#allocation5 + $0x4b8] sm:$0xff]
    %v274 = vld [vmem:[#allocation5 + $0x4c0] sm:$0xff]
    %v275 = vld [vmem:[#allocation5 + $0x4c8] sm:$0xff]
    %v276 = vld [vmem:[#allocation5 + $0x4d0] sm:$0xff]
    %v277 = vld [vmem:[#allocation5 + $0x4d8] sm:$0xff]
    %v278 = vld [vmem:[#allocation5 + $0x4e0] sm:$0xff]
    %v279 = vld [vmem:[#allocation5 + $0x4e8] sm:$0xff]
    %v280 = vld [vmem:[#allocation5 + $0x4f0] sm:$0xff]
    %v281 = vld [vmem:[#allocation5 + $0x4f8] sm:$0xff]
    %v282 = vld [vmem:[#allocation5 + $0x500] sm:$0xff]
    %v283 = vld [vmem:[#allocation5 + $0x508] sm:$0xff]
    %v284 = vld [vmem:[#allocation5 + $0x510] sm:$0xff]
    %v285 = vld [vmem:[#allocation5 + $0x518] sm:$0xff]
    %v286 = vld [vmem:[#allocation5 + $0x520] sm:$0xff]
    %v287 = vld [vmem:[#allocation5 + $0x528] sm:$0xff]
    %v288 = vld [vmem:[#allocation5 + $0x530] sm:$0xff]
    %v289 = vld [vmem:[#allocation5 + $0x538] sm:$0xff]
    %v290 = vld [vmem:[#allocation5 + $0x540] sm:$0xff]
    %v291 = vld [vmem:[#allocation5 + $0x548] sm:$0xff]
    %v292 = vld [vmem:[#allocation5 + $0x550] sm:$0xff]
    %v293 = vld [vmem:[#allocation5 + $0x558] sm:$0xff]
    %v294 = vld [vmem:[#allocation5 + $0x560] sm:$0xff]
    %v295 = vld [vmem:[#allocation5 + $0x568] sm:$0xff]
    %v296 = vld [vmem:[#allocation5 + $0x570] sm:$0xff]
    %v297 = vld [vmem:[#allocation5 + $0x578] sm:$0xff]
    %v298 = vld [vmem:[#allocation5 + $0x580] sm:$0xff]
    %v299 = vld [vmem:[#allocation5 + $0x588] sm:$0xff]
    %v300 = vld [vmem:[#allocation5 + $0x590] sm:$0xff]
    %v301 = vld [vmem:[#allocation5 + $0x598] sm:$0xff]
    %v302 = vld [vmem:[#allocation5 + $0x5a0] sm:$0xff]
    %v303 = vld [vmem:[#allocation5 + $0x5a8] sm:$0xff]
    %v304 = vld [vmem:[#allocation5 + $0x5b0] sm:$0xff]
    %v305 = vld [vmem:[#allocation5 + $0x5b8] sm:$0xff]
    %v306 = vld [vmem:[#allocation5 + $0x5c0] sm:$0xff]
    %v307 = vld [vmem:[#allocation5 + $0x5c8] sm:$0xff]
    %v308 = vld [vmem:[#allocation5 + $0x5d0] sm:$0xff]
    %v309 = vld [vmem:[#allocation5 + $0x5d8] sm:$0xff]
    %v310 = vld [vmem:[#allocation5 + $0x5e0] sm:$0xff]
    %v311 = vld [vmem:[#allocation5 + $0x5e8] sm:$0xff]
    %v312 = vld [vmem:[#allocation5 + $0x5f0] sm:$0xff]
    %v313 = vld [vmem:[#allocation5 + $0x5f8] sm:$0xff]
    %v314 = vld [vmem:[#allocation5 + $0x600] sm:$0xff]
    %v315 = vld [vmem:[#allocation5 + $0x608] sm:$0xff]
    %v316 = vld [vmem:[#allocation5 + $0x610] sm:$0xff]
    %v317 = vld [vmem:[#allocation5 + $0x618] sm:$0xff]
    %v318 = vld [vmem:[#allocation5 + $0x620] sm:$0xff]
    %v319 = vld [vmem:[#allocation5 + $0x628] sm:$0xff]
    %v320 = vld [vmem:[#allocation5 + $0x630] sm:$0xff]
    %v321 = vld [vmem:[#allocation5 + $0x638] sm:$0xff]
    %v322 = vld [vmem:[#allocation5 + $0x640] sm:$0xff]
    %v323 = vld [vmem:[#allocation5 + $0x648] sm:$0xff]
    %v324 = vld [vmem:[#allocation5 + $0x650] sm:$0xff]
    %v325 = vld [vmem:[#allocation5 + $0x658] sm:$0xff]
    %v326 = vld [vmem:[#allocation5 + $0x660] sm:$0xff]
    %v327 = vld [vmem:[#allocation5 + $0x668] sm:$0xff]
    %v328 = vld [vmem:[#allocation5 + $0x670] sm:$0xff]
    %v329 = vld [vmem:[#allocation5 + $0x678] sm:$0xff]
    %v330 = vld [vmem:[#allocation5 + $0x680] sm:$0xff]
    %v331 = vld [vmem:[#allocation5 + $0x688] sm:$0xff]
    %v332 = vld [vmem:[#allocation5 + $0x690] sm:$0xff]
    %v333 = vld [vmem:[#allocation5 + $0x698] sm:$0xff]
    %v334 = vld [vmem:[#allocation5 + $0x6a0] sm:$0xff]
    %v335 = vld [vmem:[#allocation5 + $0x6a8] sm:$0xff]
    %v336 = vld [vmem:[#allocation5 + $0x6b0] sm:$0xff]
    %v337 = vld [vmem:[#allocation5 + $0x6b8] sm:$0xff]
    %v338 = vld [vmem:[#allocation5 + $0x6c0] sm:$0xff]
    %v339 = vld [vmem:[#allocation5 + $0x6c8] sm:$0xff]
    %v340 = vld [vmem:[#allocation5 + $0x6d0] sm:$0xff]
    %v341 = vld [vmem:[#allocation5 + $0x6d8] sm:$0xff]
    %v342 = vld [vmem:[#allocation5 + $0x6e0] sm:$0xff]
    %v343 = vld [vmem:[#allocation5 + $0x6e8] sm:$0xff]
    %v344 = vld [vmem:[#allocation5 + $0x6f0] sm:$0xff]
    %v345 = vld [vmem:[#allocation5 + $0x6f8] sm:$0xff]
    %v346 = vld [vmem:[#allocation7] sm:$0xf]
    %v348 = vlaneseq
    %v349 = vshrl.u32 %v348, 7
    %v350 = vsub.s32 0, %v349
    %v351 = vrot.slane %v346, %v350
    %v352 = vlaneseq
    %v353 = vshrl.u32 %v352, 7
    %v354 = vsub.s32 1, %v353
    %v355 = vrot.slane %v346, %v354
    %v356 = vlaneseq
    %v357 = vshrl.u32 %v356, 7
    %v358 = vsub.s32 2, %v357
    %v359 = vrot.slane %v346, %v358
    %v360 = vlaneseq
    %v361 = vshrl.u32 %v360, 7
    %v362 = vsub.s32 3, %v361
    %v363 = vrot.slane %v346, %v362
    %v376 = vunpack.c.l.b16 %v114
    %v377 = vunpack.c.h.b16 %v114
    %v378 = vunpack.c.l.b16 %v115
    %v379 = vunpack.c.h.b16 %v115
    %v380 = vunpack.c.l.b16 %v116
    %v381 = vunpack.c.h.b16 %v116
    %v382 = vunpack.c.l.b16 %v117
    %v383 = vunpack.c.l.b16 %v118
    %v384 = vunpack.c.h.b16 %v118
    %v385 = vunpack.c.l.b16 %v119
    %v386 = vunpack.c.h.b16 %v119
    %v387 = vunpack.c.l.b16 %v120
    %v388 = vunpack.c.h.b16 %v120
    %v389 = vunpack.c.l.b16 %v121
    %v390 = vpack.c.b16 %v383, %v376
    %v391 = vpack.c.b16 %v384, %v377
    %v392 = vpack.c.b16 %v385, %v378
    %v393 = vpack.c.b16 %v386, %v379
    %v394 = vpack.c.b16 %v387, %v380
    %v395 = vpack.c.b16 %v388, %v381
    %v396 = vpack.c.b16 %v389, %v382
    %v628 = vunpack.c.l.b16 %v122
    %v629 = vunpack.c.h.b16 %v122
    %v630 = vunpack.c.l.b16 %v123
    %v631 = vunpack.c.h.b16 %v123
    %v632 = vunpack.c.l.b16 %v124
    %v633 = vunpack.c.h.b16 %v124
    %v634 = vunpack.c.l.b16 %v125
    %v635 = vunpack.c.h.b16 %v125
    %v636 = vunpack.c.l.b16 %v126
    %v637 = vunpack.c.h.b16 %v126
    %v638 = vunpack.c.l.b16 %v127
    %v639 = vunpack.c.h.b16 %v127
    %v640 = vunpack.c.l.b16 %v128
    %v641 = vunpack.c.h.b16 %v128
    %v642 = vunpack.c.l.b16 %v129
    %v643 = vunpack.c.h.b16 %v129
    %v644 = vunpack.c.l.b16 %v130
    %v645 = vunpack.c.h.b16 %v130
    %v646 = vunpack.c.l.b16 %v131
    %v647 = vunpack.c.h.b16 %v131
    %v648 = vunpack.c.l.b16 %v132
    %v649 = vunpack.c.h.b16 %v132
    %v650 = vunpack.c.l.b16 %v133
    %v651 = vunpack.c.h.b16 %v133
    %v652 = vunpack.c.l.b16 %v134
    %v653 = vunpack.c.h.b16 %v134
    %v654 = vunpack.c.l.b16 %v135
    %v655 = vunpack.c.h.b16 %v135
    %v656 = vunpack.c.l.b16 %v136
    %v657 = vunpack.c.h.b16 %v136
    %v658 = vunpack.c.l.b16 %v137
    %v659 = vunpack.c.h.b16 %v137
    %v660 = vunpack.c.l.b16 %v138
    %v661 = vunpack.c.h.b16 %v138
    %v662 = vunpack.c.l.b16 %v139
    %v663 = vunpack.c.h.b16 %v139
    %v664 = vunpack.c.l.b16 %v140
    %v665 = vunpack.c.h.b16 %v140
    %v666 = vunpack.c.l.b16 %v141
    %v667 = vunpack.c.h.b16 %v141
    %v668 = vunpack.c.l.b16 %v142
    %v669 = vunpack.c.h.b16 %v142
    %v670 = vunpack.c.l.b16 %v143
    %v671 = vunpack.c.h.b16 %v143
    %v672 = vunpack.c.l.b16 %v144
    %v673 = vunpack.c.h.b16 %v144
    %v674 = vunpack.c.l.b16 %v145
    %v675 = vunpack.c.h.b16 %v145
    %v676 = vunpack.c.l.b16 %v146
    %v677 = vunpack.c.h.b16 %v146
    %v678 = vunpack.c.l.b16 %v147
    %v679 = vunpack.c.h.b16 %v147
    %v680 = vunpack.c.l.b16 %v148
    %v681 = vunpack.c.h.b16 %v148
    %v682 = vunpack.c.l.b16 %v149
    %v683 = vunpack.c.h.b16 %v149
    %v684 = vunpack.c.l.b16 %v150
    %v685 = vunpack.c.h.b16 %v150
    %v686 = vunpack.c.l.b16 %v151
    %v687 = vunpack.c.h.b16 %v151
    %v688 = vunpack.c.l.b16 %v152
    %v689 = vunpack.c.h.b16 %v152
    %v690 = vunpack.c.l.b16 %v153
    %v691 = vunpack.c.h.b16 %v153
    %v692 = vunpack.c.l.b16 %v154
    %v693 = vunpack.c.h.b16 %v154
    %v694 = vunpack.c.l.b16 %v155
    %v695 = vunpack.c.h.b16 %v155
    %v696 = vunpack.c.l.b16 %v156
    %v697 = vunpack.c.h.b16 %v156
    %v698 = vunpack.c.l.b16 %v157
    %v699 = vunpack.c.h.b16 %v157
    %v700 = vunpack.c.l.b16 %v158
    %v701 = vunpack.c.h.b16 %v158
    %v702 = vunpack.c.l.b16 %v159
    %v703 = vunpack.c.h.b16 %v159
    %v704 = vunpack.c.l.b16 %v160
    %v705 = vunpack.c.h.b16 %v160
    %v706 = vunpack.c.l.b16 %v161
    %v707 = vunpack.c.h.b16 %v161
    %v708 = vunpack.c.l.b16 %v162
    %v709 = vunpack.c.h.b16 %v162
    %v710 = vunpack.c.l.b16 %v163
    %v711 = vunpack.c.h.b16 %v163
    %v712 = vunpack.c.l.b16 %v164
    %v713 = vunpack.c.h.b16 %v164
    %v714 = vunpack.c.l.b16 %v165
    %v715 = vunpack.c.h.b16 %v165
    %v716 = vunpack.c.l.b16 %v166
    %v717 = vunpack.c.h.b16 %v166
    %v718 = vunpack.c.l.b16 %v167
    %v719 = vunpack.c.h.b16 %v167
    %v720 = vunpack.c.l.b16 %v168
    %v721 = vunpack.c.h.b16 %v168
    %v722 = vunpack.c.l.b16 %v169
    %v723 = vunpack.c.h.b16 %v169
    %v724 = vunpack.c.l.b16 %v170
    %v725 = vunpack.c.h.b16 %v170
    %v726 = vunpack.c.l.b16 %v171
    %v727 = vunpack.c.h.b16 %v171
    %v728 = vunpack.c.l.b16 %v172
    %v729 = vunpack.c.h.b16 %v172
    %v730 = vunpack.c.l.b16 %v173
    %v731 = vunpack.c.h.b16 %v173
    %v732 = vunpack.c.l.b16 %v174
    %v733 = vunpack.c.h.b16 %v174
    %v734 = vunpack.c.l.b16 %v175
    %v735 = vunpack.c.h.b16 %v175
    %v736 = vunpack.c.l.b16 %v176
    %v737 = vunpack.c.h.b16 %v176
    %v738 = vunpack.c.l.b16 %v177
    %v739 = vunpack.c.h.b16 %v177
    %v740 = vunpack.c.l.b16 %v178
    %v741 = vunpack.c.h.b16 %v178
    %v742 = vunpack.c.l.b16 %v179
    %v743 = vunpack.c.h.b16 %v179
    %v744 = vunpack.c.l.b16 %v180
    %v745 = vunpack.c.h.b16 %v180
    %v746 = vunpack.c.l.b16 %v181
    %v747 = vunpack.c.h.b16 %v181
    %v748 = vunpack.c.l.b16 %v182
    %v749 = vunpack.c.h.b16 %v182
    %v750 = vunpack.c.l.b16 %v183
    %v751 = vunpack.c.h.b16 %v183
    %v752 = vunpack.c.l.b16 %v184
    %v753 = vunpack.c.h.b16 %v184
    %v754 = vunpack.c.l.b16 %v185
    %v755 = vunpack.c.h.b16 %v185
    %v756 = vunpack.c.l.b16 %v186
    %v757 = vunpack.c.h.b16 %v186
    %v758 = vunpack.c.l.b16 %v187
    %v759 = vunpack.c.h.b16 %v187
    %v760 = vunpack.c.l.b16 %v188
    %v761 = vunpack.c.h.b16 %v188
    %v762 = vunpack.c.l.b16 %v189
    %v763 = vunpack.c.h.b16 %v189
    %v764 = vunpack.c.l.b16 %v190
    %v765 = vunpack.c.h.b16 %v190
    %v766 = vunpack.c.l.b16 %v191
    %v767 = vunpack.c.h.b16 %v191
    %v768 = vunpack.c.l.b16 %v192
    %v769 = vunpack.c.h.b16 %v192
    %v770 = vunpack.c.l.b16 %v193
    %v771 = vunpack.c.h.b16 %v193
    %v772 = vunpack.c.l.b16 %v194
    %v773 = vunpack.c.h.b16 %v194
    %v774 = vunpack.c.l.b16 %v195
    %v775 = vunpack.c.h.b16 %v195
    %v776 = vunpack.c.l.b16 %v196
    %v777 = vunpack.c.h.b16 %v196
    %v778 = vunpack.c.l.b16 %v197
    %v779 = vunpack.c.h.b16 %v197
    %v780 = vunpack.c.l.b16 %v198
    %v781 = vunpack.c.h.b16 %v198
    %v782 = vunpack.c.l.b16 %v199
    %v783 = vunpack.c.h.b16 %v199
    %v784 = vunpack.c.l.b16 %v200
    %v785 = vunpack.c.h.b16 %v200
    %v786 = vunpack.c.l.b16 %v201
    %v787 = vunpack.c.h.b16 %v201
    %v788 = vunpack.c.l.b16 %v202
    %v789 = vunpack.c.h.b16 %v202
    %v790 = vunpack.c.l.b16 %v203
    %v791 = vunpack.c.h.b16 %v203
    %v792 = vunpack.c.l.b16 %v204
    %v793 = vunpack.c.h.b16 %v204
    %v794 = vunpack.c.l.b16 %v205
    %v795 = vunpack.c.h.b16 %v205
    %v796 = vunpack.c.l.b16 %v206
    %v797 = vunpack.c.h.b16 %v206
    %v798 = vunpack.c.l.b16 %v207
    %v799 = vunpack.c.h.b16 %v207
    %v800 = vunpack.c.l.b16 %v208
    %v801 = vunpack.c.h.b16 %v208
    %v802 = vunpack.c.l.b16 %v209
    %v803 = vunpack.c.h.b16 %v209
    %v804 = vunpack.c.l.b16 %v210
    %v805 = vunpack.c.h.b16 %v210
    %v806 = vunpack.c.l.b16 %v211
    %v807 = vunpack.c.h.b16 %v211
    %v808 = vunpack.c.l.b16 %v212
    %v809 = vunpack.c.h.b16 %v212
    %v810 = vunpack.c.l.b16 %v213
    %v811 = vunpack.c.h.b16 %v213
    %v812 = vunpack.c.l.b16 %v214
    %v813 = vunpack.c.h.b16 %v214
    %v814 = vunpack.c.l.b16 %v215
    %v815 = vunpack.c.h.b16 %v215
    %v816 = vunpack.c.l.b16 %v216
    %v817 = vunpack.c.h.b16 %v216
    %v818 = vunpack.c.l.b16 %v217
    %v819 = vunpack.c.h.b16 %v217
    %v820 = vunpack.c.l.b16 %v218
    %v821 = vunpack.c.h.b16 %v218
    %v822 = vunpack.c.l.b16 %v219
    %v823 = vunpack.c.h.b16 %v219
    %v824 = vunpack.c.l.b16 %v220
    %v825 = vunpack.c.h.b16 %v220
    %v826 = vunpack.c.l.b16 %v221
    %v827 = vunpack.c.h.b16 %v221
    %v828 = vunpack.c.l.b16 %v222
    %v829 = vunpack.c.h.b16 %v222
    %v830 = vunpack.c.l.b16 %v223
    %v831 = vunpack.c.h.b16 %v223
    %v832 = vunpack.c.l.b16 %v224
    %v833 = vunpack.c.h.b16 %v224
    %v834 = vunpack.c.l.b16 %v225
    %v835 = vunpack.c.h.b16 %v225
    %v836 = vunpack.c.l.b16 %v226
    %v837 = vunpack.c.h.b16 %v226
    %v838 = vunpack.c.l.b16 %v227
    %v839 = vunpack.c.h.b16 %v227
    %v840 = vunpack.c.l.b16 %v228
    %v841 = vunpack.c.h.b16 %v228
    %v842 = vunpack.c.l.b16 %v229
    %v843 = vunpack.c.h.b16 %v229
    %v844 = vunpack.c.l.b16 %v230
    %v845 = vunpack.c.h.b16 %v230
    %v846 = vunpack.c.l.b16 %v231
    %v847 = vunpack.c.h.b16 %v231
    %v848 = vunpack.c.l.b16 %v232
    %v849 = vunpack.c.h.b16 %v232
    %v850 = vunpack.c.l.b16 %v233
    %v851 = vunpack.c.h.b16 %v233
    %v852 = vunpack.c.l.b16 %v234
    %v853 = vunpack.c.h.b16 %v234
    %v854 = vunpack.c.l.b16 %v235
    %v855 = vunpack.c.h.b16 %v235
    %v856 = vunpack.c.l.b16 %v236
    %v857 = vunpack.c.h.b16 %v236
    %v858 = vunpack.c.l.b16 %v237
    %v859 = vunpack.c.h.b16 %v237
    %v860 = vunpack.c.l.b16 %v238
    %v861 = vunpack.c.h.b16 %v238
    %v862 = vunpack.c.l.b16 %v239
    %v863 = vunpack.c.h.b16 %v239
    %v864 = vunpack.c.l.b16 %v240
    %v865 = vunpack.c.h.b16 %v240
    %v866 = vunpack.c.l.b16 %v241
    %v867 = vunpack.c.h.b16 %v241
    %v868 = vunpack.c.l.b16 %v242
    %v869 = vunpack.c.h.b16 %v242
    %v870 = vunpack.c.l.b16 %v243
    %v871 = vunpack.c.h.b16 %v243
    %v872 = vunpack.c.l.b16 %v244
    %v873 = vunpack.c.h.b16 %v244
    %v874 = vunpack.c.l.b16 %v245
    %v875 = vunpack.c.h.b16 %v245
    %v876 = vunpack.c.l.b16 %v246
    %v877 = vunpack.c.h.b16 %v246
    %v878 = vunpack.c.l.b16 %v247
    %v879 = vunpack.c.h.b16 %v247
    %v880 = vunpack.c.l.b16 %v248
    %v881 = vunpack.c.h.b16 %v248
    %v882 = vunpack.c.l.b16 %v249
    %v883 = vunpack.c.h.b16 %v249
    %v884 = vunpack.c.l.b16 %v250
    %v885 = vunpack.c.h.b16 %v250
    %v886 = vunpack.c.l.b16 %v251
    %v887 = vunpack.c.h.b16 %v251
    %v888 = vunpack.c.l.b16 %v252
    %v889 = vunpack.c.h.b16 %v252
    %v890 = vunpack.c.l.b16 %v253
    %v891 = vunpack.c.h.b16 %v253
    %v892 = vunpack.c.l.b16 %v254
    %v893 = vunpack.c.h.b16 %v254
    %v894 = vunpack.c.l.b16 %v255
    %v895 = vunpack.c.h.b16 %v255
    %v896 = vunpack.c.l.b16 %v256
    %v897 = vunpack.c.h.b16 %v256
    %v898 = vunpack.c.l.b16 %v257
    %v899 = vunpack.c.h.b16 %v257
    %v900 = vunpack.c.l.b16 %v258
    %v901 = vunpack.c.h.b16 %v258
    %v902 = vunpack.c.l.b16 %v259
    %v903 = vunpack.c.h.b16 %v259
    %v904 = vunpack.c.l.b16 %v260
    %v905 = vunpack.c.h.b16 %v260
    %v906 = vunpack.c.l.b16 %v261
    %v907 = vunpack.c.h.b16 %v261
    %v908 = vunpack.c.l.b16 %v262
    %v909 = vunpack.c.h.b16 %v262
    %v910 = vunpack.c.l.b16 %v263
    %v911 = vunpack.c.h.b16 %v263
    %v912 = vunpack.c.l.b16 %v264
    %v913 = vunpack.c.h.b16 %v264
    %v914 = vunpack.c.l.b16 %v265
    %v915 = vunpack.c.h.b16 %v265
    %v916 = vunpack.c.l.b16 %v266
    %v917 = vunpack.c.h.b16 %v266
    %v918 = vunpack.c.l.b16 %v267
    %v919 = vunpack.c.h.b16 %v267
    %v920 = vunpack.c.l.b16 %v268
    %v921 = vunpack.c.h.b16 %v268
    %v922 = vunpack.c.l.b16 %v269
    %v923 = vunpack.c.h.b16 %v269
    %v924 = vunpack.c.l.b16 %v270
    %v925 = vunpack.c.h.b16 %v270
    %v926 = vunpack.c.l.b16 %v271
    %v927 = vunpack.c.h.b16 %v271
    %v928 = vunpack.c.l.b16 %v272
    %v929 = vunpack.c.h.b16 %v272
    %v930 = vunpack.c.l.b16 %v273
    %v931 = vunpack.c.h.b16 %v273
    %v932 = vunpack.c.l.b16 %v274
    %v933 = vunpack.c.h.b16 %v274
    %v934 = vunpack.c.l.b16 %v275
    %v935 = vunpack.c.h.b16 %v275
    %v936 = vunpack.c.l.b16 %v276
    %v937 = vunpack.c.h.b16 %v276
    %v938 = vunpack.c.l.b16 %v277
    %v939 = vunpack.c.h.b16 %v277
    %v940 = vunpack.c.l.b16 %v278
    %v941 = vunpack.c.h.b16 %v278
    %v942 = vunpack.c.l.b16 %v279
    %v943 = vunpack.c.h.b16 %v279
    %v944 = vunpack.c.l.b16 %v280
    %v945 = vunpack.c.h.b16 %v280
    %v946 = vunpack.c.l.b16 %v281
    %v947 = vunpack.c.h.b16 %v281
    %v948 = vunpack.c.l.b16 %v282
    %v949 = vunpack.c.h.b16 %v282
    %v950 = vunpack.c.l.b16 %v283
    %v951 = vunpack.c.h.b16 %v283
    %v952 = vunpack.c.l.b16 %v284
    %v953 = vunpack.c.h.b16 %v284
    %v954 = vunpack.c.l.b16 %v285
    %v955 = vunpack.c.h.b16 %v285
    %v956 = vunpack.c.l.b16 %v286
    %v957 = vunpack.c.h.b16 %v286
    %v958 = vunpack.c.l.b16 %v287
    %v959 = vunpack.c.h.b16 %v287
    %v960 = vunpack.c.l.b16 %v288
    %v961 = vunpack.c.h.b16 %v288
    %v962 = vunpack.c.l.b16 %v289
    %v963 = vunpack.c.h.b16 %v289
    %v964 = vunpack.c.l.b16 %v290
    %v965 = vunpack.c.h.b16 %v290
    %v966 = vunpack.c.l.b16 %v291
    %v967 = vunpack.c.h.b16 %v291
    %v968 = vunpack.c.l.b16 %v292
    %v969 = vunpack.c.h.b16 %v292
    %v970 = vunpack.c.l.b16 %v293
    %v971 = vunpack.c.h.b16 %v293
    %v972 = vunpack.c.l.b16 %v294
    %v973 = vunpack.c.h.b16 %v294
    %v974 = vunpack.c.l.b16 %v295
    %v975 = vunpack.c.h.b16 %v295
    %v976 = vunpack.c.l.b16 %v296
    %v977 = vunpack.c.h.b16 %v296
    %v978 = vunpack.c.l.b16 %v297
    %v979 = vunpack.c.h.b16 %v297
    %v980 = vunpack.c.l.b16 %v298
    %v981 = vunpack.c.h.b16 %v298
    %v982 = vunpack.c.l.b16 %v299
    %v983 = vunpack.c.h.b16 %v299
    %v984 = vunpack.c.l.b16 %v300
    %v985 = vunpack.c.h.b16 %v300
    %v986 = vunpack.c.l.b16 %v301
    %v987 = vunpack.c.h.b16 %v301
    %v988 = vunpack.c.l.b16 %v302
    %v989 = vunpack.c.h.b16 %v302
    %v990 = vunpack.c.l.b16 %v303
    %v991 = vunpack.c.h.b16 %v303
    %v992 = vunpack.c.l.b16 %v304
    %v993 = vunpack.c.h.b16 %v304
    %v994 = vunpack.c.l.b16 %v305
    %v995 = vunpack.c.h.b16 %v305
    %v996 = vunpack.c.l.b16 %v306
    %v997 = vunpack.c.h.b16 %v306
    %v998 = vunpack.c.l.b16 %v307
    %v999 = vunpack.c.h.b16 %v307
    %v1000 = vunpack.c.l.b16 %v308
    %v1001 = vunpack.c.h.b16 %v308
    %v1002 = vunpack.c.l.b16 %v309
    %v1003 = vunpack.c.h.b16 %v309
    %v1004 = vunpack.c.l.b16 %v310
    %v1005 = vunpack.c.h.b16 %v310
    %v1006 = vunpack.c.l.b16 %v311
    %v1007 = vunpack.c.h.b16 %v311
    %v1008 = vunpack.c.l.b16 %v312
    %v1009 = vunpack.c.h.b16 %v312
    %v1010 = vunpack.c.l.b16 %v313
    %v1011 = vunpack.c.h.b16 %v313
    %v1012 = vunpack.c.l.b16 %v314
    %v1013 = vunpack.c.h.b16 %v314
    %v1014 = vunpack.c.l.b16 %v315
    %v1015 = vunpack.c.h.b16 %v315
    %v1016 = vunpack.c.l.b16 %v316
    %v1017 = vunpack.c.h.b16 %v316
    %v1018 = vunpack.c.l.b16 %v317
    %v1019 = vunpack.c.h.b16 %v317
    %v1020 = vunpack.c.l.b16 %v318
    %v1021 = vunpack.c.h.b16 %v318
    %v1022 = vunpack.c.l.b16 %v319
    %v1023 = vunpack.c.h.b16 %v319
    %v1024 = vunpack.c.l.b16 %v320
    %v1025 = vunpack.c.h.b16 %v320
    %v1026 = vunpack.c.l.b16 %v321
    %v1027 = vunpack.c.h.b16 %v321
    %v1028 = vunpack.c.l.b16 %v322
    %v1029 = vunpack.c.h.b16 %v322
    %v1030 = vunpack.c.l.b16 %v323
    %v1031 = vunpack.c.h.b16 %v323
    %v1032 = vunpack.c.l.b16 %v324
    %v1033 = vunpack.c.h.b16 %v324
    %v1034 = vunpack.c.l.b16 %v325
    %v1035 = vunpack.c.h.b16 %v325
    %v1036 = vunpack.c.l.b16 %v326
    %v1037 = vunpack.c.h.b16 %v326
    %v1038 = vunpack.c.l.b16 %v327
    %v1039 = vunpack.c.h.b16 %v327
    %v1040 = vunpack.c.l.b16 %v328
    %v1041 = vunpack.c.h.b16 %v328
    %v1042 = vunpack.c.l.b16 %v329
    %v1043 = vunpack.c.h.b16 %v329
    %v1044 = vunpack.c.l.b16 %v330
    %v1045 = vunpack.c.h.b16 %v330
    %v1046 = vunpack.c.l.b16 %v331
    %v1047 = vunpack.c.h.b16 %v331
    %v1048 = vunpack.c.l.b16 %v332
    %v1049 = vunpack.c.h.b16 %v332
    %v1050 = vunpack.c.l.b16 %v333
    %v1051 = vunpack.c.h.b16 %v333
    %v1052 = vunpack.c.l.b16 %v334
    %v1053 = vunpack.c.h.b16 %v334
    %v1054 = vunpack.c.l.b16 %v335
    %v1055 = vunpack.c.h.b16 %v335
    %v1056 = vunpack.c.l.b16 %v336
    %v1057 = vunpack.c.h.b16 %v336
    %v1058 = vunpack.c.l.b16 %v337
    %v1059 = vunpack.c.h.b16 %v337
    %v1060 = vunpack.c.l.b16 %v338
    %v1061 = vunpack.c.h.b16 %v338
    %v1062 = vunpack.c.l.b16 %v339
    %v1063 = vunpack.c.h.b16 %v339
    %v1064 = vunpack.c.l.b16 %v340
    %v1065 = vunpack.c.h.b16 %v340
    %v1066 = vunpack.c.l.b16 %v341
    %v1067 = vunpack.c.h.b16 %v341
    %v1068 = vunpack.c.l.b16 %v342
    %v1069 = vunpack.c.h.b16 %v342
    %v1070 = vunpack.c.l.b16 %v343
    %v1071 = vunpack.c.h.b16 %v343
    %v1072 = vunpack.c.l.b16 %v344
    %v1073 = vunpack.c.h.b16 %v344
    %v1074 = vunpack.c.l.b16 %v345
    %v1075 = vunpack.c.h.b16 %v345
    %v1076 = vpack.c.b16 %v632, %v628
    %v1077 = vpack.c.b16 %v633, %v629
    %v1078 = vpack.c.b16 %v634, %v630
    %v1079 = vpack.c.b16 %v635, %v631
    %v1080 = vpack.c.b16 %v640, %v636
    %v1081 = vpack.c.b16 %v641, %v637
    %v1082 = vpack.c.b16 %v642, %v638
    %v1083 = vpack.c.b16 %v643, %v639
    %v1084 = vpack.c.b16 %v648, %v644
    %v1085 = vpack.c.b16 %v649, %v645
    %v1086 = vpack.c.b16 %v650, %v646
    %v1087 = vpack.c.b16 %v651, %v647
    %v1088 = vpack.c.b16 %v656, %v652
    %v1089 = vpack.c.b16 %v657, %v653
    %v1090 = vpack.c.b16 %v658, %v654
    %v1091 = vpack.c.b16 %v659, %v655
    %v1092 = vpack.c.b16 %v664, %v660
    %v1093 = vpack.c.b16 %v665, %v661
    %v1094 = vpack.c.b16 %v666, %v662
    %v1095 = vpack.c.b16 %v667, %v663
    %v1096 = vpack.c.b16 %v672, %v668
    %v1097 = vpack.c.b16 %v673, %v669
    %v1098 = vpack.c.b16 %v674, %v670
    %v1099 = vpack.c.b16 %v675, %v671
    %v1100 = vpack.c.b16 %v680, %v676
    %v1101 = vpack.c.b16 %v681, %v677
    %v1102 = vpack.c.b16 %v682, %v678
    %v1103 = vpack.c.b16 %v683, %v679
    %v1104 = vpack.c.b16 %v688, %v684
    %v1105 = vpack.c.b16 %v689, %v685
    %v1106 = vpack.c.b16 %v690, %v686
    %v1107 = vpack.c.b16 %v691, %v687
    %v1108 = vpack.c.b16 %v696, %v692
    %v1109 = vpack.c.b16 %v697, %v693
    %v1110 = vpack.c.b16 %v698, %v694
    %v1111 = vpack.c.b16 %v699, %v695
    %v1112 = vpack.c.b16 %v704, %v700
    %v1113 = vpack.c.b16 %v705, %v701
    %v1114 = vpack.c.b16 %v706, %v702
    %v1115 = vpack.c.b16 %v707, %v703
    %v1116 = vpack.c.b16 %v712, %v708
    %v1117 = vpack.c.b16 %v713, %v709
    %v1118 = vpack.c.b16 %v714, %v710
    %v1119 = vpack.c.b16 %v715, %v711
    %v1120 = vpack.c.b16 %v720, %v716
    %v1121 = vpack.c.b16 %v721, %v717
    %v1122 = vpack.c.b16 %v722, %v718
    %v1123 = vpack.c.b16 %v723, %v719
    %v1124 = vpack.c.b16 %v728, %v724
    %v1125 = vpack.c.b16 %v729, %v725
    %v1126 = vpack.c.b16 %v730, %v726
    %v1127 = vpack.c.b16 %v731, %v727
    %v1128 = vpack.c.b16 %v736, %v732
    %v1129 = vpack.c.b16 %v737, %v733
    %v1130 = vpack.c.b16 %v738, %v734
    %v1131 = vpack.c.b16 %v739, %v735
    %v1132 = vpack.c.b16 %v744, %v740
    %v1133 = vpack.c.b16 %v745, %v741
    %v1134 = vpack.c.b16 %v746, %v742
    %v1135 = vpack.c.b16 %v747, %v743
    %v1136 = vpack.c.b16 %v752, %v748
    %v1137 = vpack.c.b16 %v753, %v749
    %v1138 = vpack.c.b16 %v754, %v750
    %v1139 = vpack.c.b16 %v755, %v751
    %v1140 = vpack.c.b16 %v760, %v756
    %v1141 = vpack.c.b16 %v761, %v757
    %v1142 = vpack.c.b16 %v762, %v758
    %v1143 = vpack.c.b16 %v763, %v759
    %v1144 = vpack.c.b16 %v768, %v764
    %v1145 = vpack.c.b16 %v769, %v765
    %v1146 = vpack.c.b16 %v770, %v766
    %v1147 = vpack.c.b16 %v771, %v767
    %v1148 = vpack.c.b16 %v776, %v772
    %v1149 = vpack.c.b16 %v777, %v773
    %v1150 = vpack.c.b16 %v778, %v774
    %v1151 = vpack.c.b16 %v779, %v775
    %v1152 = vpack.c.b16 %v784, %v780
    %v1153 = vpack.c.b16 %v785, %v781
    %v1154 = vpack.c.b16 %v786, %v782
    %v1155 = vpack.c.b16 %v787, %v783
    %v1156 = vpack.c.b16 %v792, %v788
    %v1157 = vpack.c.b16 %v793, %v789
    %v1158 = vpack.c.b16 %v794, %v790
    %v1159 = vpack.c.b16 %v795, %v791
    %v1160 = vpack.c.b16 %v800, %v796
    %v1161 = vpack.c.b16 %v801, %v797
    %v1162 = vpack.c.b16 %v802, %v798
    %v1163 = vpack.c.b16 %v803, %v799
    %v1164 = vpack.c.b16 %v808, %v804
    %v1165 = vpack.c.b16 %v809, %v805
    %v1166 = vpack.c.b16 %v810, %v806
    %v1167 = vpack.c.b16 %v811, %v807
    %v1168 = vpack.c.b16 %v816, %v812
    %v1169 = vpack.c.b16 %v817, %v813
    %v1170 = vpack.c.b16 %v818, %v814
    %v1171 = vpack.c.b16 %v819, %v815
    %v1172 = vpack.c.b16 %v824, %v820
    %v1173 = vpack.c.b16 %v825, %v821
    %v1174 = vpack.c.b16 %v826, %v822
    %v1175 = vpack.c.b16 %v827, %v823
    %v1176 = vpack.c.b16 %v832, %v828
    %v1177 = vpack.c.b16 %v833, %v829
    %v1178 = vpack.c.b16 %v834, %v830
    %v1179 = vpack.c.b16 %v835, %v831
    %v1180 = vpack.c.b16 %v840, %v836
    %v1181 = vpack.c.b16 %v841, %v837
    %v1182 = vpack.c.b16 %v842, %v838
    %v1183 = vpack.c.b16 %v843, %v839
    %v1184 = vpack.c.b16 %v848, %v844
    %v1185 = vpack.c.b16 %v849, %v845
    %v1186 = vpack.c.b16 %v850, %v846
    %v1187 = vpack.c.b16 %v851, %v847
    %v1188 = vpack.c.b16 %v856, %v852
    %v1189 = vpack.c.b16 %v857, %v853
    %v1190 = vpack.c.b16 %v858, %v854
    %v1191 = vpack.c.b16 %v859, %v855
    %v1192 = vpack.c.b16 %v864, %v860
    %v1193 = vpack.c.b16 %v865, %v861
    %v1194 = vpack.c.b16 %v866, %v862
    %v1195 = vpack.c.b16 %v867, %v863
    %v1196 = vpack.c.b16 %v872, %v868
    %v1197 = vpack.c.b16 %v873, %v869
    %v1198 = vpack.c.b16 %v874, %v870
    %v1199 = vpack.c.b16 %v875, %v871
    %v1200 = vpack.c.b16 %v880, %v876
    %v1201 = vpack.c.b16 %v881, %v877
    %v1202 = vpack.c.b16 %v882, %v878
    %v1203 = vpack.c.b16 %v883, %v879
    %v1204 = vpack.c.b16 %v888, %v884
    %v1205 = vpack.c.b16 %v889, %v885
    %v1206 = vpack.c.b16 %v890, %v886
    %v1207 = vpack.c.b16 %v891, %v887
    %v1208 = vpack.c.b16 %v896, %v892
    %v1209 = vpack.c.b16 %v897, %v893
    %v1210 = vpack.c.b16 %v898, %v894
    %v1211 = vpack.c.b16 %v899, %v895
    %v1212 = vpack.c.b16 %v904, %v900
    %v1213 = vpack.c.b16 %v905, %v901
    %v1214 = vpack.c.b16 %v906, %v902
    %v1215 = vpack.c.b16 %v907, %v903
    %v1216 = vpack.c.b16 %v912, %v908
    %v1217 = vpack.c.b16 %v913, %v909
    %v1218 = vpack.c.b16 %v914, %v910
    %v1219 = vpack.c.b16 %v915, %v911
    %v1220 = vpack.c.b16 %v920, %v916
    %v1221 = vpack.c.b16 %v921, %v917
    %v1222 = vpack.c.b16 %v922, %v918
    %v1223 = vpack.c.b16 %v923, %v919
    %v1224 = vpack.c.b16 %v928, %v924
    %v1225 = vpack.c.b16 %v929, %v925
    %v1226 = vpack.c.b16 %v930, %v926
    %v1227 = vpack.c.b16 %v931, %v927
    %v1228 = vpack.c.b16 %v936, %v932
    %v1229 = vpack.c.b16 %v937, %v933
    %v1230 = vpack.c.b16 %v938, %v934
    %v1231 = vpack.c.b16 %v939, %v935
    %v1232 = vpack.c.b16 %v944, %v940
    %v1233 = vpack.c.b16 %v945, %v941
    %v1234 = vpack.c.b16 %v946, %v942
    %v1235 = vpack.c.b16 %v947, %v943
    %v1236 = vpack.c.b16 %v952, %v948
    %v1237 = vpack.c.b16 %v953, %v949
    %v1238 = vpack.c.b16 %v954, %v950
    %v1239 = vpack.c.b16 %v955, %v951
    %v1240 = vpack.c.b16 %v960, %v956
    %v1241 = vpack.c.b16 %v961, %v957
    %v1242 = vpack.c.b16 %v962, %v958
    %v1243 = vpack.c.b16 %v963, %v959
    %v1244 = vpack.c.b16 %v968, %v964
    %v1245 = vpack.c.b16 %v969, %v965
    %v1246 = vpack.c.b16 %v970, %v966
    %v1247 = vpack.c.b16 %v971, %v967
    %v1248 = vpack.c.b16 %v976, %v972
    %v1249 = vpack.c.b16 %v977, %v973
    %v1250 = vpack.c.b16 %v978, %v974
    %v1251 = vpack.c.b16 %v979, %v975
    %v1252 = vpack.c.b16 %v984, %v980
    %v1253 = vpack.c.b16 %v985, %v981
    %v1254 = vpack.c.b16 %v986, %v982
    %v1255 = vpack.c.b16 %v987, %v983
    %v1256 = vpack.c.b16 %v992, %v988
    %v1257 = vpack.c.b16 %v993, %v989
    %v1258 = vpack.c.b16 %v994, %v990
    %v1259 = vpack.c.b16 %v995, %v991
    %v1260 = vpack.c.b16 %v1000, %v996
    %v1261 = vpack.c.b16 %v1001, %v997
    %v1262 = vpack.c.b16 %v1002, %v998
    %v1263 = vpack.c.b16 %v1003, %v999
    %v1264 = vpack.c.b16 %v1008, %v1004
    %v1265 = vpack.c.b16 %v1009, %v1005
    %v1266 = vpack.c.b16 %v1010, %v1006
    %v1267 = vpack.c.b16 %v1011, %v1007
    %v1268 = vpack.c.b16 %v1016, %v1012
    %v1269 = vpack.c.b16 %v1017, %v1013
    %v1270 = vpack.c.b16 %v1018, %v1014
    %v1271 = vpack.c.b16 %v1019, %v1015
    %v1272 = vpack.c.b16 %v1024, %v1020
    %v1273 = vpack.c.b16 %v1025, %v1021
    %v1274 = vpack.c.b16 %v1026, %v1022
    %v1275 = vpack.c.b16 %v1027, %v1023
    %v1276 = vpack.c.b16 %v1032, %v1028
    %v1277 = vpack.c.b16 %v1033, %v1029
    %v1278 = vpack.c.b16 %v1034, %v1030
    %v1279 = vpack.c.b16 %v1035, %v1031
    %v1280 = vpack.c.b16 %v1040, %v1036
    %v1281 = vpack.c.b16 %v1041, %v1037
    %v1282 = vpack.c.b16 %v1042, %v1038
    %v1283 = vpack.c.b16 %v1043, %v1039
    %v1284 = vpack.c.b16 %v1048, %v1044
    %v1285 = vpack.c.b16 %v1049, %v1045
    %v1286 = vpack.c.b16 %v1050, %v1046
    %v1287 = vpack.c.b16 %v1051, %v1047
    %v1288 = vpack.c.b16 %v1056, %v1052
    %v1289 = vpack.c.b16 %v1057, %v1053
    %v1290 = vpack.c.b16 %v1058, %v1054
    %v1291 = vpack.c.b16 %v1059, %v1055
    %v1292 = vpack.c.b16 %v1064, %v1060
    %v1293 = vpack.c.b16 %v1065, %v1061
    %v1294 = vpack.c.b16 %v1066, %v1062
    %v1295 = vpack.c.b16 %v1067, %v1063
    %v1296 = vpack.c.b16 %v1072, %v1068
    %v1297 = vpack.c.b16 %v1073, %v1069
    %v1298 = vpack.c.b16 %v1074, %v1070
    %v1299 = vpack.c.b16 %v1075, %v1071
    %1524 = vmatprep.subr.bf16.mxu0 %v1105
    %1525 = vmatpush1.bf16.msra.mxu0 %v1104
    %1526 = vmatprep.subr.bf16.mxu0 %v1101
    %1527 = vmatpush1.bf16.msra.mxu0 %v1100
    %1528 = vmatprep.subr.bf16.mxu0 %v1097
    %1529 = vmatpush1.bf16.msra.mxu0 %v1096
    %1530 = vmatprep.subr.bf16.mxu0 %v1093
    %1531 = vmatpush1.bf16.msra.mxu0 %v1092
    %1532 = vmatprep.subr.bf16.mxu0 %v1089
    %1533 = vmatpush1.bf16.msra.mxu0 %v1088
    %1534 = vmatprep.subr.bf16.mxu0 %v1085
    %1535 = vmatpush1.bf16.msra.mxu0 %v1084
    %1536 = vmatprep.subr.bf16.mxu0 %v1081
    %1537 = vmatpush1.bf16.msra.mxu0 %v1080
    %1538 = vmatprep.subr.bf16.mxu0 %v1077
    %1539 = vmatpush1.bf16.msra.mxu0 %v1076
    %1540 = vmatprep.subr.bf16.mxu0 %v1137
    %1541 = vmatpush2.bf16.msra.mxu0 %v1136
    %1542 = vmatprep.subr.bf16.mxu0 %v1133
    %1543 = vmatpush2.bf16.msra.mxu0 %v1132
    %1544 = vmatprep.subr.bf16.mxu0 %v1129
    %1545 = vmatpush2.bf16.msra.mxu0 %v1128
    %1546 = vmatprep.subr.bf16.mxu0 %v1125
    %1547 = vmatpush2.bf16.msra.mxu0 %v1124
    %1548 = vmatprep.subr.bf16.mxu0 %v1121
    %1549 = vmatpush2.bf16.msra.mxu0 %v1120
    %1550 = vmatprep.subr.bf16.mxu0 %v1117
    %1551 = vmatpush2.bf16.msra.mxu0 %v1116
    %1552 = vmatprep.subr.bf16.mxu0 %v1113
    %1553 = vmatpush2.bf16.msra.mxu0 %v1112
    %1554 = vmatprep.subr.bf16.mxu0 %v1109
    %1555 = vmatpush2.bf16.msra.mxu0 %v1108
    %1556 = vmatprep.mubr.bf16.mxu0 %v391
    %1557 = vmatmul.mubr.bf16.gmra.mxu0 %v390
    %v1558 = vpop.f32.mrf.mxu0
    %v1559 = vadd.f32 %v351, %v1558
    %v1560 = vpop.f32.mrf.mxu0
    %v1561 = vadd.f32 %v355, %v1560
    %v1562 = vpop.f32.mrf.mxu0
    %v1563 = vadd.f32 %v351, %v1562
    %v1564 = vpop.f32.mrf.mxu0
    %v1565 = vadd.f32 %v355, %v1564
    %1566 = vdwg.mxu0
    %1567 = vmatprep.subr.bf16.mxu0 %v1169
    %1568 = vmatpush1.bf16.msra.mxu0 %v1168
    %1569 = vmatprep.subr.bf16.mxu0 %v1165
    %1570 = vmatpush1.bf16.msra.mxu0 %v1164
    %1571 = vmatprep.subr.bf16.mxu0 %v1161
    %1572 = vmatpush1.bf16.msra.mxu0 %v1160
    %1573 = vmatprep.subr.bf16.mxu0 %v1157
    %1574 = vmatpush1.bf16.msra.mxu0 %v1156
    %1575 = vmatprep.subr.bf16.mxu0 %v1153
    %1576 = vmatpush1.bf16.msra.mxu0 %v1152
    %1577 = vmatprep.subr.bf16.mxu0 %v1149
    %1578 = vmatpush1.bf16.msra.mxu0 %v1148
    %1579 = vmatprep.subr.bf16.mxu0 %v1145
    %1580 = vmatpush1.bf16.msra.mxu0 %v1144
    %1581 = vmatprep.subr.bf16.mxu0 %v1141
    %1582 = vmatpush1.bf16.msra.mxu0 %v1140
    %1583 = vmatprep.subr.bf16.mxu0 %v1201
    %1584 = vmatpush2.bf16.msra.mxu0 %v1200
    %1585 = vmatprep.subr.bf16.mxu0 %v1197
    %1586 = vmatpush2.bf16.msra.mxu0 %v1196
    %1587 = vmatprep.subr.bf16.mxu0 %v1193
    %1588 = vmatpush2.bf16.msra.mxu0 %v1192
    %1589 = vmatprep.subr.bf16.mxu0 %v1189
    %1590 = vmatpush2.bf16.msra.mxu0 %v1188
    %1591 = vmatprep.subr.bf16.mxu0 %v1185
    %1592 = vmatpush2.bf16.msra.mxu0 %v1184
    %1593 = vmatprep.subr.bf16.mxu0 %v1181
    %1594 = vmatpush2.bf16.msra.mxu0 %v1180
    %1595 = vmatprep.subr.bf16.mxu0 %v1177
    %1596 = vmatpush2.bf16.msra.mxu0 %v1176
    %1597 = vmatprep.subr.bf16.mxu0 %v1173
    %1598 = vmatpush2.bf16.msra.mxu0 %v1172
    %1599 = vmatprep.mubr.bf16.mxu0 %v393
    %1600 = vmatmul.mubr.bf16.gmra.mxu0 %v392
    %v1601 = vpop.f32.mrf.mxu0
    %v1602 = vadd.f32 %v1559, %v1601
    %v1603 = vpop.f32.mrf.mxu0
    %v1604 = vadd.f32 %v1561, %v1603
    %v1605 = vpop.f32.mrf.mxu0
    %v1606 = vadd.f32 %v1563, %v1605
    %v1607 = vpop.f32.mrf.mxu0
    %v1608 = vadd.f32 %v1565, %v1607
    %1609 = vdwg.mxu0
    %1610 = vmatprep.subr.bf16.mxu0 %v1233
    %1611 = vmatpush1.bf16.msra.mxu0 %v1232
    %1612 = vmatprep.subr.bf16.mxu0 %v1229
    %1613 = vmatpush1.bf16.msra.mxu0 %v1228
    %1614 = vmatprep.subr.bf16.mxu0 %v1225
    %1615 = vmatpush1.bf16.msra.mxu0 %v1224
    %1616 = vmatprep.subr.bf16.mxu0 %v1221
    %1617 = vmatpush1.bf16.msra.mxu0 %v1220
    %1618 = vmatprep.subr.bf16.mxu0 %v1217
    %1619 = vmatpush1.bf16.msra.mxu0 %v1216
    %1620 = vmatprep.subr.bf16.mxu0 %v1213
    %1621 = vmatpush1.bf16.msra.mxu0 %v1212
    %1622 = vmatprep.subr.bf16.mxu0 %v1209
    %1623 = vmatpush1.bf16.msra.mxu0 %v1208
    %1624 = vmatprep.subr.bf16.mxu0 %v1205
    %1625 = vmatpush1.bf16.msra.mxu0 %v1204
    %1626 = vmatprep.subr.bf16.mxu0 %v1265
    %1627 = vmatpush2.bf16.msra.mxu0 %v1264
    %1628 = vmatprep.subr.bf16.mxu0 %v1261
    %1629 = vmatpush2.bf16.msra.mxu0 %v1260
    %1630 = vmatprep.subr.bf16.mxu0 %v1257
    %1631 = vmatpush2.bf16.msra.mxu0 %v1256
    %1632 = vmatprep.subr.bf16.mxu0 %v1253
    %1633 = vmatpush2.bf16.msra.mxu0 %v1252
    %1634 = vmatprep.subr.bf16.mxu0 %v1249
    %1635 = vmatpush2.bf16.msra.mxu0 %v1248
    %1636 = vmatprep.subr.bf16.mxu0 %v1245
    %1637 = vmatpush2.bf16.msra.mxu0 %v1244
    %1638 = vmatprep.subr.bf16.mxu0 %v1241
    %1639 = vmatpush2.bf16.msra.mxu0 %v1240
    %1640 = vmatprep.subr.bf16.mxu0 %v1237
    %1641 = vmatpush2.bf16.msra.mxu0 %v1236
    %1642 = vmatprep.mubr.bf16.mxu0 %v395
    %1643 = vmatmul.mubr.bf16.gmra.mxu0 %v394
    %v1644 = vpop.f32.mrf.mxu0
    %v1645 = vadd.f32 %v1602, %v1644
    %v1646 = vpop.f32.mrf.mxu0
    %v1647 = vadd.f32 %v1604, %v1646
    %v1648 = vpop.f32.mrf.mxu0
    %v1649 = vadd.f32 %v1606, %v1648
    %v1650 = vpop.f32.mrf.mxu0
    %v1651 = vadd.f32 %v1608, %v1650
    %1652 = vdwg.mxu0
    %1653 = vmatprep.subr.bf16.mxu0 %v1297
    %1654 = vmatpush1.bf16.msra.mxu0 %v1296
    %1655 = vmatprep.subr.bf16.mxu0 %v1293
    %1656 = vmatpush1.bf16.msra.mxu0 %v1292
    %1657 = vmatprep.subr.bf16.mxu0 %v1289
    %1658 = vmatpush1.bf16.msra.mxu0 %v1288
    %1659 = vmatprep.subr.bf16.mxu0 %v1285
    %1660 = vmatpush1.bf16.msra.mxu0 %v1284
    %1661 = vmatprep.subr.bf16.mxu0 %v1281
    %1662 = vmatpush1.bf16.msra.mxu0 %v1280
    %1663 = vmatprep.subr.bf16.mxu0 %v1277
    %1664 = vmatpush1.bf16.msra.mxu0 %v1276
    %1665 = vmatprep.subr.bf16.mxu0 %v1273
    %1666 = vmatpush1.bf16.msra.mxu0 %v1272
    %1667 = vmatprep.subr.bf16.mxu0 %v1269
    %1668 = vmatpush1.bf16.msra.mxu0 %v1268
    %1669 = vmatprep.subr.bf16.mxu0 0
    %1670 = vmatpush2.bf16.msra.mxu0 0
    %1671 = vmatprep.subr.bf16.mxu0 0
    %1672 = vmatpush2.bf16.msra.mxu0 0
    %1673 = vmatprep.subr.bf16.mxu0 0
    %1674 = vmatpush2.bf16.msra.mxu0 0
    %1675 = vmatprep.subr.bf16.mxu0 0
    %1676 = vmatpush2.bf16.msra.mxu0 0
    %1677 = vmatprep.subr.bf16.mxu0 0
    %1678 = vmatpush2.bf16.msra.mxu0 0
    %1679 = vmatprep.subr.bf16.mxu0 0
    %1680 = vmatpush2.bf16.msra.mxu0 0
    %1681 = vmatprep.subr.bf16.mxu0 0
    %1682 = vmatpush2.bf16.msra.mxu0 0
    %1683 = vmatprep.subr.bf16.mxu0 0
    %1684 = vmatpush2.bf16.msra.mxu0 0
    %1685 = vmatprep.mubr.bf16.mxu0 0
    %1686 = vmatmul.mubr.bf16.gmra.mxu0 %v396
    %v1687 = vpop.f32.mrf.mxu0
    %v1688 = vadd.f32 %v1645, %v1687
    %v1689 = vpop.f32.mrf.mxu0
    %v1690 = vadd.f32 %v1647, %v1689
    %v1691 = vpop.f32.mrf.mxu0
    %v1692 = vadd.f32 %v1649, %v1691
    %v1693 = vpop.f32.mrf.mxu0
    %v1694 = vadd.f32 %v1651, %v1693
    %1695 = vdwg.mxu0
    %1696 = vmatprep.subr.bf16.mxu0 %v1107
    %1697 = vmatpush1.bf16.msra.mxu0 %v1106
    %1698 = vmatprep.subr.bf16.mxu0 %v1103
    %1699 = vmatpush1.bf16.msra.mxu0 %v1102
    %1700 = vmatprep.subr.bf16.mxu0 %v1099
    %1701 = vmatpush1.bf16.msra.mxu0 %v1098
    %1702 = vmatprep.subr.bf16.mxu0 %v1095
    %1703 = vmatpush1.bf16.msra.mxu0 %v1094
    %1704 = vmatprep.subr.bf16.mxu0 %v1091
    %1705 = vmatpush1.bf16.msra.mxu0 %v1090
    %1706 = vmatprep.subr.bf16.mxu0 %v1087
    %1707 = vmatpush1.bf16.msra.mxu0 %v1086
    %1708 = vmatprep.subr.bf16.mxu0 %v1083
    %1709 = vmatpush1.bf16.msra.mxu0 %v1082
    %1710 = vmatprep.subr.bf16.mxu0 %v1079
    %1711 = vmatpush1.bf16.msra.mxu0 %v1078
    %1712 = vmatprep.subr.bf16.mxu0 %v1139
    %1713 = vmatpush2.bf16.msra.mxu0 %v1138
    %1714 = vmatprep.subr.bf16.mxu0 %v1135
    %1715 = vmatpush2.bf16.msra.mxu0 %v1134
    %1716 = vmatprep.subr.bf16.mxu0 %v1131
    %1717 = vmatpush2.bf16.msra.mxu0 %v1130
    %1718 = vmatprep.subr.bf16.mxu0 %v1127
    %1719 = vmatpush2.bf16.msra.mxu0 %v1126
    %1720 = vmatprep.subr.bf16.mxu0 %v1123
    %1721 = vmatpush2.bf16.msra.mxu0 %v1122
    %1722 = vmatprep.subr.bf16.mxu0 %v1119
    %1723 = vmatpush2.bf16.msra.mxu0 %v1118
    %1724 = vmatprep.subr.bf16.mxu0 %v1115
    %1725 = vmatpush2.bf16.msra.mxu0 %v1114
    %1726 = vmatprep.subr.bf16.mxu0 %v1111
    %1727 = vmatpush2.bf16.msra.mxu0 %v1110
    %1728 = vmatprep.mubr.bf16.mxu0 %v391
    %1729 = vmatmul.mubr.bf16.gmra.mxu0 %v390
    %v1730 = vpop.f32.mrf.mxu0
    %v1731 = vadd.f32 %v359, %v1730
    %v1732 = vpop.f32.mrf.mxu0
    %v1733 = vadd.f32 %v363, %v1732
    %v1734 = vpop.f32.mrf.mxu0
    %v1735 = vadd.f32 %v359, %v1734
    %v1736 = vpop.f32.mrf.mxu0
    %v1737 = vadd.f32 %v363, %v1736
    %1738 = vdwg.mxu0
    %1739 = vmatprep.subr.bf16.mxu0 %v1171
    %1740 = vmatpush1.bf16.msra.mxu0 %v1170
    %1741 = vmatprep.subr.bf16.mxu0 %v1167
    %1742 = vmatpush1.bf16.msra.mxu0 %v1166
    %1743 = vmatprep.subr.bf16.mxu0 %v1163
    %1744 = vmatpush1.bf16.msra.mxu0 %v1162
    %1745 = vmatprep.subr.bf16.mxu0 %v1159
    %1746 = vmatpush1.bf16.msra.mxu0 %v1158
    %1747 = vmatprep.subr.bf16.mxu0 %v1155
    %1748 = vmatpush1.bf16.msra.mxu0 %v1154
    %1749 = vmatprep.subr.bf16.mxu0 %v1151
    %1750 = vmatpush1.bf16.msra.mxu0 %v1150
    %1751 = vmatprep.subr.bf16.mxu0 %v1147
    %1752 = vmatpush1.bf16.msra.mxu0 %v1146
    %1753 = vmatprep.subr.bf16.mxu0 %v1143
    %1754 = vmatpush1.bf16.msra.mxu0 %v1142
    %1755 = vmatprep.subr.bf16.mxu0 %v1203
    %1756 = vmatpush2.bf16.msra.mxu0 %v1202
    %1757 = vmatprep.subr.bf16.mxu0 %v1199
    %1758 = vmatpush2.bf16.msra.mxu0 %v1198
    %1759 = vmatprep.subr.bf16.mxu0 %v1195
    %1760 = vmatpush2.bf16.msra.mxu0 %v1194
    %1761 = vmatprep.subr.bf16.mxu0 %v1191
    %1762 = vmatpush2.bf16.msra.mxu0 %v1190
    %1763 = vmatprep.subr.bf16.mxu0 %v1187
    %1764 = vmatpush2.bf16.msra.mxu0 %v1186
    %1765 = vmatprep.subr.bf16.mxu0 %v1183
    %1766 = vmatpush2.bf16.msra.mxu0 %v1182
    %1767 = vmatprep.subr.bf16.mxu0 %v1179
    %1768 = vmatpush2.bf16.msra.mxu0 %v1178
    %1769 = vmatprep.subr.bf16.mxu0 %v1175
    %1770 = vmatpush2.bf16.msra.mxu0 %v1174
    %1771 = vmatprep.mubr.bf16.mxu0 %v393
    %1772 = vmatmul.mubr.bf16.gmra.mxu0 %v392
    %v1773 = vpop.f32.mrf.mxu0
    %v1774 = vadd.f32 %v1731, %v1773
    %v1775 = vpop.f32.mrf.mxu0
    %v1776 = vadd.f32 %v1733, %v1775
    %v1777 = vpop.f32.mrf.mxu0
    %v1778 = vadd.f32 %v1735, %v1777
    %v1779 = vpop.f32.mrf.mxu0
    %v1780 = vadd.f32 %v1737, %v1779
    %1781 = vdwg.mxu0
    %1782 = vmatprep.subr.bf16.mxu0 %v1235
    %1783 = vmatpush1.bf16.msra.mxu0 %v1234
    %1784 = vmatprep.subr.bf16.mxu0 %v1231
    %1785 = vmatpush1.bf16.msra.mxu0 %v1230
    %1786 = vmatprep.subr.bf16.mxu0 %v1227
    %1787 = vmatpush1.bf16.msra.mxu0 %v1226
    %1788 = vmatprep.subr.bf16.mxu0 %v1223
    %1789 = vmatpush1.bf16.msra.mxu0 %v1222
    %1790 = vmatprep.subr.bf16.mxu0 %v1219
    %1791 = vmatpush1.bf16.msra.mxu0 %v1218
    %1792 = vmatprep.subr.bf16.mxu0 %v1215
    %1793 = vmatpush1.bf16.msra.mxu0 %v1214
    %1794 = vmatprep.subr.bf16.mxu0 %v1211
    %1795 = vmatpush1.bf16.msra.mxu0 %v1210
    %1796 = vmatprep.subr.bf16.mxu0 %v1207
    %1797 = vmatpush1.bf16.msra.mxu0 %v1206
    %1798 = vmatprep.subr.bf16.mxu0 %v1267
    %1799 = vmatpush2.bf16.msra.mxu0 %v1266
    %1800 = vmatprep.subr.bf16.mxu0 %v1263
    %1801 = vmatpush2.bf16.msra.mxu0 %v1262
    %1802 = vmatprep.subr.bf16.mxu0 %v1259
    %1803 = vmatpush2.bf16.msra.mxu0 %v1258
    %1804 = vmatprep.subr.bf16.mxu0 %v1255
    %1805 = vmatpush2.bf16.msra.mxu0 %v1254
    %1806 = vmatprep.subr.bf16.mxu0 %v1251
    %1807 = vmatpush2.bf16.msra.mxu0 %v1250
    %1808 = vmatprep.subr.bf16.mxu0 %v1247
    %1809 = vmatpush2.bf16.msra.mxu0 %v1246
    %1810 = vmatprep.subr.bf16.mxu0 %v1243
    %1811 = vmatpush2.bf16.msra.mxu0 %v1242
    %1812 = vmatprep.subr.bf16.mxu0 %v1239
    %1813 = vmatpush2.bf16.msra.mxu0 %v1238
    %1814 = vmatprep.mubr.bf16.mxu0 %v395
    %1815 = vmatmul.mubr.bf16.gmra.mxu0 %v394
    %v1816 = vpop.f32.mrf.mxu0
    %v1817 = vadd.f32 %v1774, %v1816
    %v1818 = vpop.f32.mrf.mxu0
    %v1819 = vadd.f32 %v1776, %v1818
    %v1820 = vpop.f32.mrf.mxu0
    %v1821 = vadd.f32 %v1778, %v1820
    %v1822 = vpop.f32.mrf.mxu0
    %v1823 = vadd.f32 %v1780, %v1822
    %1824 = vdwg.mxu0
    %1825 = vmatprep.subr.bf16.mxu0 %v1299
    %1826 = vmatpush1.bf16.msra.mxu0 %v1298
    %1827 = vmatprep.subr.bf16.mxu0 %v1295
    %1828 = vmatpush1.bf16.msra.mxu0 %v1294
    %1829 = vmatprep.subr.bf16.mxu0 %v1291
    %1830 = vmatpush1.bf16.msra.mxu0 %v1290
    %1831 = vmatprep.subr.bf16.mxu0 %v1287
    %1832 = vmatpush1.bf16.msra.mxu0 %v1286
    %1833 = vmatprep.subr.bf16.mxu0 %v1283
    %1834 = vmatpush1.bf16.msra.mxu0 %v1282
    %1835 = vmatprep.subr.bf16.mxu0 %v1279
    %1836 = vmatpush1.bf16.msra.mxu0 %v1278
    %1837 = vmatprep.subr.bf16.mxu0 %v1275
    %1838 = vmatpush1.bf16.msra.mxu0 %v1274
    %1839 = vmatprep.subr.bf16.mxu0 %v1271
    %1840 = vmatpush1.bf16.msra.mxu0 %v1270
    %1841 = vmatprep.subr.bf16.mxu0 0
    %1842 = vmatpush2.bf16.msra.mxu0 0
    %1843 = vmatprep.subr.bf16.mxu0 0
    %1844 = vmatpush2.bf16.msra.mxu0 0
    %1845 = vmatprep.subr.bf16.mxu0 0
    %1846 = vmatpush2.bf16.msra.mxu0 0
    %1847 = vmatprep.subr.bf16.mxu0 0
    %1848 = vmatpush2.bf16.msra.mxu0 0
    %1849 = vmatprep.subr.bf16.mxu0 0
    %1850 = vmatpush2.bf16.msra.mxu0 0
    %1851 = vmatprep.subr.bf16.mxu0 0
    %1852 = vmatpush2.bf16.msra.mxu0 0
    %1853 = vmatprep.subr.bf16.mxu0 0
    %1854 = vmatpush2.bf16.msra.mxu0 0
    %1855 = vmatprep.subr.bf16.mxu0 0
    %1856 = vmatpush2.bf16.msra.mxu0 0
    %1857 = vmatprep.mubr.bf16.mxu0 0
    %1858 = vmatmul.mubr.bf16.gmra.mxu0 %v396
    %v1859 = vpop.f32.mrf.mxu0
    %v1860 = vadd.f32 %v1817, %v1859
    %v1861 = vpop.f32.mrf.mxu0
    %v1862 = vadd.f32 %v1819, %v1861
    %v1863 = vpop.f32.mrf.mxu0
    %v1864 = vadd.f32 %v1821, %v1863
    %v1865 = vpop.f32.mrf.mxu0
    %v1866 = vadd.f32 %v1823, %v1865
    %1867 = vdwg.mxu0
    %v1868 = vmax.f32 %v1688, 0.0
    %v1869 = vmax.f32 %v1690, 0.0
    %v1870 = vmax.f32 %v1860, 0.0
    %v1871 = vmax.f32 %v1862, 0.0
    %v1872 = vmax.f32 %v1692, 0.0
    %v1873 = vmax.f32 %v1694, 0.0
    %v1874 = vmax.f32 %v1864, 0.0
    %v1875 = vmax.f32 %v1866, 0.0
    %v1876 = vpack.c.bf16 %v1872, %v1868
    %v1877 = vpack.c.bf16 %v1873, %v1869
    %v1878 = vpack.c.bf16 %v1874, %v1870
    %v1879 = vpack.c.bf16 %v1875, %v1871
    %v1880 = vld [vmem:[#allocation8] sm:$0xf]
    %v1881 = vld [vmem:[#allocation8 + $0x4] sm:$0xf]
    %v1882 = vld [vmem:[#allocation8 + $0x8] sm:$0xf]
    %v1883 = vld [vmem:[#allocation8 + $0xc] sm:$0xf]
    %v1884 = vld [vmem:[#allocation8 + $0x10] sm:$0xf]
    %v1885 = vld [vmem:[#allocation8 + $0x14] sm:$0xf]
    %v1886 = vld [vmem:[#allocation8 + $0x18] sm:$0xf]
    %v1887 = vld [vmem:[#allocation8 + $0x1c] sm:$0xf]
    %v1888 = vld [vmem:[#allocation8 + $0x20] sm:$0xf]
    %v1889 = vld [vmem:[#allocation8 + $0x24] sm:$0xf]
    %v1890 = vld [vmem:[#allocation8 + $0x28] sm:$0xf]
    %v1891 = vld [vmem:[#allocation8 + $0x2c] sm:$0xf]
    %v1892 = vld [vmem:[#allocation8 + $0x30] sm:$0xf]
    %v1893 = vld [vmem:[#allocation8 + $0x34] sm:$0xf]
    %v1894 = vld [vmem:[#allocation8 + $0x38] sm:$0xf]
    %v1895 = vld [vmem:[#allocation8 + $0x3c] sm:$0xf]
    %v1896 = vld [vmem:[#allocation8 + $0x40] sm:$0xf]
    %v1897 = vld [vmem:[#allocation8 + $0x44] sm:$0xf]
    %v1898 = vld [vmem:[#allocation8 + $0x48] sm:$0xf]
    %v1899 = vld [vmem:[#allocation8 + $0x4c] sm:$0xf]
    %v1900 = vld [vmem:[#allocation8 + $0x50] sm:$0xf]
    %v1901 = vld [vmem:[#allocation8 + $0x54] sm:$0xf]
    %v1902 = vld [vmem:[#allocation8 + $0x58] sm:$0xf]
    %v1903 = vld [vmem:[#allocation8 + $0x5c] sm:$0xf]
    %v1904 = vld [vmem:[#allocation8 + $0x60] sm:$0xf]
    %v1905 = vld [vmem:[#allocation8 + $0x64] sm:$0xf]
    %v1906 = vld [vmem:[#allocation8 + $0x68] sm:$0xf]
    %v1907 = vld [vmem:[#allocation8 + $0x6c] sm:$0xf]
    %v1908 = vld [vmem:[#allocation8 + $0x70] sm:$0xf]
    %v1909 = vld [vmem:[#allocation8 + $0x74] sm:$0xf]
    %v1910 = vld [vmem:[#allocation8 + $0x78] sm:$0xf]
    %v1911 = vld [vmem:[#allocation8 + $0x7c] sm:$0xf]
    %v1912 = vld [vmem:[#allocation8 + $0x80] sm:$0xf]
    %v1913 = vld [vmem:[#allocation8 + $0x84] sm:$0xf]
    %v1914 = vld [vmem:[#allocation8 + $0x88] sm:$0xf]
    %v1915 = vld [vmem:[#allocation8 + $0x8c] sm:$0xf]
    %v1916 = vld [vmem:[#allocation8 + $0x90] sm:$0xf]
    %v1917 = vld [vmem:[#allocation8 + $0x94] sm:$0xf]
    %v1918 = vld [vmem:[#allocation8 + $0x98] sm:$0xf]
    %v1919 = vld [vmem:[#allocation8 + $0x9c] sm:$0xf]
    %v1920 = vld [vmem:[#allocation8 + $0xa0] sm:$0xf]
    %v1921 = vld [vmem:[#allocation8 + $0xa4] sm:$0xf]
    %v1922 = vld [vmem:[#allocation8 + $0xa8] sm:$0xf]
    %v1923 = vld [vmem:[#allocation8 + $0xac] sm:$0xf]
    %v1924 = vld [vmem:[#allocation8 + $0xb0] sm:$0xf]
    %v1925 = vld [vmem:[#allocation8 + $0xb4] sm:$0xf]
    %v1926 = vld [vmem:[#allocation8 + $0xb8] sm:$0xf]
    %v1927 = vld [vmem:[#allocation8 + $0xbc] sm:$0xf]
    %v1928 = vld [vmem:[#allocation8 + $0xc0] sm:$0xf]
    %v1929 = vld [vmem:[#allocation8 + $0xc4] sm:$0xf]
    %v1930 = vld [vmem:[#allocation8 + $0xc8] sm:$0xf]
    %v1931 = vld [vmem:[#allocation8 + $0xcc] sm:$0xf]
    %v1932 = vld [vmem:[#allocation8 + $0xd0] sm:$0xf]
    %v1933 = vld [vmem:[#allocation8 + $0xd4] sm:$0xf]
    %v1934 = vld [vmem:[#allocation8 + $0xd8] sm:$0xf]
    %v1935 = vld [vmem:[#allocation8 + $0xdc] sm:$0xf]
    %v1936 = vld [vmem:[#allocation8 + $0xe0] sm:$0xf]
    %v1937 = vld [vmem:[#allocation8 + $0xe4] sm:$0xf]
    %v1938 = vld [vmem:[#allocation8 + $0xe8] sm:$0xf]
    %v1939 = vld [vmem:[#allocation8 + $0xec] sm:$0xf]
    %v1940 = vld [vmem:[#allocation8 + $0xf0] sm:$0xf]
    %v1941 = vld [vmem:[#allocation8 + $0xf4] sm:$0xf]
    %v1942 = vld [vmem:[#allocation8 + $0xf8] sm:$0xf]
    %v1943 = vld [vmem:[#allocation8 + $0xfc] sm:$0xf]
    %v1944 = vld [vmem:[%s4] sm:$0x1]
    %v1946 = vlaneseq
    %v1947 = vshrl.u32 %v1946, 7
    %v1948 = vsub.s32 0, %v1947
    %v1949 = vrot.slane %v1944, %v1948
    %v2015 = vunpack.c.l.b16 %v1880
    %v2016 = vunpack.c.l.b16 %v1881
    %v2017 = vunpack.c.l.b16 %v1882
    %v2018 = vunpack.c.l.b16 %v1883
    %v2019 = vunpack.c.l.b16 %v1884
    %v2020 = vunpack.c.l.b16 %v1885
    %v2021 = vunpack.c.l.b16 %v1886
    %v2022 = vunpack.c.l.b16 %v1887
    %v2023 = vunpack.c.l.b16 %v1888
    %v2024 = vunpack.c.l.b16 %v1889
    %v2025 = vunpack.c.l.b16 %v1890
    %v2026 = vunpack.c.l.b16 %v1891
    %v2027 = vunpack.c.l.b16 %v1892
    %v2028 = vunpack.c.l.b16 %v1893
    %v2029 = vunpack.c.l.b16 %v1894
    %v2030 = vunpack.c.l.b16 %v1895
    %v2031 = vunpack.c.l.b16 %v1896
    %v2032 = vunpack.c.l.b16 %v1897
    %v2033 = vunpack.c.l.b16 %v1898
    %v2034 = vunpack.c.l.b16 %v1899
    %v2035 = vunpack.c.l.b16 %v1900
    %v2036 = vunpack.c.l.b16 %v1901
    %v2037 = vunpack.c.l.b16 %v1902
    %v2038 = vunpack.c.l.b16 %v1903
    %v2039 = vunpack.c.l.b16 %v1904
    %v2040 = vunpack.c.l.b16 %v1905
    %v2041 = vunpack.c.l.b16 %v1906
    %v2042 = vunpack.c.l.b16 %v1907
    %v2043 = vunpack.c.l.b16 %v1908
    %v2044 = vunpack.c.l.b16 %v1909
    %v2045 = vunpack.c.l.b16 %v1910
    %v2046 = vunpack.c.l.b16 %v1911
    %v2047 = vunpack.c.l.b16 %v1912
    %v2048 = vunpack.c.l.b16 %v1913
    %v2049 = vunpack.c.l.b16 %v1914
    %v2050 = vunpack.c.l.b16 %v1915
    %v2051 = vunpack.c.l.b16 %v1916
    %v2052 = vunpack.c.l.b16 %v1917
    %v2053 = vunpack.c.l.b16 %v1918
    %v2054 = vunpack.c.l.b16 %v1919
    %v2055 = vunpack.c.l.b16 %v1920
    %v2056 = vunpack.c.l.b16 %v1921
    %v2057 = vunpack.c.l.b16 %v1922
    %v2058 = vunpack.c.l.b16 %v1923
    %v2059 = vunpack.c.l.b16 %v1924
    %v2060 = vunpack.c.l.b16 %v1925
    %v2061 = vunpack.c.l.b16 %v1926
    %v2062 = vunpack.c.l.b16 %v1927
    %v2063 = vunpack.c.l.b16 %v1928
    %v2064 = vunpack.c.l.b16 %v1929
    %v2065 = vunpack.c.l.b16 %v1930
    %v2066 = vunpack.c.l.b16 %v1931
    %v2067 = vunpack.c.l.b16 %v1932
    %v2068 = vunpack.c.l.b16 %v1933
    %v2069 = vunpack.c.l.b16 %v1934
    %v2070 = vunpack.c.l.b16 %v1935
    %v2071 = vunpack.c.l.b16 %v1936
    %v2072 = vunpack.c.l.b16 %v1937
    %v2073 = vunpack.c.l.b16 %v1938
    %v2074 = vunpack.c.l.b16 %v1939
    %v2075 = vunpack.c.l.b16 %v1940
    %v2076 = vunpack.c.l.b16 %v1941
    %v2077 = vunpack.c.l.b16 %v1942
    %v2078 = vunpack.c.l.b16 %v1943
    %v2079 = vpack.c.b16 %v2016, %v2015
    %v2080 = vpack.c.b16 %v2018, %v2017
    %v2081 = vpack.c.b16 %v2020, %v2019
    %v2082 = vpack.c.b16 %v2022, %v2021
    %v2083 = vpack.c.b16 %v2024, %v2023
    %v2084 = vpack.c.b16 %v2026, %v2025
    %v2085 = vpack.c.b16 %v2028, %v2027
    %v2086 = vpack.c.b16 %v2030, %v2029
    %v2087 = vpack.c.b16 %v2032, %v2031
    %v2088 = vpack.c.b16 %v2034, %v2033
    %v2089 = vpack.c.b16 %v2036, %v2035
    %v2090 = vpack.c.b16 %v2038, %v2037
    %v2091 = vpack.c.b16 %v2040, %v2039
    %v2092 = vpack.c.b16 %v2042, %v2041
    %v2093 = vpack.c.b16 %v2044, %v2043
    %v2094 = vpack.c.b16 %v2046, %v2045
    %v2095 = vpack.c.b16 %v2048, %v2047
    %v2096 = vpack.c.b16 %v2050, %v2049
    %v2097 = vpack.c.b16 %v2052, %v2051
    %v2098 = vpack.c.b16 %v2054, %v2053
    %v2099 = vpack.c.b16 %v2056, %v2055
    %v2100 = vpack.c.b16 %v2058, %v2057
    %v2101 = vpack.c.b16 %v2060, %v2059
    %v2102 = vpack.c.b16 %v2062, %v2061
    %v2103 = vpack.c.b16 %v2064, %v2063
    %v2104 = vpack.c.b16 %v2066, %v2065
    %v2105 = vpack.c.b16 %v2068, %v2067
    %v2106 = vpack.c.b16 %v2070, %v2069
    %v2107 = vpack.c.b16 %v2072, %v2071
    %v2108 = vpack.c.b16 %v2074, %v2073
    %v2109 = vpack.c.b16 %v2076, %v2075
    %v2110 = vpack.c.b16 %v2078, %v2077
    %2143 = vmatprep.subr.bf16.mxu0 0
    %2144 = vmatpush1.bf16.msra.mxu0 %v2086
    %2145 = vmatprep.subr.bf16.mxu0 0
    %2146 = vmatpush1.bf16.msra.mxu0 %v2085
    %2147 = vmatprep.subr.bf16.mxu0 0
    %2148 = vmatpush1.bf16.msra.mxu0 %v2084
    %2149 = vmatprep.subr.bf16.mxu0 0
    %2150 = vmatpush1.bf16.msra.mxu0 %v2083
    %2151 = vmatprep.subr.bf16.mxu0 0
    %2152 = vmatpush1.bf16.msra.mxu0 %v2082
    %2153 = vmatprep.subr.bf16.mxu0 0
    %2154 = vmatpush1.bf16.msra.mxu0 %v2081
    %2155 = vmatprep.subr.bf16.mxu0 0
    %2156 = vmatpush1.bf16.msra.mxu0 %v2080
    %2157 = vmatprep.subr.bf16.mxu0 0
    %2158 = vmatpush1.bf16.msra.mxu0 %v2079
    %2159 = vmatprep.subr.bf16.mxu0 0
    %2160 = vmatpush2.bf16.msra.mxu0 %v2094
    %2161 = vmatprep.subr.bf16.mxu0 0
    %2162 = vmatpush2.bf16.msra.mxu0 %v2093
    %2163 = vmatprep.subr.bf16.mxu0 0
    %2164 = vmatpush2.bf16.msra.mxu0 %v2092
    %2165 = vmatprep.subr.bf16.mxu0 0
    %2166 = vmatpush2.bf16.msra.mxu0 %v2091
    %2167 = vmatprep.subr.bf16.mxu0 0
    %2168 = vmatpush2.bf16.msra.mxu0 %v2090
    %2169 = vmatprep.subr.bf16.mxu0 0
    %2170 = vmatpush2.bf16.msra.mxu0 %v2089
    %2171 = vmatprep.subr.bf16.mxu0 0
    %2172 = vmatpush2.bf16.msra.mxu0 %v2088
    %2173 = vmatprep.subr.bf16.mxu0 0
    %2174 = vmatpush2.bf16.msra.mxu0 %v2087
    %2175 = vmatprep.mubr.bf16.mxu0 %v1877
    %2176 = vmatmul.mubr.bf16.gmra.mxu0 %v1876
    %v2177 = vpop.f32.mrf.mxu0
    %v2178 = vadd.f32 %v1949, %v2177
    %v2179 = vpop.f32.mrf.mxu0
    %v2180 = vpop.f32.mrf.mxu0
    %v2181 = vadd.f32 %v1949, %v2180
    %v2182 = vpop.f32.mrf.mxu0
    %2183 = vdwg.mxu0
    %2184 = vmatprep.subr.bf16.mxu0 0
    %2185 = vmatpush1.bf16.msra.mxu0 %v2102
    %2186 = vmatprep.subr.bf16.mxu0 0
    %2187 = vmatpush1.bf16.msra.mxu0 %v2101
    %2188 = vmatprep.subr.bf16.mxu0 0
    %2189 = vmatpush1.bf16.msra.mxu0 %v2100
    %2190 = vmatprep.subr.bf16.mxu0 0
    %2191 = vmatpush1.bf16.msra.mxu0 %v2099
    %2192 = vmatprep.subr.bf16.mxu0 0
    %2193 = vmatpush1.bf16.msra.mxu0 %v2098
    %2194 = vmatprep.subr.bf16.mxu0 0
    %2195 = vmatpush1.bf16.msra.mxu0 %v2097
    %2196 = vmatprep.subr.bf16.mxu0 0
    %2197 = vmatpush1.bf16.msra.mxu0 %v2096
    %2198 = vmatprep.subr.bf16.mxu0 0
    %2199 = vmatpush1.bf16.msra.mxu0 %v2095
    %2200 = vmatprep.subr.bf16.mxu0 0
    %2201 = vmatpush2.bf16.msra.mxu0 %v2110
    %2202 = vmatprep.subr.bf16.mxu0 0
    %2203 = vmatpush2.bf16.msra.mxu0 %v2109
    %2204 = vmatprep.subr.bf16.mxu0 0
    %2205 = vmatpush2.bf16.msra.mxu0 %v2108
    %2206 = vmatprep.subr.bf16.mxu0 0
    %2207 = vmatpush2.bf16.msra.mxu0 %v2107
    %2208 = vmatprep.subr.bf16.mxu0 0
    %2209 = vmatpush2.bf16.msra.mxu0 %v2106
    %2210 = vmatprep.subr.bf16.mxu0 0
    %2211 = vmatpush2.bf16.msra.mxu0 %v2105
    %2212 = vmatprep.subr.bf16.mxu0 0
    %2213 = vmatpush2.bf16.msra.mxu0 %v2104
    %2214 = vmatprep.subr.bf16.mxu0 0
    %2215 = vmatpush2.bf16.msra.mxu0 %v2103
    %2216 = vmatprep.mubr.bf16.mxu0 %v1879
    %2217 = vmatmul.mubr.bf16.gmra.mxu0 %v1878
    %v2218 = vpop.f32.mrf.mxu0
    %v2219 = vadd.f32 %v2178, %v2218
    %v2220 = vpop.f32.mrf.mxu0
    %v2221 = vpop.f32.mrf.mxu0
    %v2222 = vadd.f32 %v2181, %v2221
    %v2223 = vpop.f32.mrf.mxu0
    %2224 = vdwg.mxu0
    %v2225 = vpack.c.bf16 %v2222, %v2219
    %v2226 = vld [vmem:[#allocation10] sm:$0xff]
    %v2227 = vld [vmem:[#allocation10 + $0x8] sm:$0xff]
    %v2228 = vld [vmem:[#allocation10 + $0x10] sm:$0xff]
    %v2229 = vld [vmem:[#allocation10 + $0x18] sm:$0xff]
    %v2230 = vld [vmem:[#allocation10 + $0x20] sm:$0xff]
    %v2231 = vld [vmem:[#allocation10 + $0x28] sm:$0xff]
    %v2232 = vld [vmem:[#allocation10 + $0x30] sm:$0xff]
    %v2233 = vld [vmem:[#allocation10 + $0x38] sm:$0xff]
    %v2234 = vld [vmem:[#allocation10 + $0x40] sm:$0xff]
    %v2235 = vld [vmem:[#allocation10 + $0x48] sm:$0xff]
    %v2236 = vld [vmem:[#allocation10 + $0x50] sm:$0xff]
    %v2237 = vld [vmem:[#allocation10 + $0x58] sm:$0xff]
    %v2238 = vld [vmem:[#allocation10 + $0x60] sm:$0xff]
    %v2239 = vld [vmem:[#allocation10 + $0x68] sm:$0xff]
    %v2240 = vld [vmem:[#allocation10 + $0x70] sm:$0xff]
    %v2241 = vld [vmem:[#allocation10 + $0x78] sm:$0xff]
    %v2242 = vld [vmem:[#allocation10 + $0x80] sm:$0xff]
    %v2243 = vld [vmem:[#allocation10 + $0x88] sm:$0xff]
    %v2244 = vld [vmem:[#allocation10 + $0x90] sm:$0xff]
    %v2245 = vld [vmem:[#allocation10 + $0x98] sm:$0xff]
    %v2246 = vld [vmem:[#allocation10 + $0xa0] sm:$0xff]
    %v2247 = vld [vmem:[#allocation10 + $0xa8] sm:$0xff]
    %v2248 = vld [vmem:[#allocation10 + $0xb0] sm:$0xff]
    %v2249 = vld [vmem:[#allocation10 + $0xb8] sm:$0xff]
    %v2250 = vld [vmem:[#allocation10 + $0xc0] sm:$0xff]
    %v2251 = vld [vmem:[#allocation10 + $0xc8] sm:$0xff]
    %v2252 = vld [vmem:[#allocation10 + $0xd0] sm:$0xff]
    %v2253 = vld [vmem:[#allocation10 + $0xd8] sm:$0xff]
    %v2254 = vld [vmem:[#allocation10 + $0xe0] sm:$0xff]
    %v2255 = vld [vmem:[#allocation10 + $0xe8] sm:$0xff]
    %v2256 = vld [vmem:[#allocation10 + $0xf0] sm:$0xff]
    %v2257 = vld [vmem:[#allocation10 + $0xf8] sm:$0xff]
    %v2258 = vld [vmem:[%s6] sm:$0xf]
    %v2260 = vlaneseq
    %v2261 = vshrl.u32 %v2260, 7
    %v2262 = vsub.s32 0, %v2261
    %v2263 = vrot.slane %v2258, %v2262
    %v2264 = vlaneseq
    %v2265 = vshrl.u32 %v2264, 7
    %v2266 = vsub.s32 1, %v2265
    %v2267 = vrot.slane %v2258, %v2266
    %v2268 = vlaneseq
    %v2269 = vshrl.u32 %v2268, 7
    %v2270 = vsub.s32 2, %v2269
    %v2271 = vrot.slane %v2258, %v2270
    %v2272 = vlaneseq
    %v2273 = vshrl.u32 %v2272, 7
    %v2274 = vsub.s32 3, %v2273
    %v2275 = vrot.slane %v2258, %v2274
    %v2312 = vunpack.c.l.b16 %v2226
    %v2313 = vunpack.c.h.b16 %v2226
    %v2314 = vunpack.c.l.b16 %v2227
    %v2315 = vunpack.c.h.b16 %v2227
    %v2316 = vunpack.c.l.b16 %v2228
    %v2317 = vunpack.c.h.b16 %v2228
    %v2318 = vunpack.c.l.b16 %v2229
    %v2319 = vunpack.c.h.b16 %v2229
    %v2320 = vunpack.c.l.b16 %v2230
    %v2321 = vunpack.c.h.b16 %v2230
    %v2322 = vunpack.c.l.b16 %v2231
    %v2323 = vunpack.c.h.b16 %v2231
    %v2324 = vunpack.c.l.b16 %v2232
    %v2325 = vunpack.c.h.b16 %v2232
    %v2326 = vunpack.c.l.b16 %v2233
    %v2327 = vunpack.c.h.b16 %v2233
    %v2328 = vunpack.c.l.b16 %v2234
    %v2329 = vunpack.c.h.b16 %v2234
    %v2330 = vunpack.c.l.b16 %v2235
    %v2331 = vunpack.c.h.b16 %v2235
    %v2332 = vunpack.c.l.b16 %v2236
    %v2333 = vunpack.c.h.b16 %v2236
    %v2334 = vunpack.c.l.b16 %v2237
    %v2335 = vunpack.c.h.b16 %v2237
    %v2336 = vunpack.c.l.b16 %v2238
    %v2337 = vunpack.c.h.b16 %v2238
    %v2338 = vunpack.c.l.b16 %v2239
    %v2339 = vunpack.c.h.b16 %v2239
    %v2340 = vunpack.c.l.b16 %v2240
    %v2341 = vunpack.c.h.b16 %v2240
    %v2342 = vunpack.c.l.b16 %v2241
    %v2343 = vunpack.c.h.b16 %v2241
    %v2344 = vunpack.c.l.b16 %v2242
    %v2345 = vunpack.c.h.b16 %v2242
    %v2346 = vunpack.c.l.b16 %v2243
    %v2347 = vunpack.c.h.b16 %v2243
    %v2348 = vunpack.c.l.b16 %v2244
    %v2349 = vunpack.c.h.b16 %v2244
    %v2350 = vunpack.c.l.b16 %v2245
    %v2351 = vunpack.c.h.b16 %v2245
    %v2352 = vunpack.c.l.b16 %v2246
    %v2353 = vunpack.c.h.b16 %v2246
    %v2354 = vunpack.c.l.b16 %v2247
    %v2355 = vunpack.c.h.b16 %v2247
    %v2356 = vunpack.c.l.b16 %v2248
    %v2357 = vunpack.c.h.b16 %v2248
    %v2358 = vunpack.c.l.b16 %v2249
    %v2359 = vunpack.c.h.b16 %v2249
    %v2360 = vunpack.c.l.b16 %v2250
    %v2361 = vunpack.c.h.b16 %v2250
    %v2362 = vunpack.c.l.b16 %v2251
    %v2363 = vunpack.c.h.b16 %v2251
    %v2364 = vunpack.c.l.b16 %v2252
    %v2365 = vunpack.c.h.b16 %v2252
    %v2366 = vunpack.c.l.b16 %v2253
    %v2367 = vunpack.c.h.b16 %v2253
    %v2368 = vunpack.c.l.b16 %v2254
    %v2369 = vunpack.c.h.b16 %v2254
    %v2370 = vunpack.c.l.b16 %v2255
    %v2371 = vunpack.c.h.b16 %v2255
    %v2372 = vunpack.c.l.b16 %v2256
    %v2373 = vunpack.c.h.b16 %v2256
    %v2374 = vunpack.c.l.b16 %v2257
    %v2375 = vunpack.c.h.b16 %v2257
    %v2376 = vpack.c.b16 %v2316, %v2312
    %v2377 = vpack.c.b16 %v2317, %v2313
    %v2378 = vpack.c.b16 %v2318, %v2314
    %v2379 = vpack.c.b16 %v2319, %v2315
    %v2380 = vpack.c.b16 %v2324, %v2320
    %v2381 = vpack.c.b16 %v2325, %v2321
    %v2382 = vpack.c.b16 %v2326, %v2322
    %v2383 = vpack.c.b16 %v2327, %v2323
    %v2384 = vpack.c.b16 %v2332, %v2328
    %v2385 = vpack.c.b16 %v2333, %v2329
    %v2386 = vpack.c.b16 %v2334, %v2330
    %v2387 = vpack.c.b16 %v2335, %v2331
    %v2388 = vpack.c.b16 %v2340, %v2336
    %v2389 = vpack.c.b16 %v2341, %v2337
    %v2390 = vpack.c.b16 %v2342, %v2338
    %v2391 = vpack.c.b16 %v2343, %v2339
    %v2392 = vpack.c.b16 %v2348, %v2344
    %v2393 = vpack.c.b16 %v2349, %v2345
    %v2394 = vpack.c.b16 %v2350, %v2346
    %v2395 = vpack.c.b16 %v2351, %v2347
    %v2396 = vpack.c.b16 %v2356, %v2352
    %v2397 = vpack.c.b16 %v2357, %v2353
    %v2398 = vpack.c.b16 %v2358, %v2354
    %v2399 = vpack.c.b16 %v2359, %v2355
    %v2400 = vpack.c.b16 %v2364, %v2360
    %v2401 = vpack.c.b16 %v2365, %v2361
    %v2402 = vpack.c.b16 %v2366, %v2362
    %v2403 = vpack.c.b16 %v2367, %v2363
    %v2404 = vpack.c.b16 %v2372, %v2368
    %v2405 = vpack.c.b16 %v2373, %v2369
    %v2406 = vpack.c.b16 %v2374, %v2370
    %v2407 = vpack.c.b16 %v2375, %v2371
    %2440 = vmatprep.subr.bf16.mxu0 %v2405
    %2441 = vmatpush1.bf16.msra.mxu0 %v2404
    %2442 = vmatprep.subr.bf16.mxu0 %v2401
    %2443 = vmatpush1.bf16.msra.mxu0 %v2400
    %2444 = vmatprep.subr.bf16.mxu0 %v2397
    %2445 = vmatpush1.bf16.msra.mxu0 %v2396
    %2446 = vmatprep.subr.bf16.mxu0 %v2393
    %2447 = vmatpush1.bf16.msra.mxu0 %v2392
    %2448 = vmatprep.subr.bf16.mxu0 %v2389
    %2449 = vmatpush1.bf16.msra.mxu0 %v2388
    %2450 = vmatprep.subr.bf16.mxu0 %v2385
    %2451 = vmatpush1.bf16.msra.mxu0 %v2384
    %2452 = vmatprep.subr.bf16.mxu0 %v2381
    %2453 = vmatpush1.bf16.msra.mxu0 %v2380
    %2454 = vmatprep.subr.bf16.mxu0 %v2377
    %2455 = vmatpush1.bf16.msra.mxu0 %v2376
    %2456 = vmatprep.subr.bf16.mxu0 0
    %2457 = vmatpush2.bf16.msra.mxu0 0
    %2458 = vmatprep.subr.bf16.mxu0 0
    %2459 = vmatpush2.bf16.msra.mxu0 0
    %2460 = vmatprep.subr.bf16.mxu0 0
    %2461 = vmatpush2.bf16.msra.mxu0 0
    %2462 = vmatprep.subr.bf16.mxu0 0
    %2463 = vmatpush2.bf16.msra.mxu0 0
    %2464 = vmatprep.subr.bf16.mxu0 0
    %2465 = vmatpush2.bf16.msra.mxu0 0
    %2466 = vmatprep.subr.bf16.mxu0 0
    %2467 = vmatpush2.bf16.msra.mxu0 0
    %2468 = vmatprep.subr.bf16.mxu0 0
    %2469 = vmatpush2.bf16.msra.mxu0 0
    %2470 = vmatprep.subr.bf16.mxu0 0
    %2471 = vmatpush2.bf16.msra.mxu0 0
    %2472 = vmatprep.mubr.bf16.mxu0 0
    %2473 = vmatmul.mubr.bf16.gmra.mxu0 %v2225
    %v2474 = vpop.f32.mrf.mxu0
    %v2475 = vadd.f32 %v2263, %v2474
    %v2476 = vpop.f32.mrf.mxu0
    %v2477 = vadd.f32 %v2267, %v2476
    %v2478 = vpop.f32.mrf.mxu0
    %v2479 = vadd.f32 %v2263, %v2478
    %v2480 = vpop.f32.mrf.mxu0
    %v2481 = vadd.f32 %v2267, %v2480
    %2482 = vdwg.mxu0
    %2483 = vmatprep.subr.bf16.mxu0 %v2407
    %2484 = vmatpush1.bf16.msra.mxu0 %v2406
    %2485 = vmatprep.subr.bf16.mxu0 %v2403
    %2486 = vmatpush1.bf16.msra.mxu0 %v2402
    %2487 = vmatprep.subr.bf16.mxu0 %v2399
    %2488 = vmatpush1.bf16.msra.mxu0 %v2398
    %2489 = vmatprep.subr.bf16.mxu0 %v2395
    %2490 = vmatpush1.bf16.msra.mxu0 %v2394
    %2491 = vmatprep.subr.bf16.mxu0 %v2391
    %2492 = vmatpush1.bf16.msra.mxu0 %v2390
    %2493 = vmatprep.subr.bf16.mxu0 %v2387
    %2494 = vmatpush1.bf16.msra.mxu0 %v2386
    %2495 = vmatprep.subr.bf16.mxu0 %v2383
    %2496 = vmatpush1.bf16.msra.mxu0 %v2382
    %2497 = vmatprep.subr.bf16.mxu0 %v2379
    %2498 = vmatpush1.bf16.msra.mxu0 %v2378
    %2499 = vmatprep.subr.bf16.mxu0 0
    %2500 = vmatpush2.bf16.msra.mxu0 0
    %2501 = vmatprep.subr.bf16.mxu0 0
    %2502 = vmatpush2.bf16.msra.mxu0 0
    %2503 = vmatprep.subr.bf16.mxu0 0
    %2504 = vmatpush2.bf16.msra.mxu0 0
    %2505 = vmatprep.subr.bf16.mxu0 0
    %2506 = vmatpush2.bf16.msra.mxu0 0
    %2507 = vmatprep.subr.bf16.mxu0 0
    %2508 = vmatpush2.bf16.msra.mxu0 0
    %2509 = vmatprep.subr.bf16.mxu0 0
    %2510 = vmatpush2.bf16.msra.mxu0 0
    %2511 = vmatprep.subr.bf16.mxu0 0
    %2512 = vmatpush2.bf16.msra.mxu0 0
    %2513 = vmatprep.subr.bf16.mxu0 0
    %2514 = vmatpush2.bf16.msra.mxu0 0
    %2515 = vmatprep.mubr.bf16.mxu0 0
    %2516 = vmatmul.mubr.bf16.gmra.mxu0 %v2225
    %v2517 = vpop.f32.mrf.mxu0
    %v2518 = vadd.f32 %v2271, %v2517
    %v2519 = vpop.f32.mrf.mxu0
    %v2520 = vadd.f32 %v2275, %v2519
    %v2521 = vpop.f32.mrf.mxu0
    %v2522 = vadd.f32 %v2271, %v2521
    %v2523 = vpop.f32.mrf.mxu0
    %v2524 = vadd.f32 %v2275, %v2523
    %2525 = vdwg.mxu0
    %v2526 = vmax.f32 %v2475, 0.0
    %v2527 = vmax.f32 %v2477, 0.0
    %v2528 = vmax.f32 %v2518, 0.0
    %v2529 = vmax.f32 %v2520, 0.0
    %v2530 = vmax.f32 %v2479, 0.0
    %v2531 = vmax.f32 %v2481, 0.0
    %v2532 = vmax.f32 %v2522, 0.0
    %v2533 = vmax.f32 %v2524, 0.0
    %v2534 = vpack.c.bf16 %v2530, %v2526
    %v2535 = vpack.c.bf16 %v2531, %v2527
    %v2536 = vpack.c.bf16 %v2532, %v2528
    %v2537 = vpack.c.bf16 %v2533, %v2529
    %v2538 = vld [vmem:[#allocation11] sm:$0xff]
    %v2539 = vld [vmem:[#allocation11 + $0x8] sm:$0xff]
    %v2540 = vld [vmem:[#allocation11 + $0x10] sm:$0xff]
    %v2541 = vld [vmem:[#allocation11 + $0x18] sm:$0xf]
    %v2542 = vld [vmem:[#allocation11 + $0x1c] sm:$0xff]
    %v2543 = vld [vmem:[#allocation11 + $0x24] sm:$0xff]
    %v2544 = vld [vmem:[#allocation11 + $0x2c] sm:$0xff]
    %v2545 = vld [vmem:[#allocation11 + $0x34] sm:$0xf]
    %v2546 = vld [vmem:[#allocation11 + $0x38] sm:$0xff]
    %v2547 = vld [vmem:[#allocation11 + $0x40] sm:$0xff]
    %v2548 = vld [vmem:[#allocation11 + $0x48] sm:$0xff]
    %v2549 = vld [vmem:[#allocation11 + $0x50] sm:$0xf]
    %v2550 = vld [vmem:[#allocation11 + $0x54] sm:$0xff]
    %v2551 = vld [vmem:[#allocation11 + $0x5c] sm:$0xff]
    %v2552 = vld [vmem:[#allocation11 + $0x64] sm:$0xff]
    %v2553 = vld [vmem:[#allocation11 + $0x6c] sm:$0xf]
    %v2554 = vld [vmem:[#allocation11 + $0x70] sm:$0xff]
    %v2555 = vld [vmem:[#allocation11 + $0x78] sm:$0xff]
    %v2556 = vld [vmem:[#allocation11 + $0x80] sm:$0xff]
    %v2557 = vld [vmem:[#allocation11 + $0x88] sm:$0xf]
    %v2558 = vld [vmem:[#allocation11 + $0x8c] sm:$0xff]
    %v2559 = vld [vmem:[#allocation11 + $0x94] sm:$0xff]
    %v2560 = vld [vmem:[#allocation11 + $0x9c] sm:$0xff]
    %v2561 = vld [vmem:[#allocation11 + $0xa4] sm:$0xf]
    %v2562 = vld [vmem:[#allocation11 + $0xa8] sm:$0xff]
    %v2563 = vld [vmem:[#allocation11 + $0xb0] sm:$0xff]
    %v2564 = vld [vmem:[#allocation11 + $0xb8] sm:$0xff]
    %v2565 = vld [vmem:[#allocation11 + $0xc0] sm:$0xf]
    %v2566 = vld [vmem:[#allocation11 + $0xc4] sm:$0xff]
    %v2567 = vld [vmem:[#allocation11 + $0xcc] sm:$0xff]
    %v2568 = vld [vmem:[#allocation11 + $0xd4] sm:$0xff]
    %v2569 = vld [vmem:[#allocation11 + $0xdc] sm:$0xf]
    %v2570 = vld [vmem:[#allocation11 + $0xe0] sm:$0xff]
    %v2571 = vld [vmem:[#allocation11 + $0xe8] sm:$0xff]
    %v2572 = vld [vmem:[#allocation11 + $0xf0] sm:$0xff]
    %v2573 = vld [vmem:[#allocation11 + $0xf8] sm:$0xf]
    %v2574 = vld [vmem:[#allocation11 + $0xfc] sm:$0xff]
    %v2575 = vld [vmem:[#allocation11 + $0x104] sm:$0xff]
    %v2576 = vld [vmem:[#allocation11 + $0x10c] sm:$0xff]
    %v2577 = vld [vmem:[#allocation11 + $0x114] sm:$0xf]
    %v2578 = vld [vmem:[#allocation11 + $0x118] sm:$0xff]
    %v2579 = vld [vmem:[#allocation11 + $0x120] sm:$0xff]
    %v2580 = vld [vmem:[#allocation11 + $0x128] sm:$0xff]
    %v2581 = vld [vmem:[#allocation11 + $0x130] sm:$0xf]
    %v2582 = vld [vmem:[#allocation11 + $0x134] sm:$0xff]
    %v2583 = vld [vmem:[#allocation11 + $0x13c] sm:$0xff]
    %v2584 = vld [vmem:[#allocation11 + $0x144] sm:$0xff]
    %v2585 = vld [vmem:[#allocation11 + $0x14c] sm:$0xf]
    %v2586 = vld [vmem:[#allocation11 + $0x150] sm:$0xff]
    %v2587 = vld [vmem:[#allocation11 + $0x158] sm:$0xff]
    %v2588 = vld [vmem:[#allocation11 + $0x160] sm:$0xff]
    %v2589 = vld [vmem:[#allocation11 + $0x168] sm:$0xf]
    %v2590 = vld [vmem:[#allocation11 + $0x16c] sm:$0xff]
    %v2591 = vld [vmem:[#allocation11 + $0x174] sm:$0xff]
    %v2592 = vld [vmem:[#allocation11 + $0x17c] sm:$0xff]
    %v2593 = vld [vmem:[#allocation11 + $0x184] sm:$0xf]
    %v2594 = vld [vmem:[#allocation11 + $0x188] sm:$0xff]
    %v2595 = vld [vmem:[#allocation11 + $0x190] sm:$0xff]
    %v2596 = vld [vmem:[#allocation11 + $0x198] sm:$0xff]
    %v2597 = vld [vmem:[#allocation11 + $0x1a0] sm:$0xf]
    %v2598 = vld [vmem:[#allocation11 + $0x1a4] sm:$0xff]
    %v2599 = vld [vmem:[#allocation11 + $0x1ac] sm:$0xff]
    %v2600 = vld [vmem:[#allocation11 + $0x1b4] sm:$0xff]
    %v2601 = vld [vmem:[#allocation11 + $0x1bc] sm:$0xf]
    %v2602 = vld [vmem:[#allocation11 + $0x1c0] sm:$0xff]
    %v2603 = vld [vmem:[#allocation11 + $0x1c8] sm:$0xff]
    %v2604 = vld [vmem:[#allocation11 + $0x1d0] sm:$0xff]
    %v2605 = vld [vmem:[#allocation11 + $0x1d8] sm:$0xf]
    %v2606 = vld [vmem:[#allocation11 + $0x1dc] sm:$0xff]
    %v2607 = vld [vmem:[#allocation11 + $0x1e4] sm:$0xff]
    %v2608 = vld [vmem:[#allocation11 + $0x1ec] sm:$0xff]
    %v2609 = vld [vmem:[#allocation11 + $0x1f4] sm:$0xf]
    %v2610 = vld [vmem:[#allocation11 + $0x1f8] sm:$0xff]
    %v2611 = vld [vmem:[#allocation11 + $0x200] sm:$0xff]
    %v2612 = vld [vmem:[#allocation11 + $0x208] sm:$0xff]
    %v2613 = vld [vmem:[#allocation11 + $0x210] sm:$0xf]
    %v2614 = vld [vmem:[#allocation11 + $0x214] sm:$0xff]
    %v2615 = vld [vmem:[#allocation11 + $0x21c] sm:$0xff]
    %v2616 = vld [vmem:[#allocation11 + $0x224] sm:$0xff]
    %v2617 = vld [vmem:[#allocation11 + $0x22c] sm:$0xf]
    %v2618 = vld [vmem:[#allocation11 + $0x230] sm:$0xff]
    %v2619 = vld [vmem:[#allocation11 + $0x238] sm:$0xff]
    %v2620 = vld [vmem:[#allocation11 + $0x240] sm:$0xff]
    %v2621 = vld [vmem:[#allocation11 + $0x248] sm:$0xf]
    %v2622 = vld [vmem:[#allocation11 + $0x24c] sm:$0xff]
    %v2623 = vld [vmem:[#allocation11 + $0x254] sm:$0xff]
    %v2624 = vld [vmem:[#allocation11 + $0x25c] sm:$0xff]
    %v2625 = vld [vmem:[#allocation11 + $0x264] sm:$0xf]
    %v2626 = vld [vmem:[#allocation11 + $0x268] sm:$0xff]
    %v2627 = vld [vmem:[#allocation11 + $0x270] sm:$0xff]
    %v2628 = vld [vmem:[#allocation11 + $0x278] sm:$0xff]
    %v2629 = vld [vmem:[#allocation11 + $0x280] sm:$0xf]
    %v2630 = vld [vmem:[#allocation11 + $0x284] sm:$0xff]
    %v2631 = vld [vmem:[#allocation11 + $0x28c] sm:$0xff]
    %v2632 = vld [vmem:[#allocation11 + $0x294] sm:$0xff]
    %v2633 = vld [vmem:[#allocation11 + $0x29c] sm:$0xf]
    %v2634 = vld [vmem:[#allocation11 + $0x2a0] sm:$0xff]
    %v2635 = vld [vmem:[#allocation11 + $0x2a8] sm:$0xff]
    %v2636 = vld [vmem:[#allocation11 + $0x2b0] sm:$0xff]
    %v2637 = vld [vmem:[#allocation11 + $0x2b8] sm:$0xf]
    %v2638 = vld [vmem:[#allocation11 + $0x2bc] sm:$0xff]
    %v2639 = vld [vmem:[#allocation11 + $0x2c4] sm:$0xff]
    %v2640 = vld [vmem:[#allocation11 + $0x2cc] sm:$0xff]
    %v2641 = vld [vmem:[#allocation11 + $0x2d4] sm:$0xf]
    %v2642 = vld [vmem:[#allocation11 + $0x2d8] sm:$0xff]
    %v2643 = vld [vmem:[#allocation11 + $0x2e0] sm:$0xff]
    %v2644 = vld [vmem:[#allocation11 + $0x2e8] sm:$0xff]
    %v2645 = vld [vmem:[#allocation11 + $0x2f0] sm:$0xf]
    %v2646 = vld [vmem:[#allocation11 + $0x2f4] sm:$0xff]
    %v2647 = vld [vmem:[#allocation11 + $0x2fc] sm:$0xff]
    %v2648 = vld [vmem:[#allocation11 + $0x304] sm:$0xff]
    %v2649 = vld [vmem:[#allocation11 + $0x30c] sm:$0xf]
    %v2650 = vld [vmem:[#allocation11 + $0x310] sm:$0xff]
    %v2651 = vld [vmem:[#allocation11 + $0x318] sm:$0xff]
    %v2652 = vld [vmem:[#allocation11 + $0x320] sm:$0xff]
    %v2653 = vld [vmem:[#allocation11 + $0x328] sm:$0xf]
    %v2654 = vld [vmem:[#allocation11 + $0x32c] sm:$0xff]
    %v2655 = vld [vmem:[#allocation11 + $0x334] sm:$0xff]
    %v2656 = vld [vmem:[#allocation11 + $0x33c] sm:$0xff]
    %v2657 = vld [vmem:[#allocation11 + $0x344] sm:$0xf]
    %v2658 = vld [vmem:[#allocation11 + $0x348] sm:$0xff]
    %v2659 = vld [vmem:[#allocation11 + $0x350] sm:$0xff]
    %v2660 = vld [vmem:[#allocation11 + $0x358] sm:$0xff]
    %v2661 = vld [vmem:[#allocation11 + $0x360] sm:$0xf]
    %v2662 = vld [vmem:[#allocation11 + $0x364] sm:$0xff]
    %v2663 = vld [vmem:[#allocation11 + $0x36c] sm:$0xff]
    %v2664 = vld [vmem:[#allocation11 + $0x374] sm:$0xff]
    %v2665 = vld [vmem:[#allocation11 + $0x37c] sm:$0xf]
    %v2666 = vld [vmem:[#allocation11 + $0x380] sm:$0xff]
    %v2667 = vld [vmem:[#allocation11 + $0x388] sm:$0xff]
    %v2668 = vld [vmem:[#allocation11 + $0x390] sm:$0xff]
    %v2669 = vld [vmem:[#allocation11 + $0x398] sm:$0xf]
    %v2670 = vld [vmem:[#allocation11 + $0x39c] sm:$0xff]
    %v2671 = vld [vmem:[#allocation11 + $0x3a4] sm:$0xff]
    %v2672 = vld [vmem:[#allocation11 + $0x3ac] sm:$0xff]
    %v2673 = vld [vmem:[#allocation11 + $0x3b4] sm:$0xf]
    %v2674 = vld [vmem:[#allocation11 + $0x3b8] sm:$0xff]
    %v2675 = vld [vmem:[#allocation11 + $0x3c0] sm:$0xff]
    %v2676 = vld [vmem:[#allocation11 + $0x3c8] sm:$0xff]
    %v2677 = vld [vmem:[#allocation11 + $0x3d0] sm:$0xf]
    %v2678 = vld [vmem:[#allocation11 + $0x3d4] sm:$0xff]
    %v2679 = vld [vmem:[#allocation11 + $0x3dc] sm:$0xff]
    %v2680 = vld [vmem:[#allocation11 + $0x3e4] sm:$0xff]
    %v2681 = vld [vmem:[#allocation11 + $0x3ec] sm:$0xf]
    %v2682 = vld [vmem:[#allocation11 + $0x3f0] sm:$0xff]
    %v2683 = vld [vmem:[#allocation11 + $0x3f8] sm:$0xff]
    %v2684 = vld [vmem:[#allocation11 + $0x400] sm:$0xff]
    %v2685 = vld [vmem:[#allocation11 + $0x408] sm:$0xf]
    %v2686 = vld [vmem:[#allocation11 + $0x40c] sm:$0xff]
    %v2687 = vld [vmem:[#allocation11 + $0x414] sm:$0xff]
    %v2688 = vld [vmem:[#allocation11 + $0x41c] sm:$0xff]
    %v2689 = vld [vmem:[#allocation11 + $0x424] sm:$0xf]
    %v2690 = vld [vmem:[#allocation11 + $0x428] sm:$0xff]
    %v2691 = vld [vmem:[#allocation11 + $0x430] sm:$0xff]
    %v2692 = vld [vmem:[#allocation11 + $0x438] sm:$0xff]
    %v2693 = vld [vmem:[#allocation11 + $0x440] sm:$0xf]
    %v2694 = vld [vmem:[#allocation11 + $0x444] sm:$0xff]
    %v2695 = vld [vmem:[#allocation11 + $0x44c] sm:$0xff]
    %v2696 = vld [vmem:[#allocation11 + $0x454] sm:$0xff]
    %v2697 = vld [vmem:[#allocation11 + $0x45c] sm:$0xf]
    %v2698 = vld [vmem:[#allocation11 + $0x460] sm:$0xff]
    %v2699 = vld [vmem:[#allocation11 + $0x468] sm:$0xff]
    %v2700 = vld [vmem:[#allocation11 + $0x470] sm:$0xff]
    %v2701 = vld [vmem:[#allocation11 + $0x478] sm:$0xf]
    %v2702 = vld [vmem:[#allocation11 + $0x47c] sm:$0xff]
    %v2703 = vld [vmem:[#allocation11 + $0x484] sm:$0xff]
    %v2704 = vld [vmem:[#allocation11 + $0x48c] sm:$0xff]
    %v2705 = vld [vmem:[#allocation11 + $0x494] sm:$0xf]
    %v2706 = vld [vmem:[#allocation11 + $0x498] sm:$0xff]
    %v2707 = vld [vmem:[#allocation11 + $0x4a0] sm:$0xff]
    %v2708 = vld [vmem:[#allocation11 + $0x4a8] sm:$0xff]
    %v2709 = vld [vmem:[#allocation11 + $0x4b0] sm:$0xf]
    %v2710 = vld [vmem:[#allocation11 + $0x4b4] sm:$0xff]
    %v2711 = vld [vmem:[#allocation11 + $0x4bc] sm:$0xff]
    %v2712 = vld [vmem:[#allocation11 + $0x4c4] sm:$0xff]
    %v2713 = vld [vmem:[#allocation11 + $0x4cc] sm:$0xf]
    %v2714 = vld [vmem:[#allocation11 + $0x4d0] sm:$0xff]
    %v2715 = vld [vmem:[#allocation11 + $0x4d8] sm:$0xff]
    %v2716 = vld [vmem:[#allocation11 + $0x4e0] sm:$0xff]
    %v2717 = vld [vmem:[#allocation11 + $0x4e8] sm:$0xf]
    %v2718 = vld [vmem:[#allocation11 + $0x4ec] sm:$0xff]
    %v2719 = vld [vmem:[#allocation11 + $0x4f4] sm:$0xff]
    %v2720 = vld [vmem:[#allocation11 + $0x4fc] sm:$0xff]
    %v2721 = vld [vmem:[#allocation11 + $0x504] sm:$0xf]
    %v2722 = vld [vmem:[#allocation11 + $0x508] sm:$0xff]
    %v2723 = vld [vmem:[#allocation11 + $0x510] sm:$0xff]
    %v2724 = vld [vmem:[#allocation11 + $0x518] sm:$0xff]
    %v2725 = vld [vmem:[#allocation11 + $0x520] sm:$0xf]
    %v2726 = vld [vmem:[#allocation11 + $0x524] sm:$0xff]
    %v2727 = vld [vmem:[#allocation11 + $0x52c] sm:$0xff]
    %v2728 = vld [vmem:[#allocation11 + $0x534] sm:$0xff]
    %v2729 = vld [vmem:[#allocation11 + $0x53c] sm:$0xf]
    %v2730 = vld [vmem:[#allocation11 + $0x540] sm:$0xff]
    %v2731 = vld [vmem:[#allocation11 + $0x548] sm:$0xff]
    %v2732 = vld [vmem:[#allocation11 + $0x550] sm:$0xff]
    %v2733 = vld [vmem:[#allocation11 + $0x558] sm:$0xf]
    %v2734 = vld [vmem:[#allocation11 + $0x55c] sm:$0xff]
    %v2735 = vld [vmem:[#allocation11 + $0x564] sm:$0xff]
    %v2736 = vld [vmem:[#allocation11 + $0x56c] sm:$0xff]
    %v2737 = vld [vmem:[#allocation11 + $0x574] sm:$0xf]
    %v2738 = vld [vmem:[#allocation11 + $0x578] sm:$0xff]
    %v2739 = vld [vmem:[#allocation11 + $0x580] sm:$0xff]
    %v2740 = vld [vmem:[#allocation11 + $0x588] sm:$0xff]
    %v2741 = vld [vmem:[#allocation11 + $0x590] sm:$0xf]
    %v2742 = vld [vmem:[#allocation11 + $0x594] sm:$0xff]
    %v2743 = vld [vmem:[#allocation11 + $0x59c] sm:$0xff]
    %v2744 = vld [vmem:[#allocation11 + $0x5a4] sm:$0xff]
    %v2745 = vld [vmem:[#allocation11 + $0x5ac] sm:$0xf]
    %v2746 = vld [vmem:[#allocation11 + $0x5b0] sm:$0xff]
    %v2747 = vld [vmem:[#allocation11 + $0x5b8] sm:$0xff]
    %v2748 = vld [vmem:[#allocation11 + $0x5c0] sm:$0xff]
    %v2749 = vld [vmem:[#allocation11 + $0x5c8] sm:$0xf]
    %v2750 = vld [vmem:[#allocation11 + $0x5cc] sm:$0xff]
    %v2751 = vld [vmem:[#allocation11 + $0x5d4] sm:$0xff]
    %v2752 = vld [vmem:[#allocation11 + $0x5dc] sm:$0xff]
    %v2753 = vld [vmem:[#allocation11 + $0x5e4] sm:$0xf]
    %v2754 = vld [vmem:[#allocation11 + $0x5e8] sm:$0xff]
    %v2755 = vld [vmem:[#allocation11 + $0x5f0] sm:$0xff]
    %v2756 = vld [vmem:[#allocation11 + $0x5f8] sm:$0xff]
    %v2757 = vld [vmem:[#allocation11 + $0x600] sm:$0xf]
    %v2758 = vld [vmem:[#allocation11 + $0x604] sm:$0xff]
    %v2759 = vld [vmem:[#allocation11 + $0x60c] sm:$0xff]
    %v2760 = vld [vmem:[#allocation11 + $0x614] sm:$0xff]
    %v2761 = vld [vmem:[#allocation11 + $0x61c] sm:$0xf]
    %v2762 = vld [vmem:[#allocation11 + $0x620] sm:$0xff]
    %v2763 = vld [vmem:[#allocation11 + $0x628] sm:$0xff]
    %v2764 = vld [vmem:[#allocation11 + $0x630] sm:$0xff]
    %v2765 = vld [vmem:[#allocation11 + $0x638] sm:$0xf]
    %v2766 = vld [vmem:[#allocation11 + $0x63c] sm:$0xff]
    %v2767 = vld [vmem:[#allocation11 + $0x644] sm:$0xff]
    %v2768 = vld [vmem:[#allocation11 + $0x64c] sm:$0xff]
    %v2769 = vld [vmem:[#allocation11 + $0x654] sm:$0xf]
    %v2770 = vld [vmem:[#allocation11 + $0x658] sm:$0xff]
    %v2771 = vld [vmem:[#allocation11 + $0x660] sm:$0xff]
    %v2772 = vld [vmem:[#allocation11 + $0x668] sm:$0xff]
    %v2773 = vld [vmem:[#allocation11 + $0x670] sm:$0xf]
    %v2774 = vld [vmem:[#allocation11 + $0x674] sm:$0xff]
    %v2775 = vld [vmem:[#allocation11 + $0x67c] sm:$0xff]
    %v2776 = vld [vmem:[#allocation11 + $0x684] sm:$0xff]
    %v2777 = vld [vmem:[#allocation11 + $0x68c] sm:$0xf]
    %v2778 = vld [vmem:[#allocation11 + $0x690] sm:$0xff]
    %v2779 = vld [vmem:[#allocation11 + $0x698] sm:$0xff]
    %v2780 = vld [vmem:[#allocation11 + $0x6a0] sm:$0xff]
    %v2781 = vld [vmem:[#allocation11 + $0x6a8] sm:$0xf]
    %v2782 = vld [vmem:[#allocation11 + $0x6ac] sm:$0xff]
    %v2783 = vld [vmem:[#allocation11 + $0x6b4] sm:$0xff]
    %v2784 = vld [vmem:[#allocation11 + $0x6bc] sm:$0xff]
    %v2785 = vld [vmem:[#allocation11 + $0x6c4] sm:$0xf]
    %v2786 = vld [vmem:[#allocation11 + $0x6c8] sm:$0xff]
    %v2787 = vld [vmem:[#allocation11 + $0x6d0] sm:$0xff]
    %v2788 = vld [vmem:[#allocation11 + $0x6d8] sm:$0xff]
    %v2789 = vld [vmem:[#allocation11 + $0x6e0] sm:$0xf]
    %v2790 = vld [vmem:[#allocation11 + $0x6e4] sm:$0xff]
    %v2791 = vld [vmem:[#allocation11 + $0x6ec] sm:$0xff]
    %v2792 = vld [vmem:[#allocation11 + $0x6f4] sm:$0xff]
    %v2793 = vld [vmem:[#allocation11 + $0x6fc] sm:$0xf]
    %v2794 = vld [vmem:[%s8] sm:$0xff]
    %v2796 = vlaneseq
    %v2797 = vshrl.u32 %v2796, 7
    %v2798 = vsub.s32 0, %v2797
    %v2799 = vrot.slane %v2794, %v2798
    %v2800 = vlaneseq
    %v2801 = vshrl.u32 %v2800, 7
    %v2802 = vsub.s32 1, %v2801
    %v2803 = vrot.slane %v2794, %v2802
    %v2804 = vlaneseq
    %v2805 = vshrl.u32 %v2804, 7
    %v2806 = vsub.s32 2, %v2805
    %v2807 = vrot.slane %v2794, %v2806
    %v2808 = vlaneseq
    %v2809 = vshrl.u32 %v2808, 7
    %v2810 = vsub.s32 3, %v2809
    %v2811 = vrot.slane %v2794, %v2810
    %v2812 = vlaneseq
    %v2813 = vshrl.u32 %v2812, 7
    %v2814 = vsub.s32 4, %v2813
    %v2815 = vrot.slane %v2794, %v2814
    %v2816 = vlaneseq
    %v2817 = vshrl.u32 %v2816, 7
    %v2818 = vsub.s32 5, %v2817
    %v2819 = vrot.slane %v2794, %v2818
    %v2820 = vlaneseq
    %v2821 = vshrl.u32 %v2820, 7
    %v2822 = vsub.s32 6, %v2821
    %v2823 = vrot.slane %v2794, %v2822
    %v3087 = vunpack.c.l.b16 %v2538
    %v3088 = vunpack.c.h.b16 %v2538
    %v3089 = vunpack.c.l.b16 %v2539
    %v3090 = vunpack.c.h.b16 %v2539
    %v3091 = vunpack.c.l.b16 %v2540
    %v3092 = vunpack.c.h.b16 %v2540
    %v3093 = vunpack.c.l.b16 %v2541
    %v3094 = vunpack.c.l.b16 %v2542
    %v3095 = vunpack.c.h.b16 %v2542
    %v3096 = vunpack.c.l.b16 %v2543
    %v3097 = vunpack.c.h.b16 %v2543
    %v3098 = vunpack.c.l.b16 %v2544
    %v3099 = vunpack.c.h.b16 %v2544
    %v3100 = vunpack.c.l.b16 %v2545
    %v3101 = vunpack.c.l.b16 %v2546
    %v3102 = vunpack.c.h.b16 %v2546
    %v3103 = vunpack.c.l.b16 %v2547
    %v3104 = vunpack.c.h.b16 %v2547
    %v3105 = vunpack.c.l.b16 %v2548
    %v3106 = vunpack.c.h.b16 %v2548
    %v3107 = vunpack.c.l.b16 %v2549
    %v3108 = vunpack.c.l.b16 %v2550
    %v3109 = vunpack.c.h.b16 %v2550
    %v3110 = vunpack.c.l.b16 %v2551
    %v3111 = vunpack.c.h.b16 %v2551
    %v3112 = vunpack.c.l.b16 %v2552
    %v3113 = vunpack.c.h.b16 %v2552
    %v3114 = vunpack.c.l.b16 %v2553
    %v3115 = vunpack.c.l.b16 %v2554
    %v3116 = vunpack.c.h.b16 %v2554
    %v3117 = vunpack.c.l.b16 %v2555
    %v3118 = vunpack.c.h.b16 %v2555
    %v3119 = vunpack.c.l.b16 %v2556
    %v3120 = vunpack.c.h.b16 %v2556
    %v3121 = vunpack.c.l.b16 %v2557
    %v3122 = vunpack.c.l.b16 %v2558
    %v3123 = vunpack.c.h.b16 %v2558
    %v3124 = vunpack.c.l.b16 %v2559
    %v3125 = vunpack.c.h.b16 %v2559
    %v3126 = vunpack.c.l.b16 %v2560
    %v3127 = vunpack.c.h.b16 %v2560
    %v3128 = vunpack.c.l.b16 %v2561
    %v3129 = vunpack.c.l.b16 %v2562
    %v3130 = vunpack.c.h.b16 %v2562
    %v3131 = vunpack.c.l.b16 %v2563
    %v3132 = vunpack.c.h.b16 %v2563
    %v3133 = vunpack.c.l.b16 %v2564
    %v3134 = vunpack.c.h.b16 %v2564
    %v3135 = vunpack.c.l.b16 %v2565
    %v3136 = vunpack.c.l.b16 %v2566
    %v3137 = vunpack.c.h.b16 %v2566
    %v3138 = vunpack.c.l.b16 %v2567
    %v3139 = vunpack.c.h.b16 %v2567
    %v3140 = vunpack.c.l.b16 %v2568
    %v3141 = vunpack.c.h.b16 %v2568
    %v3142 = vunpack.c.l.b16 %v2569
    %v3143 = vunpack.c.l.b16 %v2570
    %v3144 = vunpack.c.h.b16 %v2570
    %v3145 = vunpack.c.l.b16 %v2571
    %v3146 = vunpack.c.h.b16 %v2571
    %v3147 = vunpack.c.l.b16 %v2572
    %v3148 = vunpack.c.h.b16 %v2572
    %v3149 = vunpack.c.l.b16 %v2573
    %v3150 = vunpack.c.l.b16 %v2574
    %v3151 = vunpack.c.h.b16 %v2574
    %v3152 = vunpack.c.l.b16 %v2575
    %v3153 = vunpack.c.h.b16 %v2575
    %v3154 = vunpack.c.l.b16 %v2576
    %v3155 = vunpack.c.h.b16 %v2576
    %v3156 = vunpack.c.l.b16 %v2577
    %v3157 = vunpack.c.l.b16 %v2578
    %v3158 = vunpack.c.h.b16 %v2578
    %v3159 = vunpack.c.l.b16 %v2579
    %v3160 = vunpack.c.h.b16 %v2579
    %v3161 = vunpack.c.l.b16 %v2580
    %v3162 = vunpack.c.h.b16 %v2580
    %v3163 = vunpack.c.l.b16 %v2581
    %v3164 = vunpack.c.l.b16 %v2582
    %v3165 = vunpack.c.h.b16 %v2582
    %v3166 = vunpack.c.l.b16 %v2583
    %v3167 = vunpack.c.h.b16 %v2583
    %v3168 = vunpack.c.l.b16 %v2584
    %v3169 = vunpack.c.h.b16 %v2584
    %v3170 = vunpack.c.l.b16 %v2585
    %v3171 = vunpack.c.l.b16 %v2586
    %v3172 = vunpack.c.h.b16 %v2586
    %v3173 = vunpack.c.l.b16 %v2587
    %v3174 = vunpack.c.h.b16 %v2587
    %v3175 = vunpack.c.l.b16 %v2588
    %v3176 = vunpack.c.h.b16 %v2588
    %v3177 = vunpack.c.l.b16 %v2589
    %v3178 = vunpack.c.l.b16 %v2590
    %v3179 = vunpack.c.h.b16 %v2590
    %v3180 = vunpack.c.l.b16 %v2591
    %v3181 = vunpack.c.h.b16 %v2591
    %v3182 = vunpack.c.l.b16 %v2592
    %v3183 = vunpack.c.h.b16 %v2592
    %v3184 = vunpack.c.l.b16 %v2593
    %v3185 = vunpack.c.l.b16 %v2594
    %v3186 = vunpack.c.h.b16 %v2594
    %v3187 = vunpack.c.l.b16 %v2595
    %v3188 = vunpack.c.h.b16 %v2595
    %v3189 = vunpack.c.l.b16 %v2596
    %v3190 = vunpack.c.h.b16 %v2596
    %v3191 = vunpack.c.l.b16 %v2597
    %v3192 = vunpack.c.l.b16 %v2598
    %v3193 = vunpack.c.h.b16 %v2598
    %v3194 = vunpack.c.l.b16 %v2599
    %v3195 = vunpack.c.h.b16 %v2599
    %v3196 = vunpack.c.l.b16 %v2600
    %v3197 = vunpack.c.h.b16 %v2600
    %v3198 = vunpack.c.l.b16 %v2601
    %v3199 = vunpack.c.l.b16 %v2602
    %v3200 = vunpack.c.h.b16 %v2602
    %v3201 = vunpack.c.l.b16 %v2603
    %v3202 = vunpack.c.h.b16 %v2603
    %v3203 = vunpack.c.l.b16 %v2604
    %v3204 = vunpack.c.h.b16 %v2604
    %v3205 = vunpack.c.l.b16 %v2605
    %v3206 = vunpack.c.l.b16 %v2606
    %v3207 = vunpack.c.h.b16 %v2606
    %v3208 = vunpack.c.l.b16 %v2607
    %v3209 = vunpack.c.h.b16 %v2607
    %v3210 = vunpack.c.l.b16 %v2608
    %v3211 = vunpack.c.h.b16 %v2608
    %v3212 = vunpack.c.l.b16 %v2609
    %v3213 = vunpack.c.l.b16 %v2610
    %v3214 = vunpack.c.h.b16 %v2610
    %v3215 = vunpack.c.l.b16 %v2611
    %v3216 = vunpack.c.h.b16 %v2611
    %v3217 = vunpack.c.l.b16 %v2612
    %v3218 = vunpack.c.h.b16 %v2612
    %v3219 = vunpack.c.l.b16 %v2613
    %v3220 = vunpack.c.l.b16 %v2614
    %v3221 = vunpack.c.h.b16 %v2614
    %v3222 = vunpack.c.l.b16 %v2615
    %v3223 = vunpack.c.h.b16 %v2615
    %v3224 = vunpack.c.l.b16 %v2616
    %v3225 = vunpack.c.h.b16 %v2616
    %v3226 = vunpack.c.l.b16 %v2617
    %v3227 = vunpack.c.l.b16 %v2618
    %v3228 = vunpack.c.h.b16 %v2618
    %v3229 = vunpack.c.l.b16 %v2619
    %v3230 = vunpack.c.h.b16 %v2619
    %v3231 = vunpack.c.l.b16 %v2620
    %v3232 = vunpack.c.h.b16 %v2620
    %v3233 = vunpack.c.l.b16 %v2621
    %v3234 = vunpack.c.l.b16 %v2622
    %v3235 = vunpack.c.h.b16 %v2622
    %v3236 = vunpack.c.l.b16 %v2623
    %v3237 = vunpack.c.h.b16 %v2623
    %v3238 = vunpack.c.l.b16 %v2624
    %v3239 = vunpack.c.h.b16 %v2624
    %v3240 = vunpack.c.l.b16 %v2625
    %v3241 = vunpack.c.l.b16 %v2626
    %v3242 = vunpack.c.h.b16 %v2626
    %v3243 = vunpack.c.l.b16 %v2627
    %v3244 = vunpack.c.h.b16 %v2627
    %v3245 = vunpack.c.l.b16 %v2628
    %v3246 = vunpack.c.h.b16 %v2628
    %v3247 = vunpack.c.l.b16 %v2629
    %v3248 = vunpack.c.l.b16 %v2630
    %v3249 = vunpack.c.h.b16 %v2630
    %v3250 = vunpack.c.l.b16 %v2631
    %v3251 = vunpack.c.h.b16 %v2631
    %v3252 = vunpack.c.l.b16 %v2632
    %v3253 = vunpack.c.h.b16 %v2632
    %v3254 = vunpack.c.l.b16 %v2633
    %v3255 = vunpack.c.l.b16 %v2634
    %v3256 = vunpack.c.h.b16 %v2634
    %v3257 = vunpack.c.l.b16 %v2635
    %v3258 = vunpack.c.h.b16 %v2635
    %v3259 = vunpack.c.l.b16 %v2636
    %v3260 = vunpack.c.h.b16 %v2636
    %v3261 = vunpack.c.l.b16 %v2637
    %v3262 = vunpack.c.l.b16 %v2638
    %v3263 = vunpack.c.h.b16 %v2638
    %v3264 = vunpack.c.l.b16 %v2639
    %v3265 = vunpack.c.h.b16 %v2639
    %v3266 = vunpack.c.l.b16 %v2640
    %v3267 = vunpack.c.h.b16 %v2640
    %v3268 = vunpack.c.l.b16 %v2641
    %v3269 = vunpack.c.l.b16 %v2642
    %v3270 = vunpack.c.h.b16 %v2642
    %v3271 = vunpack.c.l.b16 %v2643
    %v3272 = vunpack.c.h.b16 %v2643
    %v3273 = vunpack.c.l.b16 %v2644
    %v3274 = vunpack.c.h.b16 %v2644
    %v3275 = vunpack.c.l.b16 %v2645
    %v3276 = vunpack.c.l.b16 %v2646
    %v3277 = vunpack.c.h.b16 %v2646
    %v3278 = vunpack.c.l.b16 %v2647
    %v3279 = vunpack.c.h.b16 %v2647
    %v3280 = vunpack.c.l.b16 %v2648
    %v3281 = vunpack.c.h.b16 %v2648
    %v3282 = vunpack.c.l.b16 %v2649
    %v3283 = vunpack.c.l.b16 %v2650
    %v3284 = vunpack.c.h.b16 %v2650
    %v3285 = vunpack.c.l.b16 %v2651
    %v3286 = vunpack.c.h.b16 %v2651
    %v3287 = vunpack.c.l.b16 %v2652
    %v3288 = vunpack.c.h.b16 %v2652
    %v3289 = vunpack.c.l.b16 %v2653
    %v3290 = vunpack.c.l.b16 %v2654
    %v3291 = vunpack.c.h.b16 %v2654
    %v3292 = vunpack.c.l.b16 %v2655
    %v3293 = vunpack.c.h.b16 %v2655
    %v3294 = vunpack.c.l.b16 %v2656
    %v3295 = vunpack.c.h.b16 %v2656
    %v3296 = vunpack.c.l.b16 %v2657
    %v3297 = vunpack.c.l.b16 %v2658
    %v3298 = vunpack.c.h.b16 %v2658
    %v3299 = vunpack.c.l.b16 %v2659
    %v3300 = vunpack.c.h.b16 %v2659
    %v3301 = vunpack.c.l.b16 %v2660
    %v3302 = vunpack.c.h.b16 %v2660
    %v3303 = vunpack.c.l.b16 %v2661
    %v3304 = vunpack.c.l.b16 %v2662
    %v3305 = vunpack.c.h.b16 %v2662
    %v3306 = vunpack.c.l.b16 %v2663
    %v3307 = vunpack.c.h.b16 %v2663
    %v3308 = vunpack.c.l.b16 %v2664
    %v3309 = vunpack.c.h.b16 %v2664
    %v3310 = vunpack.c.l.b16 %v2665
    %v3311 = vunpack.c.l.b16 %v2666
    %v3312 = vunpack.c.h.b16 %v2666
    %v3313 = vunpack.c.l.b16 %v2667
    %v3314 = vunpack.c.h.b16 %v2667
    %v3315 = vunpack.c.l.b16 %v2668
    %v3316 = vunpack.c.h.b16 %v2668
    %v3317 = vunpack.c.l.b16 %v2669
    %v3318 = vunpack.c.l.b16 %v2670
    %v3319 = vunpack.c.h.b16 %v2670
    %v3320 = vunpack.c.l.b16 %v2671
    %v3321 = vunpack.c.h.b16 %v2671
    %v3322 = vunpack.c.l.b16 %v2672
    %v3323 = vunpack.c.h.b16 %v2672
    %v3324 = vunpack.c.l.b16 %v2673
    %v3325 = vunpack.c.l.b16 %v2674
    %v3326 = vunpack.c.h.b16 %v2674
    %v3327 = vunpack.c.l.b16 %v2675
    %v3328 = vunpack.c.h.b16 %v2675
    %v3329 = vunpack.c.l.b16 %v2676
    %v3330 = vunpack.c.h.b16 %v2676
    %v3331 = vunpack.c.l.b16 %v2677
    %v3332 = vunpack.c.l.b16 %v2678
    %v3333 = vunpack.c.h.b16 %v2678
    %v3334 = vunpack.c.l.b16 %v2679
    %v3335 = vunpack.c.h.b16 %v2679
    %v3336 = vunpack.c.l.b16 %v2680
    %v3337 = vunpack.c.h.b16 %v2680
    %v3338 = vunpack.c.l.b16 %v2681
    %v3339 = vunpack.c.l.b16 %v2682
    %v3340 = vunpack.c.h.b16 %v2682
    %v3341 = vunpack.c.l.b16 %v2683
    %v3342 = vunpack.c.h.b16 %v2683
    %v3343 = vunpack.c.l.b16 %v2684
    %v3344 = vunpack.c.h.b16 %v2684
    %v3345 = vunpack.c.l.b16 %v2685
    %v3346 = vunpack.c.l.b16 %v2686
    %v3347 = vunpack.c.h.b16 %v2686
    %v3348 = vunpack.c.l.b16 %v2687
    %v3349 = vunpack.c.h.b16 %v2687
    %v3350 = vunpack.c.l.b16 %v2688
    %v3351 = vunpack.c.h.b16 %v2688
    %v3352 = vunpack.c.l.b16 %v2689
    %v3353 = vunpack.c.l.b16 %v2690
    %v3354 = vunpack.c.h.b16 %v2690
    %v3355 = vunpack.c.l.b16 %v2691
    %v3356 = vunpack.c.h.b16 %v2691
    %v3357 = vunpack.c.l.b16 %v2692
    %v3358 = vunpack.c.h.b16 %v2692
    %v3359 = vunpack.c.l.b16 %v2693
    %v3360 = vunpack.c.l.b16 %v2694
    %v3361 = vunpack.c.h.b16 %v2694
    %v3362 = vunpack.c.l.b16 %v2695
    %v3363 = vunpack.c.h.b16 %v2695
    %v3364 = vunpack.c.l.b16 %v2696
    %v3365 = vunpack.c.h.b16 %v2696
    %v3366 = vunpack.c.l.b16 %v2697
    %v3367 = vunpack.c.l.b16 %v2698
    %v3368 = vunpack.c.h.b16 %v2698
    %v3369 = vunpack.c.l.b16 %v2699
    %v3370 = vunpack.c.h.b16 %v2699
    %v3371 = vunpack.c.l.b16 %v2700
    %v3372 = vunpack.c.h.b16 %v2700
    %v3373 = vunpack.c.l.b16 %v2701
    %v3374 = vunpack.c.l.b16 %v2702
    %v3375 = vunpack.c.h.b16 %v2702
    %v3376 = vunpack.c.l.b16 %v2703
    %v3377 = vunpack.c.h.b16 %v2703
    %v3378 = vunpack.c.l.b16 %v2704
    %v3379 = vunpack.c.h.b16 %v2704
    %v3380 = vunpack.c.l.b16 %v2705
    %v3381 = vunpack.c.l.b16 %v2706
    %v3382 = vunpack.c.h.b16 %v2706
    %v3383 = vunpack.c.l.b16 %v2707
    %v3384 = vunpack.c.h.b16 %v2707
    %v3385 = vunpack.c.l.b16 %v2708
    %v3386 = vunpack.c.h.b16 %v2708
    %v3387 = vunpack.c.l.b16 %v2709
    %v3388 = vunpack.c.l.b16 %v2710
    %v3389 = vunpack.c.h.b16 %v2710
    %v3390 = vunpack.c.l.b16 %v2711
    %v3391 = vunpack.c.h.b16 %v2711
    %v3392 = vunpack.c.l.b16 %v2712
    %v3393 = vunpack.c.h.b16 %v2712
    %v3394 = vunpack.c.l.b16 %v2713
    %v3395 = vunpack.c.l.b16 %v2714
    %v3396 = vunpack.c.h.b16 %v2714
    %v3397 = vunpack.c.l.b16 %v2715
    %v3398 = vunpack.c.h.b16 %v2715
    %v3399 = vunpack.c.l.b16 %v2716
    %v3400 = vunpack.c.h.b16 %v2716
    %v3401 = vunpack.c.l.b16 %v2717
    %v3402 = vunpack.c.l.b16 %v2718
    %v3403 = vunpack.c.h.b16 %v2718
    %v3404 = vunpack.c.l.b16 %v2719
    %v3405 = vunpack.c.h.b16 %v2719
    %v3406 = vunpack.c.l.b16 %v2720
    %v3407 = vunpack.c.h.b16 %v2720
    %v3408 = vunpack.c.l.b16 %v2721
    %v3409 = vunpack.c.l.b16 %v2722
    %v3410 = vunpack.c.h.b16 %v2722
    %v3411 = vunpack.c.l.b16 %v2723
    %v3412 = vunpack.c.h.b16 %v2723
    %v3413 = vunpack.c.l.b16 %v2724
    %v3414 = vunpack.c.h.b16 %v2724
    %v3415 = vunpack.c.l.b16 %v2725
    %v3416 = vunpack.c.l.b16 %v2726
    %v3417 = vunpack.c.h.b16 %v2726
    %v3418 = vunpack.c.l.b16 %v2727
    %v3419 = vunpack.c.h.b16 %v2727
    %v3420 = vunpack.c.l.b16 %v2728
    %v3421 = vunpack.c.h.b16 %v2728
    %v3422 = vunpack.c.l.b16 %v2729
    %v3423 = vunpack.c.l.b16 %v2730
    %v3424 = vunpack.c.h.b16 %v2730
    %v3425 = vunpack.c.l.b16 %v2731
    %v3426 = vunpack.c.h.b16 %v2731
    %v3427 = vunpack.c.l.b16 %v2732
    %v3428 = vunpack.c.h.b16 %v2732
    %v3429 = vunpack.c.l.b16 %v2733
    %v3430 = vunpack.c.l.b16 %v2734
    %v3431 = vunpack.c.h.b16 %v2734
    %v3432 = vunpack.c.l.b16 %v2735
    %v3433 = vunpack.c.h.b16 %v2735
    %v3434 = vunpack.c.l.b16 %v2736
    %v3435 = vunpack.c.h.b16 %v2736
    %v3436 = vunpack.c.l.b16 %v2737
    %v3437 = vunpack.c.l.b16 %v2738
    %v3438 = vunpack.c.h.b16 %v2738
    %v3439 = vunpack.c.l.b16 %v2739
    %v3440 = vunpack.c.h.b16 %v2739
    %v3441 = vunpack.c.l.b16 %v2740
    %v3442 = vunpack.c.h.b16 %v2740
    %v3443 = vunpack.c.l.b16 %v2741
    %v3444 = vunpack.c.l.b16 %v2742
    %v3445 = vunpack.c.h.b16 %v2742
    %v3446 = vunpack.c.l.b16 %v2743
    %v3447 = vunpack.c.h.b16 %v2743
    %v3448 = vunpack.c.l.b16 %v2744
    %v3449 = vunpack.c.h.b16 %v2744
    %v3450 = vunpack.c.l.b16 %v2745
    %v3451 = vunpack.c.l.b16 %v2746
    %v3452 = vunpack.c.h.b16 %v2746
    %v3453 = vunpack.c.l.b16 %v2747
    %v3454 = vunpack.c.h.b16 %v2747
    %v3455 = vunpack.c.l.b16 %v2748
    %v3456 = vunpack.c.h.b16 %v2748
    %v3457 = vunpack.c.l.b16 %v2749
    %v3458 = vunpack.c.l.b16 %v2750
    %v3459 = vunpack.c.h.b16 %v2750
    %v3460 = vunpack.c.l.b16 %v2751
    %v3461 = vunpack.c.h.b16 %v2751
    %v3462 = vunpack.c.l.b16 %v2752
    %v3463 = vunpack.c.h.b16 %v2752
    %v3464 = vunpack.c.l.b16 %v2753
    %v3465 = vunpack.c.l.b16 %v2754
    %v3466 = vunpack.c.h.b16 %v2754
    %v3467 = vunpack.c.l.b16 %v2755
    %v3468 = vunpack.c.h.b16 %v2755
    %v3469 = vunpack.c.l.b16 %v2756
    %v3470 = vunpack.c.h.b16 %v2756
    %v3471 = vunpack.c.l.b16 %v2757
    %v3472 = vunpack.c.l.b16 %v2758
    %v3473 = vunpack.c.h.b16 %v2758
    %v3474 = vunpack.c.l.b16 %v2759
    %v3475 = vunpack.c.h.b16 %v2759
    %v3476 = vunpack.c.l.b16 %v2760
    %v3477 = vunpack.c.h.b16 %v2760
    %v3478 = vunpack.c.l.b16 %v2761
    %v3479 = vunpack.c.l.b16 %v2762
    %v3480 = vunpack.c.h.b16 %v2762
    %v3481 = vunpack.c.l.b16 %v2763
    %v3482 = vunpack.c.h.b16 %v2763
    %v3483 = vunpack.c.l.b16 %v2764
    %v3484 = vunpack.c.h.b16 %v2764
    %v3485 = vunpack.c.l.b16 %v2765
    %v3486 = vunpack.c.l.b16 %v2766
    %v3487 = vunpack.c.h.b16 %v2766
    %v3488 = vunpack.c.l.b16 %v2767
    %v3489 = vunpack.c.h.b16 %v2767
    %v3490 = vunpack.c.l.b16 %v2768
    %v3491 = vunpack.c.h.b16 %v2768
    %v3492 = vunpack.c.l.b16 %v2769
    %v3493 = vunpack.c.l.b16 %v2770
    %v3494 = vunpack.c.h.b16 %v2770
    %v3495 = vunpack.c.l.b16 %v2771
    %v3496 = vunpack.c.h.b16 %v2771
    %v3497 = vunpack.c.l.b16 %v2772
    %v3498 = vunpack.c.h.b16 %v2772
    %v3499 = vunpack.c.l.b16 %v2773
    %v3500 = vunpack.c.l.b16 %v2774
    %v3501 = vunpack.c.h.b16 %v2774
    %v3502 = vunpack.c.l.b16 %v2775
    %v3503 = vunpack.c.h.b16 %v2775
    %v3504 = vunpack.c.l.b16 %v2776
    %v3505 = vunpack.c.h.b16 %v2776
    %v3506 = vunpack.c.l.b16 %v2777
    %v3507 = vunpack.c.l.b16 %v2778
    %v3508 = vunpack.c.h.b16 %v2778
    %v3509 = vunpack.c.l.b16 %v2779
    %v3510 = vunpack.c.h.b16 %v2779
    %v3511 = vunpack.c.l.b16 %v2780
    %v3512 = vunpack.c.h.b16 %v2780
    %v3513 = vunpack.c.l.b16 %v2781
    %v3514 = vunpack.c.l.b16 %v2782
    %v3515 = vunpack.c.h.b16 %v2782
    %v3516 = vunpack.c.l.b16 %v2783
    %v3517 = vunpack.c.h.b16 %v2783
    %v3518 = vunpack.c.l.b16 %v2784
    %v3519 = vunpack.c.h.b16 %v2784
    %v3520 = vunpack.c.l.b16 %v2785
    %v3521 = vunpack.c.l.b16 %v2786
    %v3522 = vunpack.c.h.b16 %v2786
    %v3523 = vunpack.c.l.b16 %v2787
    %v3524 = vunpack.c.h.b16 %v2787
    %v3525 = vunpack.c.l.b16 %v2788
    %v3526 = vunpack.c.h.b16 %v2788
    %v3527 = vunpack.c.l.b16 %v2789
    %v3528 = vunpack.c.l.b16 %v2790
    %v3529 = vunpack.c.h.b16 %v2790
    %v3530 = vunpack.c.l.b16 %v2791
    %v3531 = vunpack.c.h.b16 %v2791
    %v3532 = vunpack.c.l.b16 %v2792
    %v3533 = vunpack.c.h.b16 %v2792
    %v3534 = vunpack.c.l.b16 %v2793
    %v3535 = vpack.c.b16 %v3094, %v3087
    %v3536 = vpack.c.b16 %v3095, %v3088
    %v3537 = vpack.c.b16 %v3096, %v3089
    %v3538 = vpack.c.b16 %v3097, %v3090
    %v3539 = vpack.c.b16 %v3098, %v3091
    %v3540 = vpack.c.b16 %v3099, %v3092
    %v3541 = vpack.c.b16 %v3100, %v3093
    %v3542 = vpack.c.b16 %v3108, %v3101
    %v3543 = vpack.c.b16 %v3109, %v3102
    %v3544 = vpack.c.b16 %v3110, %v3103
    %v3545 = vpack.c.b16 %v3111, %v3104
    %v3546 = vpack.c.b16 %v3112, %v3105
    %v3547 = vpack.c.b16 %v3113, %v3106
    %v3548 = vpack.c.b16 %v3114, %v3107
    %v3549 = vpack.c.b16 %v3122, %v3115
    %v3550 = vpack.c.b16 %v3123, %v3116
    %v3551 = vpack.c.b16 %v3124, %v3117
    %v3552 = vpack.c.b16 %v3125, %v3118
    %v3553 = vpack.c.b16 %v3126, %v3119
    %v3554 = vpack.c.b16 %v3127, %v3120
    %v3555 = vpack.c.b16 %v3128, %v3121
    %v3556 = vpack.c.b16 %v3136, %v3129
    %v3557 = vpack.c.b16 %v3137, %v3130
    %v3558 = vpack.c.b16 %v3138, %v3131
    %v3559 = vpack.c.b16 %v3139, %v3132
    %v3560 = vpack.c.b16 %v3140, %v3133
    %v3561 = vpack.c.b16 %v3141, %v3134
    %v3562 = vpack.c.b16 %v3142, %v3135
    %v3563 = vpack.c.b16 %v3150, %v3143
    %v3564 = vpack.c.b16 %v3151, %v3144
    %v3565 = vpack.c.b16 %v3152, %v3145
    %v3566 = vpack.c.b16 %v3153, %v3146
    %v3567 = vpack.c.b16 %v3154, %v3147
    %v3568 = vpack.c.b16 %v3155, %v3148
    %v3569 = vpack.c.b16 %v3156, %v3149
    %v3570 = vpack.c.b16 %v3164, %v3157
    %v3571 = vpack.c.b16 %v3165, %v3158
    %v3572 = vpack.c.b16 %v3166, %v3159
    %v3573 = vpack.c.b16 %v3167, %v3160
    %v3574 = vpack.c.b16 %v3168, %v3161
    %v3575 = vpack.c.b16 %v3169, %v3162
    %v3576 = vpack.c.b16 %v3170, %v3163
    %v3577 = vpack.c.b16 %v3178, %v3171
    %v3578 = vpack.c.b16 %v3179, %v3172
    %v3579 = vpack.c.b16 %v3180, %v3173
    %v3580 = vpack.c.b16 %v3181, %v3174
    %v3581 = vpack.c.b16 %v3182, %v3175
    %v3582 = vpack.c.b16 %v3183, %v3176
    %v3583 = vpack.c.b16 %v3184, %v3177
    %v3584 = vpack.c.b16 %v3192, %v3185
    %v3585 = vpack.c.b16 %v3193, %v3186
    %v3586 = vpack.c.b16 %v3194, %v3187
    %v3587 = vpack.c.b16 %v3195, %v3188
    %v3588 = vpack.c.b16 %v3196, %v3189
    %v3589 = vpack.c.b16 %v3197, %v3190
    %v3590 = vpack.c.b16 %v3198, %v3191
    %v3591 = vpack.c.b16 %v3206, %v3199
    %v3592 = vpack.c.b16 %v3207, %v3200
    %v3593 = vpack.c.b16 %v3208, %v3201
    %v3594 = vpack.c.b16 %v3209, %v3202
    %v3595 = vpack.c.b16 %v3210, %v3203
    %v3596 = vpack.c.b16 %v3211, %v3204
    %v3597 = vpack.c.b16 %v3212, %v3205
    %v3598 = vpack.c.b16 %v3220, %v3213
    %v3599 = vpack.c.b16 %v3221, %v3214
    %v3600 = vpack.c.b16 %v3222, %v3215
    %v3601 = vpack.c.b16 %v3223, %v3216
    %v3602 = vpack.c.b16 %v3224, %v3217
    %v3603 = vpack.c.b16 %v3225, %v3218
    %v3604 = vpack.c.b16 %v3226, %v3219
    %v3605 = vpack.c.b16 %v3234, %v3227
    %v3606 = vpack.c.b16 %v3235, %v3228
    %v3607 = vpack.c.b16 %v3236, %v3229
    %v3608 = vpack.c.b16 %v3237, %v3230
    %v3609 = vpack.c.b16 %v3238, %v3231
    %v3610 = vpack.c.b16 %v3239, %v3232
    %v3611 = vpack.c.b16 %v3240, %v3233
    %v3612 = vpack.c.b16 %v3248, %v3241
    %v3613 = vpack.c.b16 %v3249, %v3242
    %v3614 = vpack.c.b16 %v3250, %v3243
    %v3615 = vpack.c.b16 %v3251, %v3244
    %v3616 = vpack.c.b16 %v3252, %v3245
    %v3617 = vpack.c.b16 %v3253, %v3246
    %v3618 = vpack.c.b16 %v3254, %v3247
    %v3619 = vpack.c.b16 %v3262, %v3255
    %v3620 = vpack.c.b16 %v3263, %v3256
    %v3621 = vpack.c.b16 %v3264, %v3257
    %v3622 = vpack.c.b16 %v3265, %v3258
    %v3623 = vpack.c.b16 %v3266, %v3259
    %v3624 = vpack.c.b16 %v3267, %v3260
    %v3625 = vpack.c.b16 %v3268, %v3261
    %v3626 = vpack.c.b16 %v3276, %v3269
    %v3627 = vpack.c.b16 %v3277, %v3270
    %v3628 = vpack.c.b16 %v3278, %v3271
    %v3629 = vpack.c.b16 %v3279, %v3272
    %v3630 = vpack.c.b16 %v3280, %v3273
    %v3631 = vpack.c.b16 %v3281, %v3274
    %v3632 = vpack.c.b16 %v3282, %v3275
    %v3633 = vpack.c.b16 %v3290, %v3283
    %v3634 = vpack.c.b16 %v3291, %v3284
    %v3635 = vpack.c.b16 %v3292, %v3285
    %v3636 = vpack.c.b16 %v3293, %v3286
    %v3637 = vpack.c.b16 %v3294, %v3287
    %v3638 = vpack.c.b16 %v3295, %v3288
    %v3639 = vpack.c.b16 %v3296, %v3289
    %v3640 = vpack.c.b16 %v3304, %v3297
    %v3641 = vpack.c.b16 %v3305, %v3298
    %v3642 = vpack.c.b16 %v3306, %v3299
    %v3643 = vpack.c.b16 %v3307, %v3300
    %v3644 = vpack.c.b16 %v3308, %v3301
    %v3645 = vpack.c.b16 %v3309, %v3302
    %v3646 = vpack.c.b16 %v3310, %v3303
    %v3647 = vpack.c.b16 %v3318, %v3311
    %v3648 = vpack.c.b16 %v3319, %v3312
    %v3649 = vpack.c.b16 %v3320, %v3313
    %v3650 = vpack.c.b16 %v3321, %v3314
    %v3651 = vpack.c.b16 %v3322, %v3315
    %v3652 = vpack.c.b16 %v3323, %v3316
    %v3653 = vpack.c.b16 %v3324, %v3317
    %v3654 = vpack.c.b16 %v3332, %v3325
    %v3655 = vpack.c.b16 %v3333, %v3326
    %v3656 = vpack.c.b16 %v3334, %v3327
    %v3657 = vpack.c.b16 %v3335, %v3328
    %v3658 = vpack.c.b16 %v3336, %v3329
    %v3659 = vpack.c.b16 %v3337, %v3330
    %v3660 = vpack.c.b16 %v3338, %v3331
    %v3661 = vpack.c.b16 %v3346, %v3339
    %v3662 = vpack.c.b16 %v3347, %v3340
    %v3663 = vpack.c.b16 %v3348, %v3341
    %v3664 = vpack.c.b16 %v3349, %v3342
    %v3665 = vpack.c.b16 %v3350, %v3343
    %v3666 = vpack.c.b16 %v3351, %v3344
    %v3667 = vpack.c.b16 %v3352, %v3345
    %v3668 = vpack.c.b16 %v3360, %v3353
    %v3669 = vpack.c.b16 %v3361, %v3354
    %v3670 = vpack.c.b16 %v3362, %v3355
    %v3671 = vpack.c.b16 %v3363, %v3356
    %v3672 = vpack.c.b16 %v3364, %v3357
    %v3673 = vpack.c.b16 %v3365, %v3358
    %v3674 = vpack.c.b16 %v3366, %v3359
    %v3675 = vpack.c.b16 %v3374, %v3367
    %v3676 = vpack.c.b16 %v3375, %v3368
    %v3677 = vpack.c.b16 %v3376, %v3369
    %v3678 = vpack.c.b16 %v3377, %v3370
    %v3679 = vpack.c.b16 %v3378, %v3371
    %v3680 = vpack.c.b16 %v3379, %v3372
    %v3681 = vpack.c.b16 %v3380, %v3373
    %v3682 = vpack.c.b16 %v3388, %v3381
    %v3683 = vpack.c.b16 %v3389, %v3382
    %v3684 = vpack.c.b16 %v3390, %v3383
    %v3685 = vpack.c.b16 %v3391, %v3384
    %v3686 = vpack.c.b16 %v3392, %v3385
    %v3687 = vpack.c.b16 %v3393, %v3386
    %v3688 = vpack.c.b16 %v3394, %v3387
    %v3689 = vpack.c.b16 %v3402, %v3395
    %v3690 = vpack.c.b16 %v3403, %v3396
    %v3691 = vpack.c.b16 %v3404, %v3397
    %v3692 = vpack.c.b16 %v3405, %v3398
    %v3693 = vpack.c.b16 %v3406, %v3399
    %v3694 = vpack.c.b16 %v3407, %v3400
    %v3695 = vpack.c.b16 %v3408, %v3401
    %v3696 = vpack.c.b16 %v3416, %v3409
    %v3697 = vpack.c.b16 %v3417, %v3410
    %v3698 = vpack.c.b16 %v3418, %v3411
    %v3699 = vpack.c.b16 %v3419, %v3412
    %v3700 = vpack.c.b16 %v3420, %v3413
    %v3701 = vpack.c.b16 %v3421, %v3414
    %v3702 = vpack.c.b16 %v3422, %v3415
    %v3703 = vpack.c.b16 %v3430, %v3423
    %v3704 = vpack.c.b16 %v3431, %v3424
    %v3705 = vpack.c.b16 %v3432, %v3425
    %v3706 = vpack.c.b16 %v3433, %v3426
    %v3707 = vpack.c.b16 %v3434, %v3427
    %v3708 = vpack.c.b16 %v3435, %v3428
    %v3709 = vpack.c.b16 %v3436, %v3429
    %v3710 = vpack.c.b16 %v3444, %v3437
    %v3711 = vpack.c.b16 %v3445, %v3438
    %v3712 = vpack.c.b16 %v3446, %v3439
    %v3713 = vpack.c.b16 %v3447, %v3440
    %v3714 = vpack.c.b16 %v3448, %v3441
    %v3715 = vpack.c.b16 %v3449, %v3442
    %v3716 = vpack.c.b16 %v3450, %v3443
    %v3717 = vpack.c.b16 %v3458, %v3451
    %v3718 = vpack.c.b16 %v3459, %v3452
    %v3719 = vpack.c.b16 %v3460, %v3453
    %v3720 = vpack.c.b16 %v3461, %v3454
    %v3721 = vpack.c.b16 %v3462, %v3455
    %v3722 = vpack.c.b16 %v3463, %v3456
    %v3723 = vpack.c.b16 %v3464, %v3457
    %v3724 = vpack.c.b16 %v3472, %v3465
    %v3725 = vpack.c.b16 %v3473, %v3466
    %v3726 = vpack.c.b16 %v3474, %v3467
    %v3727 = vpack.c.b16 %v3475, %v3468
    %v3728 = vpack.c.b16 %v3476, %v3469
    %v3729 = vpack.c.b16 %v3477, %v3470
    %v3730 = vpack.c.b16 %v3478, %v3471
    %v3731 = vpack.c.b16 %v3486, %v3479
    %v3732 = vpack.c.b16 %v3487, %v3480
    %v3733 = vpack.c.b16 %v3488, %v3481
    %v3734 = vpack.c.b16 %v3489, %v3482
    %v3735 = vpack.c.b16 %v3490, %v3483
    %v3736 = vpack.c.b16 %v3491, %v3484
    %v3737 = vpack.c.b16 %v3492, %v3485
    %v3738 = vpack.c.b16 %v3500, %v3493
    %v3739 = vpack.c.b16 %v3501, %v3494
    %v3740 = vpack.c.b16 %v3502, %v3495
    %v3741 = vpack.c.b16 %v3503, %v3496
    %v3742 = vpack.c.b16 %v3504, %v3497
    %v3743 = vpack.c.b16 %v3505, %v3498
    %v3744 = vpack.c.b16 %v3506, %v3499
    %v3745 = vpack.c.b16 %v3514, %v3507
    %v3746 = vpack.c.b16 %v3515, %v3508
    %v3747 = vpack.c.b16 %v3516, %v3509
    %v3748 = vpack.c.b16 %v3517, %v3510
    %v3749 = vpack.c.b16 %v3518, %v3511
    %v3750 = vpack.c.b16 %v3519, %v3512
    %v3751 = vpack.c.b16 %v3520, %v3513
    %v3752 = vpack.c.b16 %v3528, %v3521
    %v3753 = vpack.c.b16 %v3529, %v3522
    %v3754 = vpack.c.b16 %v3530, %v3523
    %v3755 = vpack.c.b16 %v3531, %v3524
    %v3756 = vpack.c.b16 %v3532, %v3525
    %v3757 = vpack.c.b16 %v3533, %v3526
    %v3758 = vpack.c.b16 %v3534, %v3527
    %3983 = vmatprep.subr.bf16.mxu0 %v3585
    %3984 = vmatpush1.bf16.msra.mxu0 %v3584
    %3985 = vmatprep.subr.bf16.mxu0 %v3578
    %3986 = vmatpush1.bf16.msra.mxu0 %v3577
    %3987 = vmatprep.subr.bf16.mxu0 %v3571
    %3988 = vmatpush1.bf16.msra.mxu0 %v3570
    %3989 = vmatprep.subr.bf16.mxu0 %v3564
    %3990 = vmatpush1.bf16.msra.mxu0 %v3563
    %3991 = vmatprep.subr.bf16.mxu0 %v3557
    %3992 = vmatpush1.bf16.msra.mxu0 %v3556
    %3993 = vmatprep.subr.bf16.mxu0 %v3550
    %3994 = vmatpush1.bf16.msra.mxu0 %v3549
    %3995 = vmatprep.subr.bf16.mxu0 %v3543
    %3996 = vmatpush1.bf16.msra.mxu0 %v3542
    %3997 = vmatprep.subr.bf16.mxu0 %v3536
    %3998 = vmatpush1.bf16.msra.mxu0 %v3535
    %3999 = vmatprep.subr.bf16.mxu0 %v3641
    %4000 = vmatpush2.bf16.msra.mxu0 %v3640
    %4001 = vmatprep.subr.bf16.mxu0 %v3634
    %4002 = vmatpush2.bf16.msra.mxu0 %v3633
    %4003 = vmatprep.subr.bf16.mxu0 %v3627
    %4004 = vmatpush2.bf16.msra.mxu0 %v3626
    %4005 = vmatprep.subr.bf16.mxu0 %v3620
    %4006 = vmatpush2.bf16.msra.mxu0 %v3619
    %4007 = vmatprep.subr.bf16.mxu0 %v3613
    %4008 = vmatpush2.bf16.msra.mxu0 %v3612
    %4009 = vmatprep.subr.bf16.mxu0 %v3606
    %4010 = vmatpush2.bf16.msra.mxu0 %v3605
    %4011 = vmatprep.subr.bf16.mxu0 %v3599
    %4012 = vmatpush2.bf16.msra.mxu0 %v3598
    %4013 = vmatprep.subr.bf16.mxu0 %v3592
    %4014 = vmatpush2.bf16.msra.mxu0 %v3591
    %4015 = vmatprep.mubr.bf16.mxu0 %v2535
    %4016 = vmatmul.mubr.bf16.gmra.mxu0 %v2534
    %v4017 = vpop.f32.mrf.mxu0
    %v4018 = vadd.f32 %v2799, %v4017
    %v4019 = vpop.f32.mrf.mxu0
    %v4020 = vadd.f32 %v2803, %v4019
    %v4021 = vpop.f32.mrf.mxu0
    %v4022 = vadd.f32 %v2799, %v4021
    %v4023 = vpop.f32.mrf.mxu0
    %v4024 = vadd.f32 %v2803, %v4023
    %4025 = vdwg.mxu0
    %4026 = vmatprep.subr.bf16.mxu0 %v3697
    %4027 = vmatpush1.bf16.msra.mxu0 %v3696
    %4028 = vmatprep.subr.bf16.mxu0 %v3690
    %4029 = vmatpush1.bf16.msra.mxu0 %v3689
    %4030 = vmatprep.subr.bf16.mxu0 %v3683
    %4031 = vmatpush1.bf16.msra.mxu0 %v3682
    %4032 = vmatprep.subr.bf16.mxu0 %v3676
    %4033 = vmatpush1.bf16.msra.mxu0 %v3675
    %4034 = vmatprep.subr.bf16.mxu0 %v3669
    %4035 = vmatpush1.bf16.msra.mxu0 %v3668
    %4036 = vmatprep.subr.bf16.mxu0 %v3662
    %4037 = vmatpush1.bf16.msra.mxu0 %v3661
    %4038 = vmatprep.subr.bf16.mxu0 %v3655
    %4039 = vmatpush1.bf16.msra.mxu0 %v3654
    %4040 = vmatprep.subr.bf16.mxu0 %v3648
    %4041 = vmatpush1.bf16.msra.mxu0 %v3647
    %4042 = vmatprep.subr.bf16.mxu0 %v3753
    %4043 = vmatpush2.bf16.msra.mxu0 %v3752
    %4044 = vmatprep.subr.bf16.mxu0 %v3746
    %4045 = vmatpush2.bf16.msra.mxu0 %v3745
    %4046 = vmatprep.subr.bf16.mxu0 %v3739
    %4047 = vmatpush2.bf16.msra.mxu0 %v3738
    %4048 = vmatprep.subr.bf16.mxu0 %v3732
    %4049 = vmatpush2.bf16.msra.mxu0 %v3731
    %4050 = vmatprep.subr.bf16.mxu0 %v3725
    %4051 = vmatpush2.bf16.msra.mxu0 %v3724
    %4052 = vmatprep.subr.bf16.mxu0 %v3718
    %4053 = vmatpush2.bf16.msra.mxu0 %v3717
    %4054 = vmatprep.subr.bf16.mxu0 %v3711
    %4055 = vmatpush2.bf16.msra.mxu0 %v3710
    %4056 = vmatprep.subr.bf16.mxu0 %v3704
    %4057 = vmatpush2.bf16.msra.mxu0 %v3703
    %4058 = vmatprep.mubr.bf16.mxu0 %v2537
    %4059 = vmatmul.mubr.bf16.gmra.mxu0 %v2536
    %v4060 = vpop.f32.mrf.mxu0
    %v4061 = vadd.f32 %v4018, %v4060
    %v4062 = vpop.f32.mrf.mxu0
    %v4063 = vadd.f32 %v4020, %v4062
    %v4064 = vpop.f32.mrf.mxu0
    %v4065 = vadd.f32 %v4022, %v4064
    %v4066 = vpop.f32.mrf.mxu0
    %v4067 = vadd.f32 %v4024, %v4066
    %4068 = vdwg.mxu0
    %4069 = vmatprep.subr.bf16.mxu0 %v3587
    %4070 = vmatpush1.bf16.msra.mxu0 %v3586
    %4071 = vmatprep.subr.bf16.mxu0 %v3580
    %4072 = vmatpush1.bf16.msra.mxu0 %v3579
    %4073 = vmatprep.subr.bf16.mxu0 %v3573
    %4074 = vmatpush1.bf16.msra.mxu0 %v3572
    %4075 = vmatprep.subr.bf16.mxu0 %v3566
    %4076 = vmatpush1.bf16.msra.mxu0 %v3565
    %4077 = vmatprep.subr.bf16.mxu0 %v3559
    %4078 = vmatpush1.bf16.msra.mxu0 %v3558
    %4079 = vmatprep.subr.bf16.mxu0 %v3552
    %4080 = vmatpush1.bf16.msra.mxu0 %v3551
    %4081 = vmatprep.subr.bf16.mxu0 %v3545
    %4082 = vmatpush1.bf16.msra.mxu0 %v3544
    %4083 = vmatprep.subr.bf16.mxu0 %v3538
    %4084 = vmatpush1.bf16.msra.mxu0 %v3537
    %4085 = vmatprep.subr.bf16.mxu0 %v3643
    %4086 = vmatpush2.bf16.msra.mxu0 %v3642
    %4087 = vmatprep.subr.bf16.mxu0 %v3636
    %4088 = vmatpush2.bf16.msra.mxu0 %v3635
    %4089 = vmatprep.subr.bf16.mxu0 %v3629
    %4090 = vmatpush2.bf16.msra.mxu0 %v3628
    %4091 = vmatprep.subr.bf16.mxu0 %v3622
    %4092 = vmatpush2.bf16.msra.mxu0 %v3621
    %4093 = vmatprep.subr.bf16.mxu0 %v3615
    %4094 = vmatpush2.bf16.msra.mxu0 %v3614
    %4095 = vmatprep.subr.bf16.mxu0 %v3608
    %4096 = vmatpush2.bf16.msra.mxu0 %v3607
    %4097 = vmatprep.subr.bf16.mxu0 %v3601
    %4098 = vmatpush2.bf16.msra.mxu0 %v3600
    %4099 = vmatprep.subr.bf16.mxu0 %v3594
    %4100 = vmatpush2.bf16.msra.mxu0 %v3593
    %4101 = vmatprep.mubr.bf16.mxu0 %v2535
    %4102 = vmatmul.mubr.bf16.gmra.mxu0 %v2534
    %v4103 = vpop.f32.mrf.mxu0
    %v4104 = vadd.f32 %v2807, %v4103
    %v4105 = vpop.f32.mrf.mxu0
    %v4106 = vadd.f32 %v2811, %v4105
    %v4107 = vpop.f32.mrf.mxu0
    %v4108 = vadd.f32 %v2807, %v4107
    %v4109 = vpop.f32.mrf.mxu0
    %v4110 = vadd.f32 %v2811, %v4109
    %4111 = vdwg.mxu0
    %4112 = vmatprep.subr.bf16.mxu0 %v3699
    %4113 = vmatpush1.bf16.msra.mxu0 %v3698
    %4114 = vmatprep.subr.bf16.mxu0 %v3692
    %4115 = vmatpush1.bf16.msra.mxu0 %v3691
    %4116 = vmatprep.subr.bf16.mxu0 %v3685
    %4117 = vmatpush1.bf16.msra.mxu0 %v3684
    %4118 = vmatprep.subr.bf16.mxu0 %v3678
    %4119 = vmatpush1.bf16.msra.mxu0 %v3677
    %4120 = vmatprep.subr.bf16.mxu0 %v3671
    %4121 = vmatpush1.bf16.msra.mxu0 %v3670
    %4122 = vmatprep.subr.bf16.mxu0 %v3664
    %4123 = vmatpush1.bf16.msra.mxu0 %v3663
    %4124 = vmatprep.subr.bf16.mxu0 %v3657
    %4125 = vmatpush1.bf16.msra.mxu0 %v3656
    %4126 = vmatprep.subr.bf16.mxu0 %v3650
    %4127 = vmatpush1.bf16.msra.mxu0 %v3649
    %4128 = vmatprep.subr.bf16.mxu0 %v3755
    %4129 = vmatpush2.bf16.msra.mxu0 %v3754
    %4130 = vmatprep.subr.bf16.mxu0 %v3748
    %4131 = vmatpush2.bf16.msra.mxu0 %v3747
    %4132 = vmatprep.subr.bf16.mxu0 %v3741
    %4133 = vmatpush2.bf16.msra.mxu0 %v3740
    %4134 = vmatprep.subr.bf16.mxu0 %v3734
    %4135 = vmatpush2.bf16.msra.mxu0 %v3733
    %4136 = vmatprep.subr.bf16.mxu0 %v3727
    %4137 = vmatpush2.bf16.msra.mxu0 %v3726
    %4138 = vmatprep.subr.bf16.mxu0 %v3720
    %4139 = vmatpush2.bf16.msra.mxu0 %v3719
    %4140 = vmatprep.subr.bf16.mxu0 %v3713
    %4141 = vmatpush2.bf16.msra.mxu0 %v3712
    %4142 = vmatprep.subr.bf16.mxu0 %v3706
    %4143 = vmatpush2.bf16.msra.mxu0 %v3705
    %4144 = vmatprep.mubr.bf16.mxu0 %v2537
    %4145 = vmatmul.mubr.bf16.gmra.mxu0 %v2536
    %v4146 = vpop.f32.mrf.mxu0
    %v4147 = vadd.f32 %v4104, %v4146
    %v4148 = vpop.f32.mrf.mxu0
    %v4149 = vadd.f32 %v4106, %v4148
    %v4150 = vpop.f32.mrf.mxu0
    %v4151 = vadd.f32 %v4108, %v4150
    %v4152 = vpop.f32.mrf.mxu0
    %v4153 = vadd.f32 %v4110, %v4152
    %4154 = vdwg.mxu0
    %4155 = vmatprep.subr.bf16.mxu0 %v3589
    %4156 = vmatpush1.bf16.msra.mxu0 %v3588
    %4157 = vmatprep.subr.bf16.mxu0 %v3582
    %4158 = vmatpush1.bf16.msra.mxu0 %v3581
    %4159 = vmatprep.subr.bf16.mxu0 %v3575
    %4160 = vmatpush1.bf16.msra.mxu0 %v3574
    %4161 = vmatprep.subr.bf16.mxu0 %v3568
    %4162 = vmatpush1.bf16.msra.mxu0 %v3567
    %4163 = vmatprep.subr.bf16.mxu0 %v3561
    %4164 = vmatpush1.bf16.msra.mxu0 %v3560
    %4165 = vmatprep.subr.bf16.mxu0 %v3554
    %4166 = vmatpush1.bf16.msra.mxu0 %v3553
    %4167 = vmatprep.subr.bf16.mxu0 %v3547
    %4168 = vmatpush1.bf16.msra.mxu0 %v3546
    %4169 = vmatprep.subr.bf16.mxu0 %v3540
    %4170 = vmatpush1.bf16.msra.mxu0 %v3539
    %4171 = vmatprep.subr.bf16.mxu0 %v3645
    %4172 = vmatpush2.bf16.msra.mxu0 %v3644
    %4173 = vmatprep.subr.bf16.mxu0 %v3638
    %4174 = vmatpush2.bf16.msra.mxu0 %v3637
    %4175 = vmatprep.subr.bf16.mxu0 %v3631
    %4176 = vmatpush2.bf16.msra.mxu0 %v3630
    %4177 = vmatprep.subr.bf16.mxu0 %v3624
    %4178 = vmatpush2.bf16.msra.mxu0 %v3623
    %4179 = vmatprep.subr.bf16.mxu0 %v3617
    %4180 = vmatpush2.bf16.msra.mxu0 %v3616
    %4181 = vmatprep.subr.bf16.mxu0 %v3610
    %4182 = vmatpush2.bf16.msra.mxu0 %v3609
    %4183 = vmatprep.subr.bf16.mxu0 %v3603
    %4184 = vmatpush2.bf16.msra.mxu0 %v3602
    %4185 = vmatprep.subr.bf16.mxu0 %v3596
    %4186 = vmatpush2.bf16.msra.mxu0 %v3595
    %4187 = vmatprep.mubr.bf16.mxu0 %v2535
    %4188 = vmatmul.mubr.bf16.gmra.mxu0 %v2534
    %v4189 = vpop.f32.mrf.mxu0
    %v4190 = vadd.f32 %v2815, %v4189
    %v4191 = vpop.f32.mrf.mxu0
    %v4192 = vadd.f32 %v2819, %v4191
    %v4193 = vpop.f32.mrf.mxu0
    %v4194 = vadd.f32 %v2815, %v4193
    %v4195 = vpop.f32.mrf.mxu0
    %v4196 = vadd.f32 %v2819, %v4195
    %4197 = vdwg.mxu0
    %4198 = vmatprep.subr.bf16.mxu0 %v3701
    %4199 = vmatpush1.bf16.msra.mxu0 %v3700
    %4200 = vmatprep.subr.bf16.mxu0 %v3694
    %4201 = vmatpush1.bf16.msra.mxu0 %v3693
    %4202 = vmatprep.subr.bf16.mxu0 %v3687
    %4203 = vmatpush1.bf16.msra.mxu0 %v3686
    %4204 = vmatprep.subr.bf16.mxu0 %v3680
    %4205 = vmatpush1.bf16.msra.mxu0 %v3679
    %4206 = vmatprep.subr.bf16.mxu0 %v3673
    %4207 = vmatpush1.bf16.msra.mxu0 %v3672
    %4208 = vmatprep.subr.bf16.mxu0 %v3666
    %4209 = vmatpush1.bf16.msra.mxu0 %v3665
    %4210 = vmatprep.subr.bf16.mxu0 %v3659
    %4211 = vmatpush1.bf16.msra.mxu0 %v3658
    %4212 = vmatprep.subr.bf16.mxu0 %v3652
    %4213 = vmatpush1.bf16.msra.mxu0 %v3651
    %4214 = vmatprep.subr.bf16.mxu0 %v3757
    %4215 = vmatpush2.bf16.msra.mxu0 %v3756
    %4216 = vmatprep.subr.bf16.mxu0 %v3750
    %4217 = vmatpush2.bf16.msra.mxu0 %v3749
    %4218 = vmatprep.subr.bf16.mxu0 %v3743
    %4219 = vmatpush2.bf16.msra.mxu0 %v3742
    %4220 = vmatprep.subr.bf16.mxu0 %v3736
    %4221 = vmatpush2.bf16.msra.mxu0 %v3735
    %4222 = vmatprep.subr.bf16.mxu0 %v3729
    %4223 = vmatpush2.bf16.msra.mxu0 %v3728
    %4224 = vmatprep.subr.bf16.mxu0 %v3722
    %4225 = vmatpush2.bf16.msra.mxu0 %v3721
    %4226 = vmatprep.subr.bf16.mxu0 %v3715
    %4227 = vmatpush2.bf16.msra.mxu0 %v3714
    %4228 = vmatprep.subr.bf16.mxu0 %v3708
    %4229 = vmatpush2.bf16.msra.mxu0 %v3707
    %4230 = vmatprep.mubr.bf16.mxu0 %v2537
    %4231 = vmatmul.mubr.bf16.gmra.mxu0 %v2536
    %v4232 = vpop.f32.mrf.mxu0
    %v4233 = vadd.f32 %v4190, %v4232
    %v4234 = vpop.f32.mrf.mxu0
    %v4235 = vadd.f32 %v4192, %v4234
    %v4236 = vpop.f32.mrf.mxu0
    %v4237 = vadd.f32 %v4194, %v4236
    %v4238 = vpop.f32.mrf.mxu0
    %v4239 = vadd.f32 %v4196, %v4238
    %4240 = vdwg.mxu0
    %4241 = vmatprep.subr.bf16.mxu0 0
    %4242 = vmatpush1.bf16.msra.mxu0 %v3590
    %4243 = vmatprep.subr.bf16.mxu0 0
    %4244 = vmatpush1.bf16.msra.mxu0 %v3583
    %4245 = vmatprep.subr.bf16.mxu0 0
    %4246 = vmatpush1.bf16.msra.mxu0 %v3576
    %4247 = vmatprep.subr.bf16.mxu0 0
    %4248 = vmatpush1.bf16.msra.mxu0 %v3569
    %4249 = vmatprep.subr.bf16.mxu0 0
    %4250 = vmatpush1.bf16.msra.mxu0 %v3562
    %4251 = vmatprep.subr.bf16.mxu0 0
    %4252 = vmatpush1.bf16.msra.mxu0 %v3555
    %4253 = vmatprep.subr.bf16.mxu0 0
    %4254 = vmatpush1.bf16.msra.mxu0 %v3548
    %4255 = vmatprep.subr.bf16.mxu0 0
    %4256 = vmatpush1.bf16.msra.mxu0 %v3541
    %4257 = vmatprep.subr.bf16.mxu0 0
    %4258 = vmatpush2.bf16.msra.mxu0 %v3646
    %4259 = vmatprep.subr.bf16.mxu0 0
    %4260 = vmatpush2.bf16.msra.mxu0 %v3639
    %4261 = vmatprep.subr.bf16.mxu0 0
    %4262 = vmatpush2.bf16.msra.mxu0 %v3632
    %4263 = vmatprep.subr.bf16.mxu0 0
    %4264 = vmatpush2.bf16.msra.mxu0 %v3625
    %4265 = vmatprep.subr.bf16.mxu0 0
    %4266 = vmatpush2.bf16.msra.mxu0 %v3618
    %4267 = vmatprep.subr.bf16.mxu0 0
    %4268 = vmatpush2.bf16.msra.mxu0 %v3611
    %4269 = vmatprep.subr.bf16.mxu0 0
    %4270 = vmatpush2.bf16.msra.mxu0 %v3604
    %4271 = vmatprep.subr.bf16.mxu0 0
    %4272 = vmatpush2.bf16.msra.mxu0 %v3597
    %4273 = vmatprep.mubr.bf16.mxu0 %v2535
    %4274 = vmatmul.mubr.bf16.gmra.mxu0 %v2534
    %v4275 = vpop.f32.mrf.mxu0
    %v4276 = vadd.f32 %v2823, %v4275
    %v4277 = vpop.f32.mrf.mxu0
    %v4278 = vpop.f32.mrf.mxu0
    %v4279 = vadd.f32 %v2823, %v4278
    %v4280 = vpop.f32.mrf.mxu0
    %4281 = vdwg.mxu0
    %4282 = vmatprep.subr.bf16.mxu0 0
    %4283 = vmatpush1.bf16.msra.mxu0 %v3702
    %4284 = vmatprep.subr.bf16.mxu0 0
    %4285 = vmatpush1.bf16.msra.mxu0 %v3695
    %4286 = vmatprep.subr.bf16.mxu0 0
    %4287 = vmatpush1.bf16.msra.mxu0 %v3688
    %4288 = vmatprep.subr.bf16.mxu0 0
    %4289 = vmatpush1.bf16.msra.mxu0 %v3681
    %4290 = vmatprep.subr.bf16.mxu0 0
    %4291 = vmatpush1.bf16.msra.mxu0 %v3674
    %4292 = vmatprep.subr.bf16.mxu0 0
    %4293 = vmatpush1.bf16.msra.mxu0 %v3667
    %4294 = vmatprep.subr.bf16.mxu0 0
    %4295 = vmatpush1.bf16.msra.mxu0 %v3660
    %4296 = vmatprep.subr.bf16.mxu0 0
    %4297 = vmatpush1.bf16.msra.mxu0 %v3653
    %4298 = vmatprep.subr.bf16.mxu0 0
    %4299 = vmatpush2.bf16.msra.mxu0 %v3758
    %4300 = vmatprep.subr.bf16.mxu0 0
    %4301 = vmatpush2.bf16.msra.mxu0 %v3751
    %4302 = vmatprep.subr.bf16.mxu0 0
    %4303 = vmatpush2.bf16.msra.mxu0 %v3744
    %4304 = vmatprep.subr.bf16.mxu0 0
    %4305 = vmatpush2.bf16.msra.mxu0 %v3737
    %4306 = vmatprep.subr.bf16.mxu0 0
    %4307 = vmatpush2.bf16.msra.mxu0 %v3730
    %4308 = vmatprep.subr.bf16.mxu0 0
    %4309 = vmatpush2.bf16.msra.mxu0 %v3723
    %4310 = vmatprep.subr.bf16.mxu0 0
    %4311 = vmatpush2.bf16.msra.mxu0 %v3716
    %4312 = vmatprep.subr.bf16.mxu0 0
    %4313 = vmatpush2.bf16.msra.mxu0 %v3709
    %4314 = vmatprep.mubr.bf16.mxu0 %v2537
    %4315 = vmatmul.mubr.bf16.gmra.mxu0 %v2536
    %v4316 = vpop.f32.mrf.mxu0
    %v4317 = vadd.f32 %v4276, %v4316
    %v4318 = vpop.f32.mrf.mxu0
    %v4319 = vpop.f32.mrf.mxu0
    %v4320 = vadd.f32 %v4279, %v4319
    %v4321 = vpop.f32.mrf.mxu0
    %4322 = vdwg.mxu0
    %v4323 = vxor.u32 %v4061, 2147483648
    %v4324 = vxor.u32 %v4063, 2147483648
    %v4325 = vxor.u32 %v4147, 2147483648
    %v4326 = vxor.u32 %v4149, 2147483648
    %v4327 = vxor.u32 %v4233, 2147483648
    %v4328 = vxor.u32 %v4235, 2147483648
    %v4329 = vxor.u32 %v4317, 2147483648
    %v4330 = vxor.u32 %v4065, 2147483648
    %v4331 = vxor.u32 %v4067, 2147483648
    %v4332 = vxor.u32 %v4151, 2147483648
    %v4333 = vxor.u32 %v4153, 2147483648
    %v4334 = vxor.u32 %v4237, 2147483648
    %v4335 = vxor.u32 %v4239, 2147483648
    %v4336 = vxor.u32 %v4320, 2147483648
    %v4337 = vmul.f32 %v4323, 1.442695
    %v4338 = vpow.pop %v4337
    %v4339 = vmul.f32 %v4324, 1.442695
    %v4340 = vpow.pop %v4339
    %v4341 = vmul.f32 %v4325, 1.442695
    %v4342 = vpow.pop %v4341
    %v4343 = vmul.f32 %v4326, 1.442695
    %v4344 = vpow.pop %v4343
    %v4345 = vmul.f32 %v4327, 1.442695
    %v4346 = vpow.pop %v4345
    %v4347 = vmul.f32 %v4328, 1.442695
    %v4348 = vpow.pop %v4347
    %v4349 = vmul.f32 %v4329, 1.442695
    %v4350 = vpow.pop %v4349
    %v4351 = vmul.f32 %v4330, 1.442695
    %v4352 = vpow.pop %v4351
    %v4353 = vmul.f32 %v4331, 1.442695
    %v4354 = vpow.pop %v4353
    %v4355 = vmul.f32 %v4332, 1.442695
    %v4356 = vpow.pop %v4355
    %v4357 = vmul.f32 %v4333, 1.442695
    %v4358 = vpow.pop %v4357
    %v4359 = vmul.f32 %v4334, 1.442695
    %v4360 = vpow.pop %v4359
    %v4361 = vmul.f32 %v4335, 1.442695
    %v4362 = vpow.pop %v4361
    %v4363 = vmul.f32 %v4336, 1.442695
    %v4364 = vpow.pop %v4363
    %v4365 = vadd.f32 %v4338, 1.0
    %v4366 = vadd.f32 %v4340, 1.0
    %v4367 = vadd.f32 %v4342, 1.0
    %v4368 = vadd.f32 %v4344, 1.0
    %v4369 = vadd.f32 %v4346, 1.0
    %v4370 = vadd.f32 %v4348, 1.0
    %v4371 = vadd.f32 %v4350, 1.0
    %v4372 = vadd.f32 %v4352, 1.0
    %v4373 = vadd.f32 %v4354, 1.0
    %v4374 = vadd.f32 %v4356, 1.0
    %v4375 = vadd.f32 %v4358, 1.0
    %v4376 = vadd.f32 %v4360, 1.0
    %v4377 = vadd.f32 %v4362, 1.0
    %v4378 = vadd.f32 %v4364, 1.0
    %v4379 = vrcp.pop %v4365
    %v4380 = vmul.f32 1.0, %v4379
    %v4381 = vrcp.pop %v4366
    %v4382 = vmul.f32 1.0, %v4381
    %v4383 = vrcp.pop %v4367
    %v4384 = vmul.f32 1.0, %v4383
    %v4385 = vrcp.pop %v4368
    %v4386 = vmul.f32 1.0, %v4385
    %v4387 = vrcp.pop %v4369
    %v4388 = vmul.f32 1.0, %v4387
    %v4389 = vrcp.pop %v4370
    %v4390 = vmul.f32 1.0, %v4389
    %v4391 = vrcp.pop %v4371
    %v4392 = vmul.f32 1.0, %v4391
    %v4393 = vrcp.pop %v4372
    %v4394 = vmul.f32 1.0, %v4393
    %v4395 = vrcp.pop %v4373
    %v4396 = vmul.f32 1.0, %v4395
    %v4397 = vrcp.pop %v4374
    %v4398 = vmul.f32 1.0, %v4397
    %v4399 = vrcp.pop %v4375
    %v4400 = vmul.f32 1.0, %v4399
    %v4401 = vrcp.pop %v4376
    %v4402 = vmul.f32 1.0, %v4401
    %v4403 = vrcp.pop %v4377
    %v4404 = vmul.f32 1.0, %v4403
    %v4405 = vrcp.pop %v4378
    %v4406 = vmul.f32 1.0, %v4405
    %v4407 = vpack.c.bf16 %v4394, %v4380
    %v4408 = vpack.c.bf16 %v4396, %v4382
    %v4409 = vpack.c.bf16 %v4398, %v4384
    %v4410 = vpack.c.bf16 %v4400, %v4386
    %v4411 = vpack.c.bf16 %v4402, %v4388
    %v4412 = vpack.c.bf16 %v4404, %v4390
    %v4413 = vpack.c.bf16 %v4406, %v4392
    %v4421 = vunpack.c.l.b16 %v4407
    %v4422 = vunpack.c.l.b16 %v4408
    %v4423 = vunpack.c.l.b16 %v4409
    %v4424 = vunpack.c.l.b16 %v4410
    %v4425 = vunpack.c.l.b16 %v4411
    %v4426 = vunpack.c.l.b16 %v4412
    %v4427 = vunpack.c.l.b16 %v4413
    %v4428 = vunpack.c.h.b16 %v4407
    %v4429 = vunpack.c.h.b16 %v4408
    %v4430 = vunpack.c.h.b16 %v4409
    %v4431 = vunpack.c.h.b16 %v4410
    %v4432 = vunpack.c.h.b16 %v4411
    %v4433 = vunpack.c.h.b16 %v4412
    %v4434 = vunpack.c.h.b16 %v4413
    %v4435 = vpack.c.b16 %v4422, %v4421
    %v4436 = vpack.c.b16 %v4424, %v4423
    %v4437 = vpack.c.b16 %v4426, %v4425
    %v4438 = vpack.c.b16 %v4427, %v4427
    %v4439 = vpack.c.b16 %v4429, %v4428
    %v4440 = vpack.c.b16 %v4431, %v4430
    %v4441 = vpack.c.b16 %v4433, %v4432
    %v4442 = vpack.c.b16 %v4434, %v4434
    %4451 = vst [vmem:[#allocation13] sm:$0xff] %v4435
    %4452 = vst [vmem:[#allocation13 + $0x8] sm:$0xff] %v4436
    %4453 = vst [vmem:[#allocation13 + $0x10] sm:$0xff] %v4437
    %4454 = vst [vmem:[#allocation13 + $0x18] sm:$0xf] %v4438
    %4455 = vst [vmem:[#allocation13 + $0x1c] sm:$0xff] %v4439
    %4456 = vst [vmem:[#allocation13 + $0x24] sm:$0xff] %v4440
    %4457 = vst [vmem:[#allocation13 + $0x2c] sm:$0xff] %v4441
    %4458 = vst [vmem:[#allocation13 + $0x34] sm:$0xf] %v4442
    // Predicated region
    $region62: #{tpu_custom_call.1} parent=1 // pred_check
      _
    $region63: #{tpu_custom_call.1} parent=1 // pred_check_branch
      %4460 = sbr.rel (0) target = $region65
    $region64: #{tpu_custom_call.1} parent=1 // pred_region
      %s4462 = ssub.s32 896, 896
      %4463 = vsyncadd [#allocation4], %s4462
      %s4464 = sshll.u32 [#allocation13], 4
      %s4465 = int_to_ptr.vmem [resolvable:$true] %s4464
      %4470 = dma.vmem_to_hbm [thread:$0]  %s4465, 896, %s9, [#allocation4], 448, 448, 28
    $region65: #{tpu_custom_call.1} parent=1 // pred_fallthru
      _
    // Predicated region
    $region66: #{tpu_custom_call.1} parent=1 // pred_check
      _
    $region67: #{tpu_custom_call.1} parent=1 // pred_check_branch
      %4472 = sbr.rel (0) target = $region69
    $region68: #{tpu_custom_call.1} parent=1 // pred_region
      %4473 = dma.done [#allocation4], 896
    $region69: #{tpu_custom_call.1} parent=1 // pred_fallthru
      _
    %4474 = vsyncpa [#allocation3], 1
    %4475 = vsyncpa [#allocation6], 1
    %4476 = vsyncpa [#allocation9], 1
    %4477 = vsyncpa [#allocation12], 1
    %4478 = vsyncpa [#allocation4], 1

</llo_original>
